<compile_context>
chip_gen: v6e
topology: v6e:2x2x1
jax: 0.10.0
libtpu: 0.0.40
codegen_flags: <defaults>
</compile_context>

<pallas_src>
import math

import jax
import jax.numpy as jnp
from jax import lax
from jax.experimental import pallas as pl
from jax.experimental.pallas import tpu as pltpu

C = 257          # in/out channels of every conv layer
KSIZE = 3        # conv kernel size
NLAYERS = 4      # number of conv layers
NEG_SLOPE = 0.2  # LeakyReLU negative slope


def _fused_convnet_kernel(x_ref, w_ref, blc_ref, bcl_ref, out_ref, buf_ref):
    """Whole 4-layer conv stack for one batch element, activations in VMEM.

    x_ref  : (1, C, L)     f32 input block in the native NCL layout
    w_ref  : (4, 3, C, C)  bf16 weights
                             layers 0..2: w_ref[l, k, ci, co] = W_l[co, ci, k]
                             layer  3   : w_ref[3, k, co, ci] = W_3[co, ci, k]
    blc_ref: (3, 1, C)     f32 biases for layers 0..2 (broadcast over L rows)
    bcl_ref: (C, 1)        f32 bias for layer 3 (broadcast over L lanes)
    out_ref: (1, C, L)     f32 output block (native NCL layout)
    buf_ref: (L + 2, C)    f32 scratch: zero-bordered channels-last slab
    """
    length = out_ref.shape[2]

    # Zero only the two border rows (not the whole slab); interior rows are
    # fully overwritten below.  Done every step -> megacore-safe.
    zero_row = jnp.zeros((1, buf_ref.shape[1]), dtype=buf_ref.dtype)
    buf_ref[pl.ds(0, 1), :] = zero_row
    buf_ref[pl.ds(length + 1, 1), :] = zero_row

    # In-kernel layout conversion (XLU transpose), no wrapper HBM transpose.
    buf_ref[pl.ds(1, length), :] = jnp.transpose(x_ref[0])      # (C,L)->(L,C)

    # Layers 1..3: channels-last; taps are sublane-shifted slab windows,
    # bf16 MXU operands, f32 accumulation, bias + LeakyReLU in f32.
    for layer in range(NLAYERS - 1):
        y = jnp.dot(buf_ref[pl.ds(0, length), :].astype(jnp.bfloat16),
                    w_ref[layer, 0],
                    preferred_element_type=jnp.float32)
        for k in range(1, KSIZE):
            y = y + jnp.dot(buf_ref[pl.ds(k, length), :].astype(jnp.bfloat16),
                            w_ref[layer, k],
                            preferred_element_type=jnp.float32)
        y = y + blc_ref[layer]                         # (1, C) broadcast
        y = jnp.where(y > 0, y, NEG_SLOPE * y)         # LeakyReLU(0.2)
        buf_ref[pl.ds(1, length), :] = y

    # Layer 4: compute natively as W @ H^T (contract C_in with C_in) so the
    # (C, L) result goes straight into the NCL output block (no transpose).
    dn = (((1,), (1,)), ((), ()))
    last = NLAYERS - 1
    z = lax.dot_general(w_ref[last, 0],
                        buf_ref[pl.ds(0, length), :].astype(jnp.bfloat16),
                        dn, preferred_element_type=jnp.float32)
    for k in range(1, KSIZE):
        z = z + lax.dot_general(w_ref[last, k],
                                buf_ref[pl.ds(k, length), :].astype(jnp.bfloat16),
                                dn, preferred_element_type=jnp.float32)
    z = z + bcl_ref[...]                               # (C, 1) broadcast over L
    # Sigmoid: EUP exp + approx reciprocal (no VALU divide).
    out_ref[0] = pl.reciprocal(1.0 + jnp.exp(-z), approx=True).astype(out_ref.dtype)


def _round_up(v, m):
    return ((v + m - 1) // m) * m


def _vmem_limit_bytes(length):
    """Rough per-step VMEM footprint (padded layouts, 2x buffers), with headroom."""
    lanes_c = _round_up(C, 128)
    w_bytes = NLAYERS * KSIZE * _round_up(C, 16) * lanes_c * 2          # bf16 weights
    b_bytes = (NLAYERS - 1) * 8 * lanes_c * 4 + _round_up(C, 8) * 128 * 4
    io_blk = _round_up(C, 8) * _round_up(length, 128) * 4               # f32 (C, L) block
    slab = _round_up(length + 2, 8) * lanes_c * 4                       # f32 slab
    est = 2 * (w_bytes + b_bytes) + 4 * io_blk + slab
    # TODO(synk): L-tiling with a 4-row halo (review) is needed for very long L.
    return int(min(max(2 * est, 32 * 1024 * 1024), 64 * 1024 * 1024))


def base_model_forward(x, packed_params):
    """x: (N, 257, L) float32 (PyTorch NCL layout). Returns (N, 257, L) float32."""
    w_stack, b_first3, b_last = packed_params
    n, c, length = x.shape
    assert c == C, f"expected {C} channels, got {c}"

    return pl.pallas_call(
        _fused_convnet_kernel,
        out_shape=jax.ShapeDtypeStruct((n, c, length), jnp.float32),
        grid_spec=pltpu.PrefetchScalarGridSpec(
            num_scalar_prefetch=0,
            grid=(n,),
            in_specs=[
                pl.BlockSpec((1, c, length), lambda i: (i, 0, 0)),
                pl.BlockSpec((NLAYERS, KSIZE, c, c), lambda i: (0, 0, 0, 0)),
                pl.BlockSpec((NLAYERS - 1, 1, c), lambda i: (0, 0, 0)),
                pl.BlockSpec((c, 1), lambda i: (0, 0)),
            ],
            out_specs=pl.BlockSpec((1, c, length), lambda i: (i, 0, 0)),
            scratch_shapes=[pltpu.VMEM((length + 2, c), jnp.float32)],
        ),
        compiler_params=pltpu.CompilerParams(
            dimension_semantics=("parallel",),
            vmem_limit_bytes=_vmem_limit_bytes(length),
        ),
    )(x, w_stack, b_first3, b_last)


def init_params(key):
    """PyTorch-style Conv1d params: list of (W (C_out,C_in,3), b (C_out,))."""
    params = []
    bound = 1.0 / math.sqrt(C * KSIZE)
    for _ in range(NLAYERS):
        key, kw, kb = jax.random.split(key, 3)
        w = jax.random.uniform(kw, (C, C, KSIZE), jnp.float32, -bound, bound)
        b = jax.random.uniform(kb, (C,), jnp.float32, -bound, bound)
        params.append((w, b))
    return params


def pack_params(params):
    """One-time repack: stacked, tap-major bf16 weights; layer-appropriate biases.

    Layers 0..2 are consumed channels-last (H @ W^T), so they are stored as
    (k, C_in, C_out); layer 3 is consumed natively (W @ H^T), stored as
    (k, C_out, C_in).  Both are (3, C, C), so all four stack into (4, 3, C, C).
    """
    w_lc = [jnp.transpose(w, (2, 1, 0)) for w, _ in params[:NLAYERS - 1]]
    w_cl = [jnp.transpose(w, (2, 0, 1)) for w, _ in params[NLAYERS - 1:]]
    w_stack = jnp.stack(w_lc + w_cl).astype(jnp.bfloat16)                 # (4,3,C,C)
    b_first3 = jnp.stack([b.reshape(1, C) for _, b in params[:NLAYERS - 1]])  # (3,1,C)
    b_last = params[NLAYERS - 1][1].reshape(C, 1)                         # (C,1)
    return w_stack, b_first3, b_last


def ref_forward(x, params):
    """Pure-JAX f32 reference of the PyTorch module (for correctness check)."""
    h = x
    for idx, (w, b) in enumerate(params):
        hp = jnp.pad(h, ((0, 0), (0, 0), (1, 1)))
        length = h.shape[-1]
        y = b[None, :, None]
        for k in range(KSIZE):
            y = y + jnp.einsum('oi,nil->nol', w[:, :, k], hp[:, :, k:k + length])
        if idx < NLAYERS - 1:
            h = jnp.where(y > 0, y, NEG_SLOPE * y)
        else:
            h = jax.nn.sigmoid(y)
    return h


if __name__ == "__main__":
    key = jax.random.PRNGKey(0)
    key, kx = jax.random.split(key)

    # Small example input consistent with the module: (batch, 257 channels, L).
    batch, length = 2, 16
    x = jax.random.normal(kx, (batch, C, length), dtype=jnp.float32)

    params = init_params(key)
    packed = pack_params(params)

    fwd = jax.jit(base_model_forward)
    out = jax.block_until_ready(fwd(x, packed))

    assert out.shape == (batch, C, length)
    assert bool(jnp.all(jnp.isfinite(out)))

    # Numerical check vs f32 reference (bf16 MXU operands -> loose tolerance).
    ref = ref_forward(x, params)
    max_err = float(jnp.max(jnp.abs(out - ref)))
    assert max_err < 5e-2, f"max abs error vs f32 reference: {max_err}"

    print("KERNEL_OK")
</pallas_src>

<mosaic_0001>
module attributes {stable_mosaic.version = 11 : i64} {
  func.func @_fused_convnet_kernel(%arg0: i32, %arg1: memref<1x257x16xf32, #tpu.memory_space<vmem>>, %arg2: memref<4x3x257x257xbf16, #tpu.memory_space<vmem>>, %arg3: memref<3x1x257xf32, #tpu.memory_space<vmem>>, %arg4: memref<257x1xf32, #tpu.memory_space<vmem>>, %arg5: memref<1x257x16xf32, #tpu.memory_space<vmem>>, %arg6: memref<18x257xf32, #tpu.memory_space<vmem>>) attributes {dimension_semantics = [#tpu.dimension_semantics<parallel>], iteration_bounds = array<i64: 2>, scalar_prefetch = 0 : i64, scratch_operands = 1 : i64, tpu.core_type = #tpu.core_type<tc>, window_params = [{transform_indices = @transform_0, window_bounds = array<i64: 1, 257, 16>}, {pipeline_mode = #tpu.pipeline_mode<synchronous>, transform_indices = @transform_1, window_bounds = array<i64: 4, 3, 257, 257>}, {pipeline_mode = #tpu.pipeline_mode<synchronous>, transform_indices = @transform_2, window_bounds = array<i64: 3, 1, 257>}, {pipeline_mode = #tpu.pipeline_mode<synchronous>, transform_indices = @transform_3, window_bounds = array<i64: 257, 1>}, {transform_indices = @transform_4, window_bounds = array<i64: 1, 257, 16>}]} {
    %cst = arith.constant 0.000000e+00 : f32
    %0 = vector.broadcast %cst : f32 to vector<1x257xf32>
    %c0 = arith.constant 0 : index
    %c0_0 = arith.constant 0 : index
    %1 = vector.load %arg6[%c0, %c0_0] : memref<18x257xf32, #tpu.memory_space<vmem>>, vector<1x257xf32>
    tpu.vector_store %arg6[%c0, %c0_0], %0 {strides = array<i32>} : memref<18x257xf32, #tpu.memory_space<vmem>>, vector<1x257xf32>,
    %c17 = arith.constant 17 : index
    %c0_1 = arith.constant 0 : index
    %2 = vector.load %arg6[%c17, %c0_1] : memref<18x257xf32, #tpu.memory_space<vmem>>, vector<1x257xf32>
    tpu.vector_store %arg6[%c17, %c0_1], %0 {strides = array<i32>} : memref<18x257xf32, #tpu.memory_space<vmem>>, vector<1x257xf32>,
    %c0_2 = arith.constant 0 : index
    %c0_3 = arith.constant 0 : index
    %c0_4 = arith.constant 0 : index
    %3 = vector.load %arg1[%c0_2, %c0_3, %c0_4] : memref<1x257x16xf32, #tpu.memory_space<vmem>>, vector<1x257x16xf32>
    %4 = vector.shape_cast %3 : vector<1x257x16xf32> to vector<257x16xf32>
    %5 = tpu.transpose %4, [1, 0] : vector<257x16xf32> -> vector<16x257xf32>
    %c1 = arith.constant 1 : index
    %c0_5 = arith.constant 0 : index
    %6 = vector.load %arg6[%c1, %c0_5] : memref<18x257xf32, #tpu.memory_space<vmem>>, vector<16x257xf32>
    tpu.vector_store %arg6[%c1, %c0_5], %5 {strides = array<i32>} : memref<18x257xf32, #tpu.memory_space<vmem>>, vector<16x257xf32>,
    %c0_6 = arith.constant 0 : index
    %c0_7 = arith.constant 0 : index
    %7 = vector.load %arg6[%c0_6, %c0_7] : memref<18x257xf32, #tpu.memory_space<vmem>>, vector<16x257xf32>
    %8 = arith.truncf %7 : vector<16x257xf32> to vector<16x257xbf16>
    %c0_8 = arith.constant 0 : index
    %c0_9 = arith.constant 0 : index
    %c0_10 = arith.constant 0 : index
    %c0_11 = arith.constant 0 : index
    %9 = vector.load %arg2[%c0_8, %c0_9, %c0_10, %c0_11] : memref<4x3x257x257xbf16, #tpu.memory_space<vmem>>, vector<1x1x257x257xbf16>
    %10 = vector.shape_cast %9 : vector<1x1x257x257xbf16> to vector<257x257xbf16>
    %cst_12 = arith.constant dense<0.000000e+00> : vector<16x257xf32>
    %11 = tpu.matmul %8, %10, %cst_12 {dimension_numbers = #tpu.dot_dimension_numbers<[1], [0], [0], [1], [0, 0, 1, 1], [], []>} : vector<16x257xbf16>, vector<257x257xbf16>, vector<16x257xf32> -> vector<16x257xf32>
    %c1_13 = arith.constant 1 : index
    %c0_14 = arith.constant 0 : index
    %12 = vector.load %arg6[%c1_13, %c0_14] : memref<18x257xf32, #tpu.memory_space<vmem>>, vector<16x257xf32>
    %13 = arith.truncf %12 : vector<16x257xf32> to vector<16x257xbf16>
    %c0_15 = arith.constant 0 : index
    %c1_16 = arith.constant 1 : index
    %c0_17 = arith.constant 0 : index
    %c0_18 = arith.constant 0 : index
    %14 = vector.load %arg2[%c0_15, %c1_16, %c0_17, %c0_18] : memref<4x3x257x257xbf16, #tpu.memory_space<vmem>>, vector<1x1x257x257xbf16>
    %15 = vector.shape_cast %14 : vector<1x1x257x257xbf16> to vector<257x257xbf16>
    %cst_19 = arith.constant dense<0.000000e+00> : vector<16x257xf32>
    %16 = tpu.matmul %13, %15, %cst_19 {dimension_numbers = #tpu.dot_dimension_numbers<[1], [0], [0], [1], [0, 0, 1, 1], [], []>} : vector<16x257xbf16>, vector<257x257xbf16>, vector<16x257xf32> -> vector<16x257xf32>
    %17 = arith.addf %11, %16 : vector<16x257xf32>
    %c2 = arith.constant 2 : index
    %c0_20 = arith.constant 0 : index
    %18 = vector.load %arg6[%c2, %c0_20] : memref<18x257xf32, #tpu.memory_space<vmem>>, vector<16x257xf32>
    %19 = arith.truncf %18 : vector<16x257xf32> to vector<16x257xbf16>
    %c0_21 = arith.constant 0 : index
    %c2_22 = arith.constant 2 : index
    %c0_23 = arith.constant 0 : index
    %c0_24 = arith.constant 0 : index
    %20 = vector.load %arg2[%c0_21, %c2_22, %c0_23, %c0_24] : memref<4x3x257x257xbf16, #tpu.memory_space<vmem>>, vector<1x1x257x257xbf16>
    %21 = vector.shape_cast %20 : vector<1x1x257x257xbf16> to vector<257x257xbf16>
    %cst_25 = arith.constant dense<0.000000e+00> : vector<16x257xf32>
    %22 = tpu.matmul %19, %21, %cst_25 {dimension_numbers = #tpu.dot_dimension_numbers<[1], [0], [0], [1], [0, 0, 1, 1], [], []>} : vector<16x257xbf16>, vector<257x257xbf16>, vector<16x257xf32> -> vector<16x257xf32>
    %23 = arith.addf %17, %22 : vector<16x257xf32>
    %c0_26 = arith.constant 0 : index
    %c0_27 = arith.constant 0 : index
    %c0_28 = arith.constant 0 : index
    %24 = vector.load %arg3[%c0_26, %c0_27, %c0_28] : memref<3x1x257xf32, #tpu.memory_space<vmem>>, vector<1x1x257xf32>
    %25 = vector.shape_cast %24 : vector<1x1x257xf32> to vector<1x257xf32>
    %26 = vector.broadcast %25 : vector<1x257xf32> to vector<16x257xf32>
    %27 = arith.addf %23, %26 : vector<16x257xf32>
    %cst_29 = arith.constant 0.000000e+00 : f32
    %28 = vector.broadcast %cst_29 : f32 to vector<16x257xf32>
    %29 = arith.cmpf ogt, %27, %28 : vector<16x257xf32>
    %cst_30 = arith.constant 2.000000e-01 : f32
    %30 = vector.broadcast %cst_30 : f32 to vector<16x257xf32>
    %31 = arith.mulf %30, %27 : vector<16x257xf32>
    %32 = arith.select %29, %27, %31 : vector<16x257xi1>, vector<16x257xf32>
    %c1_31 = arith.constant 1 : index
    %c0_32 = arith.constant 0 : index
    %33 = vector.load %arg6[%c1_31, %c0_32] : memref<18x257xf32, #tpu.memory_space<vmem>>, vector<16x257xf32>
    tpu.vector_store %arg6[%c1_31, %c0_32], %32 {strides = array<i32>} : memref<18x257xf32, #tpu.memory_space<vmem>>, vector<16x257xf32>,
    %c0_33 = arith.constant 0 : index
    %c0_34 = arith.constant 0 : index
    %34 = vector.load %arg6[%c0_33, %c0_34] : memref<18x257xf32, #tpu.memory_space<vmem>>, vector<16x257xf32>
    %35 = arith.truncf %34 : vector<16x257xf32> to vector<16x257xbf16>
    %c1_35 = arith.constant 1 : index
    %c0_36 = arith.constant 0 : index
    %c0_37 = arith.constant 0 : index
    %c0_38 = arith.constant 0 : index
    %36 = vector.load %arg2[%c1_35, %c0_36, %c0_37, %c0_38] : memref<4x3x257x257xbf16, #tpu.memory_space<vmem>>, vector<1x1x257x257xbf16>
    %37 = vector.shape_cast %36 : vector<1x1x257x257xbf16> to vector<257x257xbf16>
    %cst_39 = arith.constant dense<0.000000e+00> : vector<16x257xf32>
    %38 = tpu.matmul %35, %37, %cst_39 {dimension_numbers = #tpu.dot_dimension_numbers<[1], [0], [0], [1], [0, 0, 1, 1], [], []>} : vector<16x257xbf16>, vector<257x257xbf16>, vector<16x257xf32> -> vector<16x257xf32>
    %c1_40 = arith.constant 1 : index
    %c0_41 = arith.constant 0 : index
    %39 = vector.load %arg6[%c1_40, %c0_41] : memref<18x257xf32, #tpu.memory_space<vmem>>, vector<16x257xf32>
    %40 = arith.truncf %39 : vector<16x257xf32> to vector<16x257xbf16>
    %c1_42 = arith.constant 1 : index
    %c1_43 = arith.constant 1 : index
    %c0_44 = arith.constant 0 : index
    %c0_45 = arith.constant 0 : index
    %41 = vector.load %arg2[%c1_42, %c1_43, %c0_44, %c0_45] : memref<4x3x257x257xbf16, #tpu.memory_space<vmem>>, vector<1x1x257x257xbf16>
    %42 = vector.shape_cast %41 : vector<1x1x257x257xbf16> to vector<257x257xbf16>
    %cst_46 = arith.constant dense<0.000000e+00> : vector<16x257xf32>
    %43 = tpu.matmul %40, %42, %cst_46 {dimension_numbers = #tpu.dot_dimension_numbers<[1], [0], [0], [1], [0, 0, 1, 1], [], []>} : vector<16x257xbf16>, vector<257x257xbf16>, vector<16x257xf32> -> vector<16x257xf32>
    %44 = arith.addf %38, %43 : vector<16x257xf32>
    %c2_47 = arith.constant 2 : index
    %c0_48 = arith.constant 0 : index
    %45 = vector.load %arg6[%c2_47, %c0_48] : memref<18x257xf32, #tpu.memory_space<vmem>>, vector<16x257xf32>
    %46 = arith.truncf %45 : vector<16x257xf32> to vector<16x257xbf16>
    %c1_49 = arith.constant 1 : index
    %c2_50 = arith.constant 2 : index
    %c0_51 = arith.constant 0 : index
    %c0_52 = arith.constant 0 : index
    %47 = vector.load %arg2[%c1_49, %c2_50, %c0_51, %c0_52] : memref<4x3x257x257xbf16, #tpu.memory_space<vmem>>, vector<1x1x257x257xbf16>
    %48 = vector.shape_cast %47 : vector<1x1x257x257xbf16> to vector<257x257xbf16>
    %cst_53 = arith.constant dense<0.000000e+00> : vector<16x257xf32>
    %49 = tpu.matmul %46, %48, %cst_53 {dimension_numbers = #tpu.dot_dimension_numbers<[1], [0], [0], [1], [0, 0, 1, 1], [], []>} : vector<16x257xbf16>, vector<257x257xbf16>, vector<16x257xf32> -> vector<16x257xf32>
    %50 = arith.addf %44, %49 : vector<16x257xf32>
    %c1_54 = arith.constant 1 : index
    %c0_55 = arith.constant 0 : index
    %c0_56 = arith.constant 0 : index
    %51 = vector.load %arg3[%c1_54, %c0_55, %c0_56] : memref<3x1x257xf32, #tpu.memory_space<vmem>>, vector<1x1x257xf32>
    %52 = vector.shape_cast %51 : vector<1x1x257xf32> to vector<1x257xf32>
    %53 = vector.broadcast %52 : vector<1x257xf32> to vector<16x257xf32>
    %54 = arith.addf %50, %53 : vector<16x257xf32>
    %cst_57 = arith.constant 0.000000e+00 : f32
    %55 = vector.broadcast %cst_57 : f32 to vector<16x257xf32>
    %56 = arith.cmpf ogt, %54, %55 : vector<16x257xf32>
    %cst_58 = arith.constant 2.000000e-01 : f32
    %57 = vector.broadcast %cst_58 : f32 to vector<16x257xf32>
    %58 = arith.mulf %57, %54 : vector<16x257xf32>
    %59 = arith.select %56, %54, %58 : vector<16x257xi1>, vector<16x257xf32>
    %c1_59 = arith.constant 1 : index
    %c0_60 = arith.constant 0 : index
    %60 = vector.load %arg6[%c1_59, %c0_60] : memref<18x257xf32, #tpu.memory_space<vmem>>, vector<16x257xf32>
    tpu.vector_store %arg6[%c1_59, %c0_60], %59 {strides = array<i32>} : memref<18x257xf32, #tpu.memory_space<vmem>>, vector<16x257xf32>,
    %c0_61 = arith.constant 0 : index
    %c0_62 = arith.constant 0 : index
    %61 = vector.load %arg6[%c0_61, %c0_62] : memref<18x257xf32, #tpu.memory_space<vmem>>, vector<16x257xf32>
    %62 = arith.truncf %61 : vector<16x257xf32> to vector<16x257xbf16>
    %c2_63 = arith.constant 2 : index
    %c0_64 = arith.constant 0 : index
    %c0_65 = arith.constant 0 : index
    %c0_66 = arith.constant 0 : index
    %63 = vector.load %arg2[%c2_63, %c0_64, %c0_65, %c0_66] : memref<4x3x257x257xbf16, #tpu.memory_space<vmem>>, vector<1x1x257x257xbf16>
    %64 = vector.shape_cast %63 : vector<1x1x257x257xbf16> to vector<257x257xbf16>
    %cst_67 = arith.constant dense<0.000000e+00> : vector<16x257xf32>
    %65 = tpu.matmul %62, %64, %cst_67 {dimension_numbers = #tpu.dot_dimension_numbers<[1], [0], [0], [1], [0, 0, 1, 1], [], []>} : vector<16x257xbf16>, vector<257x257xbf16>, vector<16x257xf32> -> vector<16x257xf32>
    %c1_68 = arith.constant 1 : index
    %c0_69 = arith.constant 0 : index
    %66 = vector.load %arg6[%c1_68, %c0_69] : memref<18x257xf32, #tpu.memory_space<vmem>>, vector<16x257xf32>
    %67 = arith.truncf %66 : vector<16x257xf32> to vector<16x257xbf16>
    %c2_70 = arith.constant 2 : index
    %c1_71 = arith.constant 1 : index
    %c0_72 = arith.constant 0 : index
    %c0_73 = arith.constant 0 : index
    %68 = vector.load %arg2[%c2_70, %c1_71, %c0_72, %c0_73] : memref<4x3x257x257xbf16, #tpu.memory_space<vmem>>, vector<1x1x257x257xbf16>
    %69 = vector.shape_cast %68 : vector<1x1x257x257xbf16> to vector<257x257xbf16>
    %cst_74 = arith.constant dense<0.000000e+00> : vector<16x257xf32>
    %70 = tpu.matmul %67, %69, %cst_74 {dimension_numbers = #tpu.dot_dimension_numbers<[1], [0], [0], [1], [0, 0, 1, 1], [], []>} : vector<16x257xbf16>, vector<257x257xbf16>, vector<16x257xf32> -> vector<16x257xf32>
    %71 = arith.addf %65, %70 : vector<16x257xf32>
    %c2_75 = arith.constant 2 : index
    %c0_76 = arith.constant 0 : index
    %72 = vector.load %arg6[%c2_75, %c0_76] : memref<18x257xf32, #tpu.memory_space<vmem>>, vector<16x257xf32>
    %73 = arith.truncf %72 : vector<16x257xf32> to vector<16x257xbf16>
    %c2_77 = arith.constant 2 : index
    %c2_78 = arith.constant 2 : index
    %c0_79 = arith.constant 0 : index
    %c0_80 = arith.constant 0 : index
    %74 = vector.load %arg2[%c2_77, %c2_78, %c0_79, %c0_80] : memref<4x3x257x257xbf16, #tpu.memory_space<vmem>>, vector<1x1x257x257xbf16>
    %75 = vector.shape_cast %74 : vector<1x1x257x257xbf16> to vector<257x257xbf16>
    %cst_81 = arith.constant dense<0.000000e+00> : vector<16x257xf32>
    %76 = tpu.matmul %73, %75, %cst_81 {dimension_numbers = #tpu.dot_dimension_numbers<[1], [0], [0], [1], [0, 0, 1, 1], [], []>} : vector<16x257xbf16>, vector<257x257xbf16>, vector<16x257xf32> -> vector<16x257xf32>
    %77 = arith.addf %71, %76 : vector<16x257xf32>
    %c2_82 = arith.constant 2 : index
    %c0_83 = arith.constant 0 : index
    %c0_84 = arith.constant 0 : index
    %78 = vector.load %arg3[%c2_82, %c0_83, %c0_84] : memref<3x1x257xf32, #tpu.memory_space<vmem>>, vector<1x1x257xf32>
    %79 = vector.shape_cast %78 : vector<1x1x257xf32> to vector<1x257xf32>
    %80 = vector.broadcast %79 : vector<1x257xf32> to vector<16x257xf32>
    %81 = arith.addf %77, %80 : vector<16x257xf32>
    %cst_85 = arith.constant 0.000000e+00 : f32
    %82 = vector.broadcast %cst_85 : f32 to vector<16x257xf32>
    %83 = arith.cmpf ogt, %81, %82 : vector<16x257xf32>
    %cst_86 = arith.constant 2.000000e-01 : f32
    %84 = vector.broadcast %cst_86 : f32 to vector<16x257xf32>
    %85 = arith.mulf %84, %81 : vector<16x257xf32>
    %86 = arith.select %83, %81, %85 : vector<16x257xi1>, vector<16x257xf32>
    %c1_87 = arith.constant 1 : index
    %c0_88 = arith.constant 0 : index
    %87 = vector.load %arg6[%c1_87, %c0_88] : memref<18x257xf32, #tpu.memory_space<vmem>>, vector<16x257xf32>
    tpu.vector_store %arg6[%c1_87, %c0_88], %86 {strides = array<i32>} : memref<18x257xf32, #tpu.memory_space<vmem>>, vector<16x257xf32>,
    %c3 = arith.constant 3 : index
    %c0_89 = arith.constant 0 : index
    %c0_90 = arith.constant 0 : index
    %c0_91 = arith.constant 0 : index
    %88 = vector.load %arg2[%c3, %c0_89, %c0_90, %c0_91] : memref<4x3x257x257xbf16, #tpu.memory_space<vmem>>, vector<1x1x257x257xbf16>
    %89 = vector.shape_cast %88 : vector<1x1x257x257xbf16> to vector<257x257xbf16>
    %c0_92 = arith.constant 0 : index
    %c0_93 = arith.constant 0 : index
    %90 = vector.load %arg6[%c0_92, %c0_93] : memref<18x257xf32, #tpu.memory_space<vmem>>, vector<16x257xf32>
    %91 = arith.truncf %90 : vector<16x257xf32> to vector<16x257xbf16>
    %cst_94 = arith.constant dense<0.000000e+00> : vector<257x16xf32>
    %92 = tpu.matmul %89, %91, %cst_94 {dimension_numbers = #tpu.dot_dimension_numbers<[1], [1], [0], [0], [0, 0, 1, 0], [], []>} : vector<257x257xbf16>, vector<16x257xbf16>, vector<257x16xf32> -> vector<257x16xf32>
    %c3_95 = arith.constant 3 : index
    %c1_96 = arith.constant 1 : index
    %c0_97 = arith.constant 0 : index
    %c0_98 = arith.constant 0 : index
    %93 = vector.load %arg2[%c3_95, %c1_96, %c0_97, %c0_98] : memref<4x3x257x257xbf16, #tpu.memory_space<vmem>>, vector<1x1x257x257xbf16>
    %94 = vector.shape_cast %93 : vector<1x1x257x257xbf16> to vector<257x257xbf16>
    %c1_99 = arith.constant 1 : index
    %c0_100 = arith.constant 0 : index
    %95 = vector.load %arg6[%c1_99, %c0_100] : memref<18x257xf32, #tpu.memory_space<vmem>>, vector<16x257xf32>
    %96 = arith.truncf %95 : vector<16x257xf32> to vector<16x257xbf16>
    %cst_101 = arith.constant dense<0.000000e+00> : vector<257x16xf32>
    %97 = tpu.matmul %94, %96, %cst_101 {dimension_numbers = #tpu.dot_dimension_numbers<[1], [1], [0], [0], [0, 0, 1, 0], [], []>} : vector<257x257xbf16>, vector<16x257xbf16>, vector<257x16xf32> -> vector<257x16xf32>
    %98 = arith.addf %92, %97 : vector<257x16xf32>
    %c3_102 = arith.constant 3 : index
    %c2_103 = arith.constant 2 : index
    %c0_104 = arith.constant 0 : index
    %c0_105 = arith.constant 0 : index
    %99 = vector.load %arg2[%c3_102, %c2_103, %c0_104, %c0_105] : memref<4x3x257x257xbf16, #tpu.memory_space<vmem>>, vector<1x1x257x257xbf16>
    %100 = vector.shape_cast %99 : vector<1x1x257x257xbf16> to vector<257x257xbf16>
    %c2_106 = arith.constant 2 : index
    %c0_107 = arith.constant 0 : index
    %101 = vector.load %arg6[%c2_106, %c0_107] : memref<18x257xf32, #tpu.memory_space<vmem>>, vector<16x257xf32>
    %102 = arith.truncf %101 : vector<16x257xf32> to vector<16x257xbf16>
    %cst_108 = arith.constant dense<0.000000e+00> : vector<257x16xf32>
    %103 = tpu.matmul %100, %102, %cst_108 {dimension_numbers = #tpu.dot_dimension_numbers<[1], [1], [0], [0], [0, 0, 1, 0], [], []>} : vector<257x257xbf16>, vector<16x257xbf16>, vector<257x16xf32> -> vector<257x16xf32>
    %104 = arith.addf %98, %103 : vector<257x16xf32>
    %c0_109 = arith.constant 0 : index
    %c0_110 = arith.constant 0 : index
    %105 = vector.load %arg4[%c0_109, %c0_110] : memref<257x1xf32, #tpu.memory_space<vmem>>, vector<257x1xf32>
    %106 = vector.broadcast %105 : vector<257x1xf32> to vector<257x16xf32>
    %107 = arith.addf %104, %106 : vector<257x16xf32>
    %cst_111 = arith.constant 0.000000e+00 : f32
    %108 = vector.broadcast %cst_111 : f32 to vector<257x16xf32>
    %109 = arith.subf %108, %107 : vector<257x16xf32>
    %110 = math.exp %109 : vector<257x16xf32>
    %cst_112 = arith.constant 1.000000e+00 : f32
    %111 = vector.broadcast %cst_112 : f32 to vector<257x16xf32>
    %112 = arith.addf %111, %110 : vector<257x16xf32>
    %113 = tpu.reciprocal %112 {approx = true} : vector<257x16xf32> -> vector<257x16xf32>
    %c0_113 = arith.constant 0 : index
    %c0_114 = arith.constant 0 : index
    %c0_115 = arith.constant 0 : index
    %114 = vector.load %arg5[%c0_113, %c0_114, %c0_115] : memref<1x257x16xf32, #tpu.memory_space<vmem>>, vector<1x257x16xf32>
    %115 = vector.shape_cast %114 : vector<1x257x16xf32> to vector<257x16xf32>
    %116 = vector.shape_cast %113 : vector<257x16xf32> to vector<1x257x16xf32>
    tpu.vector_store %arg5[%c0_113, %c0_114, %c0_115], %116 {strides = array<i32>} : memref<1x257x16xf32, #tpu.memory_space<vmem>>, vector<1x257x16xf32>,
    return
  }
  func.func @transform_0(%arg0: i32) -> (i32, i32, i32) {
    %c0_i32 = arith.constant 0 : i32
    %c0_i32_0 = arith.constant 0 : i32
    %c0_i32_1 = arith.constant 0 : i32
    return %arg0, %c0_i32, %c0_i32_0 : i32, i32, i32
  }
  func.func @transform_1(%arg0: i32) -> (i32, i32, i32, i32) {
    %c0_i32 = arith.constant 0 : i32
    %c0_i32_0 = arith.constant 0 : i32
    %c0_i32_1 = arith.constant 0 : i32
    %c0_i32_2 = arith.constant 0 : i32
    %c0_i32_3 = arith.constant 0 : i32
    return %c0_i32, %c0_i32_0, %c0_i32_1, %c0_i32_2 : i32, i32, i32, i32
  }
  func.func @transform_2(%arg0: i32) -> (i32, i32, i32) {
    %c0_i32 = arith.constant 0 : i32
    %c0_i32_0 = arith.constant 0 : i32
    %c0_i32_1 = arith.constant 0 : i32
    %c0_i32_2 = arith.constant 0 : i32
    return %c0_i32, %c0_i32_0, %c0_i32_1 : i32, i32, i32
  }
  func.func @transform_3(%arg0: i32) -> (i32, i32) {
    %c0_i32 = arith.constant 0 : i32
    %c0_i32_0 = arith.constant 0 : i32
    %c0_i32_1 = arith.constant 0 : i32
    return %c0_i32, %c0_i32_0 : i32, i32
  }
  func.func @transform_4(%arg0: i32) -> (i32, i32, i32) {
    %c0_i32 = arith.constant 0 : i32
    %c0_i32_0 = arith.constant 0 : i32
    %c0_i32_1 = arith.constant 0 : i32
    return %arg0, %c0_i32, %c0_i32_0 : i32, i32, i32
  }
}

</mosaic_0001>

<llo_original>
// kernel: base_model_forward.1
$region0: #{base_model_forward.1}
  #allocation0 [shape = 'u32[]', space=smem, size = 0x4, offset = 0x4, fixed_abs, tag = 'smem constant byte address 0x4 - core index']
  #allocation1 [shape = 'u32[144,128]{1,0:T(1,128)}', space=vmem, size = 0x12000, scoped, tag = 'internal scratch']
  #allocation2 [shape = 'f32[18,257]{1,0:T(8,128)}', space=vmem, size = 0x9000, scoped, tag = 'scratch operand']
  %s0 = inlined_call_operand.vmem [shape: f32[2,257,16], index: 0, kind: input, shape index: {}]
  %s1 = inlined_call_operand.vmem [shape: bf16[4,3,257,257], index: 1, kind: input, shape index: {}]
  %s2 = inlined_call_operand.vmem [shape: f32[3,1,257], index: 2, kind: input, shape index: {}]
  %s3 = inlined_call_operand.vmem [shape: f32[257,1], index: 3, kind: input, shape index: {}]
  %s4 = inlined_call_operand.vmem [shape: f32[2,257,16], index: 4, kind: output, shape index: {}]
  %s5 = sld [smem:[#allocation0]]
  $region49: #{base_model_forward.1} parent=0
    _
  %s7 = ssub.s32 1, %s5
  %s8 = scalar_select 0, %s7, %s5
  loop: start=0, step=1, limit=4
  $region2: #{base_model_forward.1} parent=0 // loop_pre_header
    _
  $region3: #{base_model_forward.1} parent=0 // loop_header
    %s10 = sphi 0, %s14
    %p11 = scmp.ge.s32.totalorder %s10, 4
    %s20 = sphi 0, %s22
    %s23 = sphi 0, %s20
    %s24 = sphi 0, %s23
    %s40 = sphi 0, %s24
    %s44 = sphi 0, %s44
    %s46 = sphi 0, %s44
    %s47 = sphi 0, %s46
    %s61 = sphi 0, %s47
    %s65 = sphi 0, %s65
    %s67 = sphi 0, %s65
    %s68 = sphi 0, %s67
    %s82 = sphi 0, %s68
    %s86 = sphi 0, %s86
    %s88 = sphi 0, %s86
    %s89 = sphi 0, %s88
    %s103 = sphi 0, %s89
    %s109 = sphi 0, %s111
    %s112 = sphi 0, %s109
    %s113 = sphi 0, %s112
    %s129 = sphi 0, %s113
  $region4: #{base_model_forward.1} parent=0 // loop_header_branch
    %13 = sbr.rel (%p11) target = $region8
  $region5: #{base_model_forward.1} parent=0 // loop_body
    %s15 = ssub.s32 %s10, 1
    %s16 = ssub.s32 %s10, 2
    %s17 = sadd.s32 %s10, 1
    %s18 = ssub.s32 %s10, %s17
    %p19 = scmp.eq.s32.totalorder %s18, 0
    %s21 = sadd.s32 %s20, 1
    %s22 = scalar_select %p19, %s20, %s21
    %p25 = pneg %p19
    %p26 = scmp.eq.s32.totalorder %s10, 1
    %p27 = por %p25, %p26
    %p28 = scmp.ne.s32.totalorder %s20, %s23
    %p29 = scmp.eq.s32.totalorder %s10, 0
    %p30 = por %p28, %p29
    %p31 = scmp.ne.s32.totalorder %s20, %s23
    %p32 = scmp.eq.s32.totalorder %s15, 1
    %p33 = por %p31, %p32
    %p34 = scmp.ne.s32.totalorder %s23, %s24
    %p35 = scmp.eq.s32.totalorder %s15, 0
    %p36 = por %p34, %p35
    %p37 = scmp.ne.s32.totalorder %s23, %s24
    %p38 = scmp.eq.s32.totalorder %s16, 1
    %p39 = por %p37, %p38
    %p41 = scmp.ne.s32.totalorder %s24, %s40
    %p42 = scmp.eq.s32.totalorder %s16, 0
    %p43 = por %p41, %p42
    %s45 = sadd.s32 %s44, 1
    %p48 = scmp.eq.s32.totalorder %s10, 1
    %p49 = scmp.ne.s32.totalorder %s44, %s46
    %p50 = scmp.eq.s32.totalorder %s10, 0
    %p51 = por %p49, %p50
    %p52 = scmp.ne.s32.totalorder %s44, %s46
    %p53 = scmp.eq.s32.totalorder %s15, 1
    %p54 = por %p52, %p53
    %p55 = scmp.ne.s32.totalorder %s46, %s47
    %p56 = scmp.eq.s32.totalorder %s15, 0
    %p57 = por %p55, %p56
    %p58 = scmp.ne.s32.totalorder %s46, %s47
    %p59 = scmp.eq.s32.totalorder %s16, 1
    %p60 = por %p58, %p59
    %p62 = scmp.ne.s32.totalorder %s47, %s61
    %p63 = scmp.eq.s32.totalorder %s16, 0
    %p64 = por %p62, %p63
    %s66 = sadd.s32 %s65, 1
    %p69 = scmp.eq.s32.totalorder %s10, 1
    %p70 = scmp.ne.s32.totalorder %s65, %s67
    %p71 = scmp.eq.s32.totalorder %s10, 0
    %p72 = por %p70, %p71
    %p73 = scmp.ne.s32.totalorder %s65, %s67
    %p74 = scmp.eq.s32.totalorder %s15, 1
    %p75 = por %p73, %p74
    %p76 = scmp.ne.s32.totalorder %s67, %s68
    %p77 = scmp.eq.s32.totalorder %s15, 0
    %p78 = por %p76, %p77
    %p79 = scmp.ne.s32.totalorder %s67, %s68
    %p80 = scmp.eq.s32.totalorder %s16, 1
    %p81 = por %p79, %p80
    %p83 = scmp.ne.s32.totalorder %s68, %s82
    %p84 = scmp.eq.s32.totalorder %s16, 0
    %p85 = por %p83, %p84
    %s87 = sadd.s32 %s86, 1
    %p90 = scmp.eq.s32.totalorder %s10, 1
    %p91 = scmp.ne.s32.totalorder %s86, %s88
    %p92 = scmp.eq.s32.totalorder %s10, 0
    %p93 = por %p91, %p92
    %p94 = scmp.ne.s32.totalorder %s86, %s88
    %p95 = scmp.eq.s32.totalorder %s15, 1
    %p96 = por %p94, %p95
    %p97 = scmp.ne.s32.totalorder %s88, %s89
    %p98 = scmp.eq.s32.totalorder %s15, 0
    %p99 = por %p97, %p98
    %p100 = scmp.ne.s32.totalorder %s88, %s89
    %p101 = scmp.eq.s32.totalorder %s16, 1
    %p102 = por %p100, %p101
    %p104 = scmp.ne.s32.totalorder %s89, %s103
    %p105 = scmp.eq.s32.totalorder %s16, 0
    %p106 = por %p104, %p105
    %s107 = ssub.s32 %s10, %s17
    %p108 = scmp.eq.s32.totalorder %s107, 0
    %s110 = sadd.s32 %s109, 1
    %s111 = scalar_select %p108, %s109, %s110
    %p114 = pneg %p108
    %p115 = scmp.eq.s32.totalorder %s10, 1
    %p116 = por %p114, %p115
    %p117 = scmp.ne.s32.totalorder %s109, %s112
    %p118 = scmp.eq.s32.totalorder %s10, 0
    %p119 = por %p117, %p118
    %p120 = scmp.ne.s32.totalorder %s109, %s112
    %p121 = scmp.eq.s32.totalorder %s15, 1
    %p122 = por %p120, %p121
    %p123 = scmp.ne.s32.totalorder %s112, %s113
    %p124 = scmp.eq.s32.totalorder %s15, 0
    %p125 = por %p123, %p124
    %p126 = scmp.ne.s32.totalorder %s112, %s113
    %p127 = scmp.eq.s32.totalorder %s16, 1
    %p128 = por %p126, %p127
    %p130 = scmp.ne.s32.totalorder %s113, %s129
    %p131 = scmp.eq.s32.totalorder %s16, 0
    %p132 = por %p130, %p131
    %p133 = scmp.le.s32.totalorder 1, %s10
    %p134 = scmp.lt.s32.totalorder %s10, 3
    %p135 = pnand %p133, %p134
    %p136 = pneg %p135
    // Predicated region
    $region9: #{base_model_forward.1} parent=5 // pred_check
      _
    $region10: #{base_model_forward.1} parent=5 // pred_check_branch
      %138 = sbr.rel (%p135) target = $region12
    $region11: #{base_model_forward.1} parent=5 // pred_region
      %s139 = ssub.s32 %s10, 1
      // Predicated region
      $region13: #{base_model_forward.1} parent=11 // pred_check
        %p140 = pneg %p57
      $region14: #{base_model_forward.1} parent=11 // pred_check_branch
        %142 = sbr.rel (%p140) target = $region16
      $region15: #{base_model_forward.1} parent=11 // pred_region
        _
      $region16: #{base_model_forward.1} parent=11 // pred_fallthru
        _
      // Predicated region
      $region17: #{base_model_forward.1} parent=11 // pred_check
        %p143 = pneg %p78
      $region18: #{base_model_forward.1} parent=11 // pred_check_branch
        %145 = sbr.rel (%p143) target = $region20
      $region19: #{base_model_forward.1} parent=11 // pred_region
        _
      $region20: #{base_model_forward.1} parent=11 // pred_fallthru
        _
      // Predicated region
      $region21: #{base_model_forward.1} parent=11 // pred_check
        %p146 = pneg %p99
      $region22: #{base_model_forward.1} parent=11 // pred_check_branch
        %148 = sbr.rel (%p146) target = $region24
      $region23: #{base_model_forward.1} parent=11 // pred_region
        _
      $region24: #{base_model_forward.1} parent=11 // pred_fallthru
        _
    $region12: #{base_model_forward.1} parent=5 // pred_fallthru
      _
    %p149 = scmp.lt.s32.totalorder %s10, 2
    // Predicated region
    $region25: #{base_model_forward.1} parent=5 // pred_check
      %p150 = pneg %p149
    $region26: #{base_model_forward.1} parent=5 // pred_check_branch
      %152 = sbr.rel (%p150) target = $region28
    $region27: #{base_model_forward.1} parent=5 // pred_region
      // Predicated region
      $region29: #{base_model_forward.1} parent=27 // pred_check
        %p153 = pneg %p30
      $region30: #{base_model_forward.1} parent=27 // pred_check_branch
        %155 = sbr.rel (%p153) target = $region32
      $region31: #{base_model_forward.1} parent=27 // pred_region
        %p156 = scmp.lt.s32.totalorder %s10, 1
        %s157 = scalar_select %p156, %s10, 1
        %s158 = smul.addr %s157, 33
        %s159 = smul.addr %s158, 8
        %s160 = scalar_lea.vmem %s0, %s159
      $region32: #{base_model_forward.1} parent=27 // pred_fallthru
        _
    $region28: #{base_model_forward.1} parent=5 // pred_fallthru
      _
    %p161 = scmp.le.s32.totalorder 1, %s10
    %p162 = scmp.lt.s32.totalorder %s10, 3
    %p163 = pnand %p161, %p162
    %p164 = pneg %p163
    // Predicated region
    $region33: #{base_model_forward.1} parent=5 // pred_check
      _
    $region34: #{base_model_forward.1} parent=5 // pred_check_branch
      %166 = sbr.rel (%p163) target = $region36
    $region35: #{base_model_forward.1} parent=5 // pred_region
      %s167 = ssub.s32 %s10, 1
      %p168 = scmp.lt.s32.totalorder %s15, 1
      %s169 = scalar_select %p168, %s15, 1
      %s170 = smul.addr %s169, 33
      %s171 = smul.addr %s170, 8
      %s172 = scalar_lea.vmem %s0, %s171
      %p173 = pneg %p36
      %p174 = pneg %p33
      %p175 = pneg %p57
      %p176 = pneg %p54
      %p177 = pneg %p78
      %p178 = pneg %p75
      %p179 = pneg %p99
      %p180 = pneg %p96
      %p181 = pneg %p125
      %p182 = pneg %p122
      %p183 = scmp.lt.s32.totalorder %s15, 1
      %s184 = scalar_select %p183, %s15, 1
      %s185 = smul.addr %s184, 33
      %s186 = smul.addr %s185, 8
      %s187 = scalar_lea.vmem %s4, %s186
      %p188 = scmp.lt.s32.totalorder %s15, 1
      %s189 = scalar_select %p188, %s15, 1
      %s190 = smul.addr %s189, 33
      %s191 = smul.addr %s190, 8
      %s192 = scalar_lea.vmem %s0, %s191
      %p193 = scmp.lt.s32.totalorder %s15, 1
      %s194 = scalar_select %p193, %s15, 1
      %s195 = smul.addr %s194, 33
      %s196 = smul.addr %s195, 8
      %s197 = scalar_lea.vmem %s4, %s196
      %v199 = vlaneseq
      %vm200 = vcmp.ge.s32.totalorder %v199, 0
      %vm201 = vcmp.lt.s32.totalorder %v199, 257
      %vm202 = vmand %vm200, %vm201
      %203 = vst.msk [vmem:[#allocation2] ss:$8 sm:$0x7] %vm202, 0.0
      %204 = vst.msk [vmem:[#allocation2] ss:$8 sm:$0x0] %vm202, 0.0
      %s205 = scalar_lea.vmem [#allocation2], 49
      %206 = vst.msk [vmem:[%s205] ss:$8 sm:$0x7] %vm202, 0.0
      %207 = vst.msk [vmem:[%s205] ss:$8 sm:$0x0] %vm202, 0.0
      %v208 = vld [vmem:[%s192] sm:$0xff]
      %v209 = vld [vmem:[%s192 + $0x8] sm:$0xff]
      %v210 = vld [vmem:[%s192 + $0x10] sm:$0xff]
      %v211 = vld [vmem:[%s192 + $0x18] sm:$0xff]
      %v212 = vld [vmem:[%s192 + $0x20] sm:$0xff]
      %v213 = vld [vmem:[%s192 + $0x28] sm:$0xff]
      %v214 = vld [vmem:[%s192 + $0x30] sm:$0xff]
      %v215 = vld [vmem:[%s192 + $0x38] sm:$0xff]
      %v216 = vld [vmem:[%s192 + $0x40] sm:$0xff]
      %v217 = vld [vmem:[%s192 + $0x48] sm:$0xff]
      %v218 = vld [vmem:[%s192 + $0x50] sm:$0xff]
      %v219 = vld [vmem:[%s192 + $0x58] sm:$0xff]
      %v220 = vld [vmem:[%s192 + $0x60] sm:$0xff]
      %v221 = vld [vmem:[%s192 + $0x68] sm:$0xff]
      %v222 = vld [vmem:[%s192 + $0x70] sm:$0xff]
      %v223 = vld [vmem:[%s192 + $0x78] sm:$0xff]
      %v224 = vld [vmem:[%s192 + $0x80] sm:$0xff]
      %v225 = vld [vmem:[%s192 + $0x88] sm:$0xff]
      %v226 = vld [vmem:[%s192 + $0x90] sm:$0xff]
      %v227 = vld [vmem:[%s192 + $0x98] sm:$0xff]
      %v228 = vld [vmem:[%s192 + $0xa0] sm:$0xff]
      %v229 = vld [vmem:[%s192 + $0xa8] sm:$0xff]
      %v230 = vld [vmem:[%s192 + $0xb0] sm:$0xff]
      %v231 = vld [vmem:[%s192 + $0xb8] sm:$0xff]
      %v232 = vld [vmem:[%s192 + $0xc0] sm:$0xff]
      %v233 = vld [vmem:[%s192 + $0xc8] sm:$0xff]
      %v234 = vld [vmem:[%s192 + $0xd0] sm:$0xff]
      %v235 = vld [vmem:[%s192 + $0xd8] sm:$0xff]
      %v236 = vld [vmem:[%s192 + $0xe0] sm:$0xff]
      %v237 = vld [vmem:[%s192 + $0xe8] sm:$0xff]
      %v238 = vld [vmem:[%s192 + $0xf0] sm:$0xff]
      %v239 = vld [vmem:[%s192 + $0xf8] sm:$0xff]
      %v240 = vld [vmem:[%s192 + $0x100] sm:$0x1]
      %241 = vxpose.xlu0.b32.start [1/16] %v208, 128
      %242 = vxpose.xlu0.b32.cont [2/16] %v209, 128
      %243 = vxpose.xlu0.b32.cont [3/16] %v210, 128
      %244 = vxpose.xlu0.b32.cont [4/16] %v211, 128
      %245 = vxpose.xlu0.b32.cont [5/16] %v212, 128
      %246 = vxpose.xlu0.b32.cont [6/16] %v213, 128
      %247 = vxpose.xlu0.b32.cont [7/16] %v214, 128
      %248 = vxpose.xlu0.b32.cont [8/16] %v215, 128
      %249 = vxpose.xlu0.b32.cont [9/16] %v216, 128
      %250 = vxpose.xlu0.b32.cont [10/16] %v217, 128
      %251 = vxpose.xlu0.b32.cont [11/16] %v218, 128
      %252 = vxpose.xlu0.b32.cont [12/16] %v219, 128
      %253 = vxpose.xlu0.b32.cont [13/16] %v220, 128
      %254 = vxpose.xlu0.b32.cont [14/16] %v221, 128
      %255 = vxpose.xlu0.b32.cont [15/16] %v222, 128
      %256 = vxpose.xlu0.b32.end [16/16] %v223, 128
      %v257 = vpop.trf.xlu0
      %v258 = vpop.trf.xlu0
      %v259 = vpop.trf.xlu0
      %v260 = vpop.trf.xlu0
      %v261 = vpop.trf.xlu0
      %v262 = vpop.trf.xlu0
      %v263 = vpop.trf.xlu0
      %v264 = vpop.trf.xlu0
      %v265 = vpop.trf.xlu0
      %v266 = vpop.trf.xlu0
      %v267 = vpop.trf.xlu0
      %v268 = vpop.trf.xlu0
      %v269 = vpop.trf.xlu0
      %v270 = vpop.trf.xlu0
      %v271 = vpop.trf.xlu0
      %v272 = vpop.trf.xlu0
      %273 = vxpose.xlu0.b32.start [1/16] %v224, 128
      %274 = vxpose.xlu0.b32.cont [2/16] %v225, 128
      %275 = vxpose.xlu0.b32.cont [3/16] %v226, 128
      %276 = vxpose.xlu0.b32.cont [4/16] %v227, 128
      %277 = vxpose.xlu0.b32.cont [5/16] %v228, 128
      %278 = vxpose.xlu0.b32.cont [6/16] %v229, 128
      %279 = vxpose.xlu0.b32.cont [7/16] %v230, 128
      %280 = vxpose.xlu0.b32.cont [8/16] %v231, 128
      %281 = vxpose.xlu0.b32.cont [9/16] %v232, 128
      %282 = vxpose.xlu0.b32.cont [10/16] %v233, 128
      %283 = vxpose.xlu0.b32.cont [11/16] %v234, 128
      %284 = vxpose.xlu0.b32.cont [12/16] %v235, 128
      %285 = vxpose.xlu0.b32.cont [13/16] %v236, 128
      %286 = vxpose.xlu0.b32.cont [14/16] %v237, 128
      %287 = vxpose.xlu0.b32.cont [15/16] %v238, 128
      %288 = vxpose.xlu0.b32.end [16/16] %v239, 128
      %v289 = vpop.trf.xlu0
      %v290 = vpop.trf.xlu0
      %v291 = vpop.trf.xlu0
      %v292 = vpop.trf.xlu0
      %v293 = vpop.trf.xlu0
      %v294 = vpop.trf.xlu0
      %v295 = vpop.trf.xlu0
      %v296 = vpop.trf.xlu0
      %v297 = vpop.trf.xlu0
      %v298 = vpop.trf.xlu0
      %v299 = vpop.trf.xlu0
      %v300 = vpop.trf.xlu0
      %v301 = vpop.trf.xlu0
      %v302 = vpop.trf.xlu0
      %v303 = vpop.trf.xlu0
      %v304 = vpop.trf.xlu0
      %305 = vxpose.xlu0.b32.start [1/16] %v240, 128
      %306 = vxpose.xlu0.b32.cont [2/16] 0.0, 128
      %307 = vxpose.xlu0.b32.cont [3/16] 0.0, 128
      %308 = vxpose.xlu0.b32.cont [4/16] 0.0, 128
      %309 = vxpose.xlu0.b32.cont [5/16] 0.0, 128
      %310 = vxpose.xlu0.b32.cont [6/16] 0.0, 128
      %311 = vxpose.xlu0.b32.cont [7/16] 0.0, 128
      %312 = vxpose.xlu0.b32.cont [8/16] 0.0, 128
      %313 = vxpose.xlu0.b32.cont [9/16] 0.0, 128
      %314 = vxpose.xlu0.b32.cont [10/16] 0.0, 128
      %315 = vxpose.xlu0.b32.cont [11/16] 0.0, 128
      %316 = vxpose.xlu0.b32.cont [12/16] 0.0, 128
      %317 = vxpose.xlu0.b32.cont [13/16] 0.0, 128
      %318 = vxpose.xlu0.b32.cont [14/16] 0.0, 128
      %319 = vxpose.xlu0.b32.cont [15/16] 0.0, 128
      %320 = vxpose.xlu0.b32.end [16/16] 0.0, 128
      %v321 = vpop.trf.xlu0
      %v322 = vpop.trf.xlu0
      %v323 = vpop.trf.xlu0
      %v324 = vpop.trf.xlu0
      %v325 = vpop.trf.xlu0
      %v326 = vpop.trf.xlu0
      %v327 = vpop.trf.xlu0
      %v328 = vpop.trf.xlu0
      %v329 = vpop.trf.xlu0
      %v330 = vpop.trf.xlu0
      %v331 = vpop.trf.xlu0
      %v332 = vpop.trf.xlu0
      %v333 = vpop.trf.xlu0
      %v334 = vpop.trf.xlu0
      %v335 = vpop.trf.xlu0
      %v336 = vpop.trf.xlu0
      %vm343 = vcmask 1040384
      %v344 = vrot.slane %v257, 7
      %v345 = vrot.slane %v289, 7
      %v346 = vrot.slane %v321, 7
      %v347 = vrot.slane %v258, 7
      %v348 = vsel %vm343, %v344, %v347
      %v349 = vrot.slane %v290, 7
      %v350 = vsel %vm343, %v345, %v349
      %v351 = vrot.slane %v322, 7
      %v352 = vsel %vm343, %v346, %v351
      %362 = vst [vmem:[#allocation2] sm:$0xfe] %v344
      %363 = vst [vmem:[#allocation2 + $0x8] sm:$0xfe] %v345
      %vm364 = vcmask 7169
      %365 = vst.msk [vmem:[#allocation2 + $0x10] sm:$0xfe] %vm364, %v346
      %366 = vst [vmem:[#allocation2 + $0x18] sm:$0xff] %v348
      %367 = vst [vmem:[#allocation2 + $0x20] sm:$0xff] %v350
      %vm368 = vcmask 7168
      %369 = vst.msk [vmem:[#allocation2 + $0x28] sm:$0xff] %vm368, %v352
      %370 = vst [vmem:[#allocation2 + $0x30] sm:$0x1] %v347
      %371 = vst [vmem:[#allocation2 + $0x38] sm:$0x1] %v349
      %vm372 = vcmask 0
      %373 = vst.msk [vmem:[#allocation2 + $0x40] sm:$0x1] %vm372, %v351
      %v374 = vld [vmem:[#allocation2] sm:$0xff]
      %v375 = vld [vmem:[#allocation2 + $0x8] sm:$0xff]
      %v376 = vld [vmem:[#allocation2 + $0x10] sm:$0xff]
      %v377 = vld [vmem:[#allocation2 + $0x18] sm:$0xff]
      %v378 = vld [vmem:[#allocation2 + $0x20] sm:$0xff]
      %v379 = vld [vmem:[#allocation2 + $0x28] sm:$0xff]
      %v380 = vpack.c.bf16 %v377, %v374
      %v381 = vpack.c.bf16 %v378, %v375
      %v382 = vpack.c.bf16 %v379, %v376
      %v383 = vld [vmem:[%s1] sm:$0xff]
      %v384 = vld [vmem:[%s1 + $0x8] sm:$0xf]
      %v385 = vld [vmem:[%s1 + $0xc] sm:$0xff]
      %v386 = vld [vmem:[%s1 + $0x14] sm:$0xf]
      %v387 = vld [vmem:[%s1 + $0x18] sm:$0xff]
      %v388 = vld [vmem:[%s1 + $0x20] sm:$0xf]
      %v389 = vld [vmem:[%s1 + $0x24] sm:$0xff]
      %v390 = vld [vmem:[%s1 + $0x2c] sm:$0xf]
      %v391 = vld [vmem:[%s1 + $0x30] sm:$0xff]
      %v392 = vld [vmem:[%s1 + $0x38] sm:$0xf]
      %v393 = vld [vmem:[%s1 + $0x3c] sm:$0xff]
      %v394 = vld [vmem:[%s1 + $0x44] sm:$0xf]
      %v395 = vld [vmem:[%s1 + $0x48] sm:$0xff]
      %v396 = vld [vmem:[%s1 + $0x50] sm:$0xf]
      %v397 = vld [vmem:[%s1 + $0x54] sm:$0xff]
      %v398 = vld [vmem:[%s1 + $0x5c] sm:$0xf]
      %v399 = vld [vmem:[%s1 + $0x60] sm:$0xff]
      %v400 = vld [vmem:[%s1 + $0x68] sm:$0xf]
      %v401 = vld [vmem:[%s1 + $0x6c] sm:$0xff]
      %v402 = vld [vmem:[%s1 + $0x74] sm:$0xf]
      %v403 = vld [vmem:[%s1 + $0x78] sm:$0xff]
      %v404 = vld [vmem:[%s1 + $0x80] sm:$0xf]
      %v405 = vld [vmem:[%s1 + $0x84] sm:$0xff]
      %v406 = vld [vmem:[%s1 + $0x8c] sm:$0xf]
      %v407 = vld [vmem:[%s1 + $0x90] sm:$0xff]
      %v408 = vld [vmem:[%s1 + $0x98] sm:$0xf]
      %v409 = vld [vmem:[%s1 + $0x9c] sm:$0xff]
      %v410 = vld [vmem:[%s1 + $0xa4] sm:$0xf]
      %v411 = vld [vmem:[%s1 + $0xa8] sm:$0xff]
      %v412 = vld [vmem:[%s1 + $0xb0] sm:$0xf]
      %v413 = vld [vmem:[%s1 + $0xb4] sm:$0xff]
      %v414 = vld [vmem:[%s1 + $0xbc] sm:$0xf]
      %v415 = vld [vmem:[%s1 + $0xc0] sm:$0xff]
      %v416 = vld [vmem:[%s1 + $0xc8] sm:$0xf]
      %v417 = vld [vmem:[%s1 + $0xcc] sm:$0xff]
      %v418 = vld [vmem:[%s1 + $0xd4] sm:$0xf]
      %v419 = vld [vmem:[%s1 + $0xd8] sm:$0xff]
      %v420 = vld [vmem:[%s1 + $0xe0] sm:$0xf]
      %v421 = vld [vmem:[%s1 + $0xe4] sm:$0xff]
      %v422 = vld [vmem:[%s1 + $0xec] sm:$0xf]
      %v423 = vld [vmem:[%s1 + $0xf0] sm:$0xff]
      %v424 = vld [vmem:[%s1 + $0xf8] sm:$0xf]
      %v425 = vld [vmem:[%s1 + $0xfc] sm:$0xff]
      %v426 = vld [vmem:[%s1 + $0x104] sm:$0xf]
      %v427 = vld [vmem:[%s1 + $0x108] sm:$0xff]
      %v428 = vld [vmem:[%s1 + $0x110] sm:$0xf]
      %v429 = vld [vmem:[%s1 + $0x114] sm:$0xff]
      %v430 = vld [vmem:[%s1 + $0x11c] sm:$0xf]
      %v431 = vld [vmem:[%s1 + $0x120] sm:$0xff]
      %v432 = vld [vmem:[%s1 + $0x128] sm:$0xf]
      %v433 = vld [vmem:[%s1 + $0x12c] sm:$0xff]
      %v434 = vld [vmem:[%s1 + $0x134] sm:$0xf]
      %v435 = vld [vmem:[%s1 + $0x138] sm:$0xff]
      %v436 = vld [vmem:[%s1 + $0x140] sm:$0xf]
      %v437 = vld [vmem:[%s1 + $0x144] sm:$0xff]
      %v438 = vld [vmem:[%s1 + $0x14c] sm:$0xf]
      %v439 = vld [vmem:[%s1 + $0x150] sm:$0xff]
      %v440 = vld [vmem:[%s1 + $0x158] sm:$0xf]
      %v441 = vld [vmem:[%s1 + $0x15c] sm:$0xff]
      %v442 = vld [vmem:[%s1 + $0x164] sm:$0xf]
      %v443 = vld [vmem:[%s1 + $0x168] sm:$0xff]
      %v444 = vld [vmem:[%s1 + $0x170] sm:$0xf]
      %v445 = vld [vmem:[%s1 + $0x174] sm:$0xff]
      %v446 = vld [vmem:[%s1 + $0x17c] sm:$0xf]
      %v447 = vld [vmem:[%s1 + $0x180] sm:$0x11]
      %v448 = vld [vmem:[%s1 + $0x188] sm:$0x1]
      %v449 = vld [vmem:[#allocation2] sm:$0xfe]
      %v450 = vld [vmem:[#allocation2 + $0x8] sm:$0xfe]
      %v451 = vld [vmem:[#allocation2 + $0x10] sm:$0xfe]
      %v452 = vld [vmem:[#allocation2 + $0x30] sm:$0x1]
      %v453 = vld [vmem:[#allocation2 + $0x38] sm:$0x1]
      %v454 = vld [vmem:[#allocation2 + $0x40] sm:$0x1]
      %v455 = vpack.c.bf16 %v377, %v449
      %v456 = vpack.c.bf16 %v378, %v450
      %v457 = vpack.c.bf16 %v379, %v451
      %v458 = vpack.c.bf16 %v452, %v452
      %v459 = vpack.c.bf16 %v453, %v453
      %v460 = vpack.c.bf16 %v454, %v454
      %s461 = scalar_lea.vmem %s1, 396
      %v462 = vld [vmem:[%s461] sm:$0xff]
      %v463 = vld [vmem:[%s461 + $0x8] sm:$0xf]
      %v464 = vld [vmem:[%s461 + $0xc] sm:$0xff]
      %v465 = vld [vmem:[%s461 + $0x14] sm:$0xf]
      %v466 = vld [vmem:[%s461 + $0x18] sm:$0xff]
      %v467 = vld [vmem:[%s461 + $0x20] sm:$0xf]
      %v468 = vld [vmem:[%s461 + $0x24] sm:$0xff]
      %v469 = vld [vmem:[%s461 + $0x2c] sm:$0xf]
      %v470 = vld [vmem:[%s461 + $0x30] sm:$0xff]
      %v471 = vld [vmem:[%s461 + $0x38] sm:$0xf]
      %v472 = vld [vmem:[%s461 + $0x3c] sm:$0xff]
      %v473 = vld [vmem:[%s461 + $0x44] sm:$0xf]
      %v474 = vld [vmem:[%s461 + $0x48] sm:$0xff]
      %v475 = vld [vmem:[%s461 + $0x50] sm:$0xf]
      %v476 = vld [vmem:[%s461 + $0x54] sm:$0xff]
      %v477 = vld [vmem:[%s461 + $0x5c] sm:$0xf]
      %v478 = vld [vmem:[%s461 + $0x60] sm:$0xff]
      %v479 = vld [vmem:[%s461 + $0x68] sm:$0xf]
      %v480 = vld [vmem:[%s461 + $0x6c] sm:$0xff]
      %v481 = vld [vmem:[%s461 + $0x74] sm:$0xf]
      %v482 = vld [vmem:[%s461 + $0x78] sm:$0xff]
      %v483 = vld [vmem:[%s461 + $0x80] sm:$0xf]
      %v484 = vld [vmem:[%s461 + $0x84] sm:$0xff]
      %v485 = vld [vmem:[%s461 + $0x8c] sm:$0xf]
      %v486 = vld [vmem:[%s461 + $0x90] sm:$0xff]
      %v487 = vld [vmem:[%s461 + $0x98] sm:$0xf]
      %v488 = vld [vmem:[%s461 + $0x9c] sm:$0xff]
      %v489 = vld [vmem:[%s461 + $0xa4] sm:$0xf]
      %v490 = vld [vmem:[%s461 + $0xa8] sm:$0xff]
      %v491 = vld [vmem:[%s461 + $0xb0] sm:$0xf]
      %v492 = vld [vmem:[%s461 + $0xb4] sm:$0xff]
      %v493 = vld [vmem:[%s461 + $0xbc] sm:$0xf]
      %v494 = vld [vmem:[%s461 + $0xc0] sm:$0xff]
      %v495 = vld [vmem:[%s461 + $0xc8] sm:$0xf]
      %v496 = vld [vmem:[%s461 + $0xcc] sm:$0xff]
      %v497 = vld [vmem:[%s461 + $0xd4] sm:$0xf]
      %v498 = vld [vmem:[%s461 + $0xd8] sm:$0xff]
      %v499 = vld [vmem:[%s461 + $0xe0] sm:$0xf]
      %v500 = vld [vmem:[%s461 + $0xe4] sm:$0xff]
      %v501 = vld [vmem:[%s461 + $0xec] sm:$0xf]
      %v502 = vld [vmem:[%s461 + $0xf0] sm:$0xff]
      %v503 = vld [vmem:[%s461 + $0xf8] sm:$0xf]
      %v504 = vld [vmem:[%s461 + $0xfc] sm:$0xff]
      %v505 = vld [vmem:[%s461 + $0x104] sm:$0xf]
      %v506 = vld [vmem:[%s461 + $0x108] sm:$0xff]
      %v507 = vld [vmem:[%s461 + $0x110] sm:$0xf]
      %v508 = vld [vmem:[%s461 + $0x114] sm:$0xff]
      %v509 = vld [vmem:[%s461 + $0x11c] sm:$0xf]
      %v510 = vld [vmem:[%s461 + $0x120] sm:$0xff]
      %v511 = vld [vmem:[%s461 + $0x128] sm:$0xf]
      %v512 = vld [vmem:[%s461 + $0x12c] sm:$0xff]
      %v513 = vld [vmem:[%s461 + $0x134] sm:$0xf]
      %v514 = vld [vmem:[%s461 + $0x138] sm:$0xff]
      %v515 = vld [vmem:[%s461 + $0x140] sm:$0xf]
      %v516 = vld [vmem:[%s461 + $0x144] sm:$0xff]
      %v517 = vld [vmem:[%s461 + $0x14c] sm:$0xf]
      %v518 = vld [vmem:[%s461 + $0x150] sm:$0xff]
      %v519 = vld [vmem:[%s461 + $0x158] sm:$0xf]
      %v520 = vld [vmem:[%s461 + $0x15c] sm:$0xff]
      %v521 = vld [vmem:[%s461 + $0x164] sm:$0xf]
      %v522 = vld [vmem:[%s461 + $0x168] sm:$0xff]
      %v523 = vld [vmem:[%s461 + $0x170] sm:$0xf]
      %v524 = vld [vmem:[%s461 + $0x174] sm:$0xff]
      %v525 = vld [vmem:[%s461 + $0x17c] sm:$0xf]
      %v526 = vld [vmem:[%s461 + $0x180] sm:$0x11]
      %v527 = vld [vmem:[%s461 + $0x188] sm:$0x1]
      %vm528 = vsmask.f32 7424
      %v530 = vshrl.u32 %v455, 16
      %v532 = vshll.u32 %v455, 16
      %v534 = vrot.slane %v532, 1
      %v535 = vor.u32 %v530, %v534
      %v537 = vshll.u32 %v458, 16
      %v539 = vrot.slane %v537, 1
      %v540 = vsel %vm528, %v535, %v539
      %v542 = vshrl.u32 %v456, 16
      %v544 = vshll.u32 %v456, 16
      %v546 = vrot.slane %v544, 1
      %v547 = vor.u32 %v542, %v546
      %v549 = vshll.u32 %v459, 16
      %v551 = vrot.slane %v549, 1
      %v552 = vsel %vm528, %v547, %v551
      %v554 = vshrl.u32 %v457, 16
      %v556 = vshll.u32 %v457, 16
      %v558 = vrot.slane %v556, 1
      %v559 = vor.u32 %v554, %v558
      %v561 = vshll.u32 %v460, 16
      %v563 = vrot.slane %v561, 1
      %v564 = vsel %vm528, %v559, %v563
      %v633 = vunpack.c.l.b16 %v462
      %v634 = vunpack.c.h.b16 %v462
      %v635 = vunpack.c.l.b16 %v463
      %v636 = vunpack.c.l.b16 %v464
      %v637 = vunpack.c.h.b16 %v464
      %v638 = vunpack.c.l.b16 %v465
      %v639 = vunpack.c.l.b16 %v466
      %v640 = vunpack.c.h.b16 %v466
      %v641 = vunpack.c.l.b16 %v467
      %v642 = vunpack.c.l.b16 %v468
      %v643 = vunpack.c.h.b16 %v468
      %v644 = vunpack.c.l.b16 %v469
      %v645 = vunpack.c.l.b16 %v470
      %v646 = vunpack.c.h.b16 %v470
      %v647 = vunpack.c.l.b16 %v471
      %v648 = vunpack.c.l.b16 %v472
      %v649 = vunpack.c.h.b16 %v472
      %v650 = vunpack.c.l.b16 %v473
      %v651 = vunpack.c.l.b16 %v474
      %v652 = vunpack.c.h.b16 %v474
      %v653 = vunpack.c.l.b16 %v475
      %v654 = vunpack.c.l.b16 %v476
      %v655 = vunpack.c.h.b16 %v476
      %v656 = vunpack.c.l.b16 %v477
      %v657 = vunpack.c.l.b16 %v478
      %v658 = vunpack.c.h.b16 %v478
      %v659 = vunpack.c.l.b16 %v479
      %v660 = vunpack.c.l.b16 %v480
      %v661 = vunpack.c.h.b16 %v480
      %v662 = vunpack.c.l.b16 %v481
      %v663 = vunpack.c.l.b16 %v482
      %v664 = vunpack.c.h.b16 %v482
      %v665 = vunpack.c.l.b16 %v483
      %v666 = vunpack.c.l.b16 %v484
      %v667 = vunpack.c.h.b16 %v484
      %v668 = vunpack.c.l.b16 %v485
      %v669 = vunpack.c.l.b16 %v486
      %v670 = vunpack.c.h.b16 %v486
      %v671 = vunpack.c.l.b16 %v487
      %v672 = vunpack.c.l.b16 %v488
      %v673 = vunpack.c.h.b16 %v488
      %v674 = vunpack.c.l.b16 %v489
      %v675 = vunpack.c.l.b16 %v490
      %v676 = vunpack.c.h.b16 %v490
      %v677 = vunpack.c.l.b16 %v491
      %v678 = vunpack.c.l.b16 %v492
      %v679 = vunpack.c.h.b16 %v492
      %v680 = vunpack.c.l.b16 %v493
      %v681 = vunpack.c.l.b16 %v494
      %v682 = vunpack.c.h.b16 %v494
      %v683 = vunpack.c.l.b16 %v495
      %v684 = vunpack.c.l.b16 %v496
      %v685 = vunpack.c.h.b16 %v496
      %v686 = vunpack.c.l.b16 %v497
      %v687 = vunpack.c.l.b16 %v498
      %v688 = vunpack.c.h.b16 %v498
      %v689 = vunpack.c.l.b16 %v499
      %v690 = vunpack.c.l.b16 %v500
      %v691 = vunpack.c.h.b16 %v500
      %v692 = vunpack.c.l.b16 %v501
      %v693 = vunpack.c.l.b16 %v502
      %v694 = vunpack.c.h.b16 %v502
      %v695 = vunpack.c.l.b16 %v503
      %v696 = vunpack.c.l.b16 %v504
      %v697 = vunpack.c.h.b16 %v504
      %v698 = vunpack.c.l.b16 %v505
      %v699 = vunpack.c.l.b16 %v506
      %v700 = vunpack.c.h.b16 %v506
      %v701 = vunpack.c.l.b16 %v507
      %v702 = vunpack.c.l.b16 %v508
      %v703 = vunpack.c.h.b16 %v508
      %v704 = vunpack.c.l.b16 %v509
      %v705 = vunpack.c.l.b16 %v510
      %v706 = vunpack.c.h.b16 %v510
      %v707 = vunpack.c.l.b16 %v511
      %v708 = vunpack.c.l.b16 %v512
      %v709 = vunpack.c.h.b16 %v512
      %v710 = vunpack.c.l.b16 %v513
      %v711 = vunpack.c.l.b16 %v514
      %v712 = vunpack.c.h.b16 %v514
      %v713 = vunpack.c.l.b16 %v515
      %v714 = vunpack.c.l.b16 %v516
      %v715 = vunpack.c.h.b16 %v516
      %v716 = vunpack.c.l.b16 %v517
      %v717 = vunpack.c.l.b16 %v518
      %v718 = vunpack.c.h.b16 %v518
      %v719 = vunpack.c.l.b16 %v519
      %v720 = vunpack.c.l.b16 %v520
      %v721 = vunpack.c.h.b16 %v520
      %v722 = vunpack.c.l.b16 %v521
      %v723 = vunpack.c.l.b16 %v522
      %v724 = vunpack.c.h.b16 %v522
      %v725 = vunpack.c.l.b16 %v523
      %v726 = vunpack.c.l.b16 %v524
      %v727 = vunpack.c.h.b16 %v524
      %v728 = vunpack.c.l.b16 %v525
      %v729 = vunpack.c.l.b16 %v526
      %v730 = vunpack.c.h.b16 %v526
      %v731 = vunpack.c.l.b16 %v527
      %v732 = vpack.c.b16 %v636, %v633
      %v733 = vpack.c.b16 %v637, %v634
      %v734 = vpack.c.b16 %v638, %v635
      %v735 = vpack.c.b16 %v642, %v639
      %v736 = vpack.c.b16 %v643, %v640
      %v737 = vpack.c.b16 %v644, %v641
      %v738 = vpack.c.b16 %v648, %v645
      %v739 = vpack.c.b16 %v649, %v646
      %v740 = vpack.c.b16 %v650, %v647
      %v741 = vpack.c.b16 %v654, %v651
      %v742 = vpack.c.b16 %v655, %v652
      %v743 = vpack.c.b16 %v656, %v653
      %v744 = vpack.c.b16 %v660, %v657
      %v745 = vpack.c.b16 %v661, %v658
      %v746 = vpack.c.b16 %v662, %v659
      %v747 = vpack.c.b16 %v666, %v663
      %v748 = vpack.c.b16 %v667, %v664
      %v749 = vpack.c.b16 %v668, %v665
      %v750 = vpack.c.b16 %v672, %v669
      %v751 = vpack.c.b16 %v673, %v670
      %v752 = vpack.c.b16 %v674, %v671
      %v753 = vpack.c.b16 %v678, %v675
      %v754 = vpack.c.b16 %v679, %v676
      %v755 = vpack.c.b16 %v680, %v677
      %v756 = vpack.c.b16 %v684, %v681
      %v757 = vpack.c.b16 %v685, %v682
      %v758 = vpack.c.b16 %v686, %v683
      %v759 = vpack.c.b16 %v690, %v687
      %v760 = vpack.c.b16 %v691, %v688
      %v761 = vpack.c.b16 %v692, %v689
      %v762 = vpack.c.b16 %v696, %v693
      %v763 = vpack.c.b16 %v697, %v694
      %v764 = vpack.c.b16 %v698, %v695
      %v765 = vpack.c.b16 %v702, %v699
      %v766 = vpack.c.b16 %v703, %v700
      %v767 = vpack.c.b16 %v704, %v701
      %v768 = vpack.c.b16 %v708, %v705
      %v769 = vpack.c.b16 %v709, %v706
      %v770 = vpack.c.b16 %v710, %v707
      %v771 = vpack.c.b16 %v714, %v711
      %v772 = vpack.c.b16 %v715, %v712
      %v773 = vpack.c.b16 %v716, %v713
      %v774 = vpack.c.b16 %v720, %v717
      %v775 = vpack.c.b16 %v721, %v718
      %v776 = vpack.c.b16 %v722, %v719
      %v777 = vpack.c.b16 %v726, %v723
      %v778 = vpack.c.b16 %v727, %v724
      %v779 = vpack.c.b16 %v728, %v725
      %v780 = vpack.c.b16 %v729, %v729
      %v781 = vpack.c.b16 %v730, %v730
      %v782 = vpack.c.b16 %v731, %v731
      %v832 = vsel %vm368, %v564, 0
      %v834 = vsel 0, 4294967295, 65535
      %v835 = vsel %vm343, %v834, 0
      %v837 = vand.u32 %v780, %v835
      %v840 = vand.u32 %v781, %v835
      %v843 = vand.u32 %v782, %v835
      %845 = vmatprep.subr.bf16.mxu0 %v754
      %846 = vmatpush1.bf16.msra.mxu0 %v753
      %847 = vmatprep.subr.bf16.mxu0 %v751
      %848 = vmatpush1.bf16.msra.mxu0 %v750
      %849 = vmatprep.subr.bf16.mxu0 %v748
      %850 = vmatpush1.bf16.msra.mxu0 %v747
      %851 = vmatprep.subr.bf16.mxu0 %v745
      %852 = vmatpush1.bf16.msra.mxu0 %v744
      %853 = vmatprep.subr.bf16.mxu0 %v742
      %854 = vmatpush1.bf16.msra.mxu0 %v741
      %855 = vmatprep.subr.bf16.mxu0 %v739
      %856 = vmatpush1.bf16.msra.mxu0 %v738
      %857 = vmatprep.subr.bf16.mxu0 %v736
      %858 = vmatpush1.bf16.msra.mxu0 %v735
      %859 = vmatprep.subr.bf16.mxu0 %v733
      %860 = vmatpush1.bf16.msra.mxu0 %v732
      %861 = vmatprep.subr.bf16.mxu0 %v778
      %862 = vmatpush2.bf16.msra.mxu0 %v777
      %863 = vmatprep.subr.bf16.mxu0 %v775
      %864 = vmatpush2.bf16.msra.mxu0 %v774
      %865 = vmatprep.subr.bf16.mxu0 %v772
      %866 = vmatpush2.bf16.msra.mxu0 %v771
      %867 = vmatprep.subr.bf16.mxu0 %v769
      %868 = vmatpush2.bf16.msra.mxu0 %v768
      %869 = vmatprep.subr.bf16.mxu0 %v766
      %870 = vmatpush2.bf16.msra.mxu0 %v765
      %871 = vmatprep.subr.bf16.mxu0 %v763
      %872 = vmatpush2.bf16.msra.mxu0 %v762
      %873 = vmatprep.subr.bf16.mxu0 %v760
      %874 = vmatpush2.bf16.msra.mxu0 %v759
      %875 = vmatprep.subr.bf16.mxu0 %v757
      %876 = vmatpush2.bf16.msra.mxu0 %v756
      %877 = vmatprep.mubr.bf16.mxu0 %v552
      %878 = vmatmul.mubr.bf16.gmra.mxu0 %v540
      %v879 = vpop.f32.mrf.mxu0
      %v880 = vadd.f32 0.0, %v879
      %v881 = vpop.f32.mrf.mxu0
      %v882 = vadd.f32 0.0, %v881
      %v883 = vpop.f32.mrf.mxu0
      %v884 = vadd.f32 0.0, %v883
      %v885 = vpop.f32.mrf.mxu0
      %v886 = vadd.f32 0.0, %v885
      %887 = vdwg.mxu0
      %888 = vmatprep.subr.bf16.mxu0 0
      %889 = vmatpush1.bf16.msra.mxu0 0
      %890 = vmatprep.subr.bf16.mxu0 0
      %891 = vmatpush1.bf16.msra.mxu0 0
      %892 = vmatprep.subr.bf16.mxu0 0
      %893 = vmatpush1.bf16.msra.mxu0 0
      %894 = vmatprep.subr.bf16.mxu0 0
      %895 = vmatpush1.bf16.msra.mxu0 0
      %896 = vmatprep.subr.bf16.mxu0 0
      %897 = vmatpush1.bf16.msra.mxu0 0
      %898 = vmatprep.subr.bf16.mxu0 0
      %899 = vmatpush1.bf16.msra.mxu0 0
      %900 = vmatprep.subr.bf16.mxu0 0
      %901 = vmatpush1.bf16.msra.mxu0 0
      %902 = vmatprep.subr.bf16.mxu0 %v840
      %903 = vmatpush1.bf16.msra.mxu0 %v837
      %904 = vmatprep.subr.bf16.mxu0 0
      %905 = vmatpush2.bf16.msra.mxu0 0
      %906 = vmatprep.subr.bf16.mxu0 0
      %907 = vmatpush2.bf16.msra.mxu0 0
      %908 = vmatprep.subr.bf16.mxu0 0
      %909 = vmatpush2.bf16.msra.mxu0 0
      %910 = vmatprep.subr.bf16.mxu0 0
      %911 = vmatpush2.bf16.msra.mxu0 0
      %912 = vmatprep.subr.bf16.mxu0 0
      %913 = vmatpush2.bf16.msra.mxu0 0
      %914 = vmatprep.subr.bf16.mxu0 0
      %915 = vmatpush2.bf16.msra.mxu0 0
      %916 = vmatprep.subr.bf16.mxu0 0
      %917 = vmatpush2.bf16.msra.mxu0 0
      %918 = vmatprep.subr.bf16.mxu0 0
      %919 = vmatpush2.bf16.msra.mxu0 0
      %920 = vmatprep.mubr.bf16.mxu0 0
      %921 = vmatmul.mubr.bf16.gmra.mxu0 %v832
      %v922 = vpop.f32.mrf.mxu0
      %v923 = vadd.f32 %v880, %v922
      %v924 = vpop.f32.mrf.mxu0
      %v925 = vadd.f32 %v882, %v924
      %v926 = vpop.f32.mrf.mxu0
      %v927 = vadd.f32 %v884, %v926
      %v928 = vpop.f32.mrf.mxu0
      %v929 = vadd.f32 %v886, %v928
      %930 = vdwg.mxu0
      %931 = vmatprep.subr.bf16.mxu0 0
      %932 = vmatpush1.bf16.msra.mxu0 %v755
      %933 = vmatprep.subr.bf16.mxu0 0
      %934 = vmatpush1.bf16.msra.mxu0 %v752
      %935 = vmatprep.subr.bf16.mxu0 0
      %936 = vmatpush1.bf16.msra.mxu0 %v749
      %937 = vmatprep.subr.bf16.mxu0 0
      %938 = vmatpush1.bf16.msra.mxu0 %v746
      %939 = vmatprep.subr.bf16.mxu0 0
      %940 = vmatpush1.bf16.msra.mxu0 %v743
      %941 = vmatprep.subr.bf16.mxu0 0
      %942 = vmatpush1.bf16.msra.mxu0 %v740
      %943 = vmatprep.subr.bf16.mxu0 0
      %944 = vmatpush1.bf16.msra.mxu0 %v737
      %945 = vmatprep.subr.bf16.mxu0 0
      %946 = vmatpush1.bf16.msra.mxu0 %v734
      %947 = vmatprep.subr.bf16.mxu0 0
      %948 = vmatpush2.bf16.msra.mxu0 %v779
      %949 = vmatprep.subr.bf16.mxu0 0
      %950 = vmatpush2.bf16.msra.mxu0 %v776
      %951 = vmatprep.subr.bf16.mxu0 0
      %952 = vmatpush2.bf16.msra.mxu0 %v773
      %953 = vmatprep.subr.bf16.mxu0 0
      %954 = vmatpush2.bf16.msra.mxu0 %v770
      %955 = vmatprep.subr.bf16.mxu0 0
      %956 = vmatpush2.bf16.msra.mxu0 %v767
      %957 = vmatprep.subr.bf16.mxu0 0
      %958 = vmatpush2.bf16.msra.mxu0 %v764
      %959 = vmatprep.subr.bf16.mxu0 0
      %960 = vmatpush2.bf16.msra.mxu0 %v761
      %961 = vmatprep.subr.bf16.mxu0 0
      %962 = vmatpush2.bf16.msra.mxu0 %v758
      %963 = vmatprep.mubr.bf16.mxu0 %v552
      %964 = vmatmul.mubr.bf16.gmra.mxu0 %v540
      %v965 = vpop.f32.mrf.mxu0
      %v966 = vadd.f32 0.0, %v965
      %v967 = vpop.f32.mrf.mxu0
      %v968 = vpop.f32.mrf.mxu0
      %v969 = vadd.f32 0.0, %v968
      %v970 = vpop.f32.mrf.mxu0
      %971 = vdwg.mxu0
      %972 = vmatprep.subr.bf16.mxu0 0
      %973 = vmatpush1.bf16.msra.mxu0 0
      %974 = vmatprep.subr.bf16.mxu0 0
      %975 = vmatpush1.bf16.msra.mxu0 0
      %976 = vmatprep.subr.bf16.mxu0 0
      %977 = vmatpush1.bf16.msra.mxu0 0
      %978 = vmatprep.subr.bf16.mxu0 0
      %979 = vmatpush1.bf16.msra.mxu0 0
      %980 = vmatprep.subr.bf16.mxu0 0
      %981 = vmatpush1.bf16.msra.mxu0 0
      %982 = vmatprep.subr.bf16.mxu0 0
      %983 = vmatpush1.bf16.msra.mxu0 0
      %984 = vmatprep.subr.bf16.mxu0 0
      %985 = vmatpush1.bf16.msra.mxu0 0
      %986 = vmatprep.subr.bf16.mxu0 0
      %987 = vmatpush1.bf16.msra.mxu0 %v843
      %988 = vmatprep.subr.bf16.mxu0 0
      %989 = vmatpush2.bf16.msra.mxu0 0
      %990 = vmatprep.subr.bf16.mxu0 0
      %991 = vmatpush2.bf16.msra.mxu0 0
      %992 = vmatprep.subr.bf16.mxu0 0
      %993 = vmatpush2.bf16.msra.mxu0 0
      %994 = vmatprep.subr.bf16.mxu0 0
      %995 = vmatpush2.bf16.msra.mxu0 0
      %996 = vmatprep.subr.bf16.mxu0 0
      %997 = vmatpush2.bf16.msra.mxu0 0
      %998 = vmatprep.subr.bf16.mxu0 0
      %999 = vmatpush2.bf16.msra.mxu0 0
      %1000 = vmatprep.subr.bf16.mxu0 0
      %1001 = vmatpush2.bf16.msra.mxu0 0
      %1002 = vmatprep.subr.bf16.mxu0 0
      %1003 = vmatpush2.bf16.msra.mxu0 0
      %1004 = vmatprep.mubr.bf16.mxu0 0
      %1005 = vmatmul.mubr.bf16.gmra.mxu0 %v832
      %v1006 = vpop.f32.mrf.mxu0
      %v1007 = vadd.f32 %v966, %v1006
      %v1008 = vpop.f32.mrf.mxu0
      %v1009 = vpop.f32.mrf.mxu0
      %v1010 = vadd.f32 %v969, %v1009
      %v1011 = vpop.f32.mrf.mxu0
      %1012 = vdwg.mxu0
      %v1079 = vunpack.c.l.b16 %v383
      %v1080 = vunpack.c.h.b16 %v383
      %v1081 = vunpack.c.l.b16 %v384
      %v1082 = vunpack.c.l.b16 %v385
      %v1083 = vunpack.c.h.b16 %v385
      %v1084 = vunpack.c.l.b16 %v386
      %v1085 = vunpack.c.l.b16 %v387
      %v1086 = vunpack.c.h.b16 %v387
      %v1087 = vunpack.c.l.b16 %v388
      %v1088 = vunpack.c.l.b16 %v389
      %v1089 = vunpack.c.h.b16 %v389
      %v1090 = vunpack.c.l.b16 %v390
      %v1091 = vunpack.c.l.b16 %v391
      %v1092 = vunpack.c.h.b16 %v391
      %v1093 = vunpack.c.l.b16 %v392
      %v1094 = vunpack.c.l.b16 %v393
      %v1095 = vunpack.c.h.b16 %v393
      %v1096 = vunpack.c.l.b16 %v394
      %v1097 = vunpack.c.l.b16 %v395
      %v1098 = vunpack.c.h.b16 %v395
      %v1099 = vunpack.c.l.b16 %v396
      %v1100 = vunpack.c.l.b16 %v397
      %v1101 = vunpack.c.h.b16 %v397
      %v1102 = vunpack.c.l.b16 %v398
      %v1103 = vunpack.c.l.b16 %v399
      %v1104 = vunpack.c.h.b16 %v399
      %v1105 = vunpack.c.l.b16 %v400
      %v1106 = vunpack.c.l.b16 %v401
      %v1107 = vunpack.c.h.b16 %v401
      %v1108 = vunpack.c.l.b16 %v402
      %v1109 = vunpack.c.l.b16 %v403
      %v1110 = vunpack.c.h.b16 %v403
      %v1111 = vunpack.c.l.b16 %v404
      %v1112 = vunpack.c.l.b16 %v405
      %v1113 = vunpack.c.h.b16 %v405
      %v1114 = vunpack.c.l.b16 %v406
      %v1115 = vunpack.c.l.b16 %v407
      %v1116 = vunpack.c.h.b16 %v407
      %v1117 = vunpack.c.l.b16 %v408
      %v1118 = vunpack.c.l.b16 %v409
      %v1119 = vunpack.c.h.b16 %v409
      %v1120 = vunpack.c.l.b16 %v410
      %v1121 = vunpack.c.l.b16 %v411
      %v1122 = vunpack.c.h.b16 %v411
      %v1123 = vunpack.c.l.b16 %v412
      %v1124 = vunpack.c.l.b16 %v413
      %v1125 = vunpack.c.h.b16 %v413
      %v1126 = vunpack.c.l.b16 %v414
      %v1127 = vunpack.c.l.b16 %v415
      %v1128 = vunpack.c.h.b16 %v415
      %v1129 = vunpack.c.l.b16 %v416
      %v1130 = vunpack.c.l.b16 %v417
      %v1131 = vunpack.c.h.b16 %v417
      %v1132 = vunpack.c.l.b16 %v418
      %v1133 = vunpack.c.l.b16 %v419
      %v1134 = vunpack.c.h.b16 %v419
      %v1135 = vunpack.c.l.b16 %v420
      %v1136 = vunpack.c.l.b16 %v421
      %v1137 = vunpack.c.h.b16 %v421
      %v1138 = vunpack.c.l.b16 %v422
      %v1139 = vunpack.c.l.b16 %v423
      %v1140 = vunpack.c.h.b16 %v423
      %v1141 = vunpack.c.l.b16 %v424
      %v1142 = vunpack.c.l.b16 %v425
      %v1143 = vunpack.c.h.b16 %v425
      %v1144 = vunpack.c.l.b16 %v426
      %v1145 = vunpack.c.l.b16 %v427
      %v1146 = vunpack.c.h.b16 %v427
      %v1147 = vunpack.c.l.b16 %v428
      %v1148 = vunpack.c.l.b16 %v429
      %v1149 = vunpack.c.h.b16 %v429
      %v1150 = vunpack.c.l.b16 %v430
      %v1151 = vunpack.c.l.b16 %v431
      %v1152 = vunpack.c.h.b16 %v431
      %v1153 = vunpack.c.l.b16 %v432
      %v1154 = vunpack.c.l.b16 %v433
      %v1155 = vunpack.c.h.b16 %v433
      %v1156 = vunpack.c.l.b16 %v434
      %v1157 = vunpack.c.l.b16 %v435
      %v1158 = vunpack.c.h.b16 %v435
      %v1159 = vunpack.c.l.b16 %v436
      %v1160 = vunpack.c.l.b16 %v437
      %v1161 = vunpack.c.h.b16 %v437
      %v1162 = vunpack.c.l.b16 %v438
      %v1163 = vunpack.c.l.b16 %v439
      %v1164 = vunpack.c.h.b16 %v439
      %v1165 = vunpack.c.l.b16 %v440
      %v1166 = vunpack.c.l.b16 %v441
      %v1167 = vunpack.c.h.b16 %v441
      %v1168 = vunpack.c.l.b16 %v442
      %v1169 = vunpack.c.l.b16 %v443
      %v1170 = vunpack.c.h.b16 %v443
      %v1171 = vunpack.c.l.b16 %v444
      %v1172 = vunpack.c.l.b16 %v445
      %v1173 = vunpack.c.h.b16 %v445
      %v1174 = vunpack.c.l.b16 %v446
      %v1175 = vunpack.c.l.b16 %v447
      %v1176 = vunpack.c.h.b16 %v447
      %v1177 = vunpack.c.l.b16 %v448
      %v1178 = vpack.c.b16 %v1082, %v1079
      %v1179 = vpack.c.b16 %v1083, %v1080
      %v1180 = vpack.c.b16 %v1084, %v1081
      %v1181 = vpack.c.b16 %v1088, %v1085
      %v1182 = vpack.c.b16 %v1089, %v1086
      %v1183 = vpack.c.b16 %v1090, %v1087
      %v1184 = vpack.c.b16 %v1094, %v1091
      %v1185 = vpack.c.b16 %v1095, %v1092
      %v1186 = vpack.c.b16 %v1096, %v1093
      %v1187 = vpack.c.b16 %v1100, %v1097
      %v1188 = vpack.c.b16 %v1101, %v1098
      %v1189 = vpack.c.b16 %v1102, %v1099
      %v1190 = vpack.c.b16 %v1106, %v1103
      %v1191 = vpack.c.b16 %v1107, %v1104
      %v1192 = vpack.c.b16 %v1108, %v1105
      %v1193 = vpack.c.b16 %v1112, %v1109
      %v1194 = vpack.c.b16 %v1113, %v1110
      %v1195 = vpack.c.b16 %v1114, %v1111
      %v1196 = vpack.c.b16 %v1118, %v1115
      %v1197 = vpack.c.b16 %v1119, %v1116
      %v1198 = vpack.c.b16 %v1120, %v1117
      %v1199 = vpack.c.b16 %v1124, %v1121
      %v1200 = vpack.c.b16 %v1125, %v1122
      %v1201 = vpack.c.b16 %v1126, %v1123
      %v1202 = vpack.c.b16 %v1130, %v1127
      %v1203 = vpack.c.b16 %v1131, %v1128
      %v1204 = vpack.c.b16 %v1132, %v1129
      %v1205 = vpack.c.b16 %v1136, %v1133
      %v1206 = vpack.c.b16 %v1137, %v1134
      %v1207 = vpack.c.b16 %v1138, %v1135
      %v1208 = vpack.c.b16 %v1142, %v1139
      %v1209 = vpack.c.b16 %v1143, %v1140
      %v1210 = vpack.c.b16 %v1144, %v1141
      %v1211 = vpack.c.b16 %v1148, %v1145
      %v1212 = vpack.c.b16 %v1149, %v1146
      %v1213 = vpack.c.b16 %v1150, %v1147
      %v1214 = vpack.c.b16 %v1154, %v1151
      %v1215 = vpack.c.b16 %v1155, %v1152
      %v1216 = vpack.c.b16 %v1156, %v1153
      %v1217 = vpack.c.b16 %v1160, %v1157
      %v1218 = vpack.c.b16 %v1161, %v1158
      %v1219 = vpack.c.b16 %v1162, %v1159
      %v1220 = vpack.c.b16 %v1166, %v1163
      %v1221 = vpack.c.b16 %v1167, %v1164
      %v1222 = vpack.c.b16 %v1168, %v1165
      %v1223 = vpack.c.b16 %v1172, %v1169
      %v1224 = vpack.c.b16 %v1173, %v1170
      %v1225 = vpack.c.b16 %v1174, %v1171
      %v1226 = vpack.c.b16 %v1175, %v1175
      %v1227 = vpack.c.b16 %v1176, %v1176
      %v1228 = vpack.c.b16 %v1177, %v1177
      %v1278 = vsel %vm368, %v382, 0
      %v1281 = vand.u32 %v1226, %v835
      %v1284 = vand.u32 %v1227, %v835
      %v1287 = vand.u32 %v1228, %v835
      %1289 = vmatprep.subr.bf16.mxu0 %v1200
      %1290 = vmatpush1.bf16.msra.mxu0 %v1199
      %1291 = vmatprep.subr.bf16.mxu0 %v1197
      %1292 = vmatpush1.bf16.msra.mxu0 %v1196
      %1293 = vmatprep.subr.bf16.mxu0 %v1194
      %1294 = vmatpush1.bf16.msra.mxu0 %v1193
      %1295 = vmatprep.subr.bf16.mxu0 %v1191
      %1296 = vmatpush1.bf16.msra.mxu0 %v1190
      %1297 = vmatprep.subr.bf16.mxu0 %v1188
      %1298 = vmatpush1.bf16.msra.mxu0 %v1187
      %1299 = vmatprep.subr.bf16.mxu0 %v1185
      %1300 = vmatpush1.bf16.msra.mxu0 %v1184
      %1301 = vmatprep.subr.bf16.mxu0 %v1182
      %1302 = vmatpush1.bf16.msra.mxu0 %v1181
      %1303 = vmatprep.subr.bf16.mxu0 %v1179
      %1304 = vmatpush1.bf16.msra.mxu0 %v1178
      %1305 = vmatprep.subr.bf16.mxu0 %v1224
      %1306 = vmatpush2.bf16.msra.mxu0 %v1223
      %1307 = vmatprep.subr.bf16.mxu0 %v1221
      %1308 = vmatpush2.bf16.msra.mxu0 %v1220
      %1309 = vmatprep.subr.bf16.mxu0 %v1218
      %1310 = vmatpush2.bf16.msra.mxu0 %v1217
      %1311 = vmatprep.subr.bf16.mxu0 %v1215
      %1312 = vmatpush2.bf16.msra.mxu0 %v1214
      %1313 = vmatprep.subr.bf16.mxu0 %v1212
      %1314 = vmatpush2.bf16.msra.mxu0 %v1211
      %1315 = vmatprep.subr.bf16.mxu0 %v1209
      %1316 = vmatpush2.bf16.msra.mxu0 %v1208
      %1317 = vmatprep.subr.bf16.mxu0 %v1206
      %1318 = vmatpush2.bf16.msra.mxu0 %v1205
      %1319 = vmatprep.subr.bf16.mxu0 %v1203
      %1320 = vmatpush2.bf16.msra.mxu0 %v1202
      %1321 = vmatprep.mubr.bf16.mxu0 %v381
      %1322 = vmatmul.mubr.bf16.gmra.mxu0 %v380
      %v1323 = vpop.f32.mrf.mxu0
      %v1324 = vadd.f32 %v923, %v1323
      %v1325 = vpop.f32.mrf.mxu0
      %v1326 = vadd.f32 %v925, %v1325
      %v1327 = vpop.f32.mrf.mxu0
      %v1328 = vadd.f32 %v927, %v1327
      %v1329 = vpop.f32.mrf.mxu0
      %v1330 = vadd.f32 %v929, %v1329
      %1331 = vdwg.mxu0
      %1332 = vmatprep.subr.bf16.mxu0 0
      %1333 = vmatpush1.bf16.msra.mxu0 0
      %1334 = vmatprep.subr.bf16.mxu0 0
      %1335 = vmatpush1.bf16.msra.mxu0 0
      %1336 = vmatprep.subr.bf16.mxu0 0
      %1337 = vmatpush1.bf16.msra.mxu0 0
      %1338 = vmatprep.subr.bf16.mxu0 0
      %1339 = vmatpush1.bf16.msra.mxu0 0
      %1340 = vmatprep.subr.bf16.mxu0 0
      %1341 = vmatpush1.bf16.msra.mxu0 0
      %1342 = vmatprep.subr.bf16.mxu0 0
      %1343 = vmatpush1.bf16.msra.mxu0 0
      %1344 = vmatprep.subr.bf16.mxu0 0
      %1345 = vmatpush1.bf16.msra.mxu0 0
      %1346 = vmatprep.subr.bf16.mxu0 %v1284
      %1347 = vmatpush1.bf16.msra.mxu0 %v1281
      %1348 = vmatprep.subr.bf16.mxu0 0
      %1349 = vmatpush2.bf16.msra.mxu0 0
      %1350 = vmatprep.subr.bf16.mxu0 0
      %1351 = vmatpush2.bf16.msra.mxu0 0
      %1352 = vmatprep.subr.bf16.mxu0 0
      %1353 = vmatpush2.bf16.msra.mxu0 0
      %1354 = vmatprep.subr.bf16.mxu0 0
      %1355 = vmatpush2.bf16.msra.mxu0 0
      %1356 = vmatprep.subr.bf16.mxu0 0
      %1357 = vmatpush2.bf16.msra.mxu0 0
      %1358 = vmatprep.subr.bf16.mxu0 0
      %1359 = vmatpush2.bf16.msra.mxu0 0
      %1360 = vmatprep.subr.bf16.mxu0 0
      %1361 = vmatpush2.bf16.msra.mxu0 0
      %1362 = vmatprep.subr.bf16.mxu0 0
      %1363 = vmatpush2.bf16.msra.mxu0 0
      %1364 = vmatprep.mubr.bf16.mxu0 0
      %1365 = vmatmul.mubr.bf16.gmra.mxu0 %v1278
      %v1366 = vpop.f32.mrf.mxu0
      %v1367 = vadd.f32 %v1324, %v1366
      %v1368 = vpop.f32.mrf.mxu0
      %v1369 = vadd.f32 %v1326, %v1368
      %v1370 = vpop.f32.mrf.mxu0
      %v1371 = vadd.f32 %v1328, %v1370
      %v1372 = vpop.f32.mrf.mxu0
      %v1373 = vadd.f32 %v1330, %v1372
      %1374 = vdwg.mxu0
      %1375 = vmatprep.subr.bf16.mxu0 0
      %1376 = vmatpush1.bf16.msra.mxu0 %v1201
      %1377 = vmatprep.subr.bf16.mxu0 0
      %1378 = vmatpush1.bf16.msra.mxu0 %v1198
      %1379 = vmatprep.subr.bf16.mxu0 0
      %1380 = vmatpush1.bf16.msra.mxu0 %v1195
      %1381 = vmatprep.subr.bf16.mxu0 0
      %1382 = vmatpush1.bf16.msra.mxu0 %v1192
      %1383 = vmatprep.subr.bf16.mxu0 0
      %1384 = vmatpush1.bf16.msra.mxu0 %v1189
      %1385 = vmatprep.subr.bf16.mxu0 0
      %1386 = vmatpush1.bf16.msra.mxu0 %v1186
      %1387 = vmatprep.subr.bf16.mxu0 0
      %1388 = vmatpush1.bf16.msra.mxu0 %v1183
      %1389 = vmatprep.subr.bf16.mxu0 0
      %1390 = vmatpush1.bf16.msra.mxu0 %v1180
      %1391 = vmatprep.subr.bf16.mxu0 0
      %1392 = vmatpush2.bf16.msra.mxu0 %v1225
      %1393 = vmatprep.subr.bf16.mxu0 0
      %1394 = vmatpush2.bf16.msra.mxu0 %v1222
      %1395 = vmatprep.subr.bf16.mxu0 0
      %1396 = vmatpush2.bf16.msra.mxu0 %v1219
      %1397 = vmatprep.subr.bf16.mxu0 0
      %1398 = vmatpush2.bf16.msra.mxu0 %v1216
      %1399 = vmatprep.subr.bf16.mxu0 0
      %1400 = vmatpush2.bf16.msra.mxu0 %v1213
      %1401 = vmatprep.subr.bf16.mxu0 0
      %1402 = vmatpush2.bf16.msra.mxu0 %v1210
      %1403 = vmatprep.subr.bf16.mxu0 0
      %1404 = vmatpush2.bf16.msra.mxu0 %v1207
      %1405 = vmatprep.subr.bf16.mxu0 0
      %1406 = vmatpush2.bf16.msra.mxu0 %v1204
      %1407 = vmatprep.mubr.bf16.mxu0 %v381
      %1408 = vmatmul.mubr.bf16.gmra.mxu0 %v380
      %v1409 = vpop.f32.mrf.mxu0
      %v1410 = vadd.f32 %v1007, %v1409
      %v1411 = vpop.f32.mrf.mxu0
      %v1412 = vpop.f32.mrf.mxu0
      %v1413 = vadd.f32 %v1010, %v1412
      %v1414 = vpop.f32.mrf.mxu0
      %1415 = vdwg.mxu0
      %1416 = vmatprep.subr.bf16.mxu0 0
      %1417 = vmatpush1.bf16.msra.mxu0 0
      %1418 = vmatprep.subr.bf16.mxu0 0
      %1419 = vmatpush1.bf16.msra.mxu0 0
      %1420 = vmatprep.subr.bf16.mxu0 0
      %1421 = vmatpush1.bf16.msra.mxu0 0
      %1422 = vmatprep.subr.bf16.mxu0 0
      %1423 = vmatpush1.bf16.msra.mxu0 0
      %1424 = vmatprep.subr.bf16.mxu0 0
      %1425 = vmatpush1.bf16.msra.mxu0 0
      %1426 = vmatprep.subr.bf16.mxu0 0
      %1427 = vmatpush1.bf16.msra.mxu0 0
      %1428 = vmatprep.subr.bf16.mxu0 0
      %1429 = vmatpush1.bf16.msra.mxu0 0
      %1430 = vmatprep.subr.bf16.mxu0 0
      %1431 = vmatpush1.bf16.msra.mxu0 %v1287
      %1432 = vmatprep.subr.bf16.mxu0 0
      %1433 = vmatpush2.bf16.msra.mxu0 0
      %1434 = vmatprep.subr.bf16.mxu0 0
      %1435 = vmatpush2.bf16.msra.mxu0 0
      %1436 = vmatprep.subr.bf16.mxu0 0
      %1437 = vmatpush2.bf16.msra.mxu0 0
      %1438 = vmatprep.subr.bf16.mxu0 0
      %1439 = vmatpush2.bf16.msra.mxu0 0
      %1440 = vmatprep.subr.bf16.mxu0 0
      %1441 = vmatpush2.bf16.msra.mxu0 0
      %1442 = vmatprep.subr.bf16.mxu0 0
      %1443 = vmatpush2.bf16.msra.mxu0 0
      %1444 = vmatprep.subr.bf16.mxu0 0
      %1445 = vmatpush2.bf16.msra.mxu0 0
      %1446 = vmatprep.subr.bf16.mxu0 0
      %1447 = vmatpush2.bf16.msra.mxu0 0
      %1448 = vmatprep.mubr.bf16.mxu0 0
      %1449 = vmatmul.mubr.bf16.gmra.mxu0 %v1278
      %v1450 = vpop.f32.mrf.mxu0
      %v1451 = vadd.f32 %v1410, %v1450
      %v1452 = vpop.f32.mrf.mxu0
      %v1453 = vpop.f32.mrf.mxu0
      %v1454 = vadd.f32 %v1413, %v1453
      %v1455 = vpop.f32.mrf.mxu0
      %1456 = vdwg.mxu0
      %v1457 = vld [vmem:[#allocation2] sm:$0xfc]
      %v1458 = vld [vmem:[#allocation2 + $0x8] sm:$0xfc]
      %v1459 = vld [vmem:[#allocation2 + $0x10] sm:$0xfc]
      %v1460 = vld [vmem:[#allocation2 + $0x30] sm:$0x3]
      %v1461 = vld [vmem:[#allocation2 + $0x38] sm:$0x3]
      %v1462 = vld [vmem:[#allocation2 + $0x40] sm:$0x3]
      %v1463 = vpack.c.bf16 %v377, %v1457
      %v1464 = vpack.c.bf16 %v378, %v1458
      %v1465 = vpack.c.bf16 %v379, %v1459
      %v1466 = vpack.c.bf16 %v1460, %v1460
      %v1467 = vpack.c.bf16 %v1461, %v1461
      %v1468 = vpack.c.bf16 %v1462, %v1462
      %s1469 = scalar_lea.vmem %s1, 792
      %v1470 = vld [vmem:[%s1469] sm:$0xff]
      %v1471 = vld [vmem:[%s1469 + $0x8] sm:$0xf]
      %v1472 = vld [vmem:[%s1469 + $0xc] sm:$0xff]
      %v1473 = vld [vmem:[%s1469 + $0x14] sm:$0xf]
      %v1474 = vld [vmem:[%s1469 + $0x18] sm:$0xff]
      %v1475 = vld [vmem:[%s1469 + $0x20] sm:$0xf]
      %v1476 = vld [vmem:[%s1469 + $0x24] sm:$0xff]
      %v1477 = vld [vmem:[%s1469 + $0x2c] sm:$0xf]
      %v1478 = vld [vmem:[%s1469 + $0x30] sm:$0xff]
      %v1479 = vld [vmem:[%s1469 + $0x38] sm:$0xf]
      %v1480 = vld [vmem:[%s1469 + $0x3c] sm:$0xff]
      %v1481 = vld [vmem:[%s1469 + $0x44] sm:$0xf]
      %v1482 = vld [vmem:[%s1469 + $0x48] sm:$0xff]
      %v1483 = vld [vmem:[%s1469 + $0x50] sm:$0xf]
      %v1484 = vld [vmem:[%s1469 + $0x54] sm:$0xff]
      %v1485 = vld [vmem:[%s1469 + $0x5c] sm:$0xf]
      %v1486 = vld [vmem:[%s1469 + $0x60] sm:$0xff]
      %v1487 = vld [vmem:[%s1469 + $0x68] sm:$0xf]
      %v1488 = vld [vmem:[%s1469 + $0x6c] sm:$0xff]
      %v1489 = vld [vmem:[%s1469 + $0x74] sm:$0xf]
      %v1490 = vld [vmem:[%s1469 + $0x78] sm:$0xff]
      %v1491 = vld [vmem:[%s1469 + $0x80] sm:$0xf]
      %v1492 = vld [vmem:[%s1469 + $0x84] sm:$0xff]
      %v1493 = vld [vmem:[%s1469 + $0x8c] sm:$0xf]
      %v1494 = vld [vmem:[%s1469 + $0x90] sm:$0xff]
      %v1495 = vld [vmem:[%s1469 + $0x98] sm:$0xf]
      %v1496 = vld [vmem:[%s1469 + $0x9c] sm:$0xff]
      %v1497 = vld [vmem:[%s1469 + $0xa4] sm:$0xf]
      %v1498 = vld [vmem:[%s1469 + $0xa8] sm:$0xff]
      %v1499 = vld [vmem:[%s1469 + $0xb0] sm:$0xf]
      %v1500 = vld [vmem:[%s1469 + $0xb4] sm:$0xff]
      %v1501 = vld [vmem:[%s1469 + $0xbc] sm:$0xf]
      %v1502 = vld [vmem:[%s1469 + $0xc0] sm:$0xff]
      %v1503 = vld [vmem:[%s1469 + $0xc8] sm:$0xf]
      %v1504 = vld [vmem:[%s1469 + $0xcc] sm:$0xff]
      %v1505 = vld [vmem:[%s1469 + $0xd4] sm:$0xf]
      %v1506 = vld [vmem:[%s1469 + $0xd8] sm:$0xff]
      %v1507 = vld [vmem:[%s1469 + $0xe0] sm:$0xf]
      %v1508 = vld [vmem:[%s1469 + $0xe4] sm:$0xff]
      %v1509 = vld [vmem:[%s1469 + $0xec] sm:$0xf]
      %v1510 = vld [vmem:[%s1469 + $0xf0] sm:$0xff]
      %v1511 = vld [vmem:[%s1469 + $0xf8] sm:$0xf]
      %v1512 = vld [vmem:[%s1469 + $0xfc] sm:$0xff]
      %v1513 = vld [vmem:[%s1469 + $0x104] sm:$0xf]
      %v1514 = vld [vmem:[%s1469 + $0x108] sm:$0xff]
      %v1515 = vld [vmem:[%s1469 + $0x110] sm:$0xf]
      %v1516 = vld [vmem:[%s1469 + $0x114] sm:$0xff]
      %v1517 = vld [vmem:[%s1469 + $0x11c] sm:$0xf]
      %v1518 = vld [vmem:[%s1469 + $0x120] sm:$0xff]
      %v1519 = vld [vmem:[%s1469 + $0x128] sm:$0xf]
      %v1520 = vld [vmem:[%s1469 + $0x12c] sm:$0xff]
      %v1521 = vld [vmem:[%s1469 + $0x134] sm:$0xf]
      %v1522 = vld [vmem:[%s1469 + $0x138] sm:$0xff]
      %v1523 = vld [vmem:[%s1469 + $0x140] sm:$0xf]
      %v1524 = vld [vmem:[%s1469 + $0x144] sm:$0xff]
      %v1525 = vld [vmem:[%s1469 + $0x14c] sm:$0xf]
      %v1526 = vld [vmem:[%s1469 + $0x150] sm:$0xff]
      %v1527 = vld [vmem:[%s1469 + $0x158] sm:$0xf]
      %v1528 = vld [vmem:[%s1469 + $0x15c] sm:$0xff]
      %v1529 = vld [vmem:[%s1469 + $0x164] sm:$0xf]
      %v1530 = vld [vmem:[%s1469 + $0x168] sm:$0xff]
      %v1531 = vld [vmem:[%s1469 + $0x170] sm:$0xf]
      %v1532 = vld [vmem:[%s1469 + $0x174] sm:$0xff]
      %v1533 = vld [vmem:[%s1469 + $0x17c] sm:$0xf]
      %v1534 = vld [vmem:[%s1469 + $0x180] sm:$0x11]
      %v1535 = vld [vmem:[%s1469 + $0x188] sm:$0x1]
      %vm1542 = vcmask 1046528
      %v1543 = vrot.slane %v1463, 1
      %v1544 = vrot.slane %v1466, 1
      %v1545 = vsel %vm1542, %v1543, %v1544
      %v1546 = vrot.slane %v1464, 1
      %v1547 = vrot.slane %v1467, 1
      %v1548 = vsel %vm1542, %v1546, %v1547
      %v1549 = vrot.slane %v1465, 1
      %v1550 = vrot.slane %v1468, 1
      %v1551 = vsel %vm1542, %v1549, %v1550
      %v1620 = vunpack.c.l.b16 %v1470
      %v1621 = vunpack.c.h.b16 %v1470
      %v1622 = vunpack.c.l.b16 %v1471
      %v1623 = vunpack.c.l.b16 %v1472
      %v1624 = vunpack.c.h.b16 %v1472
      %v1625 = vunpack.c.l.b16 %v1473
      %v1626 = vunpack.c.l.b16 %v1474
      %v1627 = vunpack.c.h.b16 %v1474
      %v1628 = vunpack.c.l.b16 %v1475
      %v1629 = vunpack.c.l.b16 %v1476
      %v1630 = vunpack.c.h.b16 %v1476
      %v1631 = vunpack.c.l.b16 %v1477
      %v1632 = vunpack.c.l.b16 %v1478
      %v1633 = vunpack.c.h.b16 %v1478
      %v1634 = vunpack.c.l.b16 %v1479
      %v1635 = vunpack.c.l.b16 %v1480
      %v1636 = vunpack.c.h.b16 %v1480
      %v1637 = vunpack.c.l.b16 %v1481
      %v1638 = vunpack.c.l.b16 %v1482
      %v1639 = vunpack.c.h.b16 %v1482
      %v1640 = vunpack.c.l.b16 %v1483
      %v1641 = vunpack.c.l.b16 %v1484
      %v1642 = vunpack.c.h.b16 %v1484
      %v1643 = vunpack.c.l.b16 %v1485
      %v1644 = vunpack.c.l.b16 %v1486
      %v1645 = vunpack.c.h.b16 %v1486
      %v1646 = vunpack.c.l.b16 %v1487
      %v1647 = vunpack.c.l.b16 %v1488
      %v1648 = vunpack.c.h.b16 %v1488
      %v1649 = vunpack.c.l.b16 %v1489
      %v1650 = vunpack.c.l.b16 %v1490
      %v1651 = vunpack.c.h.b16 %v1490
      %v1652 = vunpack.c.l.b16 %v1491
      %v1653 = vunpack.c.l.b16 %v1492
      %v1654 = vunpack.c.h.b16 %v1492
      %v1655 = vunpack.c.l.b16 %v1493
      %v1656 = vunpack.c.l.b16 %v1494
      %v1657 = vunpack.c.h.b16 %v1494
      %v1658 = vunpack.c.l.b16 %v1495
      %v1659 = vunpack.c.l.b16 %v1496
      %v1660 = vunpack.c.h.b16 %v1496
      %v1661 = vunpack.c.l.b16 %v1497
      %v1662 = vunpack.c.l.b16 %v1498
      %v1663 = vunpack.c.h.b16 %v1498
      %v1664 = vunpack.c.l.b16 %v1499
      %v1665 = vunpack.c.l.b16 %v1500
      %v1666 = vunpack.c.h.b16 %v1500
      %v1667 = vunpack.c.l.b16 %v1501
      %v1668 = vunpack.c.l.b16 %v1502
      %v1669 = vunpack.c.h.b16 %v1502
      %v1670 = vunpack.c.l.b16 %v1503
      %v1671 = vunpack.c.l.b16 %v1504
      %v1672 = vunpack.c.h.b16 %v1504
      %v1673 = vunpack.c.l.b16 %v1505
      %v1674 = vunpack.c.l.b16 %v1506
      %v1675 = vunpack.c.h.b16 %v1506
      %v1676 = vunpack.c.l.b16 %v1507
      %v1677 = vunpack.c.l.b16 %v1508
      %v1678 = vunpack.c.h.b16 %v1508
      %v1679 = vunpack.c.l.b16 %v1509
      %v1680 = vunpack.c.l.b16 %v1510
      %v1681 = vunpack.c.h.b16 %v1510
      %v1682 = vunpack.c.l.b16 %v1511
      %v1683 = vunpack.c.l.b16 %v1512
      %v1684 = vunpack.c.h.b16 %v1512
      %v1685 = vunpack.c.l.b16 %v1513
      %v1686 = vunpack.c.l.b16 %v1514
      %v1687 = vunpack.c.h.b16 %v1514
      %v1688 = vunpack.c.l.b16 %v1515
      %v1689 = vunpack.c.l.b16 %v1516
      %v1690 = vunpack.c.h.b16 %v1516
      %v1691 = vunpack.c.l.b16 %v1517
      %v1692 = vunpack.c.l.b16 %v1518
      %v1693 = vunpack.c.h.b16 %v1518
      %v1694 = vunpack.c.l.b16 %v1519
      %v1695 = vunpack.c.l.b16 %v1520
      %v1696 = vunpack.c.h.b16 %v1520
      %v1697 = vunpack.c.l.b16 %v1521
      %v1698 = vunpack.c.l.b16 %v1522
      %v1699 = vunpack.c.h.b16 %v1522
      %v1700 = vunpack.c.l.b16 %v1523
      %v1701 = vunpack.c.l.b16 %v1524
      %v1702 = vunpack.c.h.b16 %v1524
      %v1703 = vunpack.c.l.b16 %v1525
      %v1704 = vunpack.c.l.b16 %v1526
      %v1705 = vunpack.c.h.b16 %v1526
      %v1706 = vunpack.c.l.b16 %v1527
      %v1707 = vunpack.c.l.b16 %v1528
      %v1708 = vunpack.c.h.b16 %v1528
      %v1709 = vunpack.c.l.b16 %v1529
      %v1710 = vunpack.c.l.b16 %v1530
      %v1711 = vunpack.c.h.b16 %v1530
      %v1712 = vunpack.c.l.b16 %v1531
      %v1713 = vunpack.c.l.b16 %v1532
      %v1714 = vunpack.c.h.b16 %v1532
      %v1715 = vunpack.c.l.b16 %v1533
      %v1716 = vunpack.c.l.b16 %v1534
      %v1717 = vunpack.c.h.b16 %v1534
      %v1718 = vunpack.c.l.b16 %v1535
      %v1719 = vpack.c.b16 %v1623, %v1620
      %v1720 = vpack.c.b16 %v1624, %v1621
      %v1721 = vpack.c.b16 %v1625, %v1622
      %v1722 = vpack.c.b16 %v1629, %v1626
      %v1723 = vpack.c.b16 %v1630, %v1627
      %v1724 = vpack.c.b16 %v1631, %v1628
      %v1725 = vpack.c.b16 %v1635, %v1632
      %v1726 = vpack.c.b16 %v1636, %v1633
      %v1727 = vpack.c.b16 %v1637, %v1634
      %v1728 = vpack.c.b16 %v1641, %v1638
      %v1729 = vpack.c.b16 %v1642, %v1639
      %v1730 = vpack.c.b16 %v1643, %v1640
      %v1731 = vpack.c.b16 %v1647, %v1644
      %v1732 = vpack.c.b16 %v1648, %v1645
      %v1733 = vpack.c.b16 %v1649, %v1646
      %v1734 = vpack.c.b16 %v1653, %v1650
      %v1735 = vpack.c.b16 %v1654, %v1651
      %v1736 = vpack.c.b16 %v1655, %v1652
      %v1737 = vpack.c.b16 %v1659, %v1656
      %v1738 = vpack.c.b16 %v1660, %v1657
      %v1739 = vpack.c.b16 %v1661, %v1658
      %v1740 = vpack.c.b16 %v1665, %v1662
      %v1741 = vpack.c.b16 %v1666, %v1663
      %v1742 = vpack.c.b16 %v1667, %v1664
      %v1743 = vpack.c.b16 %v1671, %v1668
      %v1744 = vpack.c.b16 %v1672, %v1669
      %v1745 = vpack.c.b16 %v1673, %v1670
      %v1746 = vpack.c.b16 %v1677, %v1674
      %v1747 = vpack.c.b16 %v1678, %v1675
      %v1748 = vpack.c.b16 %v1679, %v1676
      %v1749 = vpack.c.b16 %v1683, %v1680
      %v1750 = vpack.c.b16 %v1684, %v1681
      %v1751 = vpack.c.b16 %v1685, %v1682
      %v1752 = vpack.c.b16 %v1689, %v1686
      %v1753 = vpack.c.b16 %v1690, %v1687
      %v1754 = vpack.c.b16 %v1691, %v1688
      %v1755 = vpack.c.b16 %v1695, %v1692
      %v1756 = vpack.c.b16 %v1696, %v1693
      %v1757 = vpack.c.b16 %v1697, %v1694
      %v1758 = vpack.c.b16 %v1701, %v1698
      %v1759 = vpack.c.b16 %v1702, %v1699
      %v1760 = vpack.c.b16 %v1703, %v1700
      %v1761 = vpack.c.b16 %v1707, %v1704
      %v1762 = vpack.c.b16 %v1708, %v1705
      %v1763 = vpack.c.b16 %v1709, %v1706
      %v1764 = vpack.c.b16 %v1713, %v1710
      %v1765 = vpack.c.b16 %v1714, %v1711
      %v1766 = vpack.c.b16 %v1715, %v1712
      %v1767 = vpack.c.b16 %v1716, %v1716
      %v1768 = vpack.c.b16 %v1717, %v1717
      %v1769 = vpack.c.b16 %v1718, %v1718
      %v1819 = vsel %vm368, %v1551, 0
      %v1822 = vand.u32 %v1767, %v835
      %v1825 = vand.u32 %v1768, %v835
      %v1828 = vand.u32 %v1769, %v835
      %1830 = vmatprep.subr.bf16.mxu0 %v1741
      %1831 = vmatpush1.bf16.msra.mxu0 %v1740
      %1832 = vmatprep.subr.bf16.mxu0 %v1738
      %1833 = vmatpush1.bf16.msra.mxu0 %v1737
      %1834 = vmatprep.subr.bf16.mxu0 %v1735
      %1835 = vmatpush1.bf16.msra.mxu0 %v1734
      %1836 = vmatprep.subr.bf16.mxu0 %v1732
      %1837 = vmatpush1.bf16.msra.mxu0 %v1731
      %1838 = vmatprep.subr.bf16.mxu0 %v1729
      %1839 = vmatpush1.bf16.msra.mxu0 %v1728
      %1840 = vmatprep.subr.bf16.mxu0 %v1726
      %1841 = vmatpush1.bf16.msra.mxu0 %v1725
      %1842 = vmatprep.subr.bf16.mxu0 %v1723
      %1843 = vmatpush1.bf16.msra.mxu0 %v1722
      %1844 = vmatprep.subr.bf16.mxu0 %v1720
      %1845 = vmatpush1.bf16.msra.mxu0 %v1719
      %1846 = vmatprep.subr.bf16.mxu0 %v1765
      %1847 = vmatpush2.bf16.msra.mxu0 %v1764
      %1848 = vmatprep.subr.bf16.mxu0 %v1762
      %1849 = vmatpush2.bf16.msra.mxu0 %v1761
      %1850 = vmatprep.subr.bf16.mxu0 %v1759
      %1851 = vmatpush2.bf16.msra.mxu0 %v1758
      %1852 = vmatprep.subr.bf16.mxu0 %v1756
      %1853 = vmatpush2.bf16.msra.mxu0 %v1755
      %1854 = vmatprep.subr.bf16.mxu0 %v1753
      %1855 = vmatpush2.bf16.msra.mxu0 %v1752
      %1856 = vmatprep.subr.bf16.mxu0 %v1750
      %1857 = vmatpush2.bf16.msra.mxu0 %v1749
      %1858 = vmatprep.subr.bf16.mxu0 %v1747
      %1859 = vmatpush2.bf16.msra.mxu0 %v1746
      %1860 = vmatprep.subr.bf16.mxu0 %v1744
      %1861 = vmatpush2.bf16.msra.mxu0 %v1743
      %1862 = vmatprep.mubr.bf16.mxu0 %v1548
      %1863 = vmatmul.mubr.bf16.gmra.mxu0 %v1545
      %v1864 = vpop.f32.mrf.mxu0
      %v1865 = vadd.f32 0.0, %v1864
      %v1866 = vpop.f32.mrf.mxu0
      %v1867 = vadd.f32 0.0, %v1866
      %v1868 = vpop.f32.mrf.mxu0
      %v1869 = vadd.f32 0.0, %v1868
      %v1870 = vpop.f32.mrf.mxu0
      %v1871 = vadd.f32 0.0, %v1870
      %1872 = vdwg.mxu0
      %1873 = vmatprep.subr.bf16.mxu0 0
      %1874 = vmatpush1.bf16.msra.mxu0 0
      %1875 = vmatprep.subr.bf16.mxu0 0
      %1876 = vmatpush1.bf16.msra.mxu0 0
      %1877 = vmatprep.subr.bf16.mxu0 0
      %1878 = vmatpush1.bf16.msra.mxu0 0
      %1879 = vmatprep.subr.bf16.mxu0 0
      %1880 = vmatpush1.bf16.msra.mxu0 0
      %1881 = vmatprep.subr.bf16.mxu0 0
      %1882 = vmatpush1.bf16.msra.mxu0 0
      %1883 = vmatprep.subr.bf16.mxu0 0
      %1884 = vmatpush1.bf16.msra.mxu0 0
      %1885 = vmatprep.subr.bf16.mxu0 0
      %1886 = vmatpush1.bf16.msra.mxu0 0
      %1887 = vmatprep.subr.bf16.mxu0 %v1825
      %1888 = vmatpush1.bf16.msra.mxu0 %v1822
      %1889 = vmatprep.subr.bf16.mxu0 0
      %1890 = vmatpush2.bf16.msra.mxu0 0
      %1891 = vmatprep.subr.bf16.mxu0 0
      %1892 = vmatpush2.bf16.msra.mxu0 0
      %1893 = vmatprep.subr.bf16.mxu0 0
      %1894 = vmatpush2.bf16.msra.mxu0 0
      %1895 = vmatprep.subr.bf16.mxu0 0
      %1896 = vmatpush2.bf16.msra.mxu0 0
      %1897 = vmatprep.subr.bf16.mxu0 0
      %1898 = vmatpush2.bf16.msra.mxu0 0
      %1899 = vmatprep.subr.bf16.mxu0 0
      %1900 = vmatpush2.bf16.msra.mxu0 0
      %1901 = vmatprep.subr.bf16.mxu0 0
      %1902 = vmatpush2.bf16.msra.mxu0 0
      %1903 = vmatprep.subr.bf16.mxu0 0
      %1904 = vmatpush2.bf16.msra.mxu0 0
      %1905 = vmatprep.mubr.bf16.mxu0 0
      %1906 = vmatmul.mubr.bf16.gmra.mxu0 %v1819
      %v1907 = vpop.f32.mrf.mxu0
      %v1908 = vadd.f32 %v1865, %v1907
      %v1909 = vpop.f32.mrf.mxu0
      %v1910 = vadd.f32 %v1867, %v1909
      %v1911 = vpop.f32.mrf.mxu0
      %v1912 = vadd.f32 %v1869, %v1911
      %v1913 = vpop.f32.mrf.mxu0
      %v1914 = vadd.f32 %v1871, %v1913
      %1915 = vdwg.mxu0
      %1916 = vmatprep.subr.bf16.mxu0 0
      %1917 = vmatpush1.bf16.msra.mxu0 %v1742
      %1918 = vmatprep.subr.bf16.mxu0 0
      %1919 = vmatpush1.bf16.msra.mxu0 %v1739
      %1920 = vmatprep.subr.bf16.mxu0 0
      %1921 = vmatpush1.bf16.msra.mxu0 %v1736
      %1922 = vmatprep.subr.bf16.mxu0 0
      %1923 = vmatpush1.bf16.msra.mxu0 %v1733
      %1924 = vmatprep.subr.bf16.mxu0 0
      %1925 = vmatpush1.bf16.msra.mxu0 %v1730
      %1926 = vmatprep.subr.bf16.mxu0 0
      %1927 = vmatpush1.bf16.msra.mxu0 %v1727
      %1928 = vmatprep.subr.bf16.mxu0 0
      %1929 = vmatpush1.bf16.msra.mxu0 %v1724
      %1930 = vmatprep.subr.bf16.mxu0 0
      %1931 = vmatpush1.bf16.msra.mxu0 %v1721
      %1932 = vmatprep.subr.bf16.mxu0 0
      %1933 = vmatpush2.bf16.msra.mxu0 %v1766
      %1934 = vmatprep.subr.bf16.mxu0 0
      %1935 = vmatpush2.bf16.msra.mxu0 %v1763
      %1936 = vmatprep.subr.bf16.mxu0 0
      %1937 = vmatpush2.bf16.msra.mxu0 %v1760
      %1938 = vmatprep.subr.bf16.mxu0 0
      %1939 = vmatpush2.bf16.msra.mxu0 %v1757
      %1940 = vmatprep.subr.bf16.mxu0 0
      %1941 = vmatpush2.bf16.msra.mxu0 %v1754
      %1942 = vmatprep.subr.bf16.mxu0 0
      %1943 = vmatpush2.bf16.msra.mxu0 %v1751
      %1944 = vmatprep.subr.bf16.mxu0 0
      %1945 = vmatpush2.bf16.msra.mxu0 %v1748
      %1946 = vmatprep.subr.bf16.mxu0 0
      %1947 = vmatpush2.bf16.msra.mxu0 %v1745
      %1948 = vmatprep.mubr.bf16.mxu0 %v1548
      %1949 = vmatmul.mubr.bf16.gmra.mxu0 %v1545
      %v1950 = vpop.f32.mrf.mxu0
      %v1951 = vadd.f32 0.0, %v1950
      %v1952 = vpop.f32.mrf.mxu0
      %v1953 = vpop.f32.mrf.mxu0
      %v1954 = vadd.f32 0.0, %v1953
      %v1955 = vpop.f32.mrf.mxu0
      %1956 = vdwg.mxu0
      %1957 = vmatprep.subr.bf16.mxu0 0
      %1958 = vmatpush1.bf16.msra.mxu0 0
      %1959 = vmatprep.subr.bf16.mxu0 0
      %1960 = vmatpush1.bf16.msra.mxu0 0
      %1961 = vmatprep.subr.bf16.mxu0 0
      %1962 = vmatpush1.bf16.msra.mxu0 0
      %1963 = vmatprep.subr.bf16.mxu0 0
      %1964 = vmatpush1.bf16.msra.mxu0 0
      %1965 = vmatprep.subr.bf16.mxu0 0
      %1966 = vmatpush1.bf16.msra.mxu0 0
      %1967 = vmatprep.subr.bf16.mxu0 0
      %1968 = vmatpush1.bf16.msra.mxu0 0
      %1969 = vmatprep.subr.bf16.mxu0 0
      %1970 = vmatpush1.bf16.msra.mxu0 0
      %1971 = vmatprep.subr.bf16.mxu0 0
      %1972 = vmatpush1.bf16.msra.mxu0 %v1828
      %1973 = vmatprep.subr.bf16.mxu0 0
      %1974 = vmatpush2.bf16.msra.mxu0 0
      %1975 = vmatprep.subr.bf16.mxu0 0
      %1976 = vmatpush2.bf16.msra.mxu0 0
      %1977 = vmatprep.subr.bf16.mxu0 0
      %1978 = vmatpush2.bf16.msra.mxu0 0
      %1979 = vmatprep.subr.bf16.mxu0 0
      %1980 = vmatpush2.bf16.msra.mxu0 0
      %1981 = vmatprep.subr.bf16.mxu0 0
      %1982 = vmatpush2.bf16.msra.mxu0 0
      %1983 = vmatprep.subr.bf16.mxu0 0
      %1984 = vmatpush2.bf16.msra.mxu0 0
      %1985 = vmatprep.subr.bf16.mxu0 0
      %1986 = vmatpush2.bf16.msra.mxu0 0
      %1987 = vmatprep.subr.bf16.mxu0 0
      %1988 = vmatpush2.bf16.msra.mxu0 0
      %1989 = vmatprep.mubr.bf16.mxu0 0
      %1990 = vmatmul.mubr.bf16.gmra.mxu0 %v1819
      %v1991 = vpop.f32.mrf.mxu0
      %v1992 = vadd.f32 %v1951, %v1991
      %v1993 = vpop.f32.mrf.mxu0
      %v1994 = vpop.f32.mrf.mxu0
      %v1995 = vadd.f32 %v1954, %v1994
      %v1996 = vpop.f32.mrf.mxu0
      %1997 = vdwg.mxu0
      %v1998 = vadd.f32 %v1367, %v1908
      %v1999 = vadd.f32 %v1369, %v1910
      %v2000 = vadd.f32 %v1451, %v1992
      %v2001 = vadd.f32 %v1371, %v1912
      %v2002 = vadd.f32 %v1373, %v1914
      %v2003 = vadd.f32 %v1454, %v1995
      %v2004 = vld [vmem:[%s2] sm:$0x7]
      %v2006 = vlaneseq
      %v2007 = vshrl.u32 %v2006, 7
      %v2008 = vsub.s32 0, %v2007
      %v2009 = vrot.slane %v2004, %v2008
      %v2010 = vlaneseq
      %v2011 = vshrl.u32 %v2010, 7
      %v2012 = vsub.s32 1, %v2011
      %v2013 = vrot.slane %v2004, %v2012
      %v2014 = vlaneseq
      %v2015 = vshrl.u32 %v2014, 7
      %v2016 = vsub.s32 2, %v2015
      %v2017 = vrot.slane %v2004, %v2016
      %v2021 = vadd.f32 %v1998, %v2009
      %v2022 = vadd.f32 %v1999, %v2013
      %v2023 = vadd.f32 %v2000, %v2017
      %v2024 = vadd.f32 %v2001, %v2009
      %v2025 = vadd.f32 %v2002, %v2013
      %v2026 = vadd.f32 %v2003, %v2017
      %vm2027 = vcmp.gt.f32.partialorder %v2021, 0.0
      %vm2028 = vcmp.gt.f32.partialorder %v2022, 0.0
      %vm2029 = vcmp.gt.f32.partialorder %v2023, 0.0
      %vm2030 = vcmp.gt.f32.partialorder %v2024, 0.0
      %vm2031 = vcmp.gt.f32.partialorder %v2025, 0.0
      %vm2032 = vcmp.gt.f32.partialorder %v2026, 0.0
      %v2033 = vmul.f32 %v2021, 0.2
      %v2034 = vmul.f32 %v2022, 0.2
      %v2035 = vmul.f32 %v2023, 0.2
      %v2036 = vmul.f32 %v2024, 0.2
      %v2037 = vmul.f32 %v2025, 0.2
      %v2038 = vmul.f32 %v2026, 0.2
      %v2039 = vsel %vm2027, %v2021, %v2033
      %v2040 = vsel %vm2028, %v2022, %v2034
      %v2041 = vsel %vm2029, %v2023, %v2035
      %v2042 = vsel %vm2030, %v2024, %v2036
      %v2043 = vsel %vm2031, %v2025, %v2037
      %v2044 = vsel %vm2032, %v2026, %v2038
      %v2051 = vrot.slane %v2039, 7
      %v2052 = vrot.slane %v2040, 7
      %v2053 = vrot.slane %v2041, 7
      %v2054 = vrot.slane %v2042, 7
      %v2055 = vsel %vm343, %v2051, %v2054
      %v2056 = vrot.slane %v2043, 7
      %v2057 = vsel %vm343, %v2052, %v2056
      %v2058 = vrot.slane %v2044, 7
      %v2059 = vsel %vm343, %v2053, %v2058
      %2069 = vst [vmem:[#allocation2] sm:$0xfe] %v2051
      %2070 = vst [vmem:[#allocation2 + $0x8] sm:$0xfe] %v2052
      %2071 = vst.msk [vmem:[#allocation2 + $0x10] sm:$0xfe] %vm364, %v2053
      %2072 = vst [vmem:[#allocation2 + $0x18] sm:$0xff] %v2055
      %2073 = vst [vmem:[#allocation2 + $0x20] sm:$0xff] %v2057
      %2074 = vst.msk [vmem:[#allocation2 + $0x28] sm:$0xff] %vm368, %v2059
      %2075 = vst [vmem:[#allocation2 + $0x30] sm:$0x1] %v2054
      %2076 = vst [vmem:[#allocation2 + $0x38] sm:$0x1] %v2056
      %2077 = vst.msk [vmem:[#allocation2 + $0x40] sm:$0x1] %vm372, %v2058
      %v2078 = vld [vmem:[#allocation2] sm:$0xff]
      %v2079 = vld [vmem:[#allocation2 + $0x8] sm:$0xff]
      %v2080 = vld [vmem:[#allocation2 + $0x10] sm:$0xff]
      %v2081 = vld [vmem:[#allocation2 + $0x18] sm:$0xff]
      %v2082 = vld [vmem:[#allocation2 + $0x20] sm:$0xff]
      %v2083 = vld [vmem:[#allocation2 + $0x28] sm:$0xff]
      %v2084 = vpack.c.bf16 %v2081, %v2078
      %v2085 = vpack.c.bf16 %v2082, %v2079
      %v2086 = vpack.c.bf16 %v2083, %v2080
      %s2087 = scalar_lea.vmem %s1, 1188
      %v2088 = vld [vmem:[%s2087] sm:$0xff]
      %v2089 = vld [vmem:[%s2087 + $0x8] sm:$0xf]
      %v2090 = vld [vmem:[%s2087 + $0xc] sm:$0xff]
      %v2091 = vld [vmem:[%s2087 + $0x14] sm:$0xf]
      %v2092 = vld [vmem:[%s2087 + $0x18] sm:$0xff]
      %v2093 = vld [vmem:[%s2087 + $0x20] sm:$0xf]
      %v2094 = vld [vmem:[%s2087 + $0x24] sm:$0xff]
      %v2095 = vld [vmem:[%s2087 + $0x2c] sm:$0xf]
      %v2096 = vld [vmem:[%s2087 + $0x30] sm:$0xff]
      %v2097 = vld [vmem:[%s2087 + $0x38] sm:$0xf]
      %v2098 = vld [vmem:[%s2087 + $0x3c] sm:$0xff]
      %v2099 = vld [vmem:[%s2087 + $0x44] sm:$0xf]
      %v2100 = vld [vmem:[%s2087 + $0x48] sm:$0xff]
      %v2101 = vld [vmem:[%s2087 + $0x50] sm:$0xf]
      %v2102 = vld [vmem:[%s2087 + $0x54] sm:$0xff]
      %v2103 = vld [vmem:[%s2087 + $0x5c] sm:$0xf]
      %v2104 = vld [vmem:[%s2087 + $0x60] sm:$0xff]
      %v2105 = vld [vmem:[%s2087 + $0x68] sm:$0xf]
      %v2106 = vld [vmem:[%s2087 + $0x6c] sm:$0xff]
      %v2107 = vld [vmem:[%s2087 + $0x74] sm:$0xf]
      %v2108 = vld [vmem:[%s2087 + $0x78] sm:$0xff]
      %v2109 = vld [vmem:[%s2087 + $0x80] sm:$0xf]
      %v2110 = vld [vmem:[%s2087 + $0x84] sm:$0xff]
      %v2111 = vld [vmem:[%s2087 + $0x8c] sm:$0xf]
      %v2112 = vld [vmem:[%s2087 + $0x90] sm:$0xff]
      %v2113 = vld [vmem:[%s2087 + $0x98] sm:$0xf]
      %v2114 = vld [vmem:[%s2087 + $0x9c] sm:$0xff]
      %v2115 = vld [vmem:[%s2087 + $0xa4] sm:$0xf]
      %v2116 = vld [vmem:[%s2087 + $0xa8] sm:$0xff]
      %v2117 = vld [vmem:[%s2087 + $0xb0] sm:$0xf]
      %v2118 = vld [vmem:[%s2087 + $0xb4] sm:$0xff]
      %v2119 = vld [vmem:[%s2087 + $0xbc] sm:$0xf]
      %v2120 = vld [vmem:[%s2087 + $0xc0] sm:$0xff]
      %v2121 = vld [vmem:[%s2087 + $0xc8] sm:$0xf]
      %v2122 = vld [vmem:[%s2087 + $0xcc] sm:$0xff]
      %v2123 = vld [vmem:[%s2087 + $0xd4] sm:$0xf]
      %v2124 = vld [vmem:[%s2087 + $0xd8] sm:$0xff]
      %v2125 = vld [vmem:[%s2087 + $0xe0] sm:$0xf]
      %v2126 = vld [vmem:[%s2087 + $0xe4] sm:$0xff]
      %v2127 = vld [vmem:[%s2087 + $0xec] sm:$0xf]
      %v2128 = vld [vmem:[%s2087 + $0xf0] sm:$0xff]
      %v2129 = vld [vmem:[%s2087 + $0xf8] sm:$0xf]
      %v2130 = vld [vmem:[%s2087 + $0xfc] sm:$0xff]
      %v2131 = vld [vmem:[%s2087 + $0x104] sm:$0xf]
      %v2132 = vld [vmem:[%s2087 + $0x108] sm:$0xff]
      %v2133 = vld [vmem:[%s2087 + $0x110] sm:$0xf]
      %v2134 = vld [vmem:[%s2087 + $0x114] sm:$0xff]
      %v2135 = vld [vmem:[%s2087 + $0x11c] sm:$0xf]
      %v2136 = vld [vmem:[%s2087 + $0x120] sm:$0xff]
      %v2137 = vld [vmem:[%s2087 + $0x128] sm:$0xf]
      %v2138 = vld [vmem:[%s2087 + $0x12c] sm:$0xff]
      %v2139 = vld [vmem:[%s2087 + $0x134] sm:$0xf]
      %v2140 = vld [vmem:[%s2087 + $0x138] sm:$0xff]
      %v2141 = vld [vmem:[%s2087 + $0x140] sm:$0xf]
      %v2142 = vld [vmem:[%s2087 + $0x144] sm:$0xff]
      %v2143 = vld [vmem:[%s2087 + $0x14c] sm:$0xf]
      %v2144 = vld [vmem:[%s2087 + $0x150] sm:$0xff]
      %v2145 = vld [vmem:[%s2087 + $0x158] sm:$0xf]
      %v2146 = vld [vmem:[%s2087 + $0x15c] sm:$0xff]
      %v2147 = vld [vmem:[%s2087 + $0x164] sm:$0xf]
      %v2148 = vld [vmem:[%s2087 + $0x168] sm:$0xff]
      %v2149 = vld [vmem:[%s2087 + $0x170] sm:$0xf]
      %v2150 = vld [vmem:[%s2087 + $0x174] sm:$0xff]
      %v2151 = vld [vmem:[%s2087 + $0x17c] sm:$0xf]
      %v2152 = vld [vmem:[%s2087 + $0x180] sm:$0x11]
      %v2153 = vld [vmem:[%s2087 + $0x188] sm:$0x1]
      %v2154 = vld [vmem:[#allocation2] sm:$0xfe]
      %v2155 = vld [vmem:[#allocation2 + $0x8] sm:$0xfe]
      %v2156 = vld [vmem:[#allocation2 + $0x10] sm:$0xfe]
      %v2157 = vld [vmem:[#allocation2 + $0x30] sm:$0x1]
      %v2158 = vld [vmem:[#allocation2 + $0x38] sm:$0x1]
      %v2159 = vld [vmem:[#allocation2 + $0x40] sm:$0x1]
      %v2160 = vpack.c.bf16 %v2081, %v2154
      %v2161 = vpack.c.bf16 %v2082, %v2155
      %v2162 = vpack.c.bf16 %v2083, %v2156
      %v2163 = vpack.c.bf16 %v2157, %v2157
      %v2164 = vpack.c.bf16 %v2158, %v2158
      %v2165 = vpack.c.bf16 %v2159, %v2159
      %s2166 = scalar_lea.vmem %s1, 1584
      %v2167 = vld [vmem:[%s2166] sm:$0xff]
      %v2168 = vld [vmem:[%s2166 + $0x8] sm:$0xf]
      %v2169 = vld [vmem:[%s2166 + $0xc] sm:$0xff]
      %v2170 = vld [vmem:[%s2166 + $0x14] sm:$0xf]
      %v2171 = vld [vmem:[%s2166 + $0x18] sm:$0xff]
      %v2172 = vld [vmem:[%s2166 + $0x20] sm:$0xf]
      %v2173 = vld [vmem:[%s2166 + $0x24] sm:$0xff]
      %v2174 = vld [vmem:[%s2166 + $0x2c] sm:$0xf]
      %v2175 = vld [vmem:[%s2166 + $0x30] sm:$0xff]
      %v2176 = vld [vmem:[%s2166 + $0x38] sm:$0xf]
      %v2177 = vld [vmem:[%s2166 + $0x3c] sm:$0xff]
      %v2178 = vld [vmem:[%s2166 + $0x44] sm:$0xf]
      %v2179 = vld [vmem:[%s2166 + $0x48] sm:$0xff]
      %v2180 = vld [vmem:[%s2166 + $0x50] sm:$0xf]
      %v2181 = vld [vmem:[%s2166 + $0x54] sm:$0xff]
      %v2182 = vld [vmem:[%s2166 + $0x5c] sm:$0xf]
      %v2183 = vld [vmem:[%s2166 + $0x60] sm:$0xff]
      %v2184 = vld [vmem:[%s2166 + $0x68] sm:$0xf]
      %v2185 = vld [vmem:[%s2166 + $0x6c] sm:$0xff]
      %v2186 = vld [vmem:[%s2166 + $0x74] sm:$0xf]
      %v2187 = vld [vmem:[%s2166 + $0x78] sm:$0xff]
      %v2188 = vld [vmem:[%s2166 + $0x80] sm:$0xf]
      %v2189 = vld [vmem:[%s2166 + $0x84] sm:$0xff]
      %v2190 = vld [vmem:[%s2166 + $0x8c] sm:$0xf]
      %v2191 = vld [vmem:[%s2166 + $0x90] sm:$0xff]
      %v2192 = vld [vmem:[%s2166 + $0x98] sm:$0xf]
      %v2193 = vld [vmem:[%s2166 + $0x9c] sm:$0xff]
      %v2194 = vld [vmem:[%s2166 + $0xa4] sm:$0xf]
      %v2195 = vld [vmem:[%s2166 + $0xa8] sm:$0xff]
      %v2196 = vld [vmem:[%s2166 + $0xb0] sm:$0xf]
      %v2197 = vld [vmem:[%s2166 + $0xb4] sm:$0xff]
      %v2198 = vld [vmem:[%s2166 + $0xbc] sm:$0xf]
      %v2199 = vld [vmem:[%s2166 + $0xc0] sm:$0xff]
      %v2200 = vld [vmem:[%s2166 + $0xc8] sm:$0xf]
      %v2201 = vld [vmem:[%s2166 + $0xcc] sm:$0xff]
      %v2202 = vld [vmem:[%s2166 + $0xd4] sm:$0xf]
      %v2203 = vld [vmem:[%s2166 + $0xd8] sm:$0xff]
      %v2204 = vld [vmem:[%s2166 + $0xe0] sm:$0xf]
      %v2205 = vld [vmem:[%s2166 + $0xe4] sm:$0xff]
      %v2206 = vld [vmem:[%s2166 + $0xec] sm:$0xf]
      %v2207 = vld [vmem:[%s2166 + $0xf0] sm:$0xff]
      %v2208 = vld [vmem:[%s2166 + $0xf8] sm:$0xf]
      %v2209 = vld [vmem:[%s2166 + $0xfc] sm:$0xff]
      %v2210 = vld [vmem:[%s2166 + $0x104] sm:$0xf]
      %v2211 = vld [vmem:[%s2166 + $0x108] sm:$0xff]
      %v2212 = vld [vmem:[%s2166 + $0x110] sm:$0xf]
      %v2213 = vld [vmem:[%s2166 + $0x114] sm:$0xff]
      %v2214 = vld [vmem:[%s2166 + $0x11c] sm:$0xf]
      %v2215 = vld [vmem:[%s2166 + $0x120] sm:$0xff]
      %v2216 = vld [vmem:[%s2166 + $0x128] sm:$0xf]
      %v2217 = vld [vmem:[%s2166 + $0x12c] sm:$0xff]
      %v2218 = vld [vmem:[%s2166 + $0x134] sm:$0xf]
      %v2219 = vld [vmem:[%s2166 + $0x138] sm:$0xff]
      %v2220 = vld [vmem:[%s2166 + $0x140] sm:$0xf]
      %v2221 = vld [vmem:[%s2166 + $0x144] sm:$0xff]
      %v2222 = vld [vmem:[%s2166 + $0x14c] sm:$0xf]
      %v2223 = vld [vmem:[%s2166 + $0x150] sm:$0xff]
      %v2224 = vld [vmem:[%s2166 + $0x158] sm:$0xf]
      %v2225 = vld [vmem:[%s2166 + $0x15c] sm:$0xff]
      %v2226 = vld [vmem:[%s2166 + $0x164] sm:$0xf]
      %v2227 = vld [vmem:[%s2166 + $0x168] sm:$0xff]
      %v2228 = vld [vmem:[%s2166 + $0x170] sm:$0xf]
      %v2229 = vld [vmem:[%s2166 + $0x174] sm:$0xff]
      %v2230 = vld [vmem:[%s2166 + $0x17c] sm:$0xf]
      %v2231 = vld [vmem:[%s2166 + $0x180] sm:$0x11]
      %v2232 = vld [vmem:[%s2166 + $0x188] sm:$0x1]
      %v2234 = vshrl.u32 %v2160, 16
      %v2236 = vshll.u32 %v2160, 16
      %v2238 = vrot.slane %v2236, 1
      %v2239 = vor.u32 %v2234, %v2238
      %v2241 = vshll.u32 %v2163, 16
      %v2243 = vrot.slane %v2241, 1
      %v2244 = vsel %vm528, %v2239, %v2243
      %v2246 = vshrl.u32 %v2161, 16
      %v2248 = vshll.u32 %v2161, 16
      %v2250 = vrot.slane %v2248, 1
      %v2251 = vor.u32 %v2246, %v2250
      %v2253 = vshll.u32 %v2164, 16
      %v2255 = vrot.slane %v2253, 1
      %v2256 = vsel %vm528, %v2251, %v2255
      %v2258 = vshrl.u32 %v2162, 16
      %v2260 = vshll.u32 %v2162, 16
      %v2262 = vrot.slane %v2260, 1
      %v2263 = vor.u32 %v2258, %v2262
      %v2265 = vshll.u32 %v2165, 16
      %v2267 = vrot.slane %v2265, 1
      %v2268 = vsel %vm528, %v2263, %v2267
      %v2337 = vunpack.c.l.b16 %v2167
      %v2338 = vunpack.c.h.b16 %v2167
      %v2339 = vunpack.c.l.b16 %v2168
      %v2340 = vunpack.c.l.b16 %v2169
      %v2341 = vunpack.c.h.b16 %v2169
      %v2342 = vunpack.c.l.b16 %v2170
      %v2343 = vunpack.c.l.b16 %v2171
      %v2344 = vunpack.c.h.b16 %v2171
      %v2345 = vunpack.c.l.b16 %v2172
      %v2346 = vunpack.c.l.b16 %v2173
      %v2347 = vunpack.c.h.b16 %v2173
      %v2348 = vunpack.c.l.b16 %v2174
      %v2349 = vunpack.c.l.b16 %v2175
      %v2350 = vunpack.c.h.b16 %v2175
      %v2351 = vunpack.c.l.b16 %v2176
      %v2352 = vunpack.c.l.b16 %v2177
      %v2353 = vunpack.c.h.b16 %v2177
      %v2354 = vunpack.c.l.b16 %v2178
      %v2355 = vunpack.c.l.b16 %v2179
      %v2356 = vunpack.c.h.b16 %v2179
      %v2357 = vunpack.c.l.b16 %v2180
      %v2358 = vunpack.c.l.b16 %v2181
      %v2359 = vunpack.c.h.b16 %v2181
      %v2360 = vunpack.c.l.b16 %v2182
      %v2361 = vunpack.c.l.b16 %v2183
      %v2362 = vunpack.c.h.b16 %v2183
      %v2363 = vunpack.c.l.b16 %v2184
      %v2364 = vunpack.c.l.b16 %v2185
      %v2365 = vunpack.c.h.b16 %v2185
      %v2366 = vunpack.c.l.b16 %v2186
      %v2367 = vunpack.c.l.b16 %v2187
      %v2368 = vunpack.c.h.b16 %v2187
      %v2369 = vunpack.c.l.b16 %v2188
      %v2370 = vunpack.c.l.b16 %v2189
      %v2371 = vunpack.c.h.b16 %v2189
      %v2372 = vunpack.c.l.b16 %v2190
      %v2373 = vunpack.c.l.b16 %v2191
      %v2374 = vunpack.c.h.b16 %v2191
      %v2375 = vunpack.c.l.b16 %v2192
      %v2376 = vunpack.c.l.b16 %v2193
      %v2377 = vunpack.c.h.b16 %v2193
      %v2378 = vunpack.c.l.b16 %v2194
      %v2379 = vunpack.c.l.b16 %v2195
      %v2380 = vunpack.c.h.b16 %v2195
      %v2381 = vunpack.c.l.b16 %v2196
      %v2382 = vunpack.c.l.b16 %v2197
      %v2383 = vunpack.c.h.b16 %v2197
      %v2384 = vunpack.c.l.b16 %v2198
      %v2385 = vunpack.c.l.b16 %v2199
      %v2386 = vunpack.c.h.b16 %v2199
      %v2387 = vunpack.c.l.b16 %v2200
      %v2388 = vunpack.c.l.b16 %v2201
      %v2389 = vunpack.c.h.b16 %v2201
      %v2390 = vunpack.c.l.b16 %v2202
      %v2391 = vunpack.c.l.b16 %v2203
      %v2392 = vunpack.c.h.b16 %v2203
      %v2393 = vunpack.c.l.b16 %v2204
      %v2394 = vunpack.c.l.b16 %v2205
      %v2395 = vunpack.c.h.b16 %v2205
      %v2396 = vunpack.c.l.b16 %v2206
      %v2397 = vunpack.c.l.b16 %v2207
      %v2398 = vunpack.c.h.b16 %v2207
      %v2399 = vunpack.c.l.b16 %v2208
      %v2400 = vunpack.c.l.b16 %v2209
      %v2401 = vunpack.c.h.b16 %v2209
      %v2402 = vunpack.c.l.b16 %v2210
      %v2403 = vunpack.c.l.b16 %v2211
      %v2404 = vunpack.c.h.b16 %v2211
      %v2405 = vunpack.c.l.b16 %v2212
      %v2406 = vunpack.c.l.b16 %v2213
      %v2407 = vunpack.c.h.b16 %v2213
      %v2408 = vunpack.c.l.b16 %v2214
      %v2409 = vunpack.c.l.b16 %v2215
      %v2410 = vunpack.c.h.b16 %v2215
      %v2411 = vunpack.c.l.b16 %v2216
      %v2412 = vunpack.c.l.b16 %v2217
      %v2413 = vunpack.c.h.b16 %v2217
      %v2414 = vunpack.c.l.b16 %v2218
      %v2415 = vunpack.c.l.b16 %v2219
      %v2416 = vunpack.c.h.b16 %v2219
      %v2417 = vunpack.c.l.b16 %v2220
      %v2418 = vunpack.c.l.b16 %v2221
      %v2419 = vunpack.c.h.b16 %v2221
      %v2420 = vunpack.c.l.b16 %v2222
      %v2421 = vunpack.c.l.b16 %v2223
      %v2422 = vunpack.c.h.b16 %v2223
      %v2423 = vunpack.c.l.b16 %v2224
      %v2424 = vunpack.c.l.b16 %v2225
      %v2425 = vunpack.c.h.b16 %v2225
      %v2426 = vunpack.c.l.b16 %v2226
      %v2427 = vunpack.c.l.b16 %v2227
      %v2428 = vunpack.c.h.b16 %v2227
      %v2429 = vunpack.c.l.b16 %v2228
      %v2430 = vunpack.c.l.b16 %v2229
      %v2431 = vunpack.c.h.b16 %v2229
      %v2432 = vunpack.c.l.b16 %v2230
      %v2433 = vunpack.c.l.b16 %v2231
      %v2434 = vunpack.c.h.b16 %v2231
      %v2435 = vunpack.c.l.b16 %v2232
      %v2436 = vpack.c.b16 %v2340, %v2337
      %v2437 = vpack.c.b16 %v2341, %v2338
      %v2438 = vpack.c.b16 %v2342, %v2339
      %v2439 = vpack.c.b16 %v2346, %v2343
      %v2440 = vpack.c.b16 %v2347, %v2344
      %v2441 = vpack.c.b16 %v2348, %v2345
      %v2442 = vpack.c.b16 %v2352, %v2349
      %v2443 = vpack.c.b16 %v2353, %v2350
      %v2444 = vpack.c.b16 %v2354, %v2351
      %v2445 = vpack.c.b16 %v2358, %v2355
      %v2446 = vpack.c.b16 %v2359, %v2356
      %v2447 = vpack.c.b16 %v2360, %v2357
      %v2448 = vpack.c.b16 %v2364, %v2361
      %v2449 = vpack.c.b16 %v2365, %v2362
      %v2450 = vpack.c.b16 %v2366, %v2363
      %v2451 = vpack.c.b16 %v2370, %v2367
      %v2452 = vpack.c.b16 %v2371, %v2368
      %v2453 = vpack.c.b16 %v2372, %v2369
      %v2454 = vpack.c.b16 %v2376, %v2373
      %v2455 = vpack.c.b16 %v2377, %v2374
      %v2456 = vpack.c.b16 %v2378, %v2375
      %v2457 = vpack.c.b16 %v2382, %v2379
      %v2458 = vpack.c.b16 %v2383, %v2380
      %v2459 = vpack.c.b16 %v2384, %v2381
      %v2460 = vpack.c.b16 %v2388, %v2385
      %v2461 = vpack.c.b16 %v2389, %v2386
      %v2462 = vpack.c.b16 %v2390, %v2387
      %v2463 = vpack.c.b16 %v2394, %v2391
      %v2464 = vpack.c.b16 %v2395, %v2392
      %v2465 = vpack.c.b16 %v2396, %v2393
      %v2466 = vpack.c.b16 %v2400, %v2397
      %v2467 = vpack.c.b16 %v2401, %v2398
      %v2468 = vpack.c.b16 %v2402, %v2399
      %v2469 = vpack.c.b16 %v2406, %v2403
      %v2470 = vpack.c.b16 %v2407, %v2404
      %v2471 = vpack.c.b16 %v2408, %v2405
      %v2472 = vpack.c.b16 %v2412, %v2409
      %v2473 = vpack.c.b16 %v2413, %v2410
      %v2474 = vpack.c.b16 %v2414, %v2411
      %v2475 = vpack.c.b16 %v2418, %v2415
      %v2476 = vpack.c.b16 %v2419, %v2416
      %v2477 = vpack.c.b16 %v2420, %v2417
      %v2478 = vpack.c.b16 %v2424, %v2421
      %v2479 = vpack.c.b16 %v2425, %v2422
      %v2480 = vpack.c.b16 %v2426, %v2423
      %v2481 = vpack.c.b16 %v2430, %v2427
      %v2482 = vpack.c.b16 %v2431, %v2428
      %v2483 = vpack.c.b16 %v2432, %v2429
      %v2484 = vpack.c.b16 %v2433, %v2433
      %v2485 = vpack.c.b16 %v2434, %v2434
      %v2486 = vpack.c.b16 %v2435, %v2435
      %v2536 = vsel %vm368, %v2268, 0
      %v2539 = vand.u32 %v2484, %v835
      %v2542 = vand.u32 %v2485, %v835
      %v2545 = vand.u32 %v2486, %v835
      %2547 = vmatprep.subr.bf16.mxu0 %v2458
      %2548 = vmatpush1.bf16.msra.mxu0 %v2457
      %2549 = vmatprep.subr.bf16.mxu0 %v2455
      %2550 = vmatpush1.bf16.msra.mxu0 %v2454
      %2551 = vmatprep.subr.bf16.mxu0 %v2452
      %2552 = vmatpush1.bf16.msra.mxu0 %v2451
      %2553 = vmatprep.subr.bf16.mxu0 %v2449
      %2554 = vmatpush1.bf16.msra.mxu0 %v2448
      %2555 = vmatprep.subr.bf16.mxu0 %v2446
      %2556 = vmatpush1.bf16.msra.mxu0 %v2445
      %2557 = vmatprep.subr.bf16.mxu0 %v2443
      %2558 = vmatpush1.bf16.msra.mxu0 %v2442
      %2559 = vmatprep.subr.bf16.mxu0 %v2440
      %2560 = vmatpush1.bf16.msra.mxu0 %v2439
      %2561 = vmatprep.subr.bf16.mxu0 %v2437
      %2562 = vmatpush1.bf16.msra.mxu0 %v2436
      %2563 = vmatprep.subr.bf16.mxu0 %v2482
      %2564 = vmatpush2.bf16.msra.mxu0 %v2481
      %2565 = vmatprep.subr.bf16.mxu0 %v2479
      %2566 = vmatpush2.bf16.msra.mxu0 %v2478
      %2567 = vmatprep.subr.bf16.mxu0 %v2476
      %2568 = vmatpush2.bf16.msra.mxu0 %v2475
      %2569 = vmatprep.subr.bf16.mxu0 %v2473
      %2570 = vmatpush2.bf16.msra.mxu0 %v2472
      %2571 = vmatprep.subr.bf16.mxu0 %v2470
      %2572 = vmatpush2.bf16.msra.mxu0 %v2469
      %2573 = vmatprep.subr.bf16.mxu0 %v2467
      %2574 = vmatpush2.bf16.msra.mxu0 %v2466
      %2575 = vmatprep.subr.bf16.mxu0 %v2464
      %2576 = vmatpush2.bf16.msra.mxu0 %v2463
      %2577 = vmatprep.subr.bf16.mxu0 %v2461
      %2578 = vmatpush2.bf16.msra.mxu0 %v2460
      %2579 = vmatprep.mubr.bf16.mxu0 %v2256
      %2580 = vmatmul.mubr.bf16.gmra.mxu0 %v2244
      %v2581 = vpop.f32.mrf.mxu0
      %v2582 = vadd.f32 0.0, %v2581
      %v2583 = vpop.f32.mrf.mxu0
      %v2584 = vadd.f32 0.0, %v2583
      %v2585 = vpop.f32.mrf.mxu0
      %v2586 = vadd.f32 0.0, %v2585
      %v2587 = vpop.f32.mrf.mxu0
      %v2588 = vadd.f32 0.0, %v2587
      %2589 = vdwg.mxu0
      %2590 = vmatprep.subr.bf16.mxu0 0
      %2591 = vmatpush1.bf16.msra.mxu0 0
      %2592 = vmatprep.subr.bf16.mxu0 0
      %2593 = vmatpush1.bf16.msra.mxu0 0
      %2594 = vmatprep.subr.bf16.mxu0 0
      %2595 = vmatpush1.bf16.msra.mxu0 0
      %2596 = vmatprep.subr.bf16.mxu0 0
      %2597 = vmatpush1.bf16.msra.mxu0 0
      %2598 = vmatprep.subr.bf16.mxu0 0
      %2599 = vmatpush1.bf16.msra.mxu0 0
      %2600 = vmatprep.subr.bf16.mxu0 0
      %2601 = vmatpush1.bf16.msra.mxu0 0
      %2602 = vmatprep.subr.bf16.mxu0 0
      %2603 = vmatpush1.bf16.msra.mxu0 0
      %2604 = vmatprep.subr.bf16.mxu0 %v2542
      %2605 = vmatpush1.bf16.msra.mxu0 %v2539
      %2606 = vmatprep.subr.bf16.mxu0 0
      %2607 = vmatpush2.bf16.msra.mxu0 0
      %2608 = vmatprep.subr.bf16.mxu0 0
      %2609 = vmatpush2.bf16.msra.mxu0 0
      %2610 = vmatprep.subr.bf16.mxu0 0
      %2611 = vmatpush2.bf16.msra.mxu0 0
      %2612 = vmatprep.subr.bf16.mxu0 0
      %2613 = vmatpush2.bf16.msra.mxu0 0
      %2614 = vmatprep.subr.bf16.mxu0 0
      %2615 = vmatpush2.bf16.msra.mxu0 0
      %2616 = vmatprep.subr.bf16.mxu0 0
      %2617 = vmatpush2.bf16.msra.mxu0 0
      %2618 = vmatprep.subr.bf16.mxu0 0
      %2619 = vmatpush2.bf16.msra.mxu0 0
      %2620 = vmatprep.subr.bf16.mxu0 0
      %2621 = vmatpush2.bf16.msra.mxu0 0
      %2622 = vmatprep.mubr.bf16.mxu0 0
      %2623 = vmatmul.mubr.bf16.gmra.mxu0 %v2536
      %v2624 = vpop.f32.mrf.mxu0
      %v2625 = vadd.f32 %v2582, %v2624
      %v2626 = vpop.f32.mrf.mxu0
      %v2627 = vadd.f32 %v2584, %v2626
      %v2628 = vpop.f32.mrf.mxu0
      %v2629 = vadd.f32 %v2586, %v2628
      %v2630 = vpop.f32.mrf.mxu0
      %v2631 = vadd.f32 %v2588, %v2630
      %2632 = vdwg.mxu0
      %2633 = vmatprep.subr.bf16.mxu0 0
      %2634 = vmatpush1.bf16.msra.mxu0 %v2459
      %2635 = vmatprep.subr.bf16.mxu0 0
      %2636 = vmatpush1.bf16.msra.mxu0 %v2456
      %2637 = vmatprep.subr.bf16.mxu0 0
      %2638 = vmatpush1.bf16.msra.mxu0 %v2453
      %2639 = vmatprep.subr.bf16.mxu0 0
      %2640 = vmatpush1.bf16.msra.mxu0 %v2450
      %2641 = vmatprep.subr.bf16.mxu0 0
      %2642 = vmatpush1.bf16.msra.mxu0 %v2447
      %2643 = vmatprep.subr.bf16.mxu0 0
      %2644 = vmatpush1.bf16.msra.mxu0 %v2444
      %2645 = vmatprep.subr.bf16.mxu0 0
      %2646 = vmatpush1.bf16.msra.mxu0 %v2441
      %2647 = vmatprep.subr.bf16.mxu0 0
      %2648 = vmatpush1.bf16.msra.mxu0 %v2438
      %2649 = vmatprep.subr.bf16.mxu0 0
      %2650 = vmatpush2.bf16.msra.mxu0 %v2483
      %2651 = vmatprep.subr.bf16.mxu0 0
      %2652 = vmatpush2.bf16.msra.mxu0 %v2480
      %2653 = vmatprep.subr.bf16.mxu0 0
      %2654 = vmatpush2.bf16.msra.mxu0 %v2477
      %2655 = vmatprep.subr.bf16.mxu0 0
      %2656 = vmatpush2.bf16.msra.mxu0 %v2474
      %2657 = vmatprep.subr.bf16.mxu0 0
      %2658 = vmatpush2.bf16.msra.mxu0 %v2471
      %2659 = vmatprep.subr.bf16.mxu0 0
      %2660 = vmatpush2.bf16.msra.mxu0 %v2468
      %2661 = vmatprep.subr.bf16.mxu0 0
      %2662 = vmatpush2.bf16.msra.mxu0 %v2465
      %2663 = vmatprep.subr.bf16.mxu0 0
      %2664 = vmatpush2.bf16.msra.mxu0 %v2462
      %2665 = vmatprep.mubr.bf16.mxu0 %v2256
      %2666 = vmatmul.mubr.bf16.gmra.mxu0 %v2244
      %v2667 = vpop.f32.mrf.mxu0
      %v2668 = vadd.f32 0.0, %v2667
      %v2669 = vpop.f32.mrf.mxu0
      %v2670 = vpop.f32.mrf.mxu0
      %v2671 = vadd.f32 0.0, %v2670
      %v2672 = vpop.f32.mrf.mxu0
      %2673 = vdwg.mxu0
      %2674 = vmatprep.subr.bf16.mxu0 0
      %2675 = vmatpush1.bf16.msra.mxu0 0
      %2676 = vmatprep.subr.bf16.mxu0 0
      %2677 = vmatpush1.bf16.msra.mxu0 0
      %2678 = vmatprep.subr.bf16.mxu0 0
      %2679 = vmatpush1.bf16.msra.mxu0 0
      %2680 = vmatprep.subr.bf16.mxu0 0
      %2681 = vmatpush1.bf16.msra.mxu0 0
      %2682 = vmatprep.subr.bf16.mxu0 0
      %2683 = vmatpush1.bf16.msra.mxu0 0
      %2684 = vmatprep.subr.bf16.mxu0 0
      %2685 = vmatpush1.bf16.msra.mxu0 0
      %2686 = vmatprep.subr.bf16.mxu0 0
      %2687 = vmatpush1.bf16.msra.mxu0 0
      %2688 = vmatprep.subr.bf16.mxu0 0
      %2689 = vmatpush1.bf16.msra.mxu0 %v2545
      %2690 = vmatprep.subr.bf16.mxu0 0
      %2691 = vmatpush2.bf16.msra.mxu0 0
      %2692 = vmatprep.subr.bf16.mxu0 0
      %2693 = vmatpush2.bf16.msra.mxu0 0
      %2694 = vmatprep.subr.bf16.mxu0 0
      %2695 = vmatpush2.bf16.msra.mxu0 0
      %2696 = vmatprep.subr.bf16.mxu0 0
      %2697 = vmatpush2.bf16.msra.mxu0 0
      %2698 = vmatprep.subr.bf16.mxu0 0
      %2699 = vmatpush2.bf16.msra.mxu0 0
      %2700 = vmatprep.subr.bf16.mxu0 0
      %2701 = vmatpush2.bf16.msra.mxu0 0
      %2702 = vmatprep.subr.bf16.mxu0 0
      %2703 = vmatpush2.bf16.msra.mxu0 0
      %2704 = vmatprep.subr.bf16.mxu0 0
      %2705 = vmatpush2.bf16.msra.mxu0 0
      %2706 = vmatprep.mubr.bf16.mxu0 0
      %2707 = vmatmul.mubr.bf16.gmra.mxu0 %v2536
      %v2708 = vpop.f32.mrf.mxu0
      %v2709 = vadd.f32 %v2668, %v2708
      %v2710 = vpop.f32.mrf.mxu0
      %v2711 = vpop.f32.mrf.mxu0
      %v2712 = vadd.f32 %v2671, %v2711
      %v2713 = vpop.f32.mrf.mxu0
      %2714 = vdwg.mxu0
      %v2781 = vunpack.c.l.b16 %v2088
      %v2782 = vunpack.c.h.b16 %v2088
      %v2783 = vunpack.c.l.b16 %v2089
      %v2784 = vunpack.c.l.b16 %v2090
      %v2785 = vunpack.c.h.b16 %v2090
      %v2786 = vunpack.c.l.b16 %v2091
      %v2787 = vunpack.c.l.b16 %v2092
      %v2788 = vunpack.c.h.b16 %v2092
      %v2789 = vunpack.c.l.b16 %v2093
      %v2790 = vunpack.c.l.b16 %v2094
      %v2791 = vunpack.c.h.b16 %v2094
      %v2792 = vunpack.c.l.b16 %v2095
      %v2793 = vunpack.c.l.b16 %v2096
      %v2794 = vunpack.c.h.b16 %v2096
      %v2795 = vunpack.c.l.b16 %v2097
      %v2796 = vunpack.c.l.b16 %v2098
      %v2797 = vunpack.c.h.b16 %v2098
      %v2798 = vunpack.c.l.b16 %v2099
      %v2799 = vunpack.c.l.b16 %v2100
      %v2800 = vunpack.c.h.b16 %v2100
      %v2801 = vunpack.c.l.b16 %v2101
      %v2802 = vunpack.c.l.b16 %v2102
      %v2803 = vunpack.c.h.b16 %v2102
      %v2804 = vunpack.c.l.b16 %v2103
      %v2805 = vunpack.c.l.b16 %v2104
      %v2806 = vunpack.c.h.b16 %v2104
      %v2807 = vunpack.c.l.b16 %v2105
      %v2808 = vunpack.c.l.b16 %v2106
      %v2809 = vunpack.c.h.b16 %v2106
      %v2810 = vunpack.c.l.b16 %v2107
      %v2811 = vunpack.c.l.b16 %v2108
      %v2812 = vunpack.c.h.b16 %v2108
      %v2813 = vunpack.c.l.b16 %v2109
      %v2814 = vunpack.c.l.b16 %v2110
      %v2815 = vunpack.c.h.b16 %v2110
      %v2816 = vunpack.c.l.b16 %v2111
      %v2817 = vunpack.c.l.b16 %v2112
      %v2818 = vunpack.c.h.b16 %v2112
      %v2819 = vunpack.c.l.b16 %v2113
      %v2820 = vunpack.c.l.b16 %v2114
      %v2821 = vunpack.c.h.b16 %v2114
      %v2822 = vunpack.c.l.b16 %v2115
      %v2823 = vunpack.c.l.b16 %v2116
      %v2824 = vunpack.c.h.b16 %v2116
      %v2825 = vunpack.c.l.b16 %v2117
      %v2826 = vunpack.c.l.b16 %v2118
      %v2827 = vunpack.c.h.b16 %v2118
      %v2828 = vunpack.c.l.b16 %v2119
      %v2829 = vunpack.c.l.b16 %v2120
      %v2830 = vunpack.c.h.b16 %v2120
      %v2831 = vunpack.c.l.b16 %v2121
      %v2832 = vunpack.c.l.b16 %v2122
      %v2833 = vunpack.c.h.b16 %v2122
      %v2834 = vunpack.c.l.b16 %v2123
      %v2835 = vunpack.c.l.b16 %v2124
      %v2836 = vunpack.c.h.b16 %v2124
      %v2837 = vunpack.c.l.b16 %v2125
      %v2838 = vunpack.c.l.b16 %v2126
      %v2839 = vunpack.c.h.b16 %v2126
      %v2840 = vunpack.c.l.b16 %v2127
      %v2841 = vunpack.c.l.b16 %v2128
      %v2842 = vunpack.c.h.b16 %v2128
      %v2843 = vunpack.c.l.b16 %v2129
      %v2844 = vunpack.c.l.b16 %v2130
      %v2845 = vunpack.c.h.b16 %v2130
      %v2846 = vunpack.c.l.b16 %v2131
      %v2847 = vunpack.c.l.b16 %v2132
      %v2848 = vunpack.c.h.b16 %v2132
      %v2849 = vunpack.c.l.b16 %v2133
      %v2850 = vunpack.c.l.b16 %v2134
      %v2851 = vunpack.c.h.b16 %v2134
      %v2852 = vunpack.c.l.b16 %v2135
      %v2853 = vunpack.c.l.b16 %v2136
      %v2854 = vunpack.c.h.b16 %v2136
      %v2855 = vunpack.c.l.b16 %v2137
      %v2856 = vunpack.c.l.b16 %v2138
      %v2857 = vunpack.c.h.b16 %v2138
      %v2858 = vunpack.c.l.b16 %v2139
      %v2859 = vunpack.c.l.b16 %v2140
      %v2860 = vunpack.c.h.b16 %v2140
      %v2861 = vunpack.c.l.b16 %v2141
      %v2862 = vunpack.c.l.b16 %v2142
      %v2863 = vunpack.c.h.b16 %v2142
      %v2864 = vunpack.c.l.b16 %v2143
      %v2865 = vunpack.c.l.b16 %v2144
      %v2866 = vunpack.c.h.b16 %v2144
      %v2867 = vunpack.c.l.b16 %v2145
      %v2868 = vunpack.c.l.b16 %v2146
      %v2869 = vunpack.c.h.b16 %v2146
      %v2870 = vunpack.c.l.b16 %v2147
      %v2871 = vunpack.c.l.b16 %v2148
      %v2872 = vunpack.c.h.b16 %v2148
      %v2873 = vunpack.c.l.b16 %v2149
      %v2874 = vunpack.c.l.b16 %v2150
      %v2875 = vunpack.c.h.b16 %v2150
      %v2876 = vunpack.c.l.b16 %v2151
      %v2877 = vunpack.c.l.b16 %v2152
      %v2878 = vunpack.c.h.b16 %v2152
      %v2879 = vunpack.c.l.b16 %v2153
      %v2880 = vpack.c.b16 %v2784, %v2781
      %v2881 = vpack.c.b16 %v2785, %v2782
      %v2882 = vpack.c.b16 %v2786, %v2783
      %v2883 = vpack.c.b16 %v2790, %v2787
      %v2884 = vpack.c.b16 %v2791, %v2788
      %v2885 = vpack.c.b16 %v2792, %v2789
      %v2886 = vpack.c.b16 %v2796, %v2793
      %v2887 = vpack.c.b16 %v2797, %v2794
      %v2888 = vpack.c.b16 %v2798, %v2795
      %v2889 = vpack.c.b16 %v2802, %v2799
      %v2890 = vpack.c.b16 %v2803, %v2800
      %v2891 = vpack.c.b16 %v2804, %v2801
      %v2892 = vpack.c.b16 %v2808, %v2805
      %v2893 = vpack.c.b16 %v2809, %v2806
      %v2894 = vpack.c.b16 %v2810, %v2807
      %v2895 = vpack.c.b16 %v2814, %v2811
      %v2896 = vpack.c.b16 %v2815, %v2812
      %v2897 = vpack.c.b16 %v2816, %v2813
      %v2898 = vpack.c.b16 %v2820, %v2817
      %v2899 = vpack.c.b16 %v2821, %v2818
      %v2900 = vpack.c.b16 %v2822, %v2819
      %v2901 = vpack.c.b16 %v2826, %v2823
      %v2902 = vpack.c.b16 %v2827, %v2824
      %v2903 = vpack.c.b16 %v2828, %v2825
      %v2904 = vpack.c.b16 %v2832, %v2829
      %v2905 = vpack.c.b16 %v2833, %v2830
      %v2906 = vpack.c.b16 %v2834, %v2831
      %v2907 = vpack.c.b16 %v2838, %v2835
      %v2908 = vpack.c.b16 %v2839, %v2836
      %v2909 = vpack.c.b16 %v2840, %v2837
      %v2910 = vpack.c.b16 %v2844, %v2841
      %v2911 = vpack.c.b16 %v2845, %v2842
      %v2912 = vpack.c.b16 %v2846, %v2843
      %v2913 = vpack.c.b16 %v2850, %v2847
      %v2914 = vpack.c.b16 %v2851, %v2848
      %v2915 = vpack.c.b16 %v2852, %v2849
      %v2916 = vpack.c.b16 %v2856, %v2853
      %v2917 = vpack.c.b16 %v2857, %v2854
      %v2918 = vpack.c.b16 %v2858, %v2855
      %v2919 = vpack.c.b16 %v2862, %v2859
      %v2920 = vpack.c.b16 %v2863, %v2860
      %v2921 = vpack.c.b16 %v2864, %v2861
      %v2922 = vpack.c.b16 %v2868, %v2865
      %v2923 = vpack.c.b16 %v2869, %v2866
      %v2924 = vpack.c.b16 %v2870, %v2867
      %v2925 = vpack.c.b16 %v2874, %v2871
      %v2926 = vpack.c.b16 %v2875, %v2872
      %v2927 = vpack.c.b16 %v2876, %v2873
      %v2928 = vpack.c.b16 %v2877, %v2877
      %v2929 = vpack.c.b16 %v2878, %v2878
      %v2930 = vpack.c.b16 %v2879, %v2879
      %v2980 = vsel %vm368, %v2086, 0
      %v2983 = vand.u32 %v2928, %v835
      %v2986 = vand.u32 %v2929, %v835
      %v2989 = vand.u32 %v2930, %v835
      %2991 = vmatprep.subr.bf16.mxu0 %v2902
      %2992 = vmatpush1.bf16.msra.mxu0 %v2901
      %2993 = vmatprep.subr.bf16.mxu0 %v2899
      %2994 = vmatpush1.bf16.msra.mxu0 %v2898
      %2995 = vmatprep.subr.bf16.mxu0 %v2896
      %2996 = vmatpush1.bf16.msra.mxu0 %v2895
      %2997 = vmatprep.subr.bf16.mxu0 %v2893
      %2998 = vmatpush1.bf16.msra.mxu0 %v2892
      %2999 = vmatprep.subr.bf16.mxu0 %v2890
      %3000 = vmatpush1.bf16.msra.mxu0 %v2889
      %3001 = vmatprep.subr.bf16.mxu0 %v2887
      %3002 = vmatpush1.bf16.msra.mxu0 %v2886
      %3003 = vmatprep.subr.bf16.mxu0 %v2884
      %3004 = vmatpush1.bf16.msra.mxu0 %v2883
      %3005 = vmatprep.subr.bf16.mxu0 %v2881
      %3006 = vmatpush1.bf16.msra.mxu0 %v2880
      %3007 = vmatprep.subr.bf16.mxu0 %v2926
      %3008 = vmatpush2.bf16.msra.mxu0 %v2925
      %3009 = vmatprep.subr.bf16.mxu0 %v2923
      %3010 = vmatpush2.bf16.msra.mxu0 %v2922
      %3011 = vmatprep.subr.bf16.mxu0 %v2920
      %3012 = vmatpush2.bf16.msra.mxu0 %v2919
      %3013 = vmatprep.subr.bf16.mxu0 %v2917
      %3014 = vmatpush2.bf16.msra.mxu0 %v2916
      %3015 = vmatprep.subr.bf16.mxu0 %v2914
      %3016 = vmatpush2.bf16.msra.mxu0 %v2913
      %3017 = vmatprep.subr.bf16.mxu0 %v2911
      %3018 = vmatpush2.bf16.msra.mxu0 %v2910
      %3019 = vmatprep.subr.bf16.mxu0 %v2908
      %3020 = vmatpush2.bf16.msra.mxu0 %v2907
      %3021 = vmatprep.subr.bf16.mxu0 %v2905
      %3022 = vmatpush2.bf16.msra.mxu0 %v2904
      %3023 = vmatprep.mubr.bf16.mxu0 %v2085
      %3024 = vmatmul.mubr.bf16.gmra.mxu0 %v2084
      %v3025 = vpop.f32.mrf.mxu0
      %v3026 = vadd.f32 %v2625, %v3025
      %v3027 = vpop.f32.mrf.mxu0
      %v3028 = vadd.f32 %v2627, %v3027
      %v3029 = vpop.f32.mrf.mxu0
      %v3030 = vadd.f32 %v2629, %v3029
      %v3031 = vpop.f32.mrf.mxu0
      %v3032 = vadd.f32 %v2631, %v3031
      %3033 = vdwg.mxu0
      %3034 = vmatprep.subr.bf16.mxu0 0
      %3035 = vmatpush1.bf16.msra.mxu0 0
      %3036 = vmatprep.subr.bf16.mxu0 0
      %3037 = vmatpush1.bf16.msra.mxu0 0
      %3038 = vmatprep.subr.bf16.mxu0 0
      %3039 = vmatpush1.bf16.msra.mxu0 0
      %3040 = vmatprep.subr.bf16.mxu0 0
      %3041 = vmatpush1.bf16.msra.mxu0 0
      %3042 = vmatprep.subr.bf16.mxu0 0
      %3043 = vmatpush1.bf16.msra.mxu0 0
      %3044 = vmatprep.subr.bf16.mxu0 0
      %3045 = vmatpush1.bf16.msra.mxu0 0
      %3046 = vmatprep.subr.bf16.mxu0 0
      %3047 = vmatpush1.bf16.msra.mxu0 0
      %3048 = vmatprep.subr.bf16.mxu0 %v2986
      %3049 = vmatpush1.bf16.msra.mxu0 %v2983
      %3050 = vmatprep.subr.bf16.mxu0 0
      %3051 = vmatpush2.bf16.msra.mxu0 0
      %3052 = vmatprep.subr.bf16.mxu0 0
      %3053 = vmatpush2.bf16.msra.mxu0 0
      %3054 = vmatprep.subr.bf16.mxu0 0
      %3055 = vmatpush2.bf16.msra.mxu0 0
      %3056 = vmatprep.subr.bf16.mxu0 0
      %3057 = vmatpush2.bf16.msra.mxu0 0
      %3058 = vmatprep.subr.bf16.mxu0 0
      %3059 = vmatpush2.bf16.msra.mxu0 0
      %3060 = vmatprep.subr.bf16.mxu0 0
      %3061 = vmatpush2.bf16.msra.mxu0 0
      %3062 = vmatprep.subr.bf16.mxu0 0
      %3063 = vmatpush2.bf16.msra.mxu0 0
      %3064 = vmatprep.subr.bf16.mxu0 0
      %3065 = vmatpush2.bf16.msra.mxu0 0
      %3066 = vmatprep.mubr.bf16.mxu0 0
      %3067 = vmatmul.mubr.bf16.gmra.mxu0 %v2980
      %v3068 = vpop.f32.mrf.mxu0
      %v3069 = vadd.f32 %v3026, %v3068
      %v3070 = vpop.f32.mrf.mxu0
      %v3071 = vadd.f32 %v3028, %v3070
      %v3072 = vpop.f32.mrf.mxu0
      %v3073 = vadd.f32 %v3030, %v3072
      %v3074 = vpop.f32.mrf.mxu0
      %v3075 = vadd.f32 %v3032, %v3074
      %3076 = vdwg.mxu0
      %3077 = vmatprep.subr.bf16.mxu0 0
      %3078 = vmatpush1.bf16.msra.mxu0 %v2903
      %3079 = vmatprep.subr.bf16.mxu0 0
      %3080 = vmatpush1.bf16.msra.mxu0 %v2900
      %3081 = vmatprep.subr.bf16.mxu0 0
      %3082 = vmatpush1.bf16.msra.mxu0 %v2897
      %3083 = vmatprep.subr.bf16.mxu0 0
      %3084 = vmatpush1.bf16.msra.mxu0 %v2894
      %3085 = vmatprep.subr.bf16.mxu0 0
      %3086 = vmatpush1.bf16.msra.mxu0 %v2891
      %3087 = vmatprep.subr.bf16.mxu0 0
      %3088 = vmatpush1.bf16.msra.mxu0 %v2888
      %3089 = vmatprep.subr.bf16.mxu0 0
      %3090 = vmatpush1.bf16.msra.mxu0 %v2885
      %3091 = vmatprep.subr.bf16.mxu0 0
      %3092 = vmatpush1.bf16.msra.mxu0 %v2882
      %3093 = vmatprep.subr.bf16.mxu0 0
      %3094 = vmatpush2.bf16.msra.mxu0 %v2927
      %3095 = vmatprep.subr.bf16.mxu0 0
      %3096 = vmatpush2.bf16.msra.mxu0 %v2924
      %3097 = vmatprep.subr.bf16.mxu0 0
      %3098 = vmatpush2.bf16.msra.mxu0 %v2921
      %3099 = vmatprep.subr.bf16.mxu0 0
      %3100 = vmatpush2.bf16.msra.mxu0 %v2918
      %3101 = vmatprep.subr.bf16.mxu0 0
      %3102 = vmatpush2.bf16.msra.mxu0 %v2915
      %3103 = vmatprep.subr.bf16.mxu0 0
      %3104 = vmatpush2.bf16.msra.mxu0 %v2912
      %3105 = vmatprep.subr.bf16.mxu0 0
      %3106 = vmatpush2.bf16.msra.mxu0 %v2909
      %3107 = vmatprep.subr.bf16.mxu0 0
      %3108 = vmatpush2.bf16.msra.mxu0 %v2906
      %3109 = vmatprep.mubr.bf16.mxu0 %v2085
      %3110 = vmatmul.mubr.bf16.gmra.mxu0 %v2084
      %v3111 = vpop.f32.mrf.mxu0
      %v3112 = vadd.f32 %v2709, %v3111
      %v3113 = vpop.f32.mrf.mxu0
      %v3114 = vpop.f32.mrf.mxu0
      %v3115 = vadd.f32 %v2712, %v3114
      %v3116 = vpop.f32.mrf.mxu0
      %3117 = vdwg.mxu0
      %3118 = vmatprep.subr.bf16.mxu0 0
      %3119 = vmatpush1.bf16.msra.mxu0 0
      %3120 = vmatprep.subr.bf16.mxu0 0
      %3121 = vmatpush1.bf16.msra.mxu0 0
      %3122 = vmatprep.subr.bf16.mxu0 0
      %3123 = vmatpush1.bf16.msra.mxu0 0
      %3124 = vmatprep.subr.bf16.mxu0 0
      %3125 = vmatpush1.bf16.msra.mxu0 0
      %3126 = vmatprep.subr.bf16.mxu0 0
      %3127 = vmatpush1.bf16.msra.mxu0 0
      %3128 = vmatprep.subr.bf16.mxu0 0
      %3129 = vmatpush1.bf16.msra.mxu0 0
      %3130 = vmatprep.subr.bf16.mxu0 0
      %3131 = vmatpush1.bf16.msra.mxu0 0
      %3132 = vmatprep.subr.bf16.mxu0 0
      %3133 = vmatpush1.bf16.msra.mxu0 %v2989
      %3134 = vmatprep.subr.bf16.mxu0 0
      %3135 = vmatpush2.bf16.msra.mxu0 0
      %3136 = vmatprep.subr.bf16.mxu0 0
      %3137 = vmatpush2.bf16.msra.mxu0 0
      %3138 = vmatprep.subr.bf16.mxu0 0
      %3139 = vmatpush2.bf16.msra.mxu0 0
      %3140 = vmatprep.subr.bf16.mxu0 0
      %3141 = vmatpush2.bf16.msra.mxu0 0
      %3142 = vmatprep.subr.bf16.mxu0 0
      %3143 = vmatpush2.bf16.msra.mxu0 0
      %3144 = vmatprep.subr.bf16.mxu0 0
      %3145 = vmatpush2.bf16.msra.mxu0 0
      %3146 = vmatprep.subr.bf16.mxu0 0
      %3147 = vmatpush2.bf16.msra.mxu0 0
      %3148 = vmatprep.subr.bf16.mxu0 0
      %3149 = vmatpush2.bf16.msra.mxu0 0
      %3150 = vmatprep.mubr.bf16.mxu0 0
      %3151 = vmatmul.mubr.bf16.gmra.mxu0 %v2980
      %v3152 = vpop.f32.mrf.mxu0
      %v3153 = vadd.f32 %v3112, %v3152
      %v3154 = vpop.f32.mrf.mxu0
      %v3155 = vpop.f32.mrf.mxu0
      %v3156 = vadd.f32 %v3115, %v3155
      %v3157 = vpop.f32.mrf.mxu0
      %3158 = vdwg.mxu0
      %v3159 = vld [vmem:[#allocation2] sm:$0xfc]
      %v3160 = vld [vmem:[#allocation2 + $0x8] sm:$0xfc]
      %v3161 = vld [vmem:[#allocation2 + $0x10] sm:$0xfc]
      %v3162 = vld [vmem:[#allocation2 + $0x30] sm:$0x3]
      %v3163 = vld [vmem:[#allocation2 + $0x38] sm:$0x3]
      %v3164 = vld [vmem:[#allocation2 + $0x40] sm:$0x3]
      %v3165 = vpack.c.bf16 %v2081, %v3159
      %v3166 = vpack.c.bf16 %v2082, %v3160
      %v3167 = vpack.c.bf16 %v2083, %v3161
      %v3168 = vpack.c.bf16 %v3162, %v3162
      %v3169 = vpack.c.bf16 %v3163, %v3163
      %v3170 = vpack.c.bf16 %v3164, %v3164
      %s3171 = scalar_lea.vmem %s1, 1980
      %v3172 = vld [vmem:[%s3171] sm:$0xff]
      %v3173 = vld [vmem:[%s3171 + $0x8] sm:$0xf]
      %v3174 = vld [vmem:[%s3171 + $0xc] sm:$0xff]
      %v3175 = vld [vmem:[%s3171 + $0x14] sm:$0xf]
      %v3176 = vld [vmem:[%s3171 + $0x18] sm:$0xff]
      %v3177 = vld [vmem:[%s3171 + $0x20] sm:$0xf]
      %v3178 = vld [vmem:[%s3171 + $0x24] sm:$0xff]
      %v3179 = vld [vmem:[%s3171 + $0x2c] sm:$0xf]
      %v3180 = vld [vmem:[%s3171 + $0x30] sm:$0xff]
      %v3181 = vld [vmem:[%s3171 + $0x38] sm:$0xf]
      %v3182 = vld [vmem:[%s3171 + $0x3c] sm:$0xff]
      %v3183 = vld [vmem:[%s3171 + $0x44] sm:$0xf]
      %v3184 = vld [vmem:[%s3171 + $0x48] sm:$0xff]
      %v3185 = vld [vmem:[%s3171 + $0x50] sm:$0xf]
      %v3186 = vld [vmem:[%s3171 + $0x54] sm:$0xff]
      %v3187 = vld [vmem:[%s3171 + $0x5c] sm:$0xf]
      %v3188 = vld [vmem:[%s3171 + $0x60] sm:$0xff]
      %v3189 = vld [vmem:[%s3171 + $0x68] sm:$0xf]
      %v3190 = vld [vmem:[%s3171 + $0x6c] sm:$0xff]
      %v3191 = vld [vmem:[%s3171 + $0x74] sm:$0xf]
      %v3192 = vld [vmem:[%s3171 + $0x78] sm:$0xff]
      %v3193 = vld [vmem:[%s3171 + $0x80] sm:$0xf]
      %v3194 = vld [vmem:[%s3171 + $0x84] sm:$0xff]
      %v3195 = vld [vmem:[%s3171 + $0x8c] sm:$0xf]
      %v3196 = vld [vmem:[%s3171 + $0x90] sm:$0xff]
      %v3197 = vld [vmem:[%s3171 + $0x98] sm:$0xf]
      %v3198 = vld [vmem:[%s3171 + $0x9c] sm:$0xff]
      %v3199 = vld [vmem:[%s3171 + $0xa4] sm:$0xf]
      %v3200 = vld [vmem:[%s3171 + $0xa8] sm:$0xff]
      %v3201 = vld [vmem:[%s3171 + $0xb0] sm:$0xf]
      %v3202 = vld [vmem:[%s3171 + $0xb4] sm:$0xff]
      %v3203 = vld [vmem:[%s3171 + $0xbc] sm:$0xf]
      %v3204 = vld [vmem:[%s3171 + $0xc0] sm:$0xff]
      %v3205 = vld [vmem:[%s3171 + $0xc8] sm:$0xf]
      %v3206 = vld [vmem:[%s3171 + $0xcc] sm:$0xff]
      %v3207 = vld [vmem:[%s3171 + $0xd4] sm:$0xf]
      %v3208 = vld [vmem:[%s3171 + $0xd8] sm:$0xff]
      %v3209 = vld [vmem:[%s3171 + $0xe0] sm:$0xf]
      %v3210 = vld [vmem:[%s3171 + $0xe4] sm:$0xff]
      %v3211 = vld [vmem:[%s3171 + $0xec] sm:$0xf]
      %v3212 = vld [vmem:[%s3171 + $0xf0] sm:$0xff]
      %v3213 = vld [vmem:[%s3171 + $0xf8] sm:$0xf]
      %v3214 = vld [vmem:[%s3171 + $0xfc] sm:$0xff]
      %v3215 = vld [vmem:[%s3171 + $0x104] sm:$0xf]
      %v3216 = vld [vmem:[%s3171 + $0x108] sm:$0xff]
      %v3217 = vld [vmem:[%s3171 + $0x110] sm:$0xf]
      %v3218 = vld [vmem:[%s3171 + $0x114] sm:$0xff]
      %v3219 = vld [vmem:[%s3171 + $0x11c] sm:$0xf]
      %v3220 = vld [vmem:[%s3171 + $0x120] sm:$0xff]
      %v3221 = vld [vmem:[%s3171 + $0x128] sm:$0xf]
      %v3222 = vld [vmem:[%s3171 + $0x12c] sm:$0xff]
      %v3223 = vld [vmem:[%s3171 + $0x134] sm:$0xf]
      %v3224 = vld [vmem:[%s3171 + $0x138] sm:$0xff]
      %v3225 = vld [vmem:[%s3171 + $0x140] sm:$0xf]
      %v3226 = vld [vmem:[%s3171 + $0x144] sm:$0xff]
      %v3227 = vld [vmem:[%s3171 + $0x14c] sm:$0xf]
      %v3228 = vld [vmem:[%s3171 + $0x150] sm:$0xff]
      %v3229 = vld [vmem:[%s3171 + $0x158] sm:$0xf]
      %v3230 = vld [vmem:[%s3171 + $0x15c] sm:$0xff]
      %v3231 = vld [vmem:[%s3171 + $0x164] sm:$0xf]
      %v3232 = vld [vmem:[%s3171 + $0x168] sm:$0xff]
      %v3233 = vld [vmem:[%s3171 + $0x170] sm:$0xf]
      %v3234 = vld [vmem:[%s3171 + $0x174] sm:$0xff]
      %v3235 = vld [vmem:[%s3171 + $0x17c] sm:$0xf]
      %v3236 = vld [vmem:[%s3171 + $0x180] sm:$0x11]
      %v3237 = vld [vmem:[%s3171 + $0x188] sm:$0x1]
      %v3244 = vrot.slane %v3165, 1
      %v3245 = vrot.slane %v3168, 1
      %v3246 = vsel %vm1542, %v3244, %v3245
      %v3247 = vrot.slane %v3166, 1
      %v3248 = vrot.slane %v3169, 1
      %v3249 = vsel %vm1542, %v3247, %v3248
      %v3250 = vrot.slane %v3167, 1
      %v3251 = vrot.slane %v3170, 1
      %v3252 = vsel %vm1542, %v3250, %v3251
      %v3321 = vunpack.c.l.b16 %v3172
      %v3322 = vunpack.c.h.b16 %v3172
      %v3323 = vunpack.c.l.b16 %v3173
      %v3324 = vunpack.c.l.b16 %v3174
      %v3325 = vunpack.c.h.b16 %v3174
      %v3326 = vunpack.c.l.b16 %v3175
      %v3327 = vunpack.c.l.b16 %v3176
      %v3328 = vunpack.c.h.b16 %v3176
      %v3329 = vunpack.c.l.b16 %v3177
      %v3330 = vunpack.c.l.b16 %v3178
      %v3331 = vunpack.c.h.b16 %v3178
      %v3332 = vunpack.c.l.b16 %v3179
      %v3333 = vunpack.c.l.b16 %v3180
      %v3334 = vunpack.c.h.b16 %v3180
      %v3335 = vunpack.c.l.b16 %v3181
      %v3336 = vunpack.c.l.b16 %v3182
      %v3337 = vunpack.c.h.b16 %v3182
      %v3338 = vunpack.c.l.b16 %v3183
      %v3339 = vunpack.c.l.b16 %v3184
      %v3340 = vunpack.c.h.b16 %v3184
      %v3341 = vunpack.c.l.b16 %v3185
      %v3342 = vunpack.c.l.b16 %v3186
      %v3343 = vunpack.c.h.b16 %v3186
      %v3344 = vunpack.c.l.b16 %v3187
      %v3345 = vunpack.c.l.b16 %v3188
      %v3346 = vunpack.c.h.b16 %v3188
      %v3347 = vunpack.c.l.b16 %v3189
      %v3348 = vunpack.c.l.b16 %v3190
      %v3349 = vunpack.c.h.b16 %v3190
      %v3350 = vunpack.c.l.b16 %v3191
      %v3351 = vunpack.c.l.b16 %v3192
      %v3352 = vunpack.c.h.b16 %v3192
      %v3353 = vunpack.c.l.b16 %v3193
      %v3354 = vunpack.c.l.b16 %v3194
      %v3355 = vunpack.c.h.b16 %v3194
      %v3356 = vunpack.c.l.b16 %v3195
      %v3357 = vunpack.c.l.b16 %v3196
      %v3358 = vunpack.c.h.b16 %v3196
      %v3359 = vunpack.c.l.b16 %v3197
      %v3360 = vunpack.c.l.b16 %v3198
      %v3361 = vunpack.c.h.b16 %v3198
      %v3362 = vunpack.c.l.b16 %v3199
      %v3363 = vunpack.c.l.b16 %v3200
      %v3364 = vunpack.c.h.b16 %v3200
      %v3365 = vunpack.c.l.b16 %v3201
      %v3366 = vunpack.c.l.b16 %v3202
      %v3367 = vunpack.c.h.b16 %v3202
      %v3368 = vunpack.c.l.b16 %v3203
      %v3369 = vunpack.c.l.b16 %v3204
      %v3370 = vunpack.c.h.b16 %v3204
      %v3371 = vunpack.c.l.b16 %v3205
      %v3372 = vunpack.c.l.b16 %v3206
      %v3373 = vunpack.c.h.b16 %v3206
      %v3374 = vunpack.c.l.b16 %v3207
      %v3375 = vunpack.c.l.b16 %v3208
      %v3376 = vunpack.c.h.b16 %v3208
      %v3377 = vunpack.c.l.b16 %v3209
      %v3378 = vunpack.c.l.b16 %v3210
      %v3379 = vunpack.c.h.b16 %v3210
      %v3380 = vunpack.c.l.b16 %v3211
      %v3381 = vunpack.c.l.b16 %v3212
      %v3382 = vunpack.c.h.b16 %v3212
      %v3383 = vunpack.c.l.b16 %v3213
      %v3384 = vunpack.c.l.b16 %v3214
      %v3385 = vunpack.c.h.b16 %v3214
      %v3386 = vunpack.c.l.b16 %v3215
      %v3387 = vunpack.c.l.b16 %v3216
      %v3388 = vunpack.c.h.b16 %v3216
      %v3389 = vunpack.c.l.b16 %v3217
      %v3390 = vunpack.c.l.b16 %v3218
      %v3391 = vunpack.c.h.b16 %v3218
      %v3392 = vunpack.c.l.b16 %v3219
      %v3393 = vunpack.c.l.b16 %v3220
      %v3394 = vunpack.c.h.b16 %v3220
      %v3395 = vunpack.c.l.b16 %v3221
      %v3396 = vunpack.c.l.b16 %v3222
      %v3397 = vunpack.c.h.b16 %v3222
      %v3398 = vunpack.c.l.b16 %v3223
      %v3399 = vunpack.c.l.b16 %v3224
      %v3400 = vunpack.c.h.b16 %v3224
      %v3401 = vunpack.c.l.b16 %v3225
      %v3402 = vunpack.c.l.b16 %v3226
      %v3403 = vunpack.c.h.b16 %v3226
      %v3404 = vunpack.c.l.b16 %v3227
      %v3405 = vunpack.c.l.b16 %v3228
      %v3406 = vunpack.c.h.b16 %v3228
      %v3407 = vunpack.c.l.b16 %v3229
      %v3408 = vunpack.c.l.b16 %v3230
      %v3409 = vunpack.c.h.b16 %v3230
      %v3410 = vunpack.c.l.b16 %v3231
      %v3411 = vunpack.c.l.b16 %v3232
      %v3412 = vunpack.c.h.b16 %v3232
      %v3413 = vunpack.c.l.b16 %v3233
      %v3414 = vunpack.c.l.b16 %v3234
      %v3415 = vunpack.c.h.b16 %v3234
      %v3416 = vunpack.c.l.b16 %v3235
      %v3417 = vunpack.c.l.b16 %v3236
      %v3418 = vunpack.c.h.b16 %v3236
      %v3419 = vunpack.c.l.b16 %v3237
      %v3420 = vpack.c.b16 %v3324, %v3321
      %v3421 = vpack.c.b16 %v3325, %v3322
      %v3422 = vpack.c.b16 %v3326, %v3323
      %v3423 = vpack.c.b16 %v3330, %v3327
      %v3424 = vpack.c.b16 %v3331, %v3328
      %v3425 = vpack.c.b16 %v3332, %v3329
      %v3426 = vpack.c.b16 %v3336, %v3333
      %v3427 = vpack.c.b16 %v3337, %v3334
      %v3428 = vpack.c.b16 %v3338, %v3335
      %v3429 = vpack.c.b16 %v3342, %v3339
      %v3430 = vpack.c.b16 %v3343, %v3340
      %v3431 = vpack.c.b16 %v3344, %v3341
      %v3432 = vpack.c.b16 %v3348, %v3345
      %v3433 = vpack.c.b16 %v3349, %v3346
      %v3434 = vpack.c.b16 %v3350, %v3347
      %v3435 = vpack.c.b16 %v3354, %v3351
      %v3436 = vpack.c.b16 %v3355, %v3352
      %v3437 = vpack.c.b16 %v3356, %v3353
      %v3438 = vpack.c.b16 %v3360, %v3357
      %v3439 = vpack.c.b16 %v3361, %v3358
      %v3440 = vpack.c.b16 %v3362, %v3359
      %v3441 = vpack.c.b16 %v3366, %v3363
      %v3442 = vpack.c.b16 %v3367, %v3364
      %v3443 = vpack.c.b16 %v3368, %v3365
      %v3444 = vpack.c.b16 %v3372, %v3369
      %v3445 = vpack.c.b16 %v3373, %v3370
      %v3446 = vpack.c.b16 %v3374, %v3371
      %v3447 = vpack.c.b16 %v3378, %v3375
      %v3448 = vpack.c.b16 %v3379, %v3376
      %v3449 = vpack.c.b16 %v3380, %v3377
      %v3450 = vpack.c.b16 %v3384, %v3381
      %v3451 = vpack.c.b16 %v3385, %v3382
      %v3452 = vpack.c.b16 %v3386, %v3383
      %v3453 = vpack.c.b16 %v3390, %v3387
      %v3454 = vpack.c.b16 %v3391, %v3388
      %v3455 = vpack.c.b16 %v3392, %v3389
      %v3456 = vpack.c.b16 %v3396, %v3393
      %v3457 = vpack.c.b16 %v3397, %v3394
      %v3458 = vpack.c.b16 %v3398, %v3395
      %v3459 = vpack.c.b16 %v3402, %v3399
      %v3460 = vpack.c.b16 %v3403, %v3400
      %v3461 = vpack.c.b16 %v3404, %v3401
      %v3462 = vpack.c.b16 %v3408, %v3405
      %v3463 = vpack.c.b16 %v3409, %v3406
      %v3464 = vpack.c.b16 %v3410, %v3407
      %v3465 = vpack.c.b16 %v3414, %v3411
      %v3466 = vpack.c.b16 %v3415, %v3412
      %v3467 = vpack.c.b16 %v3416, %v3413
      %v3468 = vpack.c.b16 %v3417, %v3417
      %v3469 = vpack.c.b16 %v3418, %v3418
      %v3470 = vpack.c.b16 %v3419, %v3419
      %v3520 = vsel %vm368, %v3252, 0
      %v3523 = vand.u32 %v3468, %v835
      %v3526 = vand.u32 %v3469, %v835
      %v3529 = vand.u32 %v3470, %v835
      %3531 = vmatprep.subr.bf16.mxu0 %v3442
      %3532 = vmatpush1.bf16.msra.mxu0 %v3441
      %3533 = vmatprep.subr.bf16.mxu0 %v3439
      %3534 = vmatpush1.bf16.msra.mxu0 %v3438
      %3535 = vmatprep.subr.bf16.mxu0 %v3436
      %3536 = vmatpush1.bf16.msra.mxu0 %v3435
      %3537 = vmatprep.subr.bf16.mxu0 %v3433
      %3538 = vmatpush1.bf16.msra.mxu0 %v3432
      %3539 = vmatprep.subr.bf16.mxu0 %v3430
      %3540 = vmatpush1.bf16.msra.mxu0 %v3429
      %3541 = vmatprep.subr.bf16.mxu0 %v3427
      %3542 = vmatpush1.bf16.msra.mxu0 %v3426
      %3543 = vmatprep.subr.bf16.mxu0 %v3424
      %3544 = vmatpush1.bf16.msra.mxu0 %v3423
      %3545 = vmatprep.subr.bf16.mxu0 %v3421
      %3546 = vmatpush1.bf16.msra.mxu0 %v3420
      %3547 = vmatprep.subr.bf16.mxu0 %v3466
      %3548 = vmatpush2.bf16.msra.mxu0 %v3465
      %3549 = vmatprep.subr.bf16.mxu0 %v3463
      %3550 = vmatpush2.bf16.msra.mxu0 %v3462
      %3551 = vmatprep.subr.bf16.mxu0 %v3460
      %3552 = vmatpush2.bf16.msra.mxu0 %v3459
      %3553 = vmatprep.subr.bf16.mxu0 %v3457
      %3554 = vmatpush2.bf16.msra.mxu0 %v3456
      %3555 = vmatprep.subr.bf16.mxu0 %v3454
      %3556 = vmatpush2.bf16.msra.mxu0 %v3453
      %3557 = vmatprep.subr.bf16.mxu0 %v3451
      %3558 = vmatpush2.bf16.msra.mxu0 %v3450
      %3559 = vmatprep.subr.bf16.mxu0 %v3448
      %3560 = vmatpush2.bf16.msra.mxu0 %v3447
      %3561 = vmatprep.subr.bf16.mxu0 %v3445
      %3562 = vmatpush2.bf16.msra.mxu0 %v3444
      %3563 = vmatprep.mubr.bf16.mxu0 %v3249
      %3564 = vmatmul.mubr.bf16.gmra.mxu0 %v3246
      %v3565 = vpop.f32.mrf.mxu0
      %v3566 = vadd.f32 0.0, %v3565
      %v3567 = vpop.f32.mrf.mxu0
      %v3568 = vadd.f32 0.0, %v3567
      %v3569 = vpop.f32.mrf.mxu0
      %v3570 = vadd.f32 0.0, %v3569
      %v3571 = vpop.f32.mrf.mxu0
      %v3572 = vadd.f32 0.0, %v3571
      %3573 = vdwg.mxu0
      %3574 = vmatprep.subr.bf16.mxu0 0
      %3575 = vmatpush1.bf16.msra.mxu0 0
      %3576 = vmatprep.subr.bf16.mxu0 0
      %3577 = vmatpush1.bf16.msra.mxu0 0
      %3578 = vmatprep.subr.bf16.mxu0 0
      %3579 = vmatpush1.bf16.msra.mxu0 0
      %3580 = vmatprep.subr.bf16.mxu0 0
      %3581 = vmatpush1.bf16.msra.mxu0 0
      %3582 = vmatprep.subr.bf16.mxu0 0
      %3583 = vmatpush1.bf16.msra.mxu0 0
      %3584 = vmatprep.subr.bf16.mxu0 0
      %3585 = vmatpush1.bf16.msra.mxu0 0
      %3586 = vmatprep.subr.bf16.mxu0 0
      %3587 = vmatpush1.bf16.msra.mxu0 0
      %3588 = vmatprep.subr.bf16.mxu0 %v3526
      %3589 = vmatpush1.bf16.msra.mxu0 %v3523
      %3590 = vmatprep.subr.bf16.mxu0 0
      %3591 = vmatpush2.bf16.msra.mxu0 0
      %3592 = vmatprep.subr.bf16.mxu0 0
      %3593 = vmatpush2.bf16.msra.mxu0 0
      %3594 = vmatprep.subr.bf16.mxu0 0
      %3595 = vmatpush2.bf16.msra.mxu0 0
      %3596 = vmatprep.subr.bf16.mxu0 0
      %3597 = vmatpush2.bf16.msra.mxu0 0
      %3598 = vmatprep.subr.bf16.mxu0 0
      %3599 = vmatpush2.bf16.msra.mxu0 0
      %3600 = vmatprep.subr.bf16.mxu0 0
      %3601 = vmatpush2.bf16.msra.mxu0 0
      %3602 = vmatprep.subr.bf16.mxu0 0
      %3603 = vmatpush2.bf16.msra.mxu0 0
      %3604 = vmatprep.subr.bf16.mxu0 0
      %3605 = vmatpush2.bf16.msra.mxu0 0
      %3606 = vmatprep.mubr.bf16.mxu0 0
      %3607 = vmatmul.mubr.bf16.gmra.mxu0 %v3520
      %v3608 = vpop.f32.mrf.mxu0
      %v3609 = vadd.f32 %v3566, %v3608
      %v3610 = vpop.f32.mrf.mxu0
      %v3611 = vadd.f32 %v3568, %v3610
      %v3612 = vpop.f32.mrf.mxu0
      %v3613 = vadd.f32 %v3570, %v3612
      %v3614 = vpop.f32.mrf.mxu0
      %v3615 = vadd.f32 %v3572, %v3614
      %3616 = vdwg.mxu0
      %3617 = vmatprep.subr.bf16.mxu0 0
      %3618 = vmatpush1.bf16.msra.mxu0 %v3443
      %3619 = vmatprep.subr.bf16.mxu0 0
      %3620 = vmatpush1.bf16.msra.mxu0 %v3440
      %3621 = vmatprep.subr.bf16.mxu0 0
      %3622 = vmatpush1.bf16.msra.mxu0 %v3437
      %3623 = vmatprep.subr.bf16.mxu0 0
      %3624 = vmatpush1.bf16.msra.mxu0 %v3434
      %3625 = vmatprep.subr.bf16.mxu0 0
      %3626 = vmatpush1.bf16.msra.mxu0 %v3431
      %3627 = vmatprep.subr.bf16.mxu0 0
      %3628 = vmatpush1.bf16.msra.mxu0 %v3428
      %3629 = vmatprep.subr.bf16.mxu0 0
      %3630 = vmatpush1.bf16.msra.mxu0 %v3425
      %3631 = vmatprep.subr.bf16.mxu0 0
      %3632 = vmatpush1.bf16.msra.mxu0 %v3422
      %3633 = vmatprep.subr.bf16.mxu0 0
      %3634 = vmatpush2.bf16.msra.mxu0 %v3467
      %3635 = vmatprep.subr.bf16.mxu0 0
      %3636 = vmatpush2.bf16.msra.mxu0 %v3464
      %3637 = vmatprep.subr.bf16.mxu0 0
      %3638 = vmatpush2.bf16.msra.mxu0 %v3461
      %3639 = vmatprep.subr.bf16.mxu0 0
      %3640 = vmatpush2.bf16.msra.mxu0 %v3458
      %3641 = vmatprep.subr.bf16.mxu0 0
      %3642 = vmatpush2.bf16.msra.mxu0 %v3455
      %3643 = vmatprep.subr.bf16.mxu0 0
      %3644 = vmatpush2.bf16.msra.mxu0 %v3452
      %3645 = vmatprep.subr.bf16.mxu0 0
      %3646 = vmatpush2.bf16.msra.mxu0 %v3449
      %3647 = vmatprep.subr.bf16.mxu0 0
      %3648 = vmatpush2.bf16.msra.mxu0 %v3446
      %3649 = vmatprep.mubr.bf16.mxu0 %v3249
      %3650 = vmatmul.mubr.bf16.gmra.mxu0 %v3246
      %v3651 = vpop.f32.mrf.mxu0
      %v3652 = vadd.f32 0.0, %v3651
      %v3653 = vpop.f32.mrf.mxu0
      %v3654 = vpop.f32.mrf.mxu0
      %v3655 = vadd.f32 0.0, %v3654
      %v3656 = vpop.f32.mrf.mxu0
      %3657 = vdwg.mxu0
      %3658 = vmatprep.subr.bf16.mxu0 0
      %3659 = vmatpush1.bf16.msra.mxu0 0
      %3660 = vmatprep.subr.bf16.mxu0 0
      %3661 = vmatpush1.bf16.msra.mxu0 0
      %3662 = vmatprep.subr.bf16.mxu0 0
      %3663 = vmatpush1.bf16.msra.mxu0 0
      %3664 = vmatprep.subr.bf16.mxu0 0
      %3665 = vmatpush1.bf16.msra.mxu0 0
      %3666 = vmatprep.subr.bf16.mxu0 0
      %3667 = vmatpush1.bf16.msra.mxu0 0
      %3668 = vmatprep.subr.bf16.mxu0 0
      %3669 = vmatpush1.bf16.msra.mxu0 0
      %3670 = vmatprep.subr.bf16.mxu0 0
      %3671 = vmatpush1.bf16.msra.mxu0 0
      %3672 = vmatprep.subr.bf16.mxu0 0
      %3673 = vmatpush1.bf16.msra.mxu0 %v3529
      %3674 = vmatprep.subr.bf16.mxu0 0
      %3675 = vmatpush2.bf16.msra.mxu0 0
      %3676 = vmatprep.subr.bf16.mxu0 0
      %3677 = vmatpush2.bf16.msra.mxu0 0
      %3678 = vmatprep.subr.bf16.mxu0 0
      %3679 = vmatpush2.bf16.msra.mxu0 0
      %3680 = vmatprep.subr.bf16.mxu0 0
      %3681 = vmatpush2.bf16.msra.mxu0 0
      %3682 = vmatprep.subr.bf16.mxu0 0
      %3683 = vmatpush2.bf16.msra.mxu0 0
      %3684 = vmatprep.subr.bf16.mxu0 0
      %3685 = vmatpush2.bf16.msra.mxu0 0
      %3686 = vmatprep.subr.bf16.mxu0 0
      %3687 = vmatpush2.bf16.msra.mxu0 0
      %3688 = vmatprep.subr.bf16.mxu0 0
      %3689 = vmatpush2.bf16.msra.mxu0 0
      %3690 = vmatprep.mubr.bf16.mxu0 0
      %3691 = vmatmul.mubr.bf16.gmra.mxu0 %v3520
      %v3692 = vpop.f32.mrf.mxu0
      %v3693 = vadd.f32 %v3652, %v3692
      %v3694 = vpop.f32.mrf.mxu0
      %v3695 = vpop.f32.mrf.mxu0
      %v3696 = vadd.f32 %v3655, %v3695
      %v3697 = vpop.f32.mrf.mxu0
      %3698 = vdwg.mxu0
      %v3699 = vadd.f32 %v3069, %v3609
      %v3700 = vadd.f32 %v3071, %v3611
      %v3701 = vadd.f32 %v3153, %v3693
      %v3702 = vadd.f32 %v3073, %v3613
      %v3703 = vadd.f32 %v3075, %v3615
      %v3704 = vadd.f32 %v3156, %v3696
      %s3705 = scalar_lea.vmem %s2, 3
      %v3706 = vld [vmem:[%s3705] sm:$0x7]
      %v3708 = vlaneseq
      %v3709 = vshrl.u32 %v3708, 7
      %v3710 = vsub.s32 0, %v3709
      %v3711 = vrot.slane %v3706, %v3710
      %v3712 = vlaneseq
      %v3713 = vshrl.u32 %v3712, 7
      %v3714 = vsub.s32 1, %v3713
      %v3715 = vrot.slane %v3706, %v3714
      %v3716 = vlaneseq
      %v3717 = vshrl.u32 %v3716, 7
      %v3718 = vsub.s32 2, %v3717
      %v3719 = vrot.slane %v3706, %v3718
      %v3723 = vadd.f32 %v3699, %v3711
      %v3724 = vadd.f32 %v3700, %v3715
      %v3725 = vadd.f32 %v3701, %v3719
      %v3726 = vadd.f32 %v3702, %v3711
      %v3727 = vadd.f32 %v3703, %v3715
      %v3728 = vadd.f32 %v3704, %v3719
      %vm3729 = vcmp.gt.f32.partialorder %v3723, 0.0
      %vm3730 = vcmp.gt.f32.partialorder %v3724, 0.0
      %vm3731 = vcmp.gt.f32.partialorder %v3725, 0.0
      %vm3732 = vcmp.gt.f32.partialorder %v3726, 0.0
      %vm3733 = vcmp.gt.f32.partialorder %v3727, 0.0
      %vm3734 = vcmp.gt.f32.partialorder %v3728, 0.0
      %v3735 = vmul.f32 %v3723, 0.2
      %v3736 = vmul.f32 %v3724, 0.2
      %v3737 = vmul.f32 %v3725, 0.2
      %v3738 = vmul.f32 %v3726, 0.2
      %v3739 = vmul.f32 %v3727, 0.2
      %v3740 = vmul.f32 %v3728, 0.2
      %v3741 = vsel %vm3729, %v3723, %v3735
      %v3742 = vsel %vm3730, %v3724, %v3736
      %v3743 = vsel %vm3731, %v3725, %v3737
      %v3744 = vsel %vm3732, %v3726, %v3738
      %v3745 = vsel %vm3733, %v3727, %v3739
      %v3746 = vsel %vm3734, %v3728, %v3740
      %v3753 = vrot.slane %v3741, 7
      %v3754 = vrot.slane %v3742, 7
      %v3755 = vrot.slane %v3743, 7
      %v3756 = vrot.slane %v3744, 7
      %v3757 = vsel %vm343, %v3753, %v3756
      %v3758 = vrot.slane %v3745, 7
      %v3759 = vsel %vm343, %v3754, %v3758
      %v3760 = vrot.slane %v3746, 7
      %v3761 = vsel %vm343, %v3755, %v3760
      %3771 = vst [vmem:[#allocation2] sm:$0xfe] %v3753
      %3772 = vst [vmem:[#allocation2 + $0x8] sm:$0xfe] %v3754
      %3773 = vst.msk [vmem:[#allocation2 + $0x10] sm:$0xfe] %vm364, %v3755
      %3774 = vst [vmem:[#allocation2 + $0x18] sm:$0xff] %v3757
      %3775 = vst [vmem:[#allocation2 + $0x20] sm:$0xff] %v3759
      %3776 = vst.msk [vmem:[#allocation2 + $0x28] sm:$0xff] %vm368, %v3761
      %3777 = vst [vmem:[#allocation2 + $0x30] sm:$0x1] %v3756
      %3778 = vst [vmem:[#allocation2 + $0x38] sm:$0x1] %v3758
      %3779 = vst.msk [vmem:[#allocation2 + $0x40] sm:$0x1] %vm372, %v3760
      %v3780 = vld [vmem:[#allocation2] sm:$0xff]
      %v3781 = vld [vmem:[#allocation2 + $0x8] sm:$0xff]
      %v3782 = vld [vmem:[#allocation2 + $0x10] sm:$0xff]
      %v3783 = vld [vmem:[#allocation2 + $0x18] sm:$0xff]
      %v3784 = vld [vmem:[#allocation2 + $0x20] sm:$0xff]
      %v3785 = vld [vmem:[#allocation2 + $0x28] sm:$0xff]
      %v3786 = vpack.c.bf16 %v3783, %v3780
      %v3787 = vpack.c.bf16 %v3784, %v3781
      %v3788 = vpack.c.bf16 %v3785, %v3782
      %s3789 = scalar_lea.vmem %s1, 2376
      %v3790 = vld [vmem:[%s3789] sm:$0xff]
      %v3791 = vld [vmem:[%s3789 + $0x8] sm:$0xf]
      %v3792 = vld [vmem:[%s3789 + $0xc] sm:$0xff]
      %v3793 = vld [vmem:[%s3789 + $0x14] sm:$0xf]
      %v3794 = vld [vmem:[%s3789 + $0x18] sm:$0xff]
      %v3795 = vld [vmem:[%s3789 + $0x20] sm:$0xf]
      %v3796 = vld [vmem:[%s3789 + $0x24] sm:$0xff]
      %v3797 = vld [vmem:[%s3789 + $0x2c] sm:$0xf]
      %v3798 = vld [vmem:[%s3789 + $0x30] sm:$0xff]
      %v3799 = vld [vmem:[%s3789 + $0x38] sm:$0xf]
      %v3800 = vld [vmem:[%s3789 + $0x3c] sm:$0xff]
      %v3801 = vld [vmem:[%s3789 + $0x44] sm:$0xf]
      %v3802 = vld [vmem:[%s3789 + $0x48] sm:$0xff]
      %v3803 = vld [vmem:[%s3789 + $0x50] sm:$0xf]
      %v3804 = vld [vmem:[%s3789 + $0x54] sm:$0xff]
      %v3805 = vld [vmem:[%s3789 + $0x5c] sm:$0xf]
      %v3806 = vld [vmem:[%s3789 + $0x60] sm:$0xff]
      %v3807 = vld [vmem:[%s3789 + $0x68] sm:$0xf]
      %v3808 = vld [vmem:[%s3789 + $0x6c] sm:$0xff]
      %v3809 = vld [vmem:[%s3789 + $0x74] sm:$0xf]
      %v3810 = vld [vmem:[%s3789 + $0x78] sm:$0xff]
      %v3811 = vld [vmem:[%s3789 + $0x80] sm:$0xf]
      %v3812 = vld [vmem:[%s3789 + $0x84] sm:$0xff]
      %v3813 = vld [vmem:[%s3789 + $0x8c] sm:$0xf]
      %v3814 = vld [vmem:[%s3789 + $0x90] sm:$0xff]
      %v3815 = vld [vmem:[%s3789 + $0x98] sm:$0xf]
      %v3816 = vld [vmem:[%s3789 + $0x9c] sm:$0xff]
      %v3817 = vld [vmem:[%s3789 + $0xa4] sm:$0xf]
      %v3818 = vld [vmem:[%s3789 + $0xa8] sm:$0xff]
      %v3819 = vld [vmem:[%s3789 + $0xb0] sm:$0xf]
      %v3820 = vld [vmem:[%s3789 + $0xb4] sm:$0xff]
      %v3821 = vld [vmem:[%s3789 + $0xbc] sm:$0xf]
      %v3822 = vld [vmem:[%s3789 + $0xc0] sm:$0xff]
      %v3823 = vld [vmem:[%s3789 + $0xc8] sm:$0xf]
      %v3824 = vld [vmem:[%s3789 + $0xcc] sm:$0xff]
      %v3825 = vld [vmem:[%s3789 + $0xd4] sm:$0xf]
      %v3826 = vld [vmem:[%s3789 + $0xd8] sm:$0xff]
      %v3827 = vld [vmem:[%s3789 + $0xe0] sm:$0xf]
      %v3828 = vld [vmem:[%s3789 + $0xe4] sm:$0xff]
      %v3829 = vld [vmem:[%s3789 + $0xec] sm:$0xf]
      %v3830 = vld [vmem:[%s3789 + $0xf0] sm:$0xff]
      %v3831 = vld [vmem:[%s3789 + $0xf8] sm:$0xf]
      %v3832 = vld [vmem:[%s3789 + $0xfc] sm:$0xff]
      %v3833 = vld [vmem:[%s3789 + $0x104] sm:$0xf]
      %v3834 = vld [vmem:[%s3789 + $0x108] sm:$0xff]
      %v3835 = vld [vmem:[%s3789 + $0x110] sm:$0xf]
      %v3836 = vld [vmem:[%s3789 + $0x114] sm:$0xff]
      %v3837 = vld [vmem:[%s3789 + $0x11c] sm:$0xf]
      %v3838 = vld [vmem:[%s3789 + $0x120] sm:$0xff]
      %v3839 = vld [vmem:[%s3789 + $0x128] sm:$0xf]
      %v3840 = vld [vmem:[%s3789 + $0x12c] sm:$0xff]
      %v3841 = vld [vmem:[%s3789 + $0x134] sm:$0xf]
      %v3842 = vld [vmem:[%s3789 + $0x138] sm:$0xff]
      %v3843 = vld [vmem:[%s3789 + $0x140] sm:$0xf]
      %v3844 = vld [vmem:[%s3789 + $0x144] sm:$0xff]
      %v3845 = vld [vmem:[%s3789 + $0x14c] sm:$0xf]
      %v3846 = vld [vmem:[%s3789 + $0x150] sm:$0xff]
      %v3847 = vld [vmem:[%s3789 + $0x158] sm:$0xf]
      %v3848 = vld [vmem:[%s3789 + $0x15c] sm:$0xff]
      %v3849 = vld [vmem:[%s3789 + $0x164] sm:$0xf]
      %v3850 = vld [vmem:[%s3789 + $0x168] sm:$0xff]
      %v3851 = vld [vmem:[%s3789 + $0x170] sm:$0xf]
      %v3852 = vld [vmem:[%s3789 + $0x174] sm:$0xff]
      %v3853 = vld [vmem:[%s3789 + $0x17c] sm:$0xf]
      %v3854 = vld [vmem:[%s3789 + $0x180] sm:$0x11]
      %v3855 = vld [vmem:[%s3789 + $0x188] sm:$0x1]
      %v3856 = vld [vmem:[#allocation2] sm:$0xfe]
      %v3857 = vld [vmem:[#allocation2 + $0x8] sm:$0xfe]
      %v3858 = vld [vmem:[#allocation2 + $0x10] sm:$0xfe]
      %v3859 = vld [vmem:[#allocation2 + $0x30] sm:$0x1]
      %v3860 = vld [vmem:[#allocation2 + $0x38] sm:$0x1]
      %v3861 = vld [vmem:[#allocation2 + $0x40] sm:$0x1]
      %v3862 = vpack.c.bf16 %v3783, %v3856
      %v3863 = vpack.c.bf16 %v3784, %v3857
      %v3864 = vpack.c.bf16 %v3785, %v3858
      %v3865 = vpack.c.bf16 %v3859, %v3859
      %v3866 = vpack.c.bf16 %v3860, %v3860
      %v3867 = vpack.c.bf16 %v3861, %v3861
      %s3868 = scalar_lea.vmem %s1, 2772
      %v3869 = vld [vmem:[%s3868] sm:$0xff]
      %v3870 = vld [vmem:[%s3868 + $0x8] sm:$0xf]
      %v3871 = vld [vmem:[%s3868 + $0xc] sm:$0xff]
      %v3872 = vld [vmem:[%s3868 + $0x14] sm:$0xf]
      %v3873 = vld [vmem:[%s3868 + $0x18] sm:$0xff]
      %v3874 = vld [vmem:[%s3868 + $0x20] sm:$0xf]
      %v3875 = vld [vmem:[%s3868 + $0x24] sm:$0xff]
      %v3876 = vld [vmem:[%s3868 + $0x2c] sm:$0xf]
      %v3877 = vld [vmem:[%s3868 + $0x30] sm:$0xff]
      %v3878 = vld [vmem:[%s3868 + $0x38] sm:$0xf]
      %v3879 = vld [vmem:[%s3868 + $0x3c] sm:$0xff]
      %v3880 = vld [vmem:[%s3868 + $0x44] sm:$0xf]
      %v3881 = vld [vmem:[%s3868 + $0x48] sm:$0xff]
      %v3882 = vld [vmem:[%s3868 + $0x50] sm:$0xf]
      %v3883 = vld [vmem:[%s3868 + $0x54] sm:$0xff]
      %v3884 = vld [vmem:[%s3868 + $0x5c] sm:$0xf]
      %v3885 = vld [vmem:[%s3868 + $0x60] sm:$0xff]
      %v3886 = vld [vmem:[%s3868 + $0x68] sm:$0xf]
      %v3887 = vld [vmem:[%s3868 + $0x6c] sm:$0xff]
      %v3888 = vld [vmem:[%s3868 + $0x74] sm:$0xf]
      %v3889 = vld [vmem:[%s3868 + $0x78] sm:$0xff]
      %v3890 = vld [vmem:[%s3868 + $0x80] sm:$0xf]
      %v3891 = vld [vmem:[%s3868 + $0x84] sm:$0xff]
      %v3892 = vld [vmem:[%s3868 + $0x8c] sm:$0xf]
      %v3893 = vld [vmem:[%s3868 + $0x90] sm:$0xff]
      %v3894 = vld [vmem:[%s3868 + $0x98] sm:$0xf]
      %v3895 = vld [vmem:[%s3868 + $0x9c] sm:$0xff]
      %v3896 = vld [vmem:[%s3868 + $0xa4] sm:$0xf]
      %v3897 = vld [vmem:[%s3868 + $0xa8] sm:$0xff]
      %v3898 = vld [vmem:[%s3868 + $0xb0] sm:$0xf]
      %v3899 = vld [vmem:[%s3868 + $0xb4] sm:$0xff]
      %v3900 = vld [vmem:[%s3868 + $0xbc] sm:$0xf]
      %v3901 = vld [vmem:[%s3868 + $0xc0] sm:$0xff]
      %v3902 = vld [vmem:[%s3868 + $0xc8] sm:$0xf]
      %v3903 = vld [vmem:[%s3868 + $0xcc] sm:$0xff]
      %v3904 = vld [vmem:[%s3868 + $0xd4] sm:$0xf]
      %v3905 = vld [vmem:[%s3868 + $0xd8] sm:$0xff]
      %v3906 = vld [vmem:[%s3868 + $0xe0] sm:$0xf]
      %v3907 = vld [vmem:[%s3868 + $0xe4] sm:$0xff]
      %v3908 = vld [vmem:[%s3868 + $0xec] sm:$0xf]
      %v3909 = vld [vmem:[%s3868 + $0xf0] sm:$0xff]
      %v3910 = vld [vmem:[%s3868 + $0xf8] sm:$0xf]
      %v3911 = vld [vmem:[%s3868 + $0xfc] sm:$0xff]
      %v3912 = vld [vmem:[%s3868 + $0x104] sm:$0xf]
      %v3913 = vld [vmem:[%s3868 + $0x108] sm:$0xff]
      %v3914 = vld [vmem:[%s3868 + $0x110] sm:$0xf]
      %v3915 = vld [vmem:[%s3868 + $0x114] sm:$0xff]
      %v3916 = vld [vmem:[%s3868 + $0x11c] sm:$0xf]
      %v3917 = vld [vmem:[%s3868 + $0x120] sm:$0xff]
      %v3918 = vld [vmem:[%s3868 + $0x128] sm:$0xf]
      %v3919 = vld [vmem:[%s3868 + $0x12c] sm:$0xff]
      %v3920 = vld [vmem:[%s3868 + $0x134] sm:$0xf]
      %v3921 = vld [vmem:[%s3868 + $0x138] sm:$0xff]
      %v3922 = vld [vmem:[%s3868 + $0x140] sm:$0xf]
      %v3923 = vld [vmem:[%s3868 + $0x144] sm:$0xff]
      %v3924 = vld [vmem:[%s3868 + $0x14c] sm:$0xf]
      %v3925 = vld [vmem:[%s3868 + $0x150] sm:$0xff]
      %v3926 = vld [vmem:[%s3868 + $0x158] sm:$0xf]
      %v3927 = vld [vmem:[%s3868 + $0x15c] sm:$0xff]
      %v3928 = vld [vmem:[%s3868 + $0x164] sm:$0xf]
      %v3929 = vld [vmem:[%s3868 + $0x168] sm:$0xff]
      %v3930 = vld [vmem:[%s3868 + $0x170] sm:$0xf]
      %v3931 = vld [vmem:[%s3868 + $0x174] sm:$0xff]
      %v3932 = vld [vmem:[%s3868 + $0x17c] sm:$0xf]
      %v3933 = vld [vmem:[%s3868 + $0x180] sm:$0x11]
      %v3934 = vld [vmem:[%s3868 + $0x188] sm:$0x1]
      %v3936 = vshrl.u32 %v3862, 16
      %v3938 = vshll.u32 %v3862, 16
      %v3940 = vrot.slane %v3938, 1
      %v3941 = vor.u32 %v3936, %v3940
      %v3943 = vshll.u32 %v3865, 16
      %v3945 = vrot.slane %v3943, 1
      %v3946 = vsel %vm528, %v3941, %v3945
      %v3948 = vshrl.u32 %v3863, 16
      %v3950 = vshll.u32 %v3863, 16
      %v3952 = vrot.slane %v3950, 1
      %v3953 = vor.u32 %v3948, %v3952
      %v3955 = vshll.u32 %v3866, 16
      %v3957 = vrot.slane %v3955, 1
      %v3958 = vsel %vm528, %v3953, %v3957
      %v3960 = vshrl.u32 %v3864, 16
      %v3962 = vshll.u32 %v3864, 16
      %v3964 = vrot.slane %v3962, 1
      %v3965 = vor.u32 %v3960, %v3964
      %v3967 = vshll.u32 %v3867, 16
      %v3969 = vrot.slane %v3967, 1
      %v3970 = vsel %vm528, %v3965, %v3969
      %v4039 = vunpack.c.l.b16 %v3869
      %v4040 = vunpack.c.h.b16 %v3869
      %v4041 = vunpack.c.l.b16 %v3870
      %v4042 = vunpack.c.l.b16 %v3871
      %v4043 = vunpack.c.h.b16 %v3871
      %v4044 = vunpack.c.l.b16 %v3872
      %v4045 = vunpack.c.l.b16 %v3873
      %v4046 = vunpack.c.h.b16 %v3873
      %v4047 = vunpack.c.l.b16 %v3874
      %v4048 = vunpack.c.l.b16 %v3875
      %v4049 = vunpack.c.h.b16 %v3875
      %v4050 = vunpack.c.l.b16 %v3876
      %v4051 = vunpack.c.l.b16 %v3877
      %v4052 = vunpack.c.h.b16 %v3877
      %v4053 = vunpack.c.l.b16 %v3878
      %v4054 = vunpack.c.l.b16 %v3879
      %v4055 = vunpack.c.h.b16 %v3879
      %v4056 = vunpack.c.l.b16 %v3880
      %v4057 = vunpack.c.l.b16 %v3881
      %v4058 = vunpack.c.h.b16 %v3881
      %v4059 = vunpack.c.l.b16 %v3882
      %v4060 = vunpack.c.l.b16 %v3883
      %v4061 = vunpack.c.h.b16 %v3883
      %v4062 = vunpack.c.l.b16 %v3884
      %v4063 = vunpack.c.l.b16 %v3885
      %v4064 = vunpack.c.h.b16 %v3885
      %v4065 = vunpack.c.l.b16 %v3886
      %v4066 = vunpack.c.l.b16 %v3887
      %v4067 = vunpack.c.h.b16 %v3887
      %v4068 = vunpack.c.l.b16 %v3888
      %v4069 = vunpack.c.l.b16 %v3889
      %v4070 = vunpack.c.h.b16 %v3889
      %v4071 = vunpack.c.l.b16 %v3890
      %v4072 = vunpack.c.l.b16 %v3891
      %v4073 = vunpack.c.h.b16 %v3891
      %v4074 = vunpack.c.l.b16 %v3892
      %v4075 = vunpack.c.l.b16 %v3893
      %v4076 = vunpack.c.h.b16 %v3893
      %v4077 = vunpack.c.l.b16 %v3894
      %v4078 = vunpack.c.l.b16 %v3895
      %v4079 = vunpack.c.h.b16 %v3895
      %v4080 = vunpack.c.l.b16 %v3896
      %v4081 = vunpack.c.l.b16 %v3897
      %v4082 = vunpack.c.h.b16 %v3897
      %v4083 = vunpack.c.l.b16 %v3898
      %v4084 = vunpack.c.l.b16 %v3899
      %v4085 = vunpack.c.h.b16 %v3899
      %v4086 = vunpack.c.l.b16 %v3900
      %v4087 = vunpack.c.l.b16 %v3901
      %v4088 = vunpack.c.h.b16 %v3901
      %v4089 = vunpack.c.l.b16 %v3902
      %v4090 = vunpack.c.l.b16 %v3903
      %v4091 = vunpack.c.h.b16 %v3903
      %v4092 = vunpack.c.l.b16 %v3904
      %v4093 = vunpack.c.l.b16 %v3905
      %v4094 = vunpack.c.h.b16 %v3905
      %v4095 = vunpack.c.l.b16 %v3906
      %v4096 = vunpack.c.l.b16 %v3907
      %v4097 = vunpack.c.h.b16 %v3907
      %v4098 = vunpack.c.l.b16 %v3908
      %v4099 = vunpack.c.l.b16 %v3909
      %v4100 = vunpack.c.h.b16 %v3909
      %v4101 = vunpack.c.l.b16 %v3910
      %v4102 = vunpack.c.l.b16 %v3911
      %v4103 = vunpack.c.h.b16 %v3911
      %v4104 = vunpack.c.l.b16 %v3912
      %v4105 = vunpack.c.l.b16 %v3913
      %v4106 = vunpack.c.h.b16 %v3913
      %v4107 = vunpack.c.l.b16 %v3914
      %v4108 = vunpack.c.l.b16 %v3915
      %v4109 = vunpack.c.h.b16 %v3915
      %v4110 = vunpack.c.l.b16 %v3916
      %v4111 = vunpack.c.l.b16 %v3917
      %v4112 = vunpack.c.h.b16 %v3917
      %v4113 = vunpack.c.l.b16 %v3918
      %v4114 = vunpack.c.l.b16 %v3919
      %v4115 = vunpack.c.h.b16 %v3919
      %v4116 = vunpack.c.l.b16 %v3920
      %v4117 = vunpack.c.l.b16 %v3921
      %v4118 = vunpack.c.h.b16 %v3921
      %v4119 = vunpack.c.l.b16 %v3922
      %v4120 = vunpack.c.l.b16 %v3923
      %v4121 = vunpack.c.h.b16 %v3923
      %v4122 = vunpack.c.l.b16 %v3924
      %v4123 = vunpack.c.l.b16 %v3925
      %v4124 = vunpack.c.h.b16 %v3925
      %v4125 = vunpack.c.l.b16 %v3926
      %v4126 = vunpack.c.l.b16 %v3927
      %v4127 = vunpack.c.h.b16 %v3927
      %v4128 = vunpack.c.l.b16 %v3928
      %v4129 = vunpack.c.l.b16 %v3929
      %v4130 = vunpack.c.h.b16 %v3929
      %v4131 = vunpack.c.l.b16 %v3930
      %v4132 = vunpack.c.l.b16 %v3931
      %v4133 = vunpack.c.h.b16 %v3931
      %v4134 = vunpack.c.l.b16 %v3932
      %v4135 = vunpack.c.l.b16 %v3933
      %v4136 = vunpack.c.h.b16 %v3933
      %v4137 = vunpack.c.l.b16 %v3934
      %v4138 = vpack.c.b16 %v4042, %v4039
      %v4139 = vpack.c.b16 %v4043, %v4040
      %v4140 = vpack.c.b16 %v4044, %v4041
      %v4141 = vpack.c.b16 %v4048, %v4045
      %v4142 = vpack.c.b16 %v4049, %v4046
      %v4143 = vpack.c.b16 %v4050, %v4047
      %v4144 = vpack.c.b16 %v4054, %v4051
      %v4145 = vpack.c.b16 %v4055, %v4052
      %v4146 = vpack.c.b16 %v4056, %v4053
      %v4147 = vpack.c.b16 %v4060, %v4057
      %v4148 = vpack.c.b16 %v4061, %v4058
      %v4149 = vpack.c.b16 %v4062, %v4059
      %v4150 = vpack.c.b16 %v4066, %v4063
      %v4151 = vpack.c.b16 %v4067, %v4064
      %v4152 = vpack.c.b16 %v4068, %v4065
      %v4153 = vpack.c.b16 %v4072, %v4069
      %v4154 = vpack.c.b16 %v4073, %v4070
      %v4155 = vpack.c.b16 %v4074, %v4071
      %v4156 = vpack.c.b16 %v4078, %v4075
      %v4157 = vpack.c.b16 %v4079, %v4076
      %v4158 = vpack.c.b16 %v4080, %v4077
      %v4159 = vpack.c.b16 %v4084, %v4081
      %v4160 = vpack.c.b16 %v4085, %v4082
      %v4161 = vpack.c.b16 %v4086, %v4083
      %v4162 = vpack.c.b16 %v4090, %v4087
      %v4163 = vpack.c.b16 %v4091, %v4088
      %v4164 = vpack.c.b16 %v4092, %v4089
      %v4165 = vpack.c.b16 %v4096, %v4093
      %v4166 = vpack.c.b16 %v4097, %v4094
      %v4167 = vpack.c.b16 %v4098, %v4095
      %v4168 = vpack.c.b16 %v4102, %v4099
      %v4169 = vpack.c.b16 %v4103, %v4100
      %v4170 = vpack.c.b16 %v4104, %v4101
      %v4171 = vpack.c.b16 %v4108, %v4105
      %v4172 = vpack.c.b16 %v4109, %v4106
      %v4173 = vpack.c.b16 %v4110, %v4107
      %v4174 = vpack.c.b16 %v4114, %v4111
      %v4175 = vpack.c.b16 %v4115, %v4112
      %v4176 = vpack.c.b16 %v4116, %v4113
      %v4177 = vpack.c.b16 %v4120, %v4117
      %v4178 = vpack.c.b16 %v4121, %v4118
      %v4179 = vpack.c.b16 %v4122, %v4119
      %v4180 = vpack.c.b16 %v4126, %v4123
      %v4181 = vpack.c.b16 %v4127, %v4124
      %v4182 = vpack.c.b16 %v4128, %v4125
      %v4183 = vpack.c.b16 %v4132, %v4129
      %v4184 = vpack.c.b16 %v4133, %v4130
      %v4185 = vpack.c.b16 %v4134, %v4131
      %v4186 = vpack.c.b16 %v4135, %v4135
      %v4187 = vpack.c.b16 %v4136, %v4136
      %v4188 = vpack.c.b16 %v4137, %v4137
      %v4238 = vsel %vm368, %v3970, 0
      %v4241 = vand.u32 %v4186, %v835
      %v4244 = vand.u32 %v4187, %v835
      %v4247 = vand.u32 %v4188, %v835
      %4249 = vmatprep.subr.bf16.mxu0 %v4160
      %4250 = vmatpush1.bf16.msra.mxu0 %v4159
      %4251 = vmatprep.subr.bf16.mxu0 %v4157
      %4252 = vmatpush1.bf16.msra.mxu0 %v4156
      %4253 = vmatprep.subr.bf16.mxu0 %v4154
      %4254 = vmatpush1.bf16.msra.mxu0 %v4153
      %4255 = vmatprep.subr.bf16.mxu0 %v4151
      %4256 = vmatpush1.bf16.msra.mxu0 %v4150
      %4257 = vmatprep.subr.bf16.mxu0 %v4148
      %4258 = vmatpush1.bf16.msra.mxu0 %v4147
      %4259 = vmatprep.subr.bf16.mxu0 %v4145
      %4260 = vmatpush1.bf16.msra.mxu0 %v4144
      %4261 = vmatprep.subr.bf16.mxu0 %v4142
      %4262 = vmatpush1.bf16.msra.mxu0 %v4141
      %4263 = vmatprep.subr.bf16.mxu0 %v4139
      %4264 = vmatpush1.bf16.msra.mxu0 %v4138
      %4265 = vmatprep.subr.bf16.mxu0 %v4184
      %4266 = vmatpush2.bf16.msra.mxu0 %v4183
      %4267 = vmatprep.subr.bf16.mxu0 %v4181
      %4268 = vmatpush2.bf16.msra.mxu0 %v4180
      %4269 = vmatprep.subr.bf16.mxu0 %v4178
      %4270 = vmatpush2.bf16.msra.mxu0 %v4177
      %4271 = vmatprep.subr.bf16.mxu0 %v4175
      %4272 = vmatpush2.bf16.msra.mxu0 %v4174
      %4273 = vmatprep.subr.bf16.mxu0 %v4172
      %4274 = vmatpush2.bf16.msra.mxu0 %v4171
      %4275 = vmatprep.subr.bf16.mxu0 %v4169
      %4276 = vmatpush2.bf16.msra.mxu0 %v4168
      %4277 = vmatprep.subr.bf16.mxu0 %v4166
      %4278 = vmatpush2.bf16.msra.mxu0 %v4165
      %4279 = vmatprep.subr.bf16.mxu0 %v4163
      %4280 = vmatpush2.bf16.msra.mxu0 %v4162
      %4281 = vmatprep.mubr.bf16.mxu0 %v3958
      %4282 = vmatmul.mubr.bf16.gmra.mxu0 %v3946
      %v4283 = vpop.f32.mrf.mxu0
      %v4284 = vadd.f32 0.0, %v4283
      %v4285 = vpop.f32.mrf.mxu0
      %v4286 = vadd.f32 0.0, %v4285
      %v4287 = vpop.f32.mrf.mxu0
      %v4288 = vadd.f32 0.0, %v4287
      %v4289 = vpop.f32.mrf.mxu0
      %v4290 = vadd.f32 0.0, %v4289
      %4291 = vdwg.mxu0
      %4292 = vmatprep.subr.bf16.mxu0 0
      %4293 = vmatpush1.bf16.msra.mxu0 0
      %4294 = vmatprep.subr.bf16.mxu0 0
      %4295 = vmatpush1.bf16.msra.mxu0 0
      %4296 = vmatprep.subr.bf16.mxu0 0
      %4297 = vmatpush1.bf16.msra.mxu0 0
      %4298 = vmatprep.subr.bf16.mxu0 0
      %4299 = vmatpush1.bf16.msra.mxu0 0
      %4300 = vmatprep.subr.bf16.mxu0 0
      %4301 = vmatpush1.bf16.msra.mxu0 0
      %4302 = vmatprep.subr.bf16.mxu0 0
      %4303 = vmatpush1.bf16.msra.mxu0 0
      %4304 = vmatprep.subr.bf16.mxu0 0
      %4305 = vmatpush1.bf16.msra.mxu0 0
      %4306 = vmatprep.subr.bf16.mxu0 %v4244
      %4307 = vmatpush1.bf16.msra.mxu0 %v4241
      %4308 = vmatprep.subr.bf16.mxu0 0
      %4309 = vmatpush2.bf16.msra.mxu0 0
      %4310 = vmatprep.subr.bf16.mxu0 0
      %4311 = vmatpush2.bf16.msra.mxu0 0
      %4312 = vmatprep.subr.bf16.mxu0 0
      %4313 = vmatpush2.bf16.msra.mxu0 0
      %4314 = vmatprep.subr.bf16.mxu0 0
      %4315 = vmatpush2.bf16.msra.mxu0 0
      %4316 = vmatprep.subr.bf16.mxu0 0
      %4317 = vmatpush2.bf16.msra.mxu0 0
      %4318 = vmatprep.subr.bf16.mxu0 0
      %4319 = vmatpush2.bf16.msra.mxu0 0
      %4320 = vmatprep.subr.bf16.mxu0 0
      %4321 = vmatpush2.bf16.msra.mxu0 0
      %4322 = vmatprep.subr.bf16.mxu0 0
      %4323 = vmatpush2.bf16.msra.mxu0 0
      %4324 = vmatprep.mubr.bf16.mxu0 0
      %4325 = vmatmul.mubr.bf16.gmra.mxu0 %v4238
      %v4326 = vpop.f32.mrf.mxu0
      %v4327 = vadd.f32 %v4284, %v4326
      %v4328 = vpop.f32.mrf.mxu0
      %v4329 = vadd.f32 %v4286, %v4328
      %v4330 = vpop.f32.mrf.mxu0
      %v4331 = vadd.f32 %v4288, %v4330
      %v4332 = vpop.f32.mrf.mxu0
      %v4333 = vadd.f32 %v4290, %v4332
      %4334 = vdwg.mxu0
      %4335 = vmatprep.subr.bf16.mxu0 0
      %4336 = vmatpush1.bf16.msra.mxu0 %v4161
      %4337 = vmatprep.subr.bf16.mxu0 0
      %4338 = vmatpush1.bf16.msra.mxu0 %v4158
      %4339 = vmatprep.subr.bf16.mxu0 0
      %4340 = vmatpush1.bf16.msra.mxu0 %v4155
      %4341 = vmatprep.subr.bf16.mxu0 0
      %4342 = vmatpush1.bf16.msra.mxu0 %v4152
      %4343 = vmatprep.subr.bf16.mxu0 0
      %4344 = vmatpush1.bf16.msra.mxu0 %v4149
      %4345 = vmatprep.subr.bf16.mxu0 0
      %4346 = vmatpush1.bf16.msra.mxu0 %v4146
      %4347 = vmatprep.subr.bf16.mxu0 0
      %4348 = vmatpush1.bf16.msra.mxu0 %v4143
      %4349 = vmatprep.subr.bf16.mxu0 0
      %4350 = vmatpush1.bf16.msra.mxu0 %v4140
      %4351 = vmatprep.subr.bf16.mxu0 0
      %4352 = vmatpush2.bf16.msra.mxu0 %v4185
      %4353 = vmatprep.subr.bf16.mxu0 0
      %4354 = vmatpush2.bf16.msra.mxu0 %v4182
      %4355 = vmatprep.subr.bf16.mxu0 0
      %4356 = vmatpush2.bf16.msra.mxu0 %v4179
      %4357 = vmatprep.subr.bf16.mxu0 0
      %4358 = vmatpush2.bf16.msra.mxu0 %v4176
      %4359 = vmatprep.subr.bf16.mxu0 0
      %4360 = vmatpush2.bf16.msra.mxu0 %v4173
      %4361 = vmatprep.subr.bf16.mxu0 0
      %4362 = vmatpush2.bf16.msra.mxu0 %v4170
      %4363 = vmatprep.subr.bf16.mxu0 0
      %4364 = vmatpush2.bf16.msra.mxu0 %v4167
      %4365 = vmatprep.subr.bf16.mxu0 0
      %4366 = vmatpush2.bf16.msra.mxu0 %v4164
      %4367 = vmatprep.mubr.bf16.mxu0 %v3958
      %4368 = vmatmul.mubr.bf16.gmra.mxu0 %v3946
      %v4369 = vpop.f32.mrf.mxu0
      %v4370 = vadd.f32 0.0, %v4369
      %v4371 = vpop.f32.mrf.mxu0
      %v4372 = vpop.f32.mrf.mxu0
      %v4373 = vadd.f32 0.0, %v4372
      %v4374 = vpop.f32.mrf.mxu0
      %4375 = vdwg.mxu0
      %4376 = vmatprep.subr.bf16.mxu0 0
      %4377 = vmatpush1.bf16.msra.mxu0 0
      %4378 = vmatprep.subr.bf16.mxu0 0
      %4379 = vmatpush1.bf16.msra.mxu0 0
      %4380 = vmatprep.subr.bf16.mxu0 0
      %4381 = vmatpush1.bf16.msra.mxu0 0
      %4382 = vmatprep.subr.bf16.mxu0 0
      %4383 = vmatpush1.bf16.msra.mxu0 0
      %4384 = vmatprep.subr.bf16.mxu0 0
      %4385 = vmatpush1.bf16.msra.mxu0 0
      %4386 = vmatprep.subr.bf16.mxu0 0
      %4387 = vmatpush1.bf16.msra.mxu0 0
      %4388 = vmatprep.subr.bf16.mxu0 0
      %4389 = vmatpush1.bf16.msra.mxu0 0
      %4390 = vmatprep.subr.bf16.mxu0 0
      %4391 = vmatpush1.bf16.msra.mxu0 %v4247
      %4392 = vmatprep.subr.bf16.mxu0 0
      %4393 = vmatpush2.bf16.msra.mxu0 0
      %4394 = vmatprep.subr.bf16.mxu0 0
      %4395 = vmatpush2.bf16.msra.mxu0 0
      %4396 = vmatprep.subr.bf16.mxu0 0
      %4397 = vmatpush2.bf16.msra.mxu0 0
      %4398 = vmatprep.subr.bf16.mxu0 0
      %4399 = vmatpush2.bf16.msra.mxu0 0
      %4400 = vmatprep.subr.bf16.mxu0 0
      %4401 = vmatpush2.bf16.msra.mxu0 0
      %4402 = vmatprep.subr.bf16.mxu0 0
      %4403 = vmatpush2.bf16.msra.mxu0 0
      %4404 = vmatprep.subr.bf16.mxu0 0
      %4405 = vmatpush2.bf16.msra.mxu0 0
      %4406 = vmatprep.subr.bf16.mxu0 0
      %4407 = vmatpush2.bf16.msra.mxu0 0
      %4408 = vmatprep.mubr.bf16.mxu0 0
      %4409 = vmatmul.mubr.bf16.gmra.mxu0 %v4238
      %v4410 = vpop.f32.mrf.mxu0
      %v4411 = vadd.f32 %v4370, %v4410
      %v4412 = vpop.f32.mrf.mxu0
      %v4413 = vpop.f32.mrf.mxu0
      %v4414 = vadd.f32 %v4373, %v4413
      %v4415 = vpop.f32.mrf.mxu0
      %4416 = vdwg.mxu0
      %v4483 = vunpack.c.l.b16 %v3790
      %v4484 = vunpack.c.h.b16 %v3790
      %v4485 = vunpack.c.l.b16 %v3791
      %v4486 = vunpack.c.l.b16 %v3792
      %v4487 = vunpack.c.h.b16 %v3792
      %v4488 = vunpack.c.l.b16 %v3793
      %v4489 = vunpack.c.l.b16 %v3794
      %v4490 = vunpack.c.h.b16 %v3794
      %v4491 = vunpack.c.l.b16 %v3795
      %v4492 = vunpack.c.l.b16 %v3796
      %v4493 = vunpack.c.h.b16 %v3796
      %v4494 = vunpack.c.l.b16 %v3797
      %v4495 = vunpack.c.l.b16 %v3798
      %v4496 = vunpack.c.h.b16 %v3798
      %v4497 = vunpack.c.l.b16 %v3799
      %v4498 = vunpack.c.l.b16 %v3800
      %v4499 = vunpack.c.h.b16 %v3800
      %v4500 = vunpack.c.l.b16 %v3801
      %v4501 = vunpack.c.l.b16 %v3802
      %v4502 = vunpack.c.h.b16 %v3802
      %v4503 = vunpack.c.l.b16 %v3803
      %v4504 = vunpack.c.l.b16 %v3804
      %v4505 = vunpack.c.h.b16 %v3804
      %v4506 = vunpack.c.l.b16 %v3805
      %v4507 = vunpack.c.l.b16 %v3806
      %v4508 = vunpack.c.h.b16 %v3806
      %v4509 = vunpack.c.l.b16 %v3807
      %v4510 = vunpack.c.l.b16 %v3808
      %v4511 = vunpack.c.h.b16 %v3808
      %v4512 = vunpack.c.l.b16 %v3809
      %v4513 = vunpack.c.l.b16 %v3810
      %v4514 = vunpack.c.h.b16 %v3810
      %v4515 = vunpack.c.l.b16 %v3811
      %v4516 = vunpack.c.l.b16 %v3812
      %v4517 = vunpack.c.h.b16 %v3812
      %v4518 = vunpack.c.l.b16 %v3813
      %v4519 = vunpack.c.l.b16 %v3814
      %v4520 = vunpack.c.h.b16 %v3814
      %v4521 = vunpack.c.l.b16 %v3815
      %v4522 = vunpack.c.l.b16 %v3816
      %v4523 = vunpack.c.h.b16 %v3816
      %v4524 = vunpack.c.l.b16 %v3817
      %v4525 = vunpack.c.l.b16 %v3818
      %v4526 = vunpack.c.h.b16 %v3818
      %v4527 = vunpack.c.l.b16 %v3819
      %v4528 = vunpack.c.l.b16 %v3820
      %v4529 = vunpack.c.h.b16 %v3820
      %v4530 = vunpack.c.l.b16 %v3821
      %v4531 = vunpack.c.l.b16 %v3822
      %v4532 = vunpack.c.h.b16 %v3822
      %v4533 = vunpack.c.l.b16 %v3823
      %v4534 = vunpack.c.l.b16 %v3824
      %v4535 = vunpack.c.h.b16 %v3824
      %v4536 = vunpack.c.l.b16 %v3825
      %v4537 = vunpack.c.l.b16 %v3826
      %v4538 = vunpack.c.h.b16 %v3826
      %v4539 = vunpack.c.l.b16 %v3827
      %v4540 = vunpack.c.l.b16 %v3828
      %v4541 = vunpack.c.h.b16 %v3828
      %v4542 = vunpack.c.l.b16 %v3829
      %v4543 = vunpack.c.l.b16 %v3830
      %v4544 = vunpack.c.h.b16 %v3830
      %v4545 = vunpack.c.l.b16 %v3831
      %v4546 = vunpack.c.l.b16 %v3832
      %v4547 = vunpack.c.h.b16 %v3832
      %v4548 = vunpack.c.l.b16 %v3833
      %v4549 = vunpack.c.l.b16 %v3834
      %v4550 = vunpack.c.h.b16 %v3834
      %v4551 = vunpack.c.l.b16 %v3835
      %v4552 = vunpack.c.l.b16 %v3836
      %v4553 = vunpack.c.h.b16 %v3836
      %v4554 = vunpack.c.l.b16 %v3837
      %v4555 = vunpack.c.l.b16 %v3838
      %v4556 = vunpack.c.h.b16 %v3838
      %v4557 = vunpack.c.l.b16 %v3839
      %v4558 = vunpack.c.l.b16 %v3840
      %v4559 = vunpack.c.h.b16 %v3840
      %v4560 = vunpack.c.l.b16 %v3841
      %v4561 = vunpack.c.l.b16 %v3842
      %v4562 = vunpack.c.h.b16 %v3842
      %v4563 = vunpack.c.l.b16 %v3843
      %v4564 = vunpack.c.l.b16 %v3844
      %v4565 = vunpack.c.h.b16 %v3844
      %v4566 = vunpack.c.l.b16 %v3845
      %v4567 = vunpack.c.l.b16 %v3846
      %v4568 = vunpack.c.h.b16 %v3846
      %v4569 = vunpack.c.l.b16 %v3847
      %v4570 = vunpack.c.l.b16 %v3848
      %v4571 = vunpack.c.h.b16 %v3848
      %v4572 = vunpack.c.l.b16 %v3849
      %v4573 = vunpack.c.l.b16 %v3850
      %v4574 = vunpack.c.h.b16 %v3850
      %v4575 = vunpack.c.l.b16 %v3851
      %v4576 = vunpack.c.l.b16 %v3852
      %v4577 = vunpack.c.h.b16 %v3852
      %v4578 = vunpack.c.l.b16 %v3853
      %v4579 = vunpack.c.l.b16 %v3854
      %v4580 = vunpack.c.h.b16 %v3854
      %v4581 = vunpack.c.l.b16 %v3855
      %v4582 = vpack.c.b16 %v4486, %v4483
      %v4583 = vpack.c.b16 %v4487, %v4484
      %v4584 = vpack.c.b16 %v4488, %v4485
      %v4585 = vpack.c.b16 %v4492, %v4489
      %v4586 = vpack.c.b16 %v4493, %v4490
      %v4587 = vpack.c.b16 %v4494, %v4491
      %v4588 = vpack.c.b16 %v4498, %v4495
      %v4589 = vpack.c.b16 %v4499, %v4496
      %v4590 = vpack.c.b16 %v4500, %v4497
      %v4591 = vpack.c.b16 %v4504, %v4501
      %v4592 = vpack.c.b16 %v4505, %v4502
      %v4593 = vpack.c.b16 %v4506, %v4503
      %v4594 = vpack.c.b16 %v4510, %v4507
      %v4595 = vpack.c.b16 %v4511, %v4508
      %v4596 = vpack.c.b16 %v4512, %v4509
      %v4597 = vpack.c.b16 %v4516, %v4513
      %v4598 = vpack.c.b16 %v4517, %v4514
      %v4599 = vpack.c.b16 %v4518, %v4515
      %v4600 = vpack.c.b16 %v4522, %v4519
      %v4601 = vpack.c.b16 %v4523, %v4520
      %v4602 = vpack.c.b16 %v4524, %v4521
      %v4603 = vpack.c.b16 %v4528, %v4525
      %v4604 = vpack.c.b16 %v4529, %v4526
      %v4605 = vpack.c.b16 %v4530, %v4527
      %v4606 = vpack.c.b16 %v4534, %v4531
      %v4607 = vpack.c.b16 %v4535, %v4532
      %v4608 = vpack.c.b16 %v4536, %v4533
      %v4609 = vpack.c.b16 %v4540, %v4537
      %v4610 = vpack.c.b16 %v4541, %v4538
      %v4611 = vpack.c.b16 %v4542, %v4539
      %v4612 = vpack.c.b16 %v4546, %v4543
      %v4613 = vpack.c.b16 %v4547, %v4544
      %v4614 = vpack.c.b16 %v4548, %v4545
      %v4615 = vpack.c.b16 %v4552, %v4549
      %v4616 = vpack.c.b16 %v4553, %v4550
      %v4617 = vpack.c.b16 %v4554, %v4551
      %v4618 = vpack.c.b16 %v4558, %v4555
      %v4619 = vpack.c.b16 %v4559, %v4556
      %v4620 = vpack.c.b16 %v4560, %v4557
      %v4621 = vpack.c.b16 %v4564, %v4561
      %v4622 = vpack.c.b16 %v4565, %v4562
      %v4623 = vpack.c.b16 %v4566, %v4563
      %v4624 = vpack.c.b16 %v4570, %v4567
      %v4625 = vpack.c.b16 %v4571, %v4568
      %v4626 = vpack.c.b16 %v4572, %v4569
      %v4627 = vpack.c.b16 %v4576, %v4573
      %v4628 = vpack.c.b16 %v4577, %v4574
      %v4629 = vpack.c.b16 %v4578, %v4575
      %v4630 = vpack.c.b16 %v4579, %v4579
      %v4631 = vpack.c.b16 %v4580, %v4580
      %v4632 = vpack.c.b16 %v4581, %v4581
      %v4682 = vsel %vm368, %v3788, 0
      %v4685 = vand.u32 %v4630, %v835
      %v4688 = vand.u32 %v4631, %v835
      %v4691 = vand.u32 %v4632, %v835
      %4693 = vmatprep.subr.bf16.mxu0 %v4604
      %4694 = vmatpush1.bf16.msra.mxu0 %v4603
      %4695 = vmatprep.subr.bf16.mxu0 %v4601
      %4696 = vmatpush1.bf16.msra.mxu0 %v4600
      %4697 = vmatprep.subr.bf16.mxu0 %v4598
      %4698 = vmatpush1.bf16.msra.mxu0 %v4597
      %4699 = vmatprep.subr.bf16.mxu0 %v4595
      %4700 = vmatpush1.bf16.msra.mxu0 %v4594
      %4701 = vmatprep.subr.bf16.mxu0 %v4592
      %4702 = vmatpush1.bf16.msra.mxu0 %v4591
      %4703 = vmatprep.subr.bf16.mxu0 %v4589
      %4704 = vmatpush1.bf16.msra.mxu0 %v4588
      %4705 = vmatprep.subr.bf16.mxu0 %v4586
      %4706 = vmatpush1.bf16.msra.mxu0 %v4585
      %4707 = vmatprep.subr.bf16.mxu0 %v4583
      %4708 = vmatpush1.bf16.msra.mxu0 %v4582
      %4709 = vmatprep.subr.bf16.mxu0 %v4628
      %4710 = vmatpush2.bf16.msra.mxu0 %v4627
      %4711 = vmatprep.subr.bf16.mxu0 %v4625
      %4712 = vmatpush2.bf16.msra.mxu0 %v4624
      %4713 = vmatprep.subr.bf16.mxu0 %v4622
      %4714 = vmatpush2.bf16.msra.mxu0 %v4621
      %4715 = vmatprep.subr.bf16.mxu0 %v4619
      %4716 = vmatpush2.bf16.msra.mxu0 %v4618
      %4717 = vmatprep.subr.bf16.mxu0 %v4616
      %4718 = vmatpush2.bf16.msra.mxu0 %v4615
      %4719 = vmatprep.subr.bf16.mxu0 %v4613
      %4720 = vmatpush2.bf16.msra.mxu0 %v4612
      %4721 = vmatprep.subr.bf16.mxu0 %v4610
      %4722 = vmatpush2.bf16.msra.mxu0 %v4609
      %4723 = vmatprep.subr.bf16.mxu0 %v4607
      %4724 = vmatpush2.bf16.msra.mxu0 %v4606
      %4725 = vmatprep.mubr.bf16.mxu0 %v3787
      %4726 = vmatmul.mubr.bf16.gmra.mxu0 %v3786
      %v4727 = vpop.f32.mrf.mxu0
      %v4728 = vadd.f32 %v4327, %v4727
      %v4729 = vpop.f32.mrf.mxu0
      %v4730 = vadd.f32 %v4329, %v4729
      %v4731 = vpop.f32.mrf.mxu0
      %v4732 = vadd.f32 %v4331, %v4731
      %v4733 = vpop.f32.mrf.mxu0
      %v4734 = vadd.f32 %v4333, %v4733
      %4735 = vdwg.mxu0
      %4736 = vmatprep.subr.bf16.mxu0 0
      %4737 = vmatpush1.bf16.msra.mxu0 0
      %4738 = vmatprep.subr.bf16.mxu0 0
      %4739 = vmatpush1.bf16.msra.mxu0 0
      %4740 = vmatprep.subr.bf16.mxu0 0
      %4741 = vmatpush1.bf16.msra.mxu0 0
      %4742 = vmatprep.subr.bf16.mxu0 0
      %4743 = vmatpush1.bf16.msra.mxu0 0
      %4744 = vmatprep.subr.bf16.mxu0 0
      %4745 = vmatpush1.bf16.msra.mxu0 0
      %4746 = vmatprep.subr.bf16.mxu0 0
      %4747 = vmatpush1.bf16.msra.mxu0 0
      %4748 = vmatprep.subr.bf16.mxu0 0
      %4749 = vmatpush1.bf16.msra.mxu0 0
      %4750 = vmatprep.subr.bf16.mxu0 %v4688
      %4751 = vmatpush1.bf16.msra.mxu0 %v4685
      %4752 = vmatprep.subr.bf16.mxu0 0
      %4753 = vmatpush2.bf16.msra.mxu0 0
      %4754 = vmatprep.subr.bf16.mxu0 0
      %4755 = vmatpush2.bf16.msra.mxu0 0
      %4756 = vmatprep.subr.bf16.mxu0 0
      %4757 = vmatpush2.bf16.msra.mxu0 0
      %4758 = vmatprep.subr.bf16.mxu0 0
      %4759 = vmatpush2.bf16.msra.mxu0 0
      %4760 = vmatprep.subr.bf16.mxu0 0
      %4761 = vmatpush2.bf16.msra.mxu0 0
      %4762 = vmatprep.subr.bf16.mxu0 0
      %4763 = vmatpush2.bf16.msra.mxu0 0
      %4764 = vmatprep.subr.bf16.mxu0 0
      %4765 = vmatpush2.bf16.msra.mxu0 0
      %4766 = vmatprep.subr.bf16.mxu0 0
      %4767 = vmatpush2.bf16.msra.mxu0 0
      %4768 = vmatprep.mubr.bf16.mxu0 0
      %4769 = vmatmul.mubr.bf16.gmra.mxu0 %v4682
      %v4770 = vpop.f32.mrf.mxu0
      %v4771 = vadd.f32 %v4728, %v4770
      %v4772 = vpop.f32.mrf.mxu0
      %v4773 = vadd.f32 %v4730, %v4772
      %v4774 = vpop.f32.mrf.mxu0
      %v4775 = vadd.f32 %v4732, %v4774
      %v4776 = vpop.f32.mrf.mxu0
      %v4777 = vadd.f32 %v4734, %v4776
      %4778 = vdwg.mxu0
      %4779 = vmatprep.subr.bf16.mxu0 0
      %4780 = vmatpush1.bf16.msra.mxu0 %v4605
      %4781 = vmatprep.subr.bf16.mxu0 0
      %4782 = vmatpush1.bf16.msra.mxu0 %v4602
      %4783 = vmatprep.subr.bf16.mxu0 0
      %4784 = vmatpush1.bf16.msra.mxu0 %v4599
      %4785 = vmatprep.subr.bf16.mxu0 0
      %4786 = vmatpush1.bf16.msra.mxu0 %v4596
      %4787 = vmatprep.subr.bf16.mxu0 0
      %4788 = vmatpush1.bf16.msra.mxu0 %v4593
      %4789 = vmatprep.subr.bf16.mxu0 0
      %4790 = vmatpush1.bf16.msra.mxu0 %v4590
      %4791 = vmatprep.subr.bf16.mxu0 0
      %4792 = vmatpush1.bf16.msra.mxu0 %v4587
      %4793 = vmatprep.subr.bf16.mxu0 0
      %4794 = vmatpush1.bf16.msra.mxu0 %v4584
      %4795 = vmatprep.subr.bf16.mxu0 0
      %4796 = vmatpush2.bf16.msra.mxu0 %v4629
      %4797 = vmatprep.subr.bf16.mxu0 0
      %4798 = vmatpush2.bf16.msra.mxu0 %v4626
      %4799 = vmatprep.subr.bf16.mxu0 0
      %4800 = vmatpush2.bf16.msra.mxu0 %v4623
      %4801 = vmatprep.subr.bf16.mxu0 0
      %4802 = vmatpush2.bf16.msra.mxu0 %v4620
      %4803 = vmatprep.subr.bf16.mxu0 0
      %4804 = vmatpush2.bf16.msra.mxu0 %v4617
      %4805 = vmatprep.subr.bf16.mxu0 0
      %4806 = vmatpush2.bf16.msra.mxu0 %v4614
      %4807 = vmatprep.subr.bf16.mxu0 0
      %4808 = vmatpush2.bf16.msra.mxu0 %v4611
      %4809 = vmatprep.subr.bf16.mxu0 0
      %4810 = vmatpush2.bf16.msra.mxu0 %v4608
      %4811 = vmatprep.mubr.bf16.mxu0 %v3787
      %4812 = vmatmul.mubr.bf16.gmra.mxu0 %v3786
      %v4813 = vpop.f32.mrf.mxu0
      %v4814 = vadd.f32 %v4411, %v4813
      %v4815 = vpop.f32.mrf.mxu0
      %v4816 = vpop.f32.mrf.mxu0
      %v4817 = vadd.f32 %v4414, %v4816
      %v4818 = vpop.f32.mrf.mxu0
      %4819 = vdwg.mxu0
      %4820 = vmatprep.subr.bf16.mxu0 0
      %4821 = vmatpush1.bf16.msra.mxu0 0
      %4822 = vmatprep.subr.bf16.mxu0 0
      %4823 = vmatpush1.bf16.msra.mxu0 0
      %4824 = vmatprep.subr.bf16.mxu0 0
      %4825 = vmatpush1.bf16.msra.mxu0 0
      %4826 = vmatprep.subr.bf16.mxu0 0
      %4827 = vmatpush1.bf16.msra.mxu0 0
      %4828 = vmatprep.subr.bf16.mxu0 0
      %4829 = vmatpush1.bf16.msra.mxu0 0
      %4830 = vmatprep.subr.bf16.mxu0 0
      %4831 = vmatpush1.bf16.msra.mxu0 0
      %4832 = vmatprep.subr.bf16.mxu0 0
      %4833 = vmatpush1.bf16.msra.mxu0 0
      %4834 = vmatprep.subr.bf16.mxu0 0
      %4835 = vmatpush1.bf16.msra.mxu0 %v4691
      %4836 = vmatprep.subr.bf16.mxu0 0
      %4837 = vmatpush2.bf16.msra.mxu0 0
      %4838 = vmatprep.subr.bf16.mxu0 0
      %4839 = vmatpush2.bf16.msra.mxu0 0
      %4840 = vmatprep.subr.bf16.mxu0 0
      %4841 = vmatpush2.bf16.msra.mxu0 0
      %4842 = vmatprep.subr.bf16.mxu0 0
      %4843 = vmatpush2.bf16.msra.mxu0 0
      %4844 = vmatprep.subr.bf16.mxu0 0
      %4845 = vmatpush2.bf16.msra.mxu0 0
      %4846 = vmatprep.subr.bf16.mxu0 0
      %4847 = vmatpush2.bf16.msra.mxu0 0
      %4848 = vmatprep.subr.bf16.mxu0 0
      %4849 = vmatpush2.bf16.msra.mxu0 0
      %4850 = vmatprep.subr.bf16.mxu0 0
      %4851 = vmatpush2.bf16.msra.mxu0 0
      %4852 = vmatprep.mubr.bf16.mxu0 0
      %4853 = vmatmul.mubr.bf16.gmra.mxu0 %v4682
      %v4854 = vpop.f32.mrf.mxu0
      %v4855 = vadd.f32 %v4814, %v4854
      %v4856 = vpop.f32.mrf.mxu0
      %v4857 = vpop.f32.mrf.mxu0
      %v4858 = vadd.f32 %v4817, %v4857
      %v4859 = vpop.f32.mrf.mxu0
      %4860 = vdwg.mxu0
      %v4861 = vld [vmem:[#allocation2] sm:$0xfc]
      %v4862 = vld [vmem:[#allocation2 + $0x8] sm:$0xfc]
      %v4863 = vld [vmem:[#allocation2 + $0x10] sm:$0xfc]
      %v4864 = vld [vmem:[#allocation2 + $0x30] sm:$0x3]
      %v4865 = vld [vmem:[#allocation2 + $0x38] sm:$0x3]
      %v4866 = vld [vmem:[#allocation2 + $0x40] sm:$0x3]
      %v4867 = vpack.c.bf16 %v3783, %v4861
      %v4868 = vpack.c.bf16 %v3784, %v4862
      %v4869 = vpack.c.bf16 %v3785, %v4863
      %v4870 = vpack.c.bf16 %v4864, %v4864
      %v4871 = vpack.c.bf16 %v4865, %v4865
      %v4872 = vpack.c.bf16 %v4866, %v4866
      %s4873 = scalar_lea.vmem %s1, 3168
      %v4874 = vld [vmem:[%s4873] sm:$0xff]
      %v4875 = vld [vmem:[%s4873 + $0x8] sm:$0xf]
      %v4876 = vld [vmem:[%s4873 + $0xc] sm:$0xff]
      %v4877 = vld [vmem:[%s4873 + $0x14] sm:$0xf]
      %v4878 = vld [vmem:[%s4873 + $0x18] sm:$0xff]
      %v4879 = vld [vmem:[%s4873 + $0x20] sm:$0xf]
      %v4880 = vld [vmem:[%s4873 + $0x24] sm:$0xff]
      %v4881 = vld [vmem:[%s4873 + $0x2c] sm:$0xf]
      %v4882 = vld [vmem:[%s4873 + $0x30] sm:$0xff]
      %v4883 = vld [vmem:[%s4873 + $0x38] sm:$0xf]
      %v4884 = vld [vmem:[%s4873 + $0x3c] sm:$0xff]
      %v4885 = vld [vmem:[%s4873 + $0x44] sm:$0xf]
      %v4886 = vld [vmem:[%s4873 + $0x48] sm:$0xff]
      %v4887 = vld [vmem:[%s4873 + $0x50] sm:$0xf]
      %v4888 = vld [vmem:[%s4873 + $0x54] sm:$0xff]
      %v4889 = vld [vmem:[%s4873 + $0x5c] sm:$0xf]
      %v4890 = vld [vmem:[%s4873 + $0x60] sm:$0xff]
      %v4891 = vld [vmem:[%s4873 + $0x68] sm:$0xf]
      %v4892 = vld [vmem:[%s4873 + $0x6c] sm:$0xff]
      %v4893 = vld [vmem:[%s4873 + $0x74] sm:$0xf]
      %v4894 = vld [vmem:[%s4873 + $0x78] sm:$0xff]
      %v4895 = vld [vmem:[%s4873 + $0x80] sm:$0xf]
      %v4896 = vld [vmem:[%s4873 + $0x84] sm:$0xff]
      %v4897 = vld [vmem:[%s4873 + $0x8c] sm:$0xf]
      %v4898 = vld [vmem:[%s4873 + $0x90] sm:$0xff]
      %v4899 = vld [vmem:[%s4873 + $0x98] sm:$0xf]
      %v4900 = vld [vmem:[%s4873 + $0x9c] sm:$0xff]
      %v4901 = vld [vmem:[%s4873 + $0xa4] sm:$0xf]
      %v4902 = vld [vmem:[%s4873 + $0xa8] sm:$0xff]
      %v4903 = vld [vmem:[%s4873 + $0xb0] sm:$0xf]
      %v4904 = vld [vmem:[%s4873 + $0xb4] sm:$0xff]
      %v4905 = vld [vmem:[%s4873 + $0xbc] sm:$0xf]
      %v4906 = vld [vmem:[%s4873 + $0xc0] sm:$0xff]
      %v4907 = vld [vmem:[%s4873 + $0xc8] sm:$0xf]
      %v4908 = vld [vmem:[%s4873 + $0xcc] sm:$0xff]
      %v4909 = vld [vmem:[%s4873 + $0xd4] sm:$0xf]
      %v4910 = vld [vmem:[%s4873 + $0xd8] sm:$0xff]
      %v4911 = vld [vmem:[%s4873 + $0xe0] sm:$0xf]
      %v4912 = vld [vmem:[%s4873 + $0xe4] sm:$0xff]
      %v4913 = vld [vmem:[%s4873 + $0xec] sm:$0xf]
      %v4914 = vld [vmem:[%s4873 + $0xf0] sm:$0xff]
      %v4915 = vld [vmem:[%s4873 + $0xf8] sm:$0xf]
      %v4916 = vld [vmem:[%s4873 + $0xfc] sm:$0xff]
      %v4917 = vld [vmem:[%s4873 + $0x104] sm:$0xf]
      %v4918 = vld [vmem:[%s4873 + $0x108] sm:$0xff]
      %v4919 = vld [vmem:[%s4873 + $0x110] sm:$0xf]
      %v4920 = vld [vmem:[%s4873 + $0x114] sm:$0xff]
      %v4921 = vld [vmem:[%s4873 + $0x11c] sm:$0xf]
      %v4922 = vld [vmem:[%s4873 + $0x120] sm:$0xff]
      %v4923 = vld [vmem:[%s4873 + $0x128] sm:$0xf]
      %v4924 = vld [vmem:[%s4873 + $0x12c] sm:$0xff]
      %v4925 = vld [vmem:[%s4873 + $0x134] sm:$0xf]
      %v4926 = vld [vmem:[%s4873 + $0x138] sm:$0xff]
      %v4927 = vld [vmem:[%s4873 + $0x140] sm:$0xf]
      %v4928 = vld [vmem:[%s4873 + $0x144] sm:$0xff]
      %v4929 = vld [vmem:[%s4873 + $0x14c] sm:$0xf]
      %v4930 = vld [vmem:[%s4873 + $0x150] sm:$0xff]
      %v4931 = vld [vmem:[%s4873 + $0x158] sm:$0xf]
      %v4932 = vld [vmem:[%s4873 + $0x15c] sm:$0xff]
      %v4933 = vld [vmem:[%s4873 + $0x164] sm:$0xf]
      %v4934 = vld [vmem:[%s4873 + $0x168] sm:$0xff]
      %v4935 = vld [vmem:[%s4873 + $0x170] sm:$0xf]
      %v4936 = vld [vmem:[%s4873 + $0x174] sm:$0xff]
      %v4937 = vld [vmem:[%s4873 + $0x17c] sm:$0xf]
      %v4938 = vld [vmem:[%s4873 + $0x180] sm:$0x11]
      %v4939 = vld [vmem:[%s4873 + $0x188] sm:$0x1]
      %v4946 = vrot.slane %v4867, 1
      %v4947 = vrot.slane %v4870, 1
      %v4948 = vsel %vm1542, %v4946, %v4947
      %v4949 = vrot.slane %v4868, 1
      %v4950 = vrot.slane %v4871, 1
      %v4951 = vsel %vm1542, %v4949, %v4950
      %v4952 = vrot.slane %v4869, 1
      %v4953 = vrot.slane %v4872, 1
      %v4954 = vsel %vm1542, %v4952, %v4953
      %v5023 = vunpack.c.l.b16 %v4874
      %v5024 = vunpack.c.h.b16 %v4874
      %v5025 = vunpack.c.l.b16 %v4875
      %v5026 = vunpack.c.l.b16 %v4876
      %v5027 = vunpack.c.h.b16 %v4876
      %v5028 = vunpack.c.l.b16 %v4877
      %v5029 = vunpack.c.l.b16 %v4878
      %v5030 = vunpack.c.h.b16 %v4878
      %v5031 = vunpack.c.l.b16 %v4879
      %v5032 = vunpack.c.l.b16 %v4880
      %v5033 = vunpack.c.h.b16 %v4880
      %v5034 = vunpack.c.l.b16 %v4881
      %v5035 = vunpack.c.l.b16 %v4882
      %v5036 = vunpack.c.h.b16 %v4882
      %v5037 = vunpack.c.l.b16 %v4883
      %v5038 = vunpack.c.l.b16 %v4884
      %v5039 = vunpack.c.h.b16 %v4884
      %v5040 = vunpack.c.l.b16 %v4885
      %v5041 = vunpack.c.l.b16 %v4886
      %v5042 = vunpack.c.h.b16 %v4886
      %v5043 = vunpack.c.l.b16 %v4887
      %v5044 = vunpack.c.l.b16 %v4888
      %v5045 = vunpack.c.h.b16 %v4888
      %v5046 = vunpack.c.l.b16 %v4889
      %v5047 = vunpack.c.l.b16 %v4890
      %v5048 = vunpack.c.h.b16 %v4890
      %v5049 = vunpack.c.l.b16 %v4891
      %v5050 = vunpack.c.l.b16 %v4892
      %v5051 = vunpack.c.h.b16 %v4892
      %v5052 = vunpack.c.l.b16 %v4893
      %v5053 = vunpack.c.l.b16 %v4894
      %v5054 = vunpack.c.h.b16 %v4894
      %v5055 = vunpack.c.l.b16 %v4895
      %v5056 = vunpack.c.l.b16 %v4896
      %v5057 = vunpack.c.h.b16 %v4896
      %v5058 = vunpack.c.l.b16 %v4897
      %v5059 = vunpack.c.l.b16 %v4898
      %v5060 = vunpack.c.h.b16 %v4898
      %v5061 = vunpack.c.l.b16 %v4899
      %v5062 = vunpack.c.l.b16 %v4900
      %v5063 = vunpack.c.h.b16 %v4900
      %v5064 = vunpack.c.l.b16 %v4901
      %v5065 = vunpack.c.l.b16 %v4902
      %v5066 = vunpack.c.h.b16 %v4902
      %v5067 = vunpack.c.l.b16 %v4903
      %v5068 = vunpack.c.l.b16 %v4904
      %v5069 = vunpack.c.h.b16 %v4904
      %v5070 = vunpack.c.l.b16 %v4905
      %v5071 = vunpack.c.l.b16 %v4906
      %v5072 = vunpack.c.h.b16 %v4906
      %v5073 = vunpack.c.l.b16 %v4907
      %v5074 = vunpack.c.l.b16 %v4908
      %v5075 = vunpack.c.h.b16 %v4908
      %v5076 = vunpack.c.l.b16 %v4909
      %v5077 = vunpack.c.l.b16 %v4910
      %v5078 = vunpack.c.h.b16 %v4910
      %v5079 = vunpack.c.l.b16 %v4911
      %v5080 = vunpack.c.l.b16 %v4912
      %v5081 = vunpack.c.h.b16 %v4912
      %v5082 = vunpack.c.l.b16 %v4913
      %v5083 = vunpack.c.l.b16 %v4914
      %v5084 = vunpack.c.h.b16 %v4914
      %v5085 = vunpack.c.l.b16 %v4915
      %v5086 = vunpack.c.l.b16 %v4916
      %v5087 = vunpack.c.h.b16 %v4916
      %v5088 = vunpack.c.l.b16 %v4917
      %v5089 = vunpack.c.l.b16 %v4918
      %v5090 = vunpack.c.h.b16 %v4918
      %v5091 = vunpack.c.l.b16 %v4919
      %v5092 = vunpack.c.l.b16 %v4920
      %v5093 = vunpack.c.h.b16 %v4920
      %v5094 = vunpack.c.l.b16 %v4921
      %v5095 = vunpack.c.l.b16 %v4922
      %v5096 = vunpack.c.h.b16 %v4922
      %v5097 = vunpack.c.l.b16 %v4923
      %v5098 = vunpack.c.l.b16 %v4924
      %v5099 = vunpack.c.h.b16 %v4924
      %v5100 = vunpack.c.l.b16 %v4925
      %v5101 = vunpack.c.l.b16 %v4926
      %v5102 = vunpack.c.h.b16 %v4926
      %v5103 = vunpack.c.l.b16 %v4927
      %v5104 = vunpack.c.l.b16 %v4928
      %v5105 = vunpack.c.h.b16 %v4928
      %v5106 = vunpack.c.l.b16 %v4929
      %v5107 = vunpack.c.l.b16 %v4930
      %v5108 = vunpack.c.h.b16 %v4930
      %v5109 = vunpack.c.l.b16 %v4931
      %v5110 = vunpack.c.l.b16 %v4932
      %v5111 = vunpack.c.h.b16 %v4932
      %v5112 = vunpack.c.l.b16 %v4933
      %v5113 = vunpack.c.l.b16 %v4934
      %v5114 = vunpack.c.h.b16 %v4934
      %v5115 = vunpack.c.l.b16 %v4935
      %v5116 = vunpack.c.l.b16 %v4936
      %v5117 = vunpack.c.h.b16 %v4936
      %v5118 = vunpack.c.l.b16 %v4937
      %v5119 = vunpack.c.l.b16 %v4938
      %v5120 = vunpack.c.h.b16 %v4938
      %v5121 = vunpack.c.l.b16 %v4939
      %v5122 = vpack.c.b16 %v5026, %v5023
      %v5123 = vpack.c.b16 %v5027, %v5024
      %v5124 = vpack.c.b16 %v5028, %v5025
      %v5125 = vpack.c.b16 %v5032, %v5029
      %v5126 = vpack.c.b16 %v5033, %v5030
      %v5127 = vpack.c.b16 %v5034, %v5031
      %v5128 = vpack.c.b16 %v5038, %v5035
      %v5129 = vpack.c.b16 %v5039, %v5036
      %v5130 = vpack.c.b16 %v5040, %v5037
      %v5131 = vpack.c.b16 %v5044, %v5041
      %v5132 = vpack.c.b16 %v5045, %v5042
      %v5133 = vpack.c.b16 %v5046, %v5043
      %v5134 = vpack.c.b16 %v5050, %v5047
      %v5135 = vpack.c.b16 %v5051, %v5048
      %v5136 = vpack.c.b16 %v5052, %v5049
      %v5137 = vpack.c.b16 %v5056, %v5053
      %v5138 = vpack.c.b16 %v5057, %v5054
      %v5139 = vpack.c.b16 %v5058, %v5055
      %v5140 = vpack.c.b16 %v5062, %v5059
      %v5141 = vpack.c.b16 %v5063, %v5060
      %v5142 = vpack.c.b16 %v5064, %v5061
      %v5143 = vpack.c.b16 %v5068, %v5065
      %v5144 = vpack.c.b16 %v5069, %v5066
      %v5145 = vpack.c.b16 %v5070, %v5067
      %v5146 = vpack.c.b16 %v5074, %v5071
      %v5147 = vpack.c.b16 %v5075, %v5072
      %v5148 = vpack.c.b16 %v5076, %v5073
      %v5149 = vpack.c.b16 %v5080, %v5077
      %v5150 = vpack.c.b16 %v5081, %v5078
      %v5151 = vpack.c.b16 %v5082, %v5079
      %v5152 = vpack.c.b16 %v5086, %v5083
      %v5153 = vpack.c.b16 %v5087, %v5084
      %v5154 = vpack.c.b16 %v5088, %v5085
      %v5155 = vpack.c.b16 %v5092, %v5089
      %v5156 = vpack.c.b16 %v5093, %v5090
      %v5157 = vpack.c.b16 %v5094, %v5091
      %v5158 = vpack.c.b16 %v5098, %v5095
      %v5159 = vpack.c.b16 %v5099, %v5096
      %v5160 = vpack.c.b16 %v5100, %v5097
      %v5161 = vpack.c.b16 %v5104, %v5101
      %v5162 = vpack.c.b16 %v5105, %v5102
      %v5163 = vpack.c.b16 %v5106, %v5103
      %v5164 = vpack.c.b16 %v5110, %v5107
      %v5165 = vpack.c.b16 %v5111, %v5108
      %v5166 = vpack.c.b16 %v5112, %v5109
      %v5167 = vpack.c.b16 %v5116, %v5113
      %v5168 = vpack.c.b16 %v5117, %v5114
      %v5169 = vpack.c.b16 %v5118, %v5115
      %v5170 = vpack.c.b16 %v5119, %v5119
      %v5171 = vpack.c.b16 %v5120, %v5120
      %v5172 = vpack.c.b16 %v5121, %v5121
      %v5222 = vsel %vm368, %v4954, 0
      %v5225 = vand.u32 %v5170, %v835
      %v5228 = vand.u32 %v5171, %v835
      %v5231 = vand.u32 %v5172, %v835
      %5233 = vmatprep.subr.bf16.mxu0 %v5144
      %5234 = vmatpush1.bf16.msra.mxu0 %v5143
      %5235 = vmatprep.subr.bf16.mxu0 %v5141
      %5236 = vmatpush1.bf16.msra.mxu0 %v5140
      %5237 = vmatprep.subr.bf16.mxu0 %v5138
      %5238 = vmatpush1.bf16.msra.mxu0 %v5137
      %5239 = vmatprep.subr.bf16.mxu0 %v5135
      %5240 = vmatpush1.bf16.msra.mxu0 %v5134
      %5241 = vmatprep.subr.bf16.mxu0 %v5132
      %5242 = vmatpush1.bf16.msra.mxu0 %v5131
      %5243 = vmatprep.subr.bf16.mxu0 %v5129
      %5244 = vmatpush1.bf16.msra.mxu0 %v5128
      %5245 = vmatprep.subr.bf16.mxu0 %v5126
      %5246 = vmatpush1.bf16.msra.mxu0 %v5125
      %5247 = vmatprep.subr.bf16.mxu0 %v5123
      %5248 = vmatpush1.bf16.msra.mxu0 %v5122
      %5249 = vmatprep.subr.bf16.mxu0 %v5168
      %5250 = vmatpush2.bf16.msra.mxu0 %v5167
      %5251 = vmatprep.subr.bf16.mxu0 %v5165
      %5252 = vmatpush2.bf16.msra.mxu0 %v5164
      %5253 = vmatprep.subr.bf16.mxu0 %v5162
      %5254 = vmatpush2.bf16.msra.mxu0 %v5161
      %5255 = vmatprep.subr.bf16.mxu0 %v5159
      %5256 = vmatpush2.bf16.msra.mxu0 %v5158
      %5257 = vmatprep.subr.bf16.mxu0 %v5156
      %5258 = vmatpush2.bf16.msra.mxu0 %v5155
      %5259 = vmatprep.subr.bf16.mxu0 %v5153
      %5260 = vmatpush2.bf16.msra.mxu0 %v5152
      %5261 = vmatprep.subr.bf16.mxu0 %v5150
      %5262 = vmatpush2.bf16.msra.mxu0 %v5149
      %5263 = vmatprep.subr.bf16.mxu0 %v5147
      %5264 = vmatpush2.bf16.msra.mxu0 %v5146
      %5265 = vmatprep.mubr.bf16.mxu0 %v4951
      %5266 = vmatmul.mubr.bf16.gmra.mxu0 %v4948
      %v5267 = vpop.f32.mrf.mxu0
      %v5268 = vadd.f32 0.0, %v5267
      %v5269 = vpop.f32.mrf.mxu0
      %v5270 = vadd.f32 0.0, %v5269
      %v5271 = vpop.f32.mrf.mxu0
      %v5272 = vadd.f32 0.0, %v5271
      %v5273 = vpop.f32.mrf.mxu0
      %v5274 = vadd.f32 0.0, %v5273
      %5275 = vdwg.mxu0
      %5276 = vmatprep.subr.bf16.mxu0 0
      %5277 = vmatpush1.bf16.msra.mxu0 0
      %5278 = vmatprep.subr.bf16.mxu0 0
      %5279 = vmatpush1.bf16.msra.mxu0 0
      %5280 = vmatprep.subr.bf16.mxu0 0
      %5281 = vmatpush1.bf16.msra.mxu0 0
      %5282 = vmatprep.subr.bf16.mxu0 0
      %5283 = vmatpush1.bf16.msra.mxu0 0
      %5284 = vmatprep.subr.bf16.mxu0 0
      %5285 = vmatpush1.bf16.msra.mxu0 0
      %5286 = vmatprep.subr.bf16.mxu0 0
      %5287 = vmatpush1.bf16.msra.mxu0 0
      %5288 = vmatprep.subr.bf16.mxu0 0
      %5289 = vmatpush1.bf16.msra.mxu0 0
      %5290 = vmatprep.subr.bf16.mxu0 %v5228
      %5291 = vmatpush1.bf16.msra.mxu0 %v5225
      %5292 = vmatprep.subr.bf16.mxu0 0
      %5293 = vmatpush2.bf16.msra.mxu0 0
      %5294 = vmatprep.subr.bf16.mxu0 0
      %5295 = vmatpush2.bf16.msra.mxu0 0
      %5296 = vmatprep.subr.bf16.mxu0 0
      %5297 = vmatpush2.bf16.msra.mxu0 0
      %5298 = vmatprep.subr.bf16.mxu0 0
      %5299 = vmatpush2.bf16.msra.mxu0 0
      %5300 = vmatprep.subr.bf16.mxu0 0
      %5301 = vmatpush2.bf16.msra.mxu0 0
      %5302 = vmatprep.subr.bf16.mxu0 0
      %5303 = vmatpush2.bf16.msra.mxu0 0
      %5304 = vmatprep.subr.bf16.mxu0 0
      %5305 = vmatpush2.bf16.msra.mxu0 0
      %5306 = vmatprep.subr.bf16.mxu0 0
      %5307 = vmatpush2.bf16.msra.mxu0 0
      %5308 = vmatprep.mubr.bf16.mxu0 0
      %5309 = vmatmul.mubr.bf16.gmra.mxu0 %v5222
      %v5310 = vpop.f32.mrf.mxu0
      %v5311 = vadd.f32 %v5268, %v5310
      %v5312 = vpop.f32.mrf.mxu0
      %v5313 = vadd.f32 %v5270, %v5312
      %v5314 = vpop.f32.mrf.mxu0
      %v5315 = vadd.f32 %v5272, %v5314
      %v5316 = vpop.f32.mrf.mxu0
      %v5317 = vadd.f32 %v5274, %v5316
      %5318 = vdwg.mxu0
      %5319 = vmatprep.subr.bf16.mxu0 0
      %5320 = vmatpush1.bf16.msra.mxu0 %v5145
      %5321 = vmatprep.subr.bf16.mxu0 0
      %5322 = vmatpush1.bf16.msra.mxu0 %v5142
      %5323 = vmatprep.subr.bf16.mxu0 0
      %5324 = vmatpush1.bf16.msra.mxu0 %v5139
      %5325 = vmatprep.subr.bf16.mxu0 0
      %5326 = vmatpush1.bf16.msra.mxu0 %v5136
      %5327 = vmatprep.subr.bf16.mxu0 0
      %5328 = vmatpush1.bf16.msra.mxu0 %v5133
      %5329 = vmatprep.subr.bf16.mxu0 0
      %5330 = vmatpush1.bf16.msra.mxu0 %v5130
      %5331 = vmatprep.subr.bf16.mxu0 0
      %5332 = vmatpush1.bf16.msra.mxu0 %v5127
      %5333 = vmatprep.subr.bf16.mxu0 0
      %5334 = vmatpush1.bf16.msra.mxu0 %v5124
      %5335 = vmatprep.subr.bf16.mxu0 0
      %5336 = vmatpush2.bf16.msra.mxu0 %v5169
      %5337 = vmatprep.subr.bf16.mxu0 0
      %5338 = vmatpush2.bf16.msra.mxu0 %v5166
      %5339 = vmatprep.subr.bf16.mxu0 0
      %5340 = vmatpush2.bf16.msra.mxu0 %v5163
      %5341 = vmatprep.subr.bf16.mxu0 0
      %5342 = vmatpush2.bf16.msra.mxu0 %v5160
      %5343 = vmatprep.subr.bf16.mxu0 0
      %5344 = vmatpush2.bf16.msra.mxu0 %v5157
      %5345 = vmatprep.subr.bf16.mxu0 0
      %5346 = vmatpush2.bf16.msra.mxu0 %v5154
      %5347 = vmatprep.subr.bf16.mxu0 0
      %5348 = vmatpush2.bf16.msra.mxu0 %v5151
      %5349 = vmatprep.subr.bf16.mxu0 0
      %5350 = vmatpush2.bf16.msra.mxu0 %v5148
      %5351 = vmatprep.mubr.bf16.mxu0 %v4951
      %5352 = vmatmul.mubr.bf16.gmra.mxu0 %v4948
      %v5353 = vpop.f32.mrf.mxu0
      %v5354 = vadd.f32 0.0, %v5353
      %v5355 = vpop.f32.mrf.mxu0
      %v5356 = vpop.f32.mrf.mxu0
      %v5357 = vadd.f32 0.0, %v5356
      %v5358 = vpop.f32.mrf.mxu0
      %5359 = vdwg.mxu0
      %5360 = vmatprep.subr.bf16.mxu0 0
      %5361 = vmatpush1.bf16.msra.mxu0 0
      %5362 = vmatprep.subr.bf16.mxu0 0
      %5363 = vmatpush1.bf16.msra.mxu0 0
      %5364 = vmatprep.subr.bf16.mxu0 0
      %5365 = vmatpush1.bf16.msra.mxu0 0
      %5366 = vmatprep.subr.bf16.mxu0 0
      %5367 = vmatpush1.bf16.msra.mxu0 0
      %5368 = vmatprep.subr.bf16.mxu0 0
      %5369 = vmatpush1.bf16.msra.mxu0 0
      %5370 = vmatprep.subr.bf16.mxu0 0
      %5371 = vmatpush1.bf16.msra.mxu0 0
      %5372 = vmatprep.subr.bf16.mxu0 0
      %5373 = vmatpush1.bf16.msra.mxu0 0
      %5374 = vmatprep.subr.bf16.mxu0 0
      %5375 = vmatpush1.bf16.msra.mxu0 %v5231
      %5376 = vmatprep.subr.bf16.mxu0 0
      %5377 = vmatpush2.bf16.msra.mxu0 0
      %5378 = vmatprep.subr.bf16.mxu0 0
      %5379 = vmatpush2.bf16.msra.mxu0 0
      %5380 = vmatprep.subr.bf16.mxu0 0
      %5381 = vmatpush2.bf16.msra.mxu0 0
      %5382 = vmatprep.subr.bf16.mxu0 0
      %5383 = vmatpush2.bf16.msra.mxu0 0
      %5384 = vmatprep.subr.bf16.mxu0 0
      %5385 = vmatpush2.bf16.msra.mxu0 0
      %5386 = vmatprep.subr.bf16.mxu0 0
      %5387 = vmatpush2.bf16.msra.mxu0 0
      %5388 = vmatprep.subr.bf16.mxu0 0
      %5389 = vmatpush2.bf16.msra.mxu0 0
      %5390 = vmatprep.subr.bf16.mxu0 0
      %5391 = vmatpush2.bf16.msra.mxu0 0
      %5392 = vmatprep.mubr.bf16.mxu0 0
      %5393 = vmatmul.mubr.bf16.gmra.mxu0 %v5222
      %v5394 = vpop.f32.mrf.mxu0
      %v5395 = vadd.f32 %v5354, %v5394
      %v5396 = vpop.f32.mrf.mxu0
      %v5397 = vpop.f32.mrf.mxu0
      %v5398 = vadd.f32 %v5357, %v5397
      %v5399 = vpop.f32.mrf.mxu0
      %5400 = vdwg.mxu0
      %v5401 = vadd.f32 %v4771, %v5311
      %v5402 = vadd.f32 %v4773, %v5313
      %v5403 = vadd.f32 %v4855, %v5395
      %v5404 = vadd.f32 %v4775, %v5315
      %v5405 = vadd.f32 %v4777, %v5317
      %v5406 = vadd.f32 %v4858, %v5398
      %s5407 = scalar_lea.vmem %s2, 6
      %v5408 = vld [vmem:[%s5407] sm:$0x7]
      %v5410 = vlaneseq
      %v5411 = vshrl.u32 %v5410, 7
      %v5412 = vsub.s32 0, %v5411
      %v5413 = vrot.slane %v5408, %v5412
      %v5414 = vlaneseq
      %v5415 = vshrl.u32 %v5414, 7
      %v5416 = vsub.s32 1, %v5415
      %v5417 = vrot.slane %v5408, %v5416
      %v5418 = vlaneseq
      %v5419 = vshrl.u32 %v5418, 7
      %v5420 = vsub.s32 2, %v5419
      %v5421 = vrot.slane %v5408, %v5420
      %v5425 = vadd.f32 %v5401, %v5413
      %v5426 = vadd.f32 %v5402, %v5417
      %v5427 = vadd.f32 %v5403, %v5421
      %v5428 = vadd.f32 %v5404, %v5413
      %v5429 = vadd.f32 %v5405, %v5417
      %v5430 = vadd.f32 %v5406, %v5421
      %vm5431 = vcmp.gt.f32.partialorder %v5425, 0.0
      %vm5432 = vcmp.gt.f32.partialorder %v5426, 0.0
      %vm5433 = vcmp.gt.f32.partialorder %v5427, 0.0
      %vm5434 = vcmp.gt.f32.partialorder %v5428, 0.0
      %vm5435 = vcmp.gt.f32.partialorder %v5429, 0.0
      %vm5436 = vcmp.gt.f32.partialorder %v5430, 0.0
      %v5437 = vmul.f32 %v5425, 0.2
      %v5438 = vmul.f32 %v5426, 0.2
      %v5439 = vmul.f32 %v5427, 0.2
      %v5440 = vmul.f32 %v5428, 0.2
      %v5441 = vmul.f32 %v5429, 0.2
      %v5442 = vmul.f32 %v5430, 0.2
      %v5443 = vsel %vm5431, %v5425, %v5437
      %v5444 = vsel %vm5432, %v5426, %v5438
      %v5445 = vsel %vm5433, %v5427, %v5439
      %v5446 = vsel %vm5434, %v5428, %v5440
      %v5447 = vsel %vm5435, %v5429, %v5441
      %v5448 = vsel %vm5436, %v5430, %v5442
      %v5455 = vrot.slane %v5443, 7
      %v5456 = vrot.slane %v5444, 7
      %v5457 = vrot.slane %v5445, 7
      %v5458 = vrot.slane %v5446, 7
      %v5459 = vsel %vm343, %v5455, %v5458
      %v5460 = vrot.slane %v5447, 7
      %v5461 = vsel %vm343, %v5456, %v5460
      %v5462 = vrot.slane %v5448, 7
      %v5463 = vsel %vm343, %v5457, %v5462
      %5473 = vst [vmem:[#allocation2] sm:$0xfe] %v5455
      %5474 = vst [vmem:[#allocation2 + $0x8] sm:$0xfe] %v5456
      %5475 = vst.msk [vmem:[#allocation2 + $0x10] sm:$0xfe] %vm364, %v5457
      %5476 = vst [vmem:[#allocation2 + $0x18] sm:$0xff] %v5459
      %5477 = vst [vmem:[#allocation2 + $0x20] sm:$0xff] %v5461
      %5478 = vst.msk [vmem:[#allocation2 + $0x28] sm:$0xff] %vm368, %v5463
      %5479 = vst [vmem:[#allocation2 + $0x30] sm:$0x1] %v5458
      %5480 = vst [vmem:[#allocation2 + $0x38] sm:$0x1] %v5460
      %5481 = vst.msk [vmem:[#allocation2 + $0x40] sm:$0x1] %vm372, %v5462
      %s5482 = scalar_lea.vmem %s1, 3564
      %v5483 = vld [vmem:[%s5482] sm:$0xff]
      %v5484 = vld [vmem:[%s5482 + $0x8] sm:$0xf]
      %v5485 = vld [vmem:[%s5482 + $0xc] sm:$0xff]
      %v5486 = vld [vmem:[%s5482 + $0x14] sm:$0xf]
      %v5487 = vld [vmem:[%s5482 + $0x18] sm:$0xff]
      %v5488 = vld [vmem:[%s5482 + $0x20] sm:$0xf]
      %v5489 = vld [vmem:[%s5482 + $0x24] sm:$0xff]
      %v5490 = vld [vmem:[%s5482 + $0x2c] sm:$0xf]
      %v5491 = vld [vmem:[%s5482 + $0x30] sm:$0xff]
      %v5492 = vld [vmem:[%s5482 + $0x38] sm:$0xf]
      %v5493 = vld [vmem:[%s5482 + $0x3c] sm:$0xff]
      %v5494 = vld [vmem:[%s5482 + $0x44] sm:$0xf]
      %v5495 = vld [vmem:[%s5482 + $0x48] sm:$0xff]
      %v5496 = vld [vmem:[%s5482 + $0x50] sm:$0xf]
      %v5497 = vld [vmem:[%s5482 + $0x54] sm:$0xff]
      %v5498 = vld [vmem:[%s5482 + $0x5c] sm:$0xf]
      %v5499 = vld [vmem:[%s5482 + $0x60] sm:$0xff]
      %v5500 = vld [vmem:[%s5482 + $0x68] sm:$0xf]
      %v5501 = vld [vmem:[%s5482 + $0x6c] sm:$0xff]
      %v5502 = vld [vmem:[%s5482 + $0x74] sm:$0xf]
      %v5503 = vld [vmem:[%s5482 + $0x78] sm:$0xff]
      %v5504 = vld [vmem:[%s5482 + $0x80] sm:$0xf]
      %v5505 = vld [vmem:[%s5482 + $0x84] sm:$0xff]
      %v5506 = vld [vmem:[%s5482 + $0x8c] sm:$0xf]
      %v5507 = vld [vmem:[%s5482 + $0x90] sm:$0xff]
      %v5508 = vld [vmem:[%s5482 + $0x98] sm:$0xf]
      %v5509 = vld [vmem:[%s5482 + $0x9c] sm:$0xff]
      %v5510 = vld [vmem:[%s5482 + $0xa4] sm:$0xf]
      %v5511 = vld [vmem:[%s5482 + $0xa8] sm:$0xff]
      %v5512 = vld [vmem:[%s5482 + $0xb0] sm:$0xf]
      %v5513 = vld [vmem:[%s5482 + $0xb4] sm:$0xff]
      %v5514 = vld [vmem:[%s5482 + $0xbc] sm:$0xf]
      %v5515 = vld [vmem:[%s5482 + $0xc0] sm:$0xff]
      %v5516 = vld [vmem:[%s5482 + $0xc8] sm:$0xf]
      %v5517 = vld [vmem:[%s5482 + $0xcc] sm:$0xff]
      %v5518 = vld [vmem:[%s5482 + $0xd4] sm:$0xf]
      %v5519 = vld [vmem:[%s5482 + $0xd8] sm:$0xff]
      %v5520 = vld [vmem:[%s5482 + $0xe0] sm:$0xf]
      %v5521 = vld [vmem:[%s5482 + $0xe4] sm:$0xff]
      %v5522 = vld [vmem:[%s5482 + $0xec] sm:$0xf]
      %v5523 = vld [vmem:[%s5482 + $0xf0] sm:$0xff]
      %v5524 = vld [vmem:[%s5482 + $0xf8] sm:$0xf]
      %v5525 = vld [vmem:[%s5482 + $0xfc] sm:$0xff]
      %v5526 = vld [vmem:[%s5482 + $0x104] sm:$0xf]
      %v5527 = vld [vmem:[%s5482 + $0x108] sm:$0xff]
      %v5528 = vld [vmem:[%s5482 + $0x110] sm:$0xf]
      %v5529 = vld [vmem:[%s5482 + $0x114] sm:$0xff]
      %v5530 = vld [vmem:[%s5482 + $0x11c] sm:$0xf]
      %v5531 = vld [vmem:[%s5482 + $0x120] sm:$0xff]
      %v5532 = vld [vmem:[%s5482 + $0x128] sm:$0xf]
      %v5533 = vld [vmem:[%s5482 + $0x12c] sm:$0xff]
      %v5534 = vld [vmem:[%s5482 + $0x134] sm:$0xf]
      %v5535 = vld [vmem:[%s5482 + $0x138] sm:$0xff]
      %v5536 = vld [vmem:[%s5482 + $0x140] sm:$0xf]
      %v5537 = vld [vmem:[%s5482 + $0x144] sm:$0xff]
      %v5538 = vld [vmem:[%s5482 + $0x14c] sm:$0xf]
      %v5539 = vld [vmem:[%s5482 + $0x150] sm:$0xff]
      %v5540 = vld [vmem:[%s5482 + $0x158] sm:$0xf]
      %v5541 = vld [vmem:[%s5482 + $0x15c] sm:$0xff]
      %v5542 = vld [vmem:[%s5482 + $0x164] sm:$0xf]
      %v5543 = vld [vmem:[%s5482 + $0x168] sm:$0xff]
      %v5544 = vld [vmem:[%s5482 + $0x170] sm:$0xf]
      %v5545 = vld [vmem:[%s5482 + $0x174] sm:$0xff]
      %v5546 = vld [vmem:[%s5482 + $0x17c] sm:$0xf]
      %v5547 = vld [vmem:[%s5482 + $0x180] sm:$0x11]
      %v5548 = vld [vmem:[%s5482 + $0x188] sm:$0x1]
      %v5549 = vld [vmem:[#allocation2] sm:$0xff]
      %v5550 = vld [vmem:[#allocation2 + $0x8] sm:$0xff]
      %v5551 = vld [vmem:[#allocation2 + $0x10] sm:$0xff]
      %v5552 = vld [vmem:[#allocation2 + $0x18] sm:$0xff]
      %v5553 = vld [vmem:[#allocation2 + $0x20] sm:$0xff]
      %v5554 = vld [vmem:[#allocation2 + $0x28] sm:$0xff]
      %v5555 = vpack.c.bf16 %v5552, %v5549
      %v5556 = vpack.c.bf16 %v5553, %v5550
      %v5557 = vpack.c.bf16 %v5554, %v5551
      %s5558 = scalar_lea.vmem %s1, 3960
      %v5559 = vld [vmem:[%s5558] sm:$0xff]
      %v5560 = vld [vmem:[%s5558 + $0x8] sm:$0xf]
      %v5561 = vld [vmem:[%s5558 + $0xc] sm:$0xff]
      %v5562 = vld [vmem:[%s5558 + $0x14] sm:$0xf]
      %v5563 = vld [vmem:[%s5558 + $0x18] sm:$0xff]
      %v5564 = vld [vmem:[%s5558 + $0x20] sm:$0xf]
      %v5565 = vld [vmem:[%s5558 + $0x24] sm:$0xff]
      %v5566 = vld [vmem:[%s5558 + $0x2c] sm:$0xf]
      %v5567 = vld [vmem:[%s5558 + $0x30] sm:$0xff]
      %v5568 = vld [vmem:[%s5558 + $0x38] sm:$0xf]
      %v5569 = vld [vmem:[%s5558 + $0x3c] sm:$0xff]
      %v5570 = vld [vmem:[%s5558 + $0x44] sm:$0xf]
      %v5571 = vld [vmem:[%s5558 + $0x48] sm:$0xff]
      %v5572 = vld [vmem:[%s5558 + $0x50] sm:$0xf]
      %v5573 = vld [vmem:[%s5558 + $0x54] sm:$0xff]
      %v5574 = vld [vmem:[%s5558 + $0x5c] sm:$0xf]
      %v5575 = vld [vmem:[%s5558 + $0x60] sm:$0xff]
      %v5576 = vld [vmem:[%s5558 + $0x68] sm:$0xf]
      %v5577 = vld [vmem:[%s5558 + $0x6c] sm:$0xff]
      %v5578 = vld [vmem:[%s5558 + $0x74] sm:$0xf]
      %v5579 = vld [vmem:[%s5558 + $0x78] sm:$0xff]
      %v5580 = vld [vmem:[%s5558 + $0x80] sm:$0xf]
      %v5581 = vld [vmem:[%s5558 + $0x84] sm:$0xff]
      %v5582 = vld [vmem:[%s5558 + $0x8c] sm:$0xf]
      %v5583 = vld [vmem:[%s5558 + $0x90] sm:$0xff]
      %v5584 = vld [vmem:[%s5558 + $0x98] sm:$0xf]
      %v5585 = vld [vmem:[%s5558 + $0x9c] sm:$0xff]
      %v5586 = vld [vmem:[%s5558 + $0xa4] sm:$0xf]
      %v5587 = vld [vmem:[%s5558 + $0xa8] sm:$0xff]
      %v5588 = vld [vmem:[%s5558 + $0xb0] sm:$0xf]
      %v5589 = vld [vmem:[%s5558 + $0xb4] sm:$0xff]
      %v5590 = vld [vmem:[%s5558 + $0xbc] sm:$0xf]
      %v5591 = vld [vmem:[%s5558 + $0xc0] sm:$0xff]
      %v5592 = vld [vmem:[%s5558 + $0xc8] sm:$0xf]
      %v5593 = vld [vmem:[%s5558 + $0xcc] sm:$0xff]
      %v5594 = vld [vmem:[%s5558 + $0xd4] sm:$0xf]
      %v5595 = vld [vmem:[%s5558 + $0xd8] sm:$0xff]
      %v5596 = vld [vmem:[%s5558 + $0xe0] sm:$0xf]
      %v5597 = vld [vmem:[%s5558 + $0xe4] sm:$0xff]
      %v5598 = vld [vmem:[%s5558 + $0xec] sm:$0xf]
      %v5599 = vld [vmem:[%s5558 + $0xf0] sm:$0xff]
      %v5600 = vld [vmem:[%s5558 + $0xf8] sm:$0xf]
      %v5601 = vld [vmem:[%s5558 + $0xfc] sm:$0xff]
      %v5602 = vld [vmem:[%s5558 + $0x104] sm:$0xf]
      %v5603 = vld [vmem:[%s5558 + $0x108] sm:$0xff]
      %v5604 = vld [vmem:[%s5558 + $0x110] sm:$0xf]
      %v5605 = vld [vmem:[%s5558 + $0x114] sm:$0xff]
      %v5606 = vld [vmem:[%s5558 + $0x11c] sm:$0xf]
      %v5607 = vld [vmem:[%s5558 + $0x120] sm:$0xff]
      %v5608 = vld [vmem:[%s5558 + $0x128] sm:$0xf]
      %v5609 = vld [vmem:[%s5558 + $0x12c] sm:$0xff]
      %v5610 = vld [vmem:[%s5558 + $0x134] sm:$0xf]
      %v5611 = vld [vmem:[%s5558 + $0x138] sm:$0xff]
      %v5612 = vld [vmem:[%s5558 + $0x140] sm:$0xf]
      %v5613 = vld [vmem:[%s5558 + $0x144] sm:$0xff]
      %v5614 = vld [vmem:[%s5558 + $0x14c] sm:$0xf]
      %v5615 = vld [vmem:[%s5558 + $0x150] sm:$0xff]
      %v5616 = vld [vmem:[%s5558 + $0x158] sm:$0xf]
      %v5617 = vld [vmem:[%s5558 + $0x15c] sm:$0xff]
      %v5618 = vld [vmem:[%s5558 + $0x164] sm:$0xf]
      %v5619 = vld [vmem:[%s5558 + $0x168] sm:$0xff]
      %v5620 = vld [vmem:[%s5558 + $0x170] sm:$0xf]
      %v5621 = vld [vmem:[%s5558 + $0x174] sm:$0xff]
      %v5622 = vld [vmem:[%s5558 + $0x17c] sm:$0xf]
      %v5623 = vld [vmem:[%s5558 + $0x180] sm:$0x11]
      %v5624 = vld [vmem:[%s5558 + $0x188] sm:$0x1]
      %v5625 = vld [vmem:[#allocation2] sm:$0xfe]
      %v5626 = vld [vmem:[#allocation2 + $0x8] sm:$0xfe]
      %v5627 = vld [vmem:[#allocation2 + $0x10] sm:$0xfe]
      %v5628 = vld [vmem:[#allocation2 + $0x30] sm:$0x1]
      %v5629 = vld [vmem:[#allocation2 + $0x38] sm:$0x1]
      %v5630 = vld [vmem:[#allocation2 + $0x40] sm:$0x1]
      %v5631 = vpack.c.bf16 %v5552, %v5625
      %v5632 = vpack.c.bf16 %v5553, %v5626
      %v5633 = vpack.c.bf16 %v5554, %v5627
      %v5634 = vpack.c.bf16 %v5628, %v5628
      %v5635 = vpack.c.bf16 %v5629, %v5629
      %v5636 = vpack.c.bf16 %v5630, %v5630
      %v5703 = vunpack.c.l.b16 %v5559
      %v5704 = vunpack.c.h.b16 %v5559
      %v5705 = vunpack.c.l.b16 %v5560
      %v5706 = vunpack.c.l.b16 %v5561
      %v5707 = vunpack.c.h.b16 %v5561
      %v5708 = vunpack.c.l.b16 %v5562
      %v5709 = vunpack.c.l.b16 %v5563
      %v5710 = vunpack.c.h.b16 %v5563
      %v5711 = vunpack.c.l.b16 %v5564
      %v5712 = vunpack.c.l.b16 %v5565
      %v5713 = vunpack.c.h.b16 %v5565
      %v5714 = vunpack.c.l.b16 %v5566
      %v5715 = vunpack.c.l.b16 %v5567
      %v5716 = vunpack.c.h.b16 %v5567
      %v5717 = vunpack.c.l.b16 %v5568
      %v5718 = vunpack.c.l.b16 %v5569
      %v5719 = vunpack.c.h.b16 %v5569
      %v5720 = vunpack.c.l.b16 %v5570
      %v5721 = vunpack.c.l.b16 %v5571
      %v5722 = vunpack.c.h.b16 %v5571
      %v5723 = vunpack.c.l.b16 %v5572
      %v5724 = vunpack.c.l.b16 %v5573
      %v5725 = vunpack.c.h.b16 %v5573
      %v5726 = vunpack.c.l.b16 %v5574
      %v5727 = vunpack.c.l.b16 %v5575
      %v5728 = vunpack.c.h.b16 %v5575
      %v5729 = vunpack.c.l.b16 %v5576
      %v5730 = vunpack.c.l.b16 %v5577
      %v5731 = vunpack.c.h.b16 %v5577
      %v5732 = vunpack.c.l.b16 %v5578
      %v5733 = vunpack.c.l.b16 %v5579
      %v5734 = vunpack.c.h.b16 %v5579
      %v5735 = vunpack.c.l.b16 %v5580
      %v5736 = vunpack.c.l.b16 %v5581
      %v5737 = vunpack.c.h.b16 %v5581
      %v5738 = vunpack.c.l.b16 %v5582
      %v5739 = vunpack.c.l.b16 %v5583
      %v5740 = vunpack.c.h.b16 %v5583
      %v5741 = vunpack.c.l.b16 %v5584
      %v5742 = vunpack.c.l.b16 %v5585
      %v5743 = vunpack.c.h.b16 %v5585
      %v5744 = vunpack.c.l.b16 %v5586
      %v5745 = vunpack.c.l.b16 %v5587
      %v5746 = vunpack.c.h.b16 %v5587
      %v5747 = vunpack.c.l.b16 %v5588
      %v5748 = vunpack.c.l.b16 %v5589
      %v5749 = vunpack.c.h.b16 %v5589
      %v5750 = vunpack.c.l.b16 %v5590
      %v5751 = vunpack.c.l.b16 %v5591
      %v5752 = vunpack.c.h.b16 %v5591
      %v5753 = vunpack.c.l.b16 %v5592
      %v5754 = vunpack.c.l.b16 %v5593
      %v5755 = vunpack.c.h.b16 %v5593
      %v5756 = vunpack.c.l.b16 %v5594
      %v5757 = vunpack.c.l.b16 %v5595
      %v5758 = vunpack.c.h.b16 %v5595
      %v5759 = vunpack.c.l.b16 %v5596
      %v5760 = vunpack.c.l.b16 %v5597
      %v5761 = vunpack.c.h.b16 %v5597
      %v5762 = vunpack.c.l.b16 %v5598
      %v5763 = vunpack.c.l.b16 %v5599
      %v5764 = vunpack.c.h.b16 %v5599
      %v5765 = vunpack.c.l.b16 %v5600
      %v5766 = vunpack.c.l.b16 %v5601
      %v5767 = vunpack.c.h.b16 %v5601
      %v5768 = vunpack.c.l.b16 %v5602
      %v5769 = vunpack.c.l.b16 %v5603
      %v5770 = vunpack.c.h.b16 %v5603
      %v5771 = vunpack.c.l.b16 %v5604
      %v5772 = vunpack.c.l.b16 %v5605
      %v5773 = vunpack.c.h.b16 %v5605
      %v5774 = vunpack.c.l.b16 %v5606
      %v5775 = vunpack.c.l.b16 %v5607
      %v5776 = vunpack.c.h.b16 %v5607
      %v5777 = vunpack.c.l.b16 %v5608
      %v5778 = vunpack.c.l.b16 %v5609
      %v5779 = vunpack.c.h.b16 %v5609
      %v5780 = vunpack.c.l.b16 %v5610
      %v5781 = vunpack.c.l.b16 %v5611
      %v5782 = vunpack.c.h.b16 %v5611
      %v5783 = vunpack.c.l.b16 %v5612
      %v5784 = vunpack.c.l.b16 %v5613
      %v5785 = vunpack.c.h.b16 %v5613
      %v5786 = vunpack.c.l.b16 %v5614
      %v5787 = vunpack.c.l.b16 %v5615
      %v5788 = vunpack.c.h.b16 %v5615
      %v5789 = vunpack.c.l.b16 %v5616
      %v5790 = vunpack.c.l.b16 %v5617
      %v5791 = vunpack.c.h.b16 %v5617
      %v5792 = vunpack.c.l.b16 %v5618
      %v5793 = vunpack.c.l.b16 %v5619
      %v5794 = vunpack.c.h.b16 %v5619
      %v5795 = vunpack.c.l.b16 %v5620
      %v5796 = vunpack.c.l.b16 %v5621
      %v5797 = vunpack.c.h.b16 %v5621
      %v5798 = vunpack.c.l.b16 %v5622
      %v5799 = vunpack.c.l.b16 %v5623
      %v5800 = vunpack.c.h.b16 %v5623
      %v5801 = vunpack.c.l.b16 %v5624
      %v5802 = vpack.c.b16 %v5706, %v5703
      %v5803 = vpack.c.b16 %v5707, %v5704
      %v5804 = vpack.c.b16 %v5708, %v5705
      %v5805 = vpack.c.b16 %v5712, %v5709
      %v5806 = vpack.c.b16 %v5713, %v5710
      %v5807 = vpack.c.b16 %v5714, %v5711
      %v5808 = vpack.c.b16 %v5718, %v5715
      %v5809 = vpack.c.b16 %v5719, %v5716
      %v5810 = vpack.c.b16 %v5720, %v5717
      %v5811 = vpack.c.b16 %v5724, %v5721
      %v5812 = vpack.c.b16 %v5725, %v5722
      %v5813 = vpack.c.b16 %v5726, %v5723
      %v5814 = vpack.c.b16 %v5730, %v5727
      %v5815 = vpack.c.b16 %v5731, %v5728
      %v5816 = vpack.c.b16 %v5732, %v5729
      %v5817 = vpack.c.b16 %v5736, %v5733
      %v5818 = vpack.c.b16 %v5737, %v5734
      %v5819 = vpack.c.b16 %v5738, %v5735
      %v5820 = vpack.c.b16 %v5742, %v5739
      %v5821 = vpack.c.b16 %v5743, %v5740
      %v5822 = vpack.c.b16 %v5744, %v5741
      %v5823 = vpack.c.b16 %v5748, %v5745
      %v5824 = vpack.c.b16 %v5749, %v5746
      %v5825 = vpack.c.b16 %v5750, %v5747
      %v5826 = vpack.c.b16 %v5754, %v5751
      %v5827 = vpack.c.b16 %v5755, %v5752
      %v5828 = vpack.c.b16 %v5756, %v5753
      %v5829 = vpack.c.b16 %v5760, %v5757
      %v5830 = vpack.c.b16 %v5761, %v5758
      %v5831 = vpack.c.b16 %v5762, %v5759
      %v5832 = vpack.c.b16 %v5766, %v5763
      %v5833 = vpack.c.b16 %v5767, %v5764
      %v5834 = vpack.c.b16 %v5768, %v5765
      %v5835 = vpack.c.b16 %v5772, %v5769
      %v5836 = vpack.c.b16 %v5773, %v5770
      %v5837 = vpack.c.b16 %v5774, %v5771
      %v5838 = vpack.c.b16 %v5778, %v5775
      %v5839 = vpack.c.b16 %v5779, %v5776
      %v5840 = vpack.c.b16 %v5780, %v5777
      %v5841 = vpack.c.b16 %v5784, %v5781
      %v5842 = vpack.c.b16 %v5785, %v5782
      %v5843 = vpack.c.b16 %v5786, %v5783
      %v5844 = vpack.c.b16 %v5790, %v5787
      %v5845 = vpack.c.b16 %v5791, %v5788
      %v5846 = vpack.c.b16 %v5792, %v5789
      %v5847 = vpack.c.b16 %v5796, %v5793
      %v5848 = vpack.c.b16 %v5797, %v5794
      %v5849 = vpack.c.b16 %v5798, %v5795
      %v5850 = vpack.c.b16 %v5799, %v5799
      %v5851 = vpack.c.b16 %v5800, %v5800
      %v5852 = vpack.c.b16 %v5801, %v5801
      %v5888 = vshrl.u32 %v5631, 16
      %v5890 = vshll.u32 %v5631, 16
      %v5892 = vrot.slane %v5890, 1
      %v5893 = vor.u32 %v5888, %v5892
      %v5895 = vshll.u32 %v5634, 16
      %v5897 = vrot.slane %v5895, 1
      %v5898 = vsel %vm528, %v5893, %v5897
      %v5900 = vshrl.u32 %v5632, 16
      %v5902 = vshll.u32 %v5632, 16
      %v5904 = vrot.slane %v5902, 1
      %v5905 = vor.u32 %v5900, %v5904
      %v5907 = vshll.u32 %v5635, 16
      %v5909 = vrot.slane %v5907, 1
      %v5910 = vsel %vm528, %v5905, %v5909
      %v5912 = vshrl.u32 %v5633, 16
      %v5914 = vshll.u32 %v5633, 16
      %v5916 = vrot.slane %v5914, 1
      %v5917 = vor.u32 %v5912, %v5916
      %v5919 = vshll.u32 %v5636, 16
      %v5921 = vrot.slane %v5919, 1
      %v5922 = vsel %vm528, %v5917, %v5921
      %v5926 = vsel %vm368, %v5804, 0
      %v5929 = vsel %vm368, %v5807, 0
      %v5932 = vsel %vm368, %v5810, 0
      %v5935 = vsel %vm368, %v5813, 0
      %v5938 = vsel %vm368, %v5816, 0
      %v5941 = vsel %vm368, %v5819, 0
      %v5944 = vsel %vm368, %v5822, 0
      %v5947 = vsel %vm368, %v5825, 0
      %v5950 = vsel %vm368, %v5828, 0
      %v5953 = vsel %vm368, %v5831, 0
      %v5956 = vsel %vm368, %v5834, 0
      %v5959 = vsel %vm368, %v5837, 0
      %v5962 = vsel %vm368, %v5840, 0
      %v5965 = vsel %vm368, %v5843, 0
      %v5968 = vsel %vm368, %v5846, 0
      %v5971 = vsel %vm368, %v5849, 0
      %v5974 = vsel %vm368, %v5852, 0
      %v5977 = vsel %vm368, %v5922, 0
      %5979 = vmatprep.subr.bf16.mxu0 0
      %5980 = vmatpush1.bf16.xpose.msra.mxu0 0
      %5981 = vmatprep.subr.bf16.mxu0 0
      %5982 = vmatpush1.bf16.xpose.msra.mxu0 0
      %5983 = vmatprep.subr.bf16.mxu0 0
      %5984 = vmatpush1.bf16.xpose.msra.mxu0 0
      %5985 = vmatprep.subr.bf16.mxu0 0
      %5986 = vmatpush1.bf16.xpose.msra.mxu0 0
      %5987 = vmatprep.subr.bf16.mxu0 0
      %5988 = vmatpush1.bf16.xpose.msra.mxu0 0
      %5989 = vmatprep.subr.bf16.mxu0 0
      %5990 = vmatpush1.bf16.xpose.msra.mxu0 0
      %5991 = vmatprep.subr.bf16.mxu0 0
      %5992 = vmatpush1.bf16.xpose.msra.mxu0 0
      %5993 = vmatprep.subr.bf16.mxu0 %v5910
      %5994 = vmatpush1.bf16.xpose.msra.mxu0 %v5898
      %5995 = vmatprep.subr.bf16.mxu0 0
      %5996 = vmatpush2.bf16.xpose.msra.mxu0 0
      %5997 = vmatprep.subr.bf16.mxu0 0
      %5998 = vmatpush2.bf16.xpose.msra.mxu0 0
      %5999 = vmatprep.subr.bf16.mxu0 0
      %6000 = vmatpush2.bf16.xpose.msra.mxu0 0
      %6001 = vmatprep.subr.bf16.mxu0 0
      %6002 = vmatpush2.bf16.xpose.msra.mxu0 0
      %6003 = vmatprep.subr.bf16.mxu0 0
      %6004 = vmatpush2.bf16.xpose.msra.mxu0 0
      %6005 = vmatprep.subr.bf16.mxu0 0
      %6006 = vmatpush2.bf16.xpose.msra.mxu0 0
      %6007 = vmatprep.subr.bf16.mxu0 0
      %6008 = vmatpush2.bf16.xpose.msra.mxu0 0
      %6009 = vmatprep.subr.bf16.mxu0 0
      %6010 = vmatpush2.bf16.xpose.msra.mxu0 0
      %6011 = vmatprep.mubr.bf16.mxu0 %v5803
      %6012 = vmatmul.mubr.bf16.gmra.mxu0 %v5802
      %v6013 = vpop.f32.mrf.mxu0
      %v6014 = vadd.f32 0.0, %v6013
      %v6015 = vpop.f32.mrf.mxu0
      %v6016 = vpop.f32.mrf.mxu0
      %v6017 = vadd.f32 0.0, %v6016
      %v6018 = vpop.f32.mrf.mxu0
      %6019 = vmatprep.mubr.bf16.mxu0 %v5806
      %6020 = vmatmul.mubr.bf16.gmra.mxu0 %v5805
      %v6021 = vpop.f32.mrf.mxu0
      %v6022 = vadd.f32 0.0, %v6021
      %v6023 = vpop.f32.mrf.mxu0
      %v6024 = vpop.f32.mrf.mxu0
      %v6025 = vadd.f32 0.0, %v6024
      %v6026 = vpop.f32.mrf.mxu0
      %6027 = vmatprep.mubr.bf16.mxu0 %v5809
      %6028 = vmatmul.mubr.bf16.gmra.mxu0 %v5808
      %v6029 = vpop.f32.mrf.mxu0
      %v6030 = vadd.f32 0.0, %v6029
      %v6031 = vpop.f32.mrf.mxu0
      %v6032 = vpop.f32.mrf.mxu0
      %v6033 = vadd.f32 0.0, %v6032
      %v6034 = vpop.f32.mrf.mxu0
      %6035 = vmatprep.mubr.bf16.mxu0 %v5812
      %6036 = vmatmul.mubr.bf16.gmra.mxu0 %v5811
      %v6037 = vpop.f32.mrf.mxu0
      %v6038 = vadd.f32 0.0, %v6037
      %v6039 = vpop.f32.mrf.mxu0
      %v6040 = vpop.f32.mrf.mxu0
      %v6041 = vadd.f32 0.0, %v6040
      %v6042 = vpop.f32.mrf.mxu0
      %6043 = vmatprep.mubr.bf16.mxu0 %v5815
      %6044 = vmatmul.mubr.bf16.gmra.mxu0 %v5814
      %v6045 = vpop.f32.mrf.mxu0
      %v6046 = vadd.f32 0.0, %v6045
      %v6047 = vpop.f32.mrf.mxu0
      %v6048 = vpop.f32.mrf.mxu0
      %v6049 = vadd.f32 0.0, %v6048
      %v6050 = vpop.f32.mrf.mxu0
      %6051 = vmatprep.mubr.bf16.mxu0 %v5818
      %6052 = vmatmul.mubr.bf16.gmra.mxu0 %v5817
      %v6053 = vpop.f32.mrf.mxu0
      %v6054 = vadd.f32 0.0, %v6053
      %v6055 = vpop.f32.mrf.mxu0
      %v6056 = vpop.f32.mrf.mxu0
      %v6057 = vadd.f32 0.0, %v6056
      %v6058 = vpop.f32.mrf.mxu0
      %6059 = vmatprep.mubr.bf16.mxu0 %v5821
      %6060 = vmatmul.mubr.bf16.gmra.mxu0 %v5820
      %v6061 = vpop.f32.mrf.mxu0
      %v6062 = vadd.f32 0.0, %v6061
      %v6063 = vpop.f32.mrf.mxu0
      %v6064 = vpop.f32.mrf.mxu0
      %v6065 = vadd.f32 0.0, %v6064
      %v6066 = vpop.f32.mrf.mxu0
      %6067 = vmatprep.mubr.bf16.mxu0 %v5824
      %6068 = vmatmul.mubr.bf16.gmra.mxu0 %v5823
      %v6069 = vpop.f32.mrf.mxu0
      %v6070 = vadd.f32 0.0, %v6069
      %v6071 = vpop.f32.mrf.mxu0
      %v6072 = vpop.f32.mrf.mxu0
      %v6073 = vadd.f32 0.0, %v6072
      %v6074 = vpop.f32.mrf.mxu0
      %6075 = vmatprep.mubr.bf16.mxu0 %v5827
      %6076 = vmatmul.mubr.bf16.gmra.mxu0 %v5826
      %v6077 = vpop.f32.mrf.mxu0
      %v6078 = vadd.f32 0.0, %v6077
      %v6079 = vpop.f32.mrf.mxu0
      %v6080 = vpop.f32.mrf.mxu0
      %v6081 = vadd.f32 0.0, %v6080
      %v6082 = vpop.f32.mrf.mxu0
      %6083 = vmatprep.mubr.bf16.mxu0 %v5830
      %6084 = vmatmul.mubr.bf16.gmra.mxu0 %v5829
      %v6085 = vpop.f32.mrf.mxu0
      %v6086 = vadd.f32 0.0, %v6085
      %v6087 = vpop.f32.mrf.mxu0
      %v6088 = vpop.f32.mrf.mxu0
      %v6089 = vadd.f32 0.0, %v6088
      %v6090 = vpop.f32.mrf.mxu0
      %6091 = vmatprep.mubr.bf16.mxu0 %v5833
      %6092 = vmatmul.mubr.bf16.gmra.mxu0 %v5832
      %v6093 = vpop.f32.mrf.mxu0
      %v6094 = vadd.f32 0.0, %v6093
      %v6095 = vpop.f32.mrf.mxu0
      %v6096 = vpop.f32.mrf.mxu0
      %v6097 = vadd.f32 0.0, %v6096
      %v6098 = vpop.f32.mrf.mxu0
      %6099 = vmatprep.mubr.bf16.mxu0 %v5836
      %6100 = vmatmul.mubr.bf16.gmra.mxu0 %v5835
      %v6101 = vpop.f32.mrf.mxu0
      %v6102 = vadd.f32 0.0, %v6101
      %v6103 = vpop.f32.mrf.mxu0
      %v6104 = vpop.f32.mrf.mxu0
      %v6105 = vadd.f32 0.0, %v6104
      %v6106 = vpop.f32.mrf.mxu0
      %6107 = vmatprep.mubr.bf16.mxu0 %v5839
      %6108 = vmatmul.mubr.bf16.gmra.mxu0 %v5838
      %v6109 = vpop.f32.mrf.mxu0
      %v6110 = vadd.f32 0.0, %v6109
      %v6111 = vpop.f32.mrf.mxu0
      %v6112 = vpop.f32.mrf.mxu0
      %v6113 = vadd.f32 0.0, %v6112
      %v6114 = vpop.f32.mrf.mxu0
      %6115 = vmatprep.mubr.bf16.mxu0 %v5842
      %6116 = vmatmul.mubr.bf16.gmra.mxu0 %v5841
      %v6117 = vpop.f32.mrf.mxu0
      %v6118 = vadd.f32 0.0, %v6117
      %v6119 = vpop.f32.mrf.mxu0
      %v6120 = vpop.f32.mrf.mxu0
      %v6121 = vadd.f32 0.0, %v6120
      %v6122 = vpop.f32.mrf.mxu0
      %6123 = vmatprep.mubr.bf16.mxu0 %v5845
      %6124 = vmatmul.mubr.bf16.gmra.mxu0 %v5844
      %v6125 = vpop.f32.mrf.mxu0
      %v6126 = vadd.f32 0.0, %v6125
      %v6127 = vpop.f32.mrf.mxu0
      %v6128 = vpop.f32.mrf.mxu0
      %v6129 = vadd.f32 0.0, %v6128
      %v6130 = vpop.f32.mrf.mxu0
      %6131 = vmatprep.mubr.bf16.mxu0 %v5848
      %6132 = vmatmul.mubr.bf16.gmra.mxu0 %v5847
      %v6133 = vpop.f32.mrf.mxu0
      %v6134 = vadd.f32 0.0, %v6133
      %v6135 = vpop.f32.mrf.mxu0
      %v6136 = vpop.f32.mrf.mxu0
      %v6137 = vadd.f32 0.0, %v6136
      %v6138 = vpop.f32.mrf.mxu0
      %6139 = vmatprep.mubr.bf16.mxu0 %v5851
      %6140 = vmatmul.mubr.bf16.gmra.mxu0 %v5850
      %v6141 = vpop.f32.mrf.mxu0
      %v6142 = vadd.f32 0.0, %v6141
      %v6143 = vpop.f32.mrf.mxu0
      %v6144 = vpop.f32.mrf.mxu0
      %v6145 = vpop.f32.mrf.mxu0
      %6146 = vdwg.mxu0
      %6147 = vmatprep.subr.bf16.mxu0 0
      %6148 = vmatpush1.bf16.xpose.msra.mxu0 0
      %6149 = vmatprep.subr.bf16.mxu0 0
      %6150 = vmatpush1.bf16.xpose.msra.mxu0 0
      %6151 = vmatprep.subr.bf16.mxu0 0
      %6152 = vmatpush1.bf16.xpose.msra.mxu0 0
      %6153 = vmatprep.subr.bf16.mxu0 0
      %6154 = vmatpush1.bf16.xpose.msra.mxu0 0
      %6155 = vmatprep.subr.bf16.mxu0 0
      %6156 = vmatpush1.bf16.xpose.msra.mxu0 0
      %6157 = vmatprep.subr.bf16.mxu0 0
      %6158 = vmatpush1.bf16.xpose.msra.mxu0 0
      %6159 = vmatprep.subr.bf16.mxu0 0
      %6160 = vmatpush1.bf16.xpose.msra.mxu0 0
      %6161 = vmatprep.subr.bf16.mxu0 0
      %6162 = vmatpush1.bf16.xpose.msra.mxu0 %v5977
      %6163 = vmatprep.subr.bf16.mxu0 0
      %6164 = vmatpush2.bf16.xpose.msra.mxu0 0
      %6165 = vmatprep.subr.bf16.mxu0 0
      %6166 = vmatpush2.bf16.xpose.msra.mxu0 0
      %6167 = vmatprep.subr.bf16.mxu0 0
      %6168 = vmatpush2.bf16.xpose.msra.mxu0 0
      %6169 = vmatprep.subr.bf16.mxu0 0
      %6170 = vmatpush2.bf16.xpose.msra.mxu0 0
      %6171 = vmatprep.subr.bf16.mxu0 0
      %6172 = vmatpush2.bf16.xpose.msra.mxu0 0
      %6173 = vmatprep.subr.bf16.mxu0 0
      %6174 = vmatpush2.bf16.xpose.msra.mxu0 0
      %6175 = vmatprep.subr.bf16.mxu0 0
      %6176 = vmatpush2.bf16.xpose.msra.mxu0 0
      %6177 = vmatprep.subr.bf16.mxu0 0
      %6178 = vmatpush2.bf16.xpose.msra.mxu0 0
      %6179 = vmatprep.mubr.bf16.mxu0 0
      %6180 = vmatmul.mubr.bf16.gmra.mxu0 %v5926
      %v6181 = vpop.f32.mrf.mxu0
      %v6182 = vadd.f32 %v6014, %v6181
      %v6183 = vpop.f32.mrf.mxu0
      %v6184 = vpop.f32.mrf.mxu0
      %v6185 = vadd.f32 %v6017, %v6184
      %v6186 = vpop.f32.mrf.mxu0
      %6187 = vmatprep.mubr.bf16.mxu0 0
      %6188 = vmatmul.mubr.bf16.gmra.mxu0 %v5929
      %v6189 = vpop.f32.mrf.mxu0
      %v6190 = vadd.f32 %v6022, %v6189
      %v6191 = vpop.f32.mrf.mxu0
      %v6192 = vpop.f32.mrf.mxu0
      %v6193 = vadd.f32 %v6025, %v6192
      %v6194 = vpop.f32.mrf.mxu0
      %6195 = vmatprep.mubr.bf16.mxu0 0
      %6196 = vmatmul.mubr.bf16.gmra.mxu0 %v5932
      %v6197 = vpop.f32.mrf.mxu0
      %v6198 = vadd.f32 %v6030, %v6197
      %v6199 = vpop.f32.mrf.mxu0
      %v6200 = vpop.f32.mrf.mxu0
      %v6201 = vadd.f32 %v6033, %v6200
      %v6202 = vpop.f32.mrf.mxu0
      %6203 = vmatprep.mubr.bf16.mxu0 0
      %6204 = vmatmul.mubr.bf16.gmra.mxu0 %v5935
      %v6205 = vpop.f32.mrf.mxu0
      %v6206 = vadd.f32 %v6038, %v6205
      %v6207 = vpop.f32.mrf.mxu0
      %v6208 = vpop.f32.mrf.mxu0
      %v6209 = vadd.f32 %v6041, %v6208
      %v6210 = vpop.f32.mrf.mxu0
      %6211 = vmatprep.mubr.bf16.mxu0 0
      %6212 = vmatmul.mubr.bf16.gmra.mxu0 %v5938
      %v6213 = vpop.f32.mrf.mxu0
      %v6214 = vadd.f32 %v6046, %v6213
      %v6215 = vpop.f32.mrf.mxu0
      %v6216 = vpop.f32.mrf.mxu0
      %v6217 = vadd.f32 %v6049, %v6216
      %v6218 = vpop.f32.mrf.mxu0
      %6219 = vmatprep.mubr.bf16.mxu0 0
      %6220 = vmatmul.mubr.bf16.gmra.mxu0 %v5941
      %v6221 = vpop.f32.mrf.mxu0
      %v6222 = vadd.f32 %v6054, %v6221
      %v6223 = vpop.f32.mrf.mxu0
      %v6224 = vpop.f32.mrf.mxu0
      %v6225 = vadd.f32 %v6057, %v6224
      %v6226 = vpop.f32.mrf.mxu0
      %6227 = vmatprep.mubr.bf16.mxu0 0
      %6228 = vmatmul.mubr.bf16.gmra.mxu0 %v5944
      %v6229 = vpop.f32.mrf.mxu0
      %v6230 = vadd.f32 %v6062, %v6229
      %v6231 = vpop.f32.mrf.mxu0
      %v6232 = vpop.f32.mrf.mxu0
      %v6233 = vadd.f32 %v6065, %v6232
      %v6234 = vpop.f32.mrf.mxu0
      %6235 = vmatprep.mubr.bf16.mxu0 0
      %6236 = vmatmul.mubr.bf16.gmra.mxu0 %v5947
      %v6237 = vpop.f32.mrf.mxu0
      %v6238 = vadd.f32 %v6070, %v6237
      %v6239 = vpop.f32.mrf.mxu0
      %v6240 = vpop.f32.mrf.mxu0
      %v6241 = vadd.f32 %v6073, %v6240
      %v6242 = vpop.f32.mrf.mxu0
      %6243 = vmatprep.mubr.bf16.mxu0 0
      %6244 = vmatmul.mubr.bf16.gmra.mxu0 %v5950
      %v6245 = vpop.f32.mrf.mxu0
      %v6246 = vadd.f32 %v6078, %v6245
      %v6247 = vpop.f32.mrf.mxu0
      %v6248 = vpop.f32.mrf.mxu0
      %v6249 = vadd.f32 %v6081, %v6248
      %v6250 = vpop.f32.mrf.mxu0
      %6251 = vmatprep.mubr.bf16.mxu0 0
      %6252 = vmatmul.mubr.bf16.gmra.mxu0 %v5953
      %v6253 = vpop.f32.mrf.mxu0
      %v6254 = vadd.f32 %v6086, %v6253
      %v6255 = vpop.f32.mrf.mxu0
      %v6256 = vpop.f32.mrf.mxu0
      %v6257 = vadd.f32 %v6089, %v6256
      %v6258 = vpop.f32.mrf.mxu0
      %6259 = vmatprep.mubr.bf16.mxu0 0
      %6260 = vmatmul.mubr.bf16.gmra.mxu0 %v5956
      %v6261 = vpop.f32.mrf.mxu0
      %v6262 = vadd.f32 %v6094, %v6261
      %v6263 = vpop.f32.mrf.mxu0
      %v6264 = vpop.f32.mrf.mxu0
      %v6265 = vadd.f32 %v6097, %v6264
      %v6266 = vpop.f32.mrf.mxu0
      %6267 = vmatprep.mubr.bf16.mxu0 0
      %6268 = vmatmul.mubr.bf16.gmra.mxu0 %v5959
      %v6269 = vpop.f32.mrf.mxu0
      %v6270 = vadd.f32 %v6102, %v6269
      %v6271 = vpop.f32.mrf.mxu0
      %v6272 = vpop.f32.mrf.mxu0
      %v6273 = vadd.f32 %v6105, %v6272
      %v6274 = vpop.f32.mrf.mxu0
      %6275 = vmatprep.mubr.bf16.mxu0 0
      %6276 = vmatmul.mubr.bf16.gmra.mxu0 %v5962
      %v6277 = vpop.f32.mrf.mxu0
      %v6278 = vadd.f32 %v6110, %v6277
      %v6279 = vpop.f32.mrf.mxu0
      %v6280 = vpop.f32.mrf.mxu0
      %v6281 = vadd.f32 %v6113, %v6280
      %v6282 = vpop.f32.mrf.mxu0
      %6283 = vmatprep.mubr.bf16.mxu0 0
      %6284 = vmatmul.mubr.bf16.gmra.mxu0 %v5965
      %v6285 = vpop.f32.mrf.mxu0
      %v6286 = vadd.f32 %v6118, %v6285
      %v6287 = vpop.f32.mrf.mxu0
      %v6288 = vpop.f32.mrf.mxu0
      %v6289 = vadd.f32 %v6121, %v6288
      %v6290 = vpop.f32.mrf.mxu0
      %6291 = vmatprep.mubr.bf16.mxu0 0
      %6292 = vmatmul.mubr.bf16.gmra.mxu0 %v5968
      %v6293 = vpop.f32.mrf.mxu0
      %v6294 = vadd.f32 %v6126, %v6293
      %v6295 = vpop.f32.mrf.mxu0
      %v6296 = vpop.f32.mrf.mxu0
      %v6297 = vadd.f32 %v6129, %v6296
      %v6298 = vpop.f32.mrf.mxu0
      %6299 = vmatprep.mubr.bf16.mxu0 0
      %6300 = vmatmul.mubr.bf16.gmra.mxu0 %v5971
      %v6301 = vpop.f32.mrf.mxu0
      %v6302 = vadd.f32 %v6134, %v6301
      %v6303 = vpop.f32.mrf.mxu0
      %v6304 = vpop.f32.mrf.mxu0
      %v6305 = vadd.f32 %v6137, %v6304
      %v6306 = vpop.f32.mrf.mxu0
      %6307 = vmatprep.mubr.bf16.mxu0 0
      %6308 = vmatmul.mubr.bf16.gmra.mxu0 %v5974
      %v6309 = vpop.f32.mrf.mxu0
      %v6310 = vadd.f32 %v6142, %v6309
      %v6311 = vpop.f32.mrf.mxu0
      %v6312 = vpop.f32.mrf.mxu0
      %v6313 = vpop.f32.mrf.mxu0
      %6314 = vdwg.mxu0
      %v6381 = vunpack.c.l.b16 %v5483
      %v6382 = vunpack.c.h.b16 %v5483
      %v6383 = vunpack.c.l.b16 %v5484
      %v6384 = vunpack.c.l.b16 %v5485
      %v6385 = vunpack.c.h.b16 %v5485
      %v6386 = vunpack.c.l.b16 %v5486
      %v6387 = vunpack.c.l.b16 %v5487
      %v6388 = vunpack.c.h.b16 %v5487
      %v6389 = vunpack.c.l.b16 %v5488
      %v6390 = vunpack.c.l.b16 %v5489
      %v6391 = vunpack.c.h.b16 %v5489
      %v6392 = vunpack.c.l.b16 %v5490
      %v6393 = vunpack.c.l.b16 %v5491
      %v6394 = vunpack.c.h.b16 %v5491
      %v6395 = vunpack.c.l.b16 %v5492
      %v6396 = vunpack.c.l.b16 %v5493
      %v6397 = vunpack.c.h.b16 %v5493
      %v6398 = vunpack.c.l.b16 %v5494
      %v6399 = vunpack.c.l.b16 %v5495
      %v6400 = vunpack.c.h.b16 %v5495
      %v6401 = vunpack.c.l.b16 %v5496
      %v6402 = vunpack.c.l.b16 %v5497
      %v6403 = vunpack.c.h.b16 %v5497
      %v6404 = vunpack.c.l.b16 %v5498
      %v6405 = vunpack.c.l.b16 %v5499
      %v6406 = vunpack.c.h.b16 %v5499
      %v6407 = vunpack.c.l.b16 %v5500
      %v6408 = vunpack.c.l.b16 %v5501
      %v6409 = vunpack.c.h.b16 %v5501
      %v6410 = vunpack.c.l.b16 %v5502
      %v6411 = vunpack.c.l.b16 %v5503
      %v6412 = vunpack.c.h.b16 %v5503
      %v6413 = vunpack.c.l.b16 %v5504
      %v6414 = vunpack.c.l.b16 %v5505
      %v6415 = vunpack.c.h.b16 %v5505
      %v6416 = vunpack.c.l.b16 %v5506
      %v6417 = vunpack.c.l.b16 %v5507
      %v6418 = vunpack.c.h.b16 %v5507
      %v6419 = vunpack.c.l.b16 %v5508
      %v6420 = vunpack.c.l.b16 %v5509
      %v6421 = vunpack.c.h.b16 %v5509
      %v6422 = vunpack.c.l.b16 %v5510
      %v6423 = vunpack.c.l.b16 %v5511
      %v6424 = vunpack.c.h.b16 %v5511
      %v6425 = vunpack.c.l.b16 %v5512
      %v6426 = vunpack.c.l.b16 %v5513
      %v6427 = vunpack.c.h.b16 %v5513
      %v6428 = vunpack.c.l.b16 %v5514
      %v6429 = vunpack.c.l.b16 %v5515
      %v6430 = vunpack.c.h.b16 %v5515
      %v6431 = vunpack.c.l.b16 %v5516
      %v6432 = vunpack.c.l.b16 %v5517
      %v6433 = vunpack.c.h.b16 %v5517
      %v6434 = vunpack.c.l.b16 %v5518
      %v6435 = vunpack.c.l.b16 %v5519
      %v6436 = vunpack.c.h.b16 %v5519
      %v6437 = vunpack.c.l.b16 %v5520
      %v6438 = vunpack.c.l.b16 %v5521
      %v6439 = vunpack.c.h.b16 %v5521
      %v6440 = vunpack.c.l.b16 %v5522
      %v6441 = vunpack.c.l.b16 %v5523
      %v6442 = vunpack.c.h.b16 %v5523
      %v6443 = vunpack.c.l.b16 %v5524
      %v6444 = vunpack.c.l.b16 %v5525
      %v6445 = vunpack.c.h.b16 %v5525
      %v6446 = vunpack.c.l.b16 %v5526
      %v6447 = vunpack.c.l.b16 %v5527
      %v6448 = vunpack.c.h.b16 %v5527
      %v6449 = vunpack.c.l.b16 %v5528
      %v6450 = vunpack.c.l.b16 %v5529
      %v6451 = vunpack.c.h.b16 %v5529
      %v6452 = vunpack.c.l.b16 %v5530
      %v6453 = vunpack.c.l.b16 %v5531
      %v6454 = vunpack.c.h.b16 %v5531
      %v6455 = vunpack.c.l.b16 %v5532
      %v6456 = vunpack.c.l.b16 %v5533
      %v6457 = vunpack.c.h.b16 %v5533
      %v6458 = vunpack.c.l.b16 %v5534
      %v6459 = vunpack.c.l.b16 %v5535
      %v6460 = vunpack.c.h.b16 %v5535
      %v6461 = vunpack.c.l.b16 %v5536
      %v6462 = vunpack.c.l.b16 %v5537
      %v6463 = vunpack.c.h.b16 %v5537
      %v6464 = vunpack.c.l.b16 %v5538
      %v6465 = vunpack.c.l.b16 %v5539
      %v6466 = vunpack.c.h.b16 %v5539
      %v6467 = vunpack.c.l.b16 %v5540
      %v6468 = vunpack.c.l.b16 %v5541
      %v6469 = vunpack.c.h.b16 %v5541
      %v6470 = vunpack.c.l.b16 %v5542
      %v6471 = vunpack.c.l.b16 %v5543
      %v6472 = vunpack.c.h.b16 %v5543
      %v6473 = vunpack.c.l.b16 %v5544
      %v6474 = vunpack.c.l.b16 %v5545
      %v6475 = vunpack.c.h.b16 %v5545
      %v6476 = vunpack.c.l.b16 %v5546
      %v6477 = vunpack.c.l.b16 %v5547
      %v6478 = vunpack.c.h.b16 %v5547
      %v6479 = vunpack.c.l.b16 %v5548
      %v6480 = vpack.c.b16 %v6384, %v6381
      %v6481 = vpack.c.b16 %v6385, %v6382
      %v6482 = vpack.c.b16 %v6386, %v6383
      %v6483 = vpack.c.b16 %v6390, %v6387
      %v6484 = vpack.c.b16 %v6391, %v6388
      %v6485 = vpack.c.b16 %v6392, %v6389
      %v6486 = vpack.c.b16 %v6396, %v6393
      %v6487 = vpack.c.b16 %v6397, %v6394
      %v6488 = vpack.c.b16 %v6398, %v6395
      %v6489 = vpack.c.b16 %v6402, %v6399
      %v6490 = vpack.c.b16 %v6403, %v6400
      %v6491 = vpack.c.b16 %v6404, %v6401
      %v6492 = vpack.c.b16 %v6408, %v6405
      %v6493 = vpack.c.b16 %v6409, %v6406
      %v6494 = vpack.c.b16 %v6410, %v6407
      %v6495 = vpack.c.b16 %v6414, %v6411
      %v6496 = vpack.c.b16 %v6415, %v6412
      %v6497 = vpack.c.b16 %v6416, %v6413
      %v6498 = vpack.c.b16 %v6420, %v6417
      %v6499 = vpack.c.b16 %v6421, %v6418
      %v6500 = vpack.c.b16 %v6422, %v6419
      %v6501 = vpack.c.b16 %v6426, %v6423
      %v6502 = vpack.c.b16 %v6427, %v6424
      %v6503 = vpack.c.b16 %v6428, %v6425
      %v6504 = vpack.c.b16 %v6432, %v6429
      %v6505 = vpack.c.b16 %v6433, %v6430
      %v6506 = vpack.c.b16 %v6434, %v6431
      %v6507 = vpack.c.b16 %v6438, %v6435
      %v6508 = vpack.c.b16 %v6439, %v6436
      %v6509 = vpack.c.b16 %v6440, %v6437
      %v6510 = vpack.c.b16 %v6444, %v6441
      %v6511 = vpack.c.b16 %v6445, %v6442
      %v6512 = vpack.c.b16 %v6446, %v6443
      %v6513 = vpack.c.b16 %v6450, %v6447
      %v6514 = vpack.c.b16 %v6451, %v6448
      %v6515 = vpack.c.b16 %v6452, %v6449
      %v6516 = vpack.c.b16 %v6456, %v6453
      %v6517 = vpack.c.b16 %v6457, %v6454
      %v6518 = vpack.c.b16 %v6458, %v6455
      %v6519 = vpack.c.b16 %v6462, %v6459
      %v6520 = vpack.c.b16 %v6463, %v6460
      %v6521 = vpack.c.b16 %v6464, %v6461
      %v6522 = vpack.c.b16 %v6468, %v6465
      %v6523 = vpack.c.b16 %v6469, %v6466
      %v6524 = vpack.c.b16 %v6470, %v6467
      %v6525 = vpack.c.b16 %v6474, %v6471
      %v6526 = vpack.c.b16 %v6475, %v6472
      %v6527 = vpack.c.b16 %v6476, %v6473
      %v6528 = vpack.c.b16 %v6477, %v6477
      %v6529 = vpack.c.b16 %v6478, %v6478
      %v6530 = vpack.c.b16 %v6479, %v6479
      %v6566 = vsel %vm368, %v6482, 0
      %v6569 = vsel %vm368, %v6485, 0
      %v6572 = vsel %vm368, %v6488, 0
      %v6575 = vsel %vm368, %v6491, 0
      %v6578 = vsel %vm368, %v6494, 0
      %v6581 = vsel %vm368, %v6497, 0
      %v6584 = vsel %vm368, %v6500, 0
      %v6587 = vsel %vm368, %v6503, 0
      %v6590 = vsel %vm368, %v6506, 0
      %v6593 = vsel %vm368, %v6509, 0
      %v6596 = vsel %vm368, %v6512, 0
      %v6599 = vsel %vm368, %v6515, 0
      %v6602 = vsel %vm368, %v6518, 0
      %v6605 = vsel %vm368, %v6521, 0
      %v6608 = vsel %vm368, %v6524, 0
      %v6611 = vsel %vm368, %v6527, 0
      %v6614 = vsel %vm368, %v6530, 0
      %v6617 = vsel %vm368, %v5557, 0
      %6619 = vmatprep.subr.bf16.mxu0 0
      %6620 = vmatpush1.bf16.xpose.msra.mxu0 0
      %6621 = vmatprep.subr.bf16.mxu0 0
      %6622 = vmatpush1.bf16.xpose.msra.mxu0 0
      %6623 = vmatprep.subr.bf16.mxu0 0
      %6624 = vmatpush1.bf16.xpose.msra.mxu0 0
      %6625 = vmatprep.subr.bf16.mxu0 0
      %6626 = vmatpush1.bf16.xpose.msra.mxu0 0
      %6627 = vmatprep.subr.bf16.mxu0 0
      %6628 = vmatpush1.bf16.xpose.msra.mxu0 0
      %6629 = vmatprep.subr.bf16.mxu0 0
      %6630 = vmatpush1.bf16.xpose.msra.mxu0 0
      %6631 = vmatprep.subr.bf16.mxu0 0
      %6632 = vmatpush1.bf16.xpose.msra.mxu0 0
      %6633 = vmatprep.subr.bf16.mxu0 %v5556
      %6634 = vmatpush1.bf16.xpose.msra.mxu0 %v5555
      %6635 = vmatprep.subr.bf16.mxu0 0
      %6636 = vmatpush2.bf16.xpose.msra.mxu0 0
      %6637 = vmatprep.subr.bf16.mxu0 0
      %6638 = vmatpush2.bf16.xpose.msra.mxu0 0
      %6639 = vmatprep.subr.bf16.mxu0 0
      %6640 = vmatpush2.bf16.xpose.msra.mxu0 0
      %6641 = vmatprep.subr.bf16.mxu0 0
      %6642 = vmatpush2.bf16.xpose.msra.mxu0 0
      %6643 = vmatprep.subr.bf16.mxu0 0
      %6644 = vmatpush2.bf16.xpose.msra.mxu0 0
      %6645 = vmatprep.subr.bf16.mxu0 0
      %6646 = vmatpush2.bf16.xpose.msra.mxu0 0
      %6647 = vmatprep.subr.bf16.mxu0 0
      %6648 = vmatpush2.bf16.xpose.msra.mxu0 0
      %6649 = vmatprep.subr.bf16.mxu0 0
      %6650 = vmatpush2.bf16.xpose.msra.mxu0 0
      %6651 = vmatprep.mubr.bf16.mxu0 %v6481
      %6652 = vmatmul.mubr.bf16.gmra.mxu0 %v6480
      %v6653 = vpop.f32.mrf.mxu0
      %v6654 = vadd.f32 %v6182, %v6653
      %v6655 = vpop.f32.mrf.mxu0
      %v6656 = vpop.f32.mrf.mxu0
      %v6657 = vadd.f32 %v6185, %v6656
      %v6658 = vpop.f32.mrf.mxu0
      %6659 = vmatprep.mubr.bf16.mxu0 %v6484
      %6660 = vmatmul.mubr.bf16.gmra.mxu0 %v6483
      %v6661 = vpop.f32.mrf.mxu0
      %v6662 = vadd.f32 %v6190, %v6661
      %v6663 = vpop.f32.mrf.mxu0
      %v6664 = vpop.f32.mrf.mxu0
      %v6665 = vadd.f32 %v6193, %v6664
      %v6666 = vpop.f32.mrf.mxu0
      %6667 = vmatprep.mubr.bf16.mxu0 %v6487
      %6668 = vmatmul.mubr.bf16.gmra.mxu0 %v6486
      %v6669 = vpop.f32.mrf.mxu0
      %v6670 = vadd.f32 %v6198, %v6669
      %v6671 = vpop.f32.mrf.mxu0
      %v6672 = vpop.f32.mrf.mxu0
      %v6673 = vadd.f32 %v6201, %v6672
      %v6674 = vpop.f32.mrf.mxu0
      %6675 = vmatprep.mubr.bf16.mxu0 %v6490
      %6676 = vmatmul.mubr.bf16.gmra.mxu0 %v6489
      %v6677 = vpop.f32.mrf.mxu0
      %v6678 = vadd.f32 %v6206, %v6677
      %v6679 = vpop.f32.mrf.mxu0
      %v6680 = vpop.f32.mrf.mxu0
      %v6681 = vadd.f32 %v6209, %v6680
      %v6682 = vpop.f32.mrf.mxu0
      %6683 = vmatprep.mubr.bf16.mxu0 %v6493
      %6684 = vmatmul.mubr.bf16.gmra.mxu0 %v6492
      %v6685 = vpop.f32.mrf.mxu0
      %v6686 = vadd.f32 %v6214, %v6685
      %v6687 = vpop.f32.mrf.mxu0
      %v6688 = vpop.f32.mrf.mxu0
      %v6689 = vadd.f32 %v6217, %v6688
      %v6690 = vpop.f32.mrf.mxu0
      %6691 = vmatprep.mubr.bf16.mxu0 %v6496
      %6692 = vmatmul.mubr.bf16.gmra.mxu0 %v6495
      %v6693 = vpop.f32.mrf.mxu0
      %v6694 = vadd.f32 %v6222, %v6693
      %v6695 = vpop.f32.mrf.mxu0
      %v6696 = vpop.f32.mrf.mxu0
      %v6697 = vadd.f32 %v6225, %v6696
      %v6698 = vpop.f32.mrf.mxu0
      %6699 = vmatprep.mubr.bf16.mxu0 %v6499
      %6700 = vmatmul.mubr.bf16.gmra.mxu0 %v6498
      %v6701 = vpop.f32.mrf.mxu0
      %v6702 = vadd.f32 %v6230, %v6701
      %v6703 = vpop.f32.mrf.mxu0
      %v6704 = vpop.f32.mrf.mxu0
      %v6705 = vadd.f32 %v6233, %v6704
      %v6706 = vpop.f32.mrf.mxu0
      %6707 = vmatprep.mubr.bf16.mxu0 %v6502
      %6708 = vmatmul.mubr.bf16.gmra.mxu0 %v6501
      %v6709 = vpop.f32.mrf.mxu0
      %v6710 = vadd.f32 %v6238, %v6709
      %v6711 = vpop.f32.mrf.mxu0
      %v6712 = vpop.f32.mrf.mxu0
      %v6713 = vadd.f32 %v6241, %v6712
      %v6714 = vpop.f32.mrf.mxu0
      %6715 = vmatprep.mubr.bf16.mxu0 %v6505
      %6716 = vmatmul.mubr.bf16.gmra.mxu0 %v6504
      %v6717 = vpop.f32.mrf.mxu0
      %v6718 = vadd.f32 %v6246, %v6717
      %v6719 = vpop.f32.mrf.mxu0
      %v6720 = vpop.f32.mrf.mxu0
      %v6721 = vadd.f32 %v6249, %v6720
      %v6722 = vpop.f32.mrf.mxu0
      %6723 = vmatprep.mubr.bf16.mxu0 %v6508
      %6724 = vmatmul.mubr.bf16.gmra.mxu0 %v6507
      %v6725 = vpop.f32.mrf.mxu0
      %v6726 = vadd.f32 %v6254, %v6725
      %v6727 = vpop.f32.mrf.mxu0
      %v6728 = vpop.f32.mrf.mxu0
      %v6729 = vadd.f32 %v6257, %v6728
      %v6730 = vpop.f32.mrf.mxu0
      %6731 = vmatprep.mubr.bf16.mxu0 %v6511
      %6732 = vmatmul.mubr.bf16.gmra.mxu0 %v6510
      %v6733 = vpop.f32.mrf.mxu0
      %v6734 = vadd.f32 %v6262, %v6733
      %v6735 = vpop.f32.mrf.mxu0
      %v6736 = vpop.f32.mrf.mxu0
      %v6737 = vadd.f32 %v6265, %v6736
      %v6738 = vpop.f32.mrf.mxu0
      %6739 = vmatprep.mubr.bf16.mxu0 %v6514
      %6740 = vmatmul.mubr.bf16.gmra.mxu0 %v6513
      %v6741 = vpop.f32.mrf.mxu0
      %v6742 = vadd.f32 %v6270, %v6741
      %v6743 = vpop.f32.mrf.mxu0
      %v6744 = vpop.f32.mrf.mxu0
      %v6745 = vadd.f32 %v6273, %v6744
      %v6746 = vpop.f32.mrf.mxu0
      %6747 = vmatprep.mubr.bf16.mxu0 %v6517
      %6748 = vmatmul.mubr.bf16.gmra.mxu0 %v6516
      %v6749 = vpop.f32.mrf.mxu0
      %v6750 = vadd.f32 %v6278, %v6749
      %v6751 = vpop.f32.mrf.mxu0
      %v6752 = vpop.f32.mrf.mxu0
      %v6753 = vadd.f32 %v6281, %v6752
      %v6754 = vpop.f32.mrf.mxu0
      %6755 = vmatprep.mubr.bf16.mxu0 %v6520
      %6756 = vmatmul.mubr.bf16.gmra.mxu0 %v6519
      %v6757 = vpop.f32.mrf.mxu0
      %v6758 = vadd.f32 %v6286, %v6757
      %v6759 = vpop.f32.mrf.mxu0
      %v6760 = vpop.f32.mrf.mxu0
      %v6761 = vadd.f32 %v6289, %v6760
      %v6762 = vpop.f32.mrf.mxu0
      %6763 = vmatprep.mubr.bf16.mxu0 %v6523
      %6764 = vmatmul.mubr.bf16.gmra.mxu0 %v6522
      %v6765 = vpop.f32.mrf.mxu0
      %v6766 = vadd.f32 %v6294, %v6765
      %v6767 = vpop.f32.mrf.mxu0
      %v6768 = vpop.f32.mrf.mxu0
      %v6769 = vadd.f32 %v6297, %v6768
      %v6770 = vpop.f32.mrf.mxu0
      %6771 = vmatprep.mubr.bf16.mxu0 %v6526
      %6772 = vmatmul.mubr.bf16.gmra.mxu0 %v6525
      %v6773 = vpop.f32.mrf.mxu0
      %v6774 = vadd.f32 %v6302, %v6773
      %v6775 = vpop.f32.mrf.mxu0
      %v6776 = vpop.f32.mrf.mxu0
      %v6777 = vadd.f32 %v6305, %v6776
      %v6778 = vpop.f32.mrf.mxu0
      %6779 = vmatprep.mubr.bf16.mxu0 %v6529
      %6780 = vmatmul.mubr.bf16.gmra.mxu0 %v6528
      %v6781 = vpop.f32.mrf.mxu0
      %v6782 = vadd.f32 %v6310, %v6781
      %v6783 = vpop.f32.mrf.mxu0
      %v6784 = vpop.f32.mrf.mxu0
      %v6785 = vpop.f32.mrf.mxu0
      %6786 = vdwg.mxu0
      %6787 = vmatprep.subr.bf16.mxu0 0
      %6788 = vmatpush1.bf16.xpose.msra.mxu0 0
      %6789 = vmatprep.subr.bf16.mxu0 0
      %6790 = vmatpush1.bf16.xpose.msra.mxu0 0
      %6791 = vmatprep.subr.bf16.mxu0 0
      %6792 = vmatpush1.bf16.xpose.msra.mxu0 0
      %6793 = vmatprep.subr.bf16.mxu0 0
      %6794 = vmatpush1.bf16.xpose.msra.mxu0 0
      %6795 = vmatprep.subr.bf16.mxu0 0
      %6796 = vmatpush1.bf16.xpose.msra.mxu0 0
      %6797 = vmatprep.subr.bf16.mxu0 0
      %6798 = vmatpush1.bf16.xpose.msra.mxu0 0
      %6799 = vmatprep.subr.bf16.mxu0 0
      %6800 = vmatpush1.bf16.xpose.msra.mxu0 0
      %6801 = vmatprep.subr.bf16.mxu0 0
      %6802 = vmatpush1.bf16.xpose.msra.mxu0 %v6617
      %6803 = vmatprep.subr.bf16.mxu0 0
      %6804 = vmatpush2.bf16.xpose.msra.mxu0 0
      %6805 = vmatprep.subr.bf16.mxu0 0
      %6806 = vmatpush2.bf16.xpose.msra.mxu0 0
      %6807 = vmatprep.subr.bf16.mxu0 0
      %6808 = vmatpush2.bf16.xpose.msra.mxu0 0
      %6809 = vmatprep.subr.bf16.mxu0 0
      %6810 = vmatpush2.bf16.xpose.msra.mxu0 0
      %6811 = vmatprep.subr.bf16.mxu0 0
      %6812 = vmatpush2.bf16.xpose.msra.mxu0 0
      %6813 = vmatprep.subr.bf16.mxu0 0
      %6814 = vmatpush2.bf16.xpose.msra.mxu0 0
      %6815 = vmatprep.subr.bf16.mxu0 0
      %6816 = vmatpush2.bf16.xpose.msra.mxu0 0
      %6817 = vmatprep.subr.bf16.mxu0 0
      %6818 = vmatpush2.bf16.xpose.msra.mxu0 0
      %6819 = vmatprep.mubr.bf16.mxu0 0
      %6820 = vmatmul.mubr.bf16.gmra.mxu0 %v6566
      %v6821 = vpop.f32.mrf.mxu0
      %v6822 = vadd.f32 %v6654, %v6821
      %v6823 = vpop.f32.mrf.mxu0
      %v6824 = vpop.f32.mrf.mxu0
      %v6825 = vadd.f32 %v6657, %v6824
      %v6826 = vpop.f32.mrf.mxu0
      %6827 = vmatprep.mubr.bf16.mxu0 0
      %6828 = vmatmul.mubr.bf16.gmra.mxu0 %v6569
      %v6829 = vpop.f32.mrf.mxu0
      %v6830 = vadd.f32 %v6662, %v6829
      %v6831 = vpop.f32.mrf.mxu0
      %v6832 = vpop.f32.mrf.mxu0
      %v6833 = vadd.f32 %v6665, %v6832
      %v6834 = vpop.f32.mrf.mxu0
      %6835 = vmatprep.mubr.bf16.mxu0 0
      %6836 = vmatmul.mubr.bf16.gmra.mxu0 %v6572
      %v6837 = vpop.f32.mrf.mxu0
      %v6838 = vadd.f32 %v6670, %v6837
      %v6839 = vpop.f32.mrf.mxu0
      %v6840 = vpop.f32.mrf.mxu0
      %v6841 = vadd.f32 %v6673, %v6840
      %v6842 = vpop.f32.mrf.mxu0
      %6843 = vmatprep.mubr.bf16.mxu0 0
      %6844 = vmatmul.mubr.bf16.gmra.mxu0 %v6575
      %v6845 = vpop.f32.mrf.mxu0
      %v6846 = vadd.f32 %v6678, %v6845
      %v6847 = vpop.f32.mrf.mxu0
      %v6848 = vpop.f32.mrf.mxu0
      %v6849 = vadd.f32 %v6681, %v6848
      %v6850 = vpop.f32.mrf.mxu0
      %6851 = vmatprep.mubr.bf16.mxu0 0
      %6852 = vmatmul.mubr.bf16.gmra.mxu0 %v6578
      %v6853 = vpop.f32.mrf.mxu0
      %v6854 = vadd.f32 %v6686, %v6853
      %v6855 = vpop.f32.mrf.mxu0
      %v6856 = vpop.f32.mrf.mxu0
      %v6857 = vadd.f32 %v6689, %v6856
      %v6858 = vpop.f32.mrf.mxu0
      %6859 = vmatprep.mubr.bf16.mxu0 0
      %6860 = vmatmul.mubr.bf16.gmra.mxu0 %v6581
      %v6861 = vpop.f32.mrf.mxu0
      %v6862 = vadd.f32 %v6694, %v6861
      %v6863 = vpop.f32.mrf.mxu0
      %v6864 = vpop.f32.mrf.mxu0
      %v6865 = vadd.f32 %v6697, %v6864
      %v6866 = vpop.f32.mrf.mxu0
      %6867 = vmatprep.mubr.bf16.mxu0 0
      %6868 = vmatmul.mubr.bf16.gmra.mxu0 %v6584
      %v6869 = vpop.f32.mrf.mxu0
      %v6870 = vadd.f32 %v6702, %v6869
      %v6871 = vpop.f32.mrf.mxu0
      %v6872 = vpop.f32.mrf.mxu0
      %v6873 = vadd.f32 %v6705, %v6872
      %v6874 = vpop.f32.mrf.mxu0
      %6875 = vmatprep.mubr.bf16.mxu0 0
      %6876 = vmatmul.mubr.bf16.gmra.mxu0 %v6587
      %v6877 = vpop.f32.mrf.mxu0
      %v6878 = vadd.f32 %v6710, %v6877
      %v6879 = vpop.f32.mrf.mxu0
      %v6880 = vpop.f32.mrf.mxu0
      %v6881 = vadd.f32 %v6713, %v6880
      %v6882 = vpop.f32.mrf.mxu0
      %6883 = vmatprep.mubr.bf16.mxu0 0
      %6884 = vmatmul.mubr.bf16.gmra.mxu0 %v6590
      %v6885 = vpop.f32.mrf.mxu0
      %v6886 = vadd.f32 %v6718, %v6885
      %v6887 = vpop.f32.mrf.mxu0
      %v6888 = vpop.f32.mrf.mxu0
      %v6889 = vadd.f32 %v6721, %v6888
      %v6890 = vpop.f32.mrf.mxu0
      %6891 = vmatprep.mubr.bf16.mxu0 0
      %6892 = vmatmul.mubr.bf16.gmra.mxu0 %v6593
      %v6893 = vpop.f32.mrf.mxu0
      %v6894 = vadd.f32 %v6726, %v6893
      %v6895 = vpop.f32.mrf.mxu0
      %v6896 = vpop.f32.mrf.mxu0
      %v6897 = vadd.f32 %v6729, %v6896
      %v6898 = vpop.f32.mrf.mxu0
      %6899 = vmatprep.mubr.bf16.mxu0 0
      %6900 = vmatmul.mubr.bf16.gmra.mxu0 %v6596
      %v6901 = vpop.f32.mrf.mxu0
      %v6902 = vadd.f32 %v6734, %v6901
      %v6903 = vpop.f32.mrf.mxu0
      %v6904 = vpop.f32.mrf.mxu0
      %v6905 = vadd.f32 %v6737, %v6904
      %v6906 = vpop.f32.mrf.mxu0
      %6907 = vmatprep.mubr.bf16.mxu0 0
      %6908 = vmatmul.mubr.bf16.gmra.mxu0 %v6599
      %v6909 = vpop.f32.mrf.mxu0
      %v6910 = vadd.f32 %v6742, %v6909
      %v6911 = vpop.f32.mrf.mxu0
      %v6912 = vpop.f32.mrf.mxu0
      %v6913 = vadd.f32 %v6745, %v6912
      %v6914 = vpop.f32.mrf.mxu0
      %6915 = vmatprep.mubr.bf16.mxu0 0
      %6916 = vmatmul.mubr.bf16.gmra.mxu0 %v6602
      %v6917 = vpop.f32.mrf.mxu0
      %v6918 = vadd.f32 %v6750, %v6917
      %v6919 = vpop.f32.mrf.mxu0
      %v6920 = vpop.f32.mrf.mxu0
      %v6921 = vadd.f32 %v6753, %v6920
      %v6922 = vpop.f32.mrf.mxu0
      %6923 = vmatprep.mubr.bf16.mxu0 0
      %6924 = vmatmul.mubr.bf16.gmra.mxu0 %v6605
      %v6925 = vpop.f32.mrf.mxu0
      %v6926 = vadd.f32 %v6758, %v6925
      %v6927 = vpop.f32.mrf.mxu0
      %v6928 = vpop.f32.mrf.mxu0
      %v6929 = vadd.f32 %v6761, %v6928
      %v6930 = vpop.f32.mrf.mxu0
      %6931 = vmatprep.mubr.bf16.mxu0 0
      %6932 = vmatmul.mubr.bf16.gmra.mxu0 %v6608
      %v6933 = vpop.f32.mrf.mxu0
      %v6934 = vadd.f32 %v6766, %v6933
      %v6935 = vpop.f32.mrf.mxu0
      %v6936 = vpop.f32.mrf.mxu0
      %v6937 = vadd.f32 %v6769, %v6936
      %v6938 = vpop.f32.mrf.mxu0
      %6939 = vmatprep.mubr.bf16.mxu0 0
      %6940 = vmatmul.mubr.bf16.gmra.mxu0 %v6611
      %v6941 = vpop.f32.mrf.mxu0
      %v6942 = vadd.f32 %v6774, %v6941
      %v6943 = vpop.f32.mrf.mxu0
      %v6944 = vpop.f32.mrf.mxu0
      %v6945 = vadd.f32 %v6777, %v6944
      %v6946 = vpop.f32.mrf.mxu0
      %6947 = vmatprep.mubr.bf16.mxu0 0
      %6948 = vmatmul.mubr.bf16.gmra.mxu0 %v6614
      %v6949 = vpop.f32.mrf.mxu0
      %v6950 = vadd.f32 %v6782, %v6949
      %v6951 = vpop.f32.mrf.mxu0
      %v6952 = vpop.f32.mrf.mxu0
      %v6953 = vpop.f32.mrf.mxu0
      %6954 = vdwg.mxu0
      %s6955 = scalar_lea.vmem %s1, 4356
      %v6956 = vld [vmem:[%s6955] sm:$0xff]
      %v6957 = vld [vmem:[%s6955 + $0x8] sm:$0xf]
      %v6958 = vld [vmem:[%s6955 + $0xc] sm:$0xff]
      %v6959 = vld [vmem:[%s6955 + $0x14] sm:$0xf]
      %v6960 = vld [vmem:[%s6955 + $0x18] sm:$0xff]
      %v6961 = vld [vmem:[%s6955 + $0x20] sm:$0xf]
      %v6962 = vld [vmem:[%s6955 + $0x24] sm:$0xff]
      %v6963 = vld [vmem:[%s6955 + $0x2c] sm:$0xf]
      %v6964 = vld [vmem:[%s6955 + $0x30] sm:$0xff]
      %v6965 = vld [vmem:[%s6955 + $0x38] sm:$0xf]
      %v6966 = vld [vmem:[%s6955 + $0x3c] sm:$0xff]
      %v6967 = vld [vmem:[%s6955 + $0x44] sm:$0xf]
      %v6968 = vld [vmem:[%s6955 + $0x48] sm:$0xff]
      %v6969 = vld [vmem:[%s6955 + $0x50] sm:$0xf]
      %v6970 = vld [vmem:[%s6955 + $0x54] sm:$0xff]
      %v6971 = vld [vmem:[%s6955 + $0x5c] sm:$0xf]
      %v6972 = vld [vmem:[%s6955 + $0x60] sm:$0xff]
      %v6973 = vld [vmem:[%s6955 + $0x68] sm:$0xf]
      %v6974 = vld [vmem:[%s6955 + $0x6c] sm:$0xff]
      %v6975 = vld [vmem:[%s6955 + $0x74] sm:$0xf]
      %v6976 = vld [vmem:[%s6955 + $0x78] sm:$0xff]
      %v6977 = vld [vmem:[%s6955 + $0x80] sm:$0xf]
      %v6978 = vld [vmem:[%s6955 + $0x84] sm:$0xff]
      %v6979 = vld [vmem:[%s6955 + $0x8c] sm:$0xf]
      %v6980 = vld [vmem:[%s6955 + $0x90] sm:$0xff]
      %v6981 = vld [vmem:[%s6955 + $0x98] sm:$0xf]
      %v6982 = vld [vmem:[%s6955 + $0x9c] sm:$0xff]
      %v6983 = vld [vmem:[%s6955 + $0xa4] sm:$0xf]
      %v6984 = vld [vmem:[%s6955 + $0xa8] sm:$0xff]
      %v6985 = vld [vmem:[%s6955 + $0xb0] sm:$0xf]
      %v6986 = vld [vmem:[%s6955 + $0xb4] sm:$0xff]
      %v6987 = vld [vmem:[%s6955 + $0xbc] sm:$0xf]
      %v6988 = vld [vmem:[%s6955 + $0xc0] sm:$0xff]
      %v6989 = vld [vmem:[%s6955 + $0xc8] sm:$0xf]
      %v6990 = vld [vmem:[%s6955 + $0xcc] sm:$0xff]
      %v6991 = vld [vmem:[%s6955 + $0xd4] sm:$0xf]
      %v6992 = vld [vmem:[%s6955 + $0xd8] sm:$0xff]
      %v6993 = vld [vmem:[%s6955 + $0xe0] sm:$0xf]
      %v6994 = vld [vmem:[%s6955 + $0xe4] sm:$0xff]
      %v6995 = vld [vmem:[%s6955 + $0xec] sm:$0xf]
      %v6996 = vld [vmem:[%s6955 + $0xf0] sm:$0xff]
      %v6997 = vld [vmem:[%s6955 + $0xf8] sm:$0xf]
      %v6998 = vld [vmem:[%s6955 + $0xfc] sm:$0xff]
      %v6999 = vld [vmem:[%s6955 + $0x104] sm:$0xf]
      %v7000 = vld [vmem:[%s6955 + $0x108] sm:$0xff]
      %v7001 = vld [vmem:[%s6955 + $0x110] sm:$0xf]
      %v7002 = vld [vmem:[%s6955 + $0x114] sm:$0xff]
      %v7003 = vld [vmem:[%s6955 + $0x11c] sm:$0xf]
      %v7004 = vld [vmem:[%s6955 + $0x120] sm:$0xff]
      %v7005 = vld [vmem:[%s6955 + $0x128] sm:$0xf]
      %v7006 = vld [vmem:[%s6955 + $0x12c] sm:$0xff]
      %v7007 = vld [vmem:[%s6955 + $0x134] sm:$0xf]
      %v7008 = vld [vmem:[%s6955 + $0x138] sm:$0xff]
      %v7009 = vld [vmem:[%s6955 + $0x140] sm:$0xf]
      %v7010 = vld [vmem:[%s6955 + $0x144] sm:$0xff]
      %v7011 = vld [vmem:[%s6955 + $0x14c] sm:$0xf]
      %v7012 = vld [vmem:[%s6955 + $0x150] sm:$0xff]
      %v7013 = vld [vmem:[%s6955 + $0x158] sm:$0xf]
      %v7014 = vld [vmem:[%s6955 + $0x15c] sm:$0xff]
      %v7015 = vld [vmem:[%s6955 + $0x164] sm:$0xf]
      %v7016 = vld [vmem:[%s6955 + $0x168] sm:$0xff]
      %v7017 = vld [vmem:[%s6955 + $0x170] sm:$0xf]
      %v7018 = vld [vmem:[%s6955 + $0x174] sm:$0xff]
      %v7019 = vld [vmem:[%s6955 + $0x17c] sm:$0xf]
      %v7020 = vld [vmem:[%s6955 + $0x180] sm:$0x11]
      %v7021 = vld [vmem:[%s6955 + $0x188] sm:$0x1]
      %v7022 = vld [vmem:[#allocation2] sm:$0xfc]
      %v7023 = vld [vmem:[#allocation2 + $0x8] sm:$0xfc]
      %v7024 = vld [vmem:[#allocation2 + $0x10] sm:$0xfc]
      %v7025 = vld [vmem:[#allocation2 + $0x30] sm:$0x3]
      %v7026 = vld [vmem:[#allocation2 + $0x38] sm:$0x3]
      %v7027 = vld [vmem:[#allocation2 + $0x40] sm:$0x3]
      %v7028 = vpack.c.bf16 %v5552, %v7022
      %v7029 = vpack.c.bf16 %v5553, %v7023
      %v7030 = vpack.c.bf16 %v5554, %v7024
      %v7031 = vpack.c.bf16 %v7025, %v7025
      %v7032 = vpack.c.bf16 %v7026, %v7026
      %v7033 = vpack.c.bf16 %v7027, %v7027
      %v7100 = vunpack.c.l.b16 %v6956
      %v7101 = vunpack.c.h.b16 %v6956
      %v7102 = vunpack.c.l.b16 %v6957
      %v7103 = vunpack.c.l.b16 %v6958
      %v7104 = vunpack.c.h.b16 %v6958
      %v7105 = vunpack.c.l.b16 %v6959
      %v7106 = vunpack.c.l.b16 %v6960
      %v7107 = vunpack.c.h.b16 %v6960
      %v7108 = vunpack.c.l.b16 %v6961
      %v7109 = vunpack.c.l.b16 %v6962
      %v7110 = vunpack.c.h.b16 %v6962
      %v7111 = vunpack.c.l.b16 %v6963
      %v7112 = vunpack.c.l.b16 %v6964
      %v7113 = vunpack.c.h.b16 %v6964
      %v7114 = vunpack.c.l.b16 %v6965
      %v7115 = vunpack.c.l.b16 %v6966
      %v7116 = vunpack.c.h.b16 %v6966
      %v7117 = vunpack.c.l.b16 %v6967
      %v7118 = vunpack.c.l.b16 %v6968
      %v7119 = vunpack.c.h.b16 %v6968
      %v7120 = vunpack.c.l.b16 %v6969
      %v7121 = vunpack.c.l.b16 %v6970
      %v7122 = vunpack.c.h.b16 %v6970
      %v7123 = vunpack.c.l.b16 %v6971
      %v7124 = vunpack.c.l.b16 %v6972
      %v7125 = vunpack.c.h.b16 %v6972
      %v7126 = vunpack.c.l.b16 %v6973
      %v7127 = vunpack.c.l.b16 %v6974
      %v7128 = vunpack.c.h.b16 %v6974
      %v7129 = vunpack.c.l.b16 %v6975
      %v7130 = vunpack.c.l.b16 %v6976
      %v7131 = vunpack.c.h.b16 %v6976
      %v7132 = vunpack.c.l.b16 %v6977
      %v7133 = vunpack.c.l.b16 %v6978
      %v7134 = vunpack.c.h.b16 %v6978
      %v7135 = vunpack.c.l.b16 %v6979
      %v7136 = vunpack.c.l.b16 %v6980
      %v7137 = vunpack.c.h.b16 %v6980
      %v7138 = vunpack.c.l.b16 %v6981
      %v7139 = vunpack.c.l.b16 %v6982
      %v7140 = vunpack.c.h.b16 %v6982
      %v7141 = vunpack.c.l.b16 %v6983
      %v7142 = vunpack.c.l.b16 %v6984
      %v7143 = vunpack.c.h.b16 %v6984
      %v7144 = vunpack.c.l.b16 %v6985
      %v7145 = vunpack.c.l.b16 %v6986
      %v7146 = vunpack.c.h.b16 %v6986
      %v7147 = vunpack.c.l.b16 %v6987
      %v7148 = vunpack.c.l.b16 %v6988
      %v7149 = vunpack.c.h.b16 %v6988
      %v7150 = vunpack.c.l.b16 %v6989
      %v7151 = vunpack.c.l.b16 %v6990
      %v7152 = vunpack.c.h.b16 %v6990
      %v7153 = vunpack.c.l.b16 %v6991
      %v7154 = vunpack.c.l.b16 %v6992
      %v7155 = vunpack.c.h.b16 %v6992
      %v7156 = vunpack.c.l.b16 %v6993
      %v7157 = vunpack.c.l.b16 %v6994
      %v7158 = vunpack.c.h.b16 %v6994
      %v7159 = vunpack.c.l.b16 %v6995
      %v7160 = vunpack.c.l.b16 %v6996
      %v7161 = vunpack.c.h.b16 %v6996
      %v7162 = vunpack.c.l.b16 %v6997
      %v7163 = vunpack.c.l.b16 %v6998
      %v7164 = vunpack.c.h.b16 %v6998
      %v7165 = vunpack.c.l.b16 %v6999
      %v7166 = vunpack.c.l.b16 %v7000
      %v7167 = vunpack.c.h.b16 %v7000
      %v7168 = vunpack.c.l.b16 %v7001
      %v7169 = vunpack.c.l.b16 %v7002
      %v7170 = vunpack.c.h.b16 %v7002
      %v7171 = vunpack.c.l.b16 %v7003
      %v7172 = vunpack.c.l.b16 %v7004
      %v7173 = vunpack.c.h.b16 %v7004
      %v7174 = vunpack.c.l.b16 %v7005
      %v7175 = vunpack.c.l.b16 %v7006
      %v7176 = vunpack.c.h.b16 %v7006
      %v7177 = vunpack.c.l.b16 %v7007
      %v7178 = vunpack.c.l.b16 %v7008
      %v7179 = vunpack.c.h.b16 %v7008
      %v7180 = vunpack.c.l.b16 %v7009
      %v7181 = vunpack.c.l.b16 %v7010
      %v7182 = vunpack.c.h.b16 %v7010
      %v7183 = vunpack.c.l.b16 %v7011
      %v7184 = vunpack.c.l.b16 %v7012
      %v7185 = vunpack.c.h.b16 %v7012
      %v7186 = vunpack.c.l.b16 %v7013
      %v7187 = vunpack.c.l.b16 %v7014
      %v7188 = vunpack.c.h.b16 %v7014
      %v7189 = vunpack.c.l.b16 %v7015
      %v7190 = vunpack.c.l.b16 %v7016
      %v7191 = vunpack.c.h.b16 %v7016
      %v7192 = vunpack.c.l.b16 %v7017
      %v7193 = vunpack.c.l.b16 %v7018
      %v7194 = vunpack.c.h.b16 %v7018
      %v7195 = vunpack.c.l.b16 %v7019
      %v7196 = vunpack.c.l.b16 %v7020
      %v7197 = vunpack.c.h.b16 %v7020
      %v7198 = vunpack.c.l.b16 %v7021
      %v7199 = vpack.c.b16 %v7103, %v7100
      %v7200 = vpack.c.b16 %v7104, %v7101
      %v7201 = vpack.c.b16 %v7105, %v7102
      %v7202 = vpack.c.b16 %v7109, %v7106
      %v7203 = vpack.c.b16 %v7110, %v7107
      %v7204 = vpack.c.b16 %v7111, %v7108
      %v7205 = vpack.c.b16 %v7115, %v7112
      %v7206 = vpack.c.b16 %v7116, %v7113
      %v7207 = vpack.c.b16 %v7117, %v7114
      %v7208 = vpack.c.b16 %v7121, %v7118
      %v7209 = vpack.c.b16 %v7122, %v7119
      %v7210 = vpack.c.b16 %v7123, %v7120
      %v7211 = vpack.c.b16 %v7127, %v7124
      %v7212 = vpack.c.b16 %v7128, %v7125
      %v7213 = vpack.c.b16 %v7129, %v7126
      %v7214 = vpack.c.b16 %v7133, %v7130
      %v7215 = vpack.c.b16 %v7134, %v7131
      %v7216 = vpack.c.b16 %v7135, %v7132
      %v7217 = vpack.c.b16 %v7139, %v7136
      %v7218 = vpack.c.b16 %v7140, %v7137
      %v7219 = vpack.c.b16 %v7141, %v7138
      %v7220 = vpack.c.b16 %v7145, %v7142
      %v7221 = vpack.c.b16 %v7146, %v7143
      %v7222 = vpack.c.b16 %v7147, %v7144
      %v7223 = vpack.c.b16 %v7151, %v7148
      %v7224 = vpack.c.b16 %v7152, %v7149
      %v7225 = vpack.c.b16 %v7153, %v7150
      %v7226 = vpack.c.b16 %v7157, %v7154
      %v7227 = vpack.c.b16 %v7158, %v7155
      %v7228 = vpack.c.b16 %v7159, %v7156
      %v7229 = vpack.c.b16 %v7163, %v7160
      %v7230 = vpack.c.b16 %v7164, %v7161
      %v7231 = vpack.c.b16 %v7165, %v7162
      %v7232 = vpack.c.b16 %v7169, %v7166
      %v7233 = vpack.c.b16 %v7170, %v7167
      %v7234 = vpack.c.b16 %v7171, %v7168
      %v7235 = vpack.c.b16 %v7175, %v7172
      %v7236 = vpack.c.b16 %v7176, %v7173
      %v7237 = vpack.c.b16 %v7177, %v7174
      %v7238 = vpack.c.b16 %v7181, %v7178
      %v7239 = vpack.c.b16 %v7182, %v7179
      %v7240 = vpack.c.b16 %v7183, %v7180
      %v7241 = vpack.c.b16 %v7187, %v7184
      %v7242 = vpack.c.b16 %v7188, %v7185
      %v7243 = vpack.c.b16 %v7189, %v7186
      %v7244 = vpack.c.b16 %v7193, %v7190
      %v7245 = vpack.c.b16 %v7194, %v7191
      %v7246 = vpack.c.b16 %v7195, %v7192
      %v7247 = vpack.c.b16 %v7196, %v7196
      %v7248 = vpack.c.b16 %v7197, %v7197
      %v7249 = vpack.c.b16 %v7198, %v7198
      %v7290 = vrot.slane %v7028, 1
      %v7291 = vrot.slane %v7031, 1
      %v7292 = vsel %vm1542, %v7290, %v7291
      %v7293 = vrot.slane %v7029, 1
      %v7294 = vrot.slane %v7032, 1
      %v7295 = vsel %vm1542, %v7293, %v7294
      %v7296 = vrot.slane %v7030, 1
      %v7297 = vrot.slane %v7033, 1
      %v7298 = vsel %vm1542, %v7296, %v7297
      %v7302 = vsel %vm368, %v7201, 0
      %v7305 = vsel %vm368, %v7204, 0
      %v7308 = vsel %vm368, %v7207, 0
      %v7311 = vsel %vm368, %v7210, 0
      %v7314 = vsel %vm368, %v7213, 0
      %v7317 = vsel %vm368, %v7216, 0
      %v7320 = vsel %vm368, %v7219, 0
      %v7323 = vsel %vm368, %v7222, 0
      %v7326 = vsel %vm368, %v7225, 0
      %v7329 = vsel %vm368, %v7228, 0
      %v7332 = vsel %vm368, %v7231, 0
      %v7335 = vsel %vm368, %v7234, 0
      %v7338 = vsel %vm368, %v7237, 0
      %v7341 = vsel %vm368, %v7240, 0
      %v7344 = vsel %vm368, %v7243, 0
      %v7347 = vsel %vm368, %v7246, 0
      %v7350 = vsel %vm368, %v7249, 0
      %v7353 = vsel %vm368, %v7298, 0
      %7355 = vmatprep.subr.bf16.mxu0 0
      %7356 = vmatpush1.bf16.xpose.msra.mxu0 0
      %7357 = vmatprep.subr.bf16.mxu0 0
      %7358 = vmatpush1.bf16.xpose.msra.mxu0 0
      %7359 = vmatprep.subr.bf16.mxu0 0
      %7360 = vmatpush1.bf16.xpose.msra.mxu0 0
      %7361 = vmatprep.subr.bf16.mxu0 0
      %7362 = vmatpush1.bf16.xpose.msra.mxu0 0
      %7363 = vmatprep.subr.bf16.mxu0 0
      %7364 = vmatpush1.bf16.xpose.msra.mxu0 0
      %7365 = vmatprep.subr.bf16.mxu0 0
      %7366 = vmatpush1.bf16.xpose.msra.mxu0 0
      %7367 = vmatprep.subr.bf16.mxu0 0
      %7368 = vmatpush1.bf16.xpose.msra.mxu0 0
      %7369 = vmatprep.subr.bf16.mxu0 %v7295
      %7370 = vmatpush1.bf16.xpose.msra.mxu0 %v7292
      %7371 = vmatprep.subr.bf16.mxu0 0
      %7372 = vmatpush2.bf16.xpose.msra.mxu0 0
      %7373 = vmatprep.subr.bf16.mxu0 0
      %7374 = vmatpush2.bf16.xpose.msra.mxu0 0
      %7375 = vmatprep.subr.bf16.mxu0 0
      %7376 = vmatpush2.bf16.xpose.msra.mxu0 0
      %7377 = vmatprep.subr.bf16.mxu0 0
      %7378 = vmatpush2.bf16.xpose.msra.mxu0 0
      %7379 = vmatprep.subr.bf16.mxu0 0
      %7380 = vmatpush2.bf16.xpose.msra.mxu0 0
      %7381 = vmatprep.subr.bf16.mxu0 0
      %7382 = vmatpush2.bf16.xpose.msra.mxu0 0
      %7383 = vmatprep.subr.bf16.mxu0 0
      %7384 = vmatpush2.bf16.xpose.msra.mxu0 0
      %7385 = vmatprep.subr.bf16.mxu0 0
      %7386 = vmatpush2.bf16.xpose.msra.mxu0 0
      %7387 = vmatprep.mubr.bf16.mxu0 %v7200
      %7388 = vmatmul.mubr.bf16.gmra.mxu0 %v7199
      %v7389 = vpop.f32.mrf.mxu0
      %v7390 = vadd.f32 0.0, %v7389
      %v7391 = vpop.f32.mrf.mxu0
      %v7392 = vpop.f32.mrf.mxu0
      %v7393 = vadd.f32 0.0, %v7392
      %v7394 = vpop.f32.mrf.mxu0
      %7395 = vmatprep.mubr.bf16.mxu0 %v7203
      %7396 = vmatmul.mubr.bf16.gmra.mxu0 %v7202
      %v7397 = vpop.f32.mrf.mxu0
      %v7398 = vadd.f32 0.0, %v7397
      %v7399 = vpop.f32.mrf.mxu0
      %v7400 = vpop.f32.mrf.mxu0
      %v7401 = vadd.f32 0.0, %v7400
      %v7402 = vpop.f32.mrf.mxu0
      %7403 = vmatprep.mubr.bf16.mxu0 %v7206
      %7404 = vmatmul.mubr.bf16.gmra.mxu0 %v7205
      %v7405 = vpop.f32.mrf.mxu0
      %v7406 = vadd.f32 0.0, %v7405
      %v7407 = vpop.f32.mrf.mxu0
      %v7408 = vpop.f32.mrf.mxu0
      %v7409 = vadd.f32 0.0, %v7408
      %v7410 = vpop.f32.mrf.mxu0
      %7411 = vmatprep.mubr.bf16.mxu0 %v7209
      %7412 = vmatmul.mubr.bf16.gmra.mxu0 %v7208
      %v7413 = vpop.f32.mrf.mxu0
      %v7414 = vadd.f32 0.0, %v7413
      %v7415 = vpop.f32.mrf.mxu0
      %v7416 = vpop.f32.mrf.mxu0
      %v7417 = vadd.f32 0.0, %v7416
      %v7418 = vpop.f32.mrf.mxu0
      %7419 = vmatprep.mubr.bf16.mxu0 %v7212
      %7420 = vmatmul.mubr.bf16.gmra.mxu0 %v7211
      %v7421 = vpop.f32.mrf.mxu0
      %v7422 = vadd.f32 0.0, %v7421
      %v7423 = vpop.f32.mrf.mxu0
      %v7424 = vpop.f32.mrf.mxu0
      %v7425 = vadd.f32 0.0, %v7424
      %v7426 = vpop.f32.mrf.mxu0
      %7427 = vmatprep.mubr.bf16.mxu0 %v7215
      %7428 = vmatmul.mubr.bf16.gmra.mxu0 %v7214
      %v7429 = vpop.f32.mrf.mxu0
      %v7430 = vadd.f32 0.0, %v7429
      %v7431 = vpop.f32.mrf.mxu0
      %v7432 = vpop.f32.mrf.mxu0
      %v7433 = vadd.f32 0.0, %v7432
      %v7434 = vpop.f32.mrf.mxu0
      %7435 = vmatprep.mubr.bf16.mxu0 %v7218
      %7436 = vmatmul.mubr.bf16.gmra.mxu0 %v7217
      %v7437 = vpop.f32.mrf.mxu0
      %v7438 = vadd.f32 0.0, %v7437
      %v7439 = vpop.f32.mrf.mxu0
      %v7440 = vpop.f32.mrf.mxu0
      %v7441 = vadd.f32 0.0, %v7440
      %v7442 = vpop.f32.mrf.mxu0
      %7443 = vmatprep.mubr.bf16.mxu0 %v7221
      %7444 = vmatmul.mubr.bf16.gmra.mxu0 %v7220
      %v7445 = vpop.f32.mrf.mxu0
      %v7446 = vadd.f32 0.0, %v7445
      %v7447 = vpop.f32.mrf.mxu0
      %v7448 = vpop.f32.mrf.mxu0
      %v7449 = vadd.f32 0.0, %v7448
      %v7450 = vpop.f32.mrf.mxu0
      %7451 = vmatprep.mubr.bf16.mxu0 %v7224
      %7452 = vmatmul.mubr.bf16.gmra.mxu0 %v7223
      %v7453 = vpop.f32.mrf.mxu0
      %v7454 = vadd.f32 0.0, %v7453
      %v7455 = vpop.f32.mrf.mxu0
      %v7456 = vpop.f32.mrf.mxu0
      %v7457 = vadd.f32 0.0, %v7456
      %v7458 = vpop.f32.mrf.mxu0
      %7459 = vmatprep.mubr.bf16.mxu0 %v7227
      %7460 = vmatmul.mubr.bf16.gmra.mxu0 %v7226
      %v7461 = vpop.f32.mrf.mxu0
      %v7462 = vadd.f32 0.0, %v7461
      %v7463 = vpop.f32.mrf.mxu0
      %v7464 = vpop.f32.mrf.mxu0
      %v7465 = vadd.f32 0.0, %v7464
      %v7466 = vpop.f32.mrf.mxu0
      %7467 = vmatprep.mubr.bf16.mxu0 %v7230
      %7468 = vmatmul.mubr.bf16.gmra.mxu0 %v7229
      %v7469 = vpop.f32.mrf.mxu0
      %v7470 = vadd.f32 0.0, %v7469
      %v7471 = vpop.f32.mrf.mxu0
      %v7472 = vpop.f32.mrf.mxu0
      %v7473 = vadd.f32 0.0, %v7472
      %v7474 = vpop.f32.mrf.mxu0
      %7475 = vmatprep.mubr.bf16.mxu0 %v7233
      %7476 = vmatmul.mubr.bf16.gmra.mxu0 %v7232
      %v7477 = vpop.f32.mrf.mxu0
      %v7478 = vadd.f32 0.0, %v7477
      %v7479 = vpop.f32.mrf.mxu0
      %v7480 = vpop.f32.mrf.mxu0
      %v7481 = vadd.f32 0.0, %v7480
      %v7482 = vpop.f32.mrf.mxu0
      %7483 = vmatprep.mubr.bf16.mxu0 %v7236
      %7484 = vmatmul.mubr.bf16.gmra.mxu0 %v7235
      %v7485 = vpop.f32.mrf.mxu0
      %v7486 = vadd.f32 0.0, %v7485
      %v7487 = vpop.f32.mrf.mxu0
      %v7488 = vpop.f32.mrf.mxu0
      %v7489 = vadd.f32 0.0, %v7488
      %v7490 = vpop.f32.mrf.mxu0
      %7491 = vmatprep.mubr.bf16.mxu0 %v7239
      %7492 = vmatmul.mubr.bf16.gmra.mxu0 %v7238
      %v7493 = vpop.f32.mrf.mxu0
      %v7494 = vadd.f32 0.0, %v7493
      %v7495 = vpop.f32.mrf.mxu0
      %v7496 = vpop.f32.mrf.mxu0
      %v7497 = vadd.f32 0.0, %v7496
      %v7498 = vpop.f32.mrf.mxu0
      %7499 = vmatprep.mubr.bf16.mxu0 %v7242
      %7500 = vmatmul.mubr.bf16.gmra.mxu0 %v7241
      %v7501 = vpop.f32.mrf.mxu0
      %v7502 = vadd.f32 0.0, %v7501
      %v7503 = vpop.f32.mrf.mxu0
      %v7504 = vpop.f32.mrf.mxu0
      %v7505 = vadd.f32 0.0, %v7504
      %v7506 = vpop.f32.mrf.mxu0
      %7507 = vmatprep.mubr.bf16.mxu0 %v7245
      %7508 = vmatmul.mubr.bf16.gmra.mxu0 %v7244
      %v7509 = vpop.f32.mrf.mxu0
      %v7510 = vadd.f32 0.0, %v7509
      %v7511 = vpop.f32.mrf.mxu0
      %v7512 = vpop.f32.mrf.mxu0
      %v7513 = vadd.f32 0.0, %v7512
      %v7514 = vpop.f32.mrf.mxu0
      %7515 = vmatprep.mubr.bf16.mxu0 %v7248
      %7516 = vmatmul.mubr.bf16.gmra.mxu0 %v7247
      %v7517 = vpop.f32.mrf.mxu0
      %v7518 = vadd.f32 0.0, %v7517
      %v7519 = vpop.f32.mrf.mxu0
      %v7520 = vpop.f32.mrf.mxu0
      %v7521 = vpop.f32.mrf.mxu0
      %7522 = vdwg.mxu0
      %7523 = vmatprep.subr.bf16.mxu0 0
      %7524 = vmatpush1.bf16.xpose.msra.mxu0 0
      %7525 = vmatprep.subr.bf16.mxu0 0
      %7526 = vmatpush1.bf16.xpose.msra.mxu0 0
      %7527 = vmatprep.subr.bf16.mxu0 0
      %7528 = vmatpush1.bf16.xpose.msra.mxu0 0
      %7529 = vmatprep.subr.bf16.mxu0 0
      %7530 = vmatpush1.bf16.xpose.msra.mxu0 0
      %7531 = vmatprep.subr.bf16.mxu0 0
      %7532 = vmatpush1.bf16.xpose.msra.mxu0 0
      %7533 = vmatprep.subr.bf16.mxu0 0
      %7534 = vmatpush1.bf16.xpose.msra.mxu0 0
      %7535 = vmatprep.subr.bf16.mxu0 0
      %7536 = vmatpush1.bf16.xpose.msra.mxu0 0
      %7537 = vmatprep.subr.bf16.mxu0 0
      %7538 = vmatpush1.bf16.xpose.msra.mxu0 %v7353
      %7539 = vmatprep.subr.bf16.mxu0 0
      %7540 = vmatpush2.bf16.xpose.msra.mxu0 0
      %7541 = vmatprep.subr.bf16.mxu0 0
      %7542 = vmatpush2.bf16.xpose.msra.mxu0 0
      %7543 = vmatprep.subr.bf16.mxu0 0
      %7544 = vmatpush2.bf16.xpose.msra.mxu0 0
      %7545 = vmatprep.subr.bf16.mxu0 0
      %7546 = vmatpush2.bf16.xpose.msra.mxu0 0
      %7547 = vmatprep.subr.bf16.mxu0 0
      %7548 = vmatpush2.bf16.xpose.msra.mxu0 0
      %7549 = vmatprep.subr.bf16.mxu0 0
      %7550 = vmatpush2.bf16.xpose.msra.mxu0 0
      %7551 = vmatprep.subr.bf16.mxu0 0
      %7552 = vmatpush2.bf16.xpose.msra.mxu0 0
      %7553 = vmatprep.subr.bf16.mxu0 0
      %7554 = vmatpush2.bf16.xpose.msra.mxu0 0
      %7555 = vmatprep.mubr.bf16.mxu0 0
      %7556 = vmatmul.mubr.bf16.gmra.mxu0 %v7302
      %v7557 = vpop.f32.mrf.mxu0
      %v7558 = vadd.f32 %v7390, %v7557
      %v7559 = vpop.f32.mrf.mxu0
      %v7560 = vpop.f32.mrf.mxu0
      %v7561 = vadd.f32 %v7393, %v7560
      %v7562 = vpop.f32.mrf.mxu0
      %7563 = vmatprep.mubr.bf16.mxu0 0
      %7564 = vmatmul.mubr.bf16.gmra.mxu0 %v7305
      %v7565 = vpop.f32.mrf.mxu0
      %v7566 = vadd.f32 %v7398, %v7565
      %v7567 = vpop.f32.mrf.mxu0
      %v7568 = vpop.f32.mrf.mxu0
      %v7569 = vadd.f32 %v7401, %v7568
      %v7570 = vpop.f32.mrf.mxu0
      %7571 = vmatprep.mubr.bf16.mxu0 0
      %7572 = vmatmul.mubr.bf16.gmra.mxu0 %v7308
      %v7573 = vpop.f32.mrf.mxu0
      %v7574 = vadd.f32 %v7406, %v7573
      %v7575 = vpop.f32.mrf.mxu0
      %v7576 = vpop.f32.mrf.mxu0
      %v7577 = vadd.f32 %v7409, %v7576
      %v7578 = vpop.f32.mrf.mxu0
      %7579 = vmatprep.mubr.bf16.mxu0 0
      %7580 = vmatmul.mubr.bf16.gmra.mxu0 %v7311
      %v7581 = vpop.f32.mrf.mxu0
      %v7582 = vadd.f32 %v7414, %v7581
      %v7583 = vpop.f32.mrf.mxu0
      %v7584 = vpop.f32.mrf.mxu0
      %v7585 = vadd.f32 %v7417, %v7584
      %v7586 = vpop.f32.mrf.mxu0
      %7587 = vmatprep.mubr.bf16.mxu0 0
      %7588 = vmatmul.mubr.bf16.gmra.mxu0 %v7314
      %v7589 = vpop.f32.mrf.mxu0
      %v7590 = vadd.f32 %v7422, %v7589
      %v7591 = vpop.f32.mrf.mxu0
      %v7592 = vpop.f32.mrf.mxu0
      %v7593 = vadd.f32 %v7425, %v7592
      %v7594 = vpop.f32.mrf.mxu0
      %7595 = vmatprep.mubr.bf16.mxu0 0
      %7596 = vmatmul.mubr.bf16.gmra.mxu0 %v7317
      %v7597 = vpop.f32.mrf.mxu0
      %v7598 = vadd.f32 %v7430, %v7597
      %v7599 = vpop.f32.mrf.mxu0
      %v7600 = vpop.f32.mrf.mxu0
      %v7601 = vadd.f32 %v7433, %v7600
      %v7602 = vpop.f32.mrf.mxu0
      %7603 = vmatprep.mubr.bf16.mxu0 0
      %7604 = vmatmul.mubr.bf16.gmra.mxu0 %v7320
      %v7605 = vpop.f32.mrf.mxu0
      %v7606 = vadd.f32 %v7438, %v7605
      %v7607 = vpop.f32.mrf.mxu0
      %v7608 = vpop.f32.mrf.mxu0
      %v7609 = vadd.f32 %v7441, %v7608
      %v7610 = vpop.f32.mrf.mxu0
      %7611 = vmatprep.mubr.bf16.mxu0 0
      %7612 = vmatmul.mubr.bf16.gmra.mxu0 %v7323
      %v7613 = vpop.f32.mrf.mxu0
      %v7614 = vadd.f32 %v7446, %v7613
      %v7615 = vpop.f32.mrf.mxu0
      %v7616 = vpop.f32.mrf.mxu0
      %v7617 = vadd.f32 %v7449, %v7616
      %v7618 = vpop.f32.mrf.mxu0
      %7619 = vmatprep.mubr.bf16.mxu0 0
      %7620 = vmatmul.mubr.bf16.gmra.mxu0 %v7326
      %v7621 = vpop.f32.mrf.mxu0
      %v7622 = vadd.f32 %v7454, %v7621
      %v7623 = vpop.f32.mrf.mxu0
      %v7624 = vpop.f32.mrf.mxu0
      %v7625 = vadd.f32 %v7457, %v7624
      %v7626 = vpop.f32.mrf.mxu0
      %7627 = vmatprep.mubr.bf16.mxu0 0
      %7628 = vmatmul.mubr.bf16.gmra.mxu0 %v7329
      %v7629 = vpop.f32.mrf.mxu0
      %v7630 = vadd.f32 %v7462, %v7629
      %v7631 = vpop.f32.mrf.mxu0
      %v7632 = vpop.f32.mrf.mxu0
      %v7633 = vadd.f32 %v7465, %v7632
      %v7634 = vpop.f32.mrf.mxu0
      %7635 = vmatprep.mubr.bf16.mxu0 0
      %7636 = vmatmul.mubr.bf16.gmra.mxu0 %v7332
      %v7637 = vpop.f32.mrf.mxu0
      %v7638 = vadd.f32 %v7470, %v7637
      %v7639 = vpop.f32.mrf.mxu0
      %v7640 = vpop.f32.mrf.mxu0
      %v7641 = vadd.f32 %v7473, %v7640
      %v7642 = vpop.f32.mrf.mxu0
      %7643 = vmatprep.mubr.bf16.mxu0 0
      %7644 = vmatmul.mubr.bf16.gmra.mxu0 %v7335
      %v7645 = vpop.f32.mrf.mxu0
      %v7646 = vadd.f32 %v7478, %v7645
      %v7647 = vpop.f32.mrf.mxu0
      %v7648 = vpop.f32.mrf.mxu0
      %v7649 = vadd.f32 %v7481, %v7648
      %v7650 = vpop.f32.mrf.mxu0
      %7651 = vmatprep.mubr.bf16.mxu0 0
      %7652 = vmatmul.mubr.bf16.gmra.mxu0 %v7338
      %v7653 = vpop.f32.mrf.mxu0
      %v7654 = vadd.f32 %v7486, %v7653
      %v7655 = vpop.f32.mrf.mxu0
      %v7656 = vpop.f32.mrf.mxu0
      %v7657 = vadd.f32 %v7489, %v7656
      %v7658 = vpop.f32.mrf.mxu0
      %7659 = vmatprep.mubr.bf16.mxu0 0
      %7660 = vmatmul.mubr.bf16.gmra.mxu0 %v7341
      %v7661 = vpop.f32.mrf.mxu0
      %v7662 = vadd.f32 %v7494, %v7661
      %v7663 = vpop.f32.mrf.mxu0
      %v7664 = vpop.f32.mrf.mxu0
      %v7665 = vadd.f32 %v7497, %v7664
      %v7666 = vpop.f32.mrf.mxu0
      %7667 = vmatprep.mubr.bf16.mxu0 0
      %7668 = vmatmul.mubr.bf16.gmra.mxu0 %v7344
      %v7669 = vpop.f32.mrf.mxu0
      %v7670 = vadd.f32 %v7502, %v7669
      %v7671 = vpop.f32.mrf.mxu0
      %v7672 = vpop.f32.mrf.mxu0
      %v7673 = vadd.f32 %v7505, %v7672
      %v7674 = vpop.f32.mrf.mxu0
      %7675 = vmatprep.mubr.bf16.mxu0 0
      %7676 = vmatmul.mubr.bf16.gmra.mxu0 %v7347
      %v7677 = vpop.f32.mrf.mxu0
      %v7678 = vadd.f32 %v7510, %v7677
      %v7679 = vpop.f32.mrf.mxu0
      %v7680 = vpop.f32.mrf.mxu0
      %v7681 = vadd.f32 %v7513, %v7680
      %v7682 = vpop.f32.mrf.mxu0
      %7683 = vmatprep.mubr.bf16.mxu0 0
      %7684 = vmatmul.mubr.bf16.gmra.mxu0 %v7350
      %v7685 = vpop.f32.mrf.mxu0
      %v7686 = vadd.f32 %v7518, %v7685
      %v7687 = vpop.f32.mrf.mxu0
      %v7688 = vpop.f32.mrf.mxu0
      %v7689 = vpop.f32.mrf.mxu0
      %7690 = vdwg.mxu0
      %v7691 = vadd.f32 %v6822, %v7558
      %v7692 = vadd.f32 %v6825, %v7561
      %v7693 = vadd.f32 %v6830, %v7566
      %v7694 = vadd.f32 %v6833, %v7569
      %v7695 = vadd.f32 %v6838, %v7574
      %v7696 = vadd.f32 %v6841, %v7577
      %v7697 = vadd.f32 %v6846, %v7582
      %v7698 = vadd.f32 %v6849, %v7585
      %v7699 = vadd.f32 %v6854, %v7590
      %v7700 = vadd.f32 %v6857, %v7593
      %v7701 = vadd.f32 %v6862, %v7598
      %v7702 = vadd.f32 %v6865, %v7601
      %v7703 = vadd.f32 %v6870, %v7606
      %v7704 = vadd.f32 %v6873, %v7609
      %v7705 = vadd.f32 %v6878, %v7614
      %v7706 = vadd.f32 %v6881, %v7617
      %v7707 = vadd.f32 %v6886, %v7622
      %v7708 = vadd.f32 %v6889, %v7625
      %v7709 = vadd.f32 %v6894, %v7630
      %v7710 = vadd.f32 %v6897, %v7633
      %v7711 = vadd.f32 %v6902, %v7638
      %v7712 = vadd.f32 %v6905, %v7641
      %v7713 = vadd.f32 %v6910, %v7646
      %v7714 = vadd.f32 %v6913, %v7649
      %v7715 = vadd.f32 %v6918, %v7654
      %v7716 = vadd.f32 %v6921, %v7657
      %v7717 = vadd.f32 %v6926, %v7662
      %v7718 = vadd.f32 %v6929, %v7665
      %v7719 = vadd.f32 %v6934, %v7670
      %v7720 = vadd.f32 %v6937, %v7673
      %v7721 = vadd.f32 %v6942, %v7678
      %v7722 = vadd.f32 %v6945, %v7681
      %v7723 = vadd.f32 %v6950, %v7686
      %v7724 = vld [vmem:[%s3] sm:$0xff]
      %v7725 = vld [vmem:[%s3 + $0x8] sm:$0xff]
      %v7726 = vld [vmem:[%s3 + $0x10] sm:$0xff]
      %v7727 = vld [vmem:[%s3 + $0x18] sm:$0xff]
      %v7728 = vld [vmem:[%s3 + $0x20] sm:$0xff]
      %v7729 = vld [vmem:[%s3 + $0x28] sm:$0xff]
      %v7730 = vld [vmem:[%s3 + $0x30] sm:$0xff]
      %v7731 = vld [vmem:[%s3 + $0x38] sm:$0xff]
      %v7732 = vld [vmem:[%s3 + $0x40] sm:$0xff]
      %v7733 = vld [vmem:[%s3 + $0x48] sm:$0xff]
      %v7734 = vld [vmem:[%s3 + $0x50] sm:$0xff]
      %v7735 = vld [vmem:[%s3 + $0x58] sm:$0xff]
      %v7736 = vld [vmem:[%s3 + $0x60] sm:$0xff]
      %v7737 = vld [vmem:[%s3 + $0x68] sm:$0xff]
      %v7738 = vld [vmem:[%s3 + $0x70] sm:$0xff]
      %v7739 = vld [vmem:[%s3 + $0x78] sm:$0xff]
      %v7740 = vld [vmem:[%s3 + $0x80] sm:$0xff]
      %v7741 = vld [vmem:[%s3 + $0x88] sm:$0xff]
      %v7742 = vld [vmem:[%s3 + $0x90] sm:$0xff]
      %v7743 = vld [vmem:[%s3 + $0x98] sm:$0xff]
      %v7744 = vld [vmem:[%s3 + $0xa0] sm:$0xff]
      %v7745 = vld [vmem:[%s3 + $0xa8] sm:$0xff]
      %v7746 = vld [vmem:[%s3 + $0xb0] sm:$0xff]
      %v7747 = vld [vmem:[%s3 + $0xb8] sm:$0xff]
      %v7748 = vld [vmem:[%s3 + $0xc0] sm:$0xff]
      %v7749 = vld [vmem:[%s3 + $0xc8] sm:$0xff]
      %v7750 = vld [vmem:[%s3 + $0xd0] sm:$0xff]
      %v7751 = vld [vmem:[%s3 + $0xd8] sm:$0xff]
      %v7752 = vld [vmem:[%s3 + $0xe0] sm:$0xff]
      %v7753 = vld [vmem:[%s3 + $0xe8] sm:$0xff]
      %v7754 = vld [vmem:[%s3 + $0xf0] sm:$0xff]
      %v7755 = vld [vmem:[%s3 + $0xf8] sm:$0xff]
      %v7756 = vld [vmem:[%s3 + $0x100] sm:$0x1]
      %7758 = vset.pattern.permute.xlu0 0
      %7759 = vperm.xlu0 %7758, %v7724
      %v7760 = vpop.permute.xlu0 %7759
      %7763 = vset.pattern.permute.xlu0 0
      %7764 = vperm.xlu0 %7763, %v7725
      %v7765 = vpop.permute.xlu0 %7764
      %7768 = vset.pattern.permute.xlu0 0
      %7769 = vperm.xlu0 %7768, %v7726
      %v7770 = vpop.permute.xlu0 %7769
      %7773 = vset.pattern.permute.xlu0 0
      %7774 = vperm.xlu0 %7773, %v7727
      %v7775 = vpop.permute.xlu0 %7774
      %7778 = vset.pattern.permute.xlu0 0
      %7779 = vperm.xlu0 %7778, %v7728
      %v7780 = vpop.permute.xlu0 %7779
      %7783 = vset.pattern.permute.xlu0 0
      %7784 = vperm.xlu0 %7783, %v7729
      %v7785 = vpop.permute.xlu0 %7784
      %7788 = vset.pattern.permute.xlu0 0
      %7789 = vperm.xlu0 %7788, %v7730
      %v7790 = vpop.permute.xlu0 %7789
      %7793 = vset.pattern.permute.xlu0 0
      %7794 = vperm.xlu0 %7793, %v7731
      %v7795 = vpop.permute.xlu0 %7794
      %7798 = vset.pattern.permute.xlu0 0
      %7799 = vperm.xlu0 %7798, %v7732
      %v7800 = vpop.permute.xlu0 %7799
      %7803 = vset.pattern.permute.xlu0 0
      %7804 = vperm.xlu0 %7803, %v7733
      %v7805 = vpop.permute.xlu0 %7804
      %7808 = vset.pattern.permute.xlu0 0
      %7809 = vperm.xlu0 %7808, %v7734
      %v7810 = vpop.permute.xlu0 %7809
      %7813 = vset.pattern.permute.xlu0 0
      %7814 = vperm.xlu0 %7813, %v7735
      %v7815 = vpop.permute.xlu0 %7814
      %7818 = vset.pattern.permute.xlu0 0
      %7819 = vperm.xlu0 %7818, %v7736
      %v7820 = vpop.permute.xlu0 %7819
      %7823 = vset.pattern.permute.xlu0 0
      %7824 = vperm.xlu0 %7823, %v7737
      %v7825 = vpop.permute.xlu0 %7824
      %7828 = vset.pattern.permute.xlu0 0
      %7829 = vperm.xlu0 %7828, %v7738
      %v7830 = vpop.permute.xlu0 %7829
      %7833 = vset.pattern.permute.xlu0 0
      %7834 = vperm.xlu0 %7833, %v7739
      %v7835 = vpop.permute.xlu0 %7834
      %7838 = vset.pattern.permute.xlu0 0
      %7839 = vperm.xlu0 %7838, %v7740
      %v7840 = vpop.permute.xlu0 %7839
      %7843 = vset.pattern.permute.xlu0 0
      %7844 = vperm.xlu0 %7843, %v7741
      %v7845 = vpop.permute.xlu0 %7844
      %7848 = vset.pattern.permute.xlu0 0
      %7849 = vperm.xlu0 %7848, %v7742
      %v7850 = vpop.permute.xlu0 %7849
      %7853 = vset.pattern.permute.xlu0 0
      %7854 = vperm.xlu0 %7853, %v7743
      %v7855 = vpop.permute.xlu0 %7854
      %7858 = vset.pattern.permute.xlu0 0
      %7859 = vperm.xlu0 %7858, %v7744
      %v7860 = vpop.permute.xlu0 %7859
      %7863 = vset.pattern.permute.xlu0 0
      %7864 = vperm.xlu0 %7863, %v7745
      %v7865 = vpop.permute.xlu0 %7864
      %7868 = vset.pattern.permute.xlu0 0
      %7869 = vperm.xlu0 %7868, %v7746
      %v7870 = vpop.permute.xlu0 %7869
      %7873 = vset.pattern.permute.xlu0 0
      %7874 = vperm.xlu0 %7873, %v7747
      %v7875 = vpop.permute.xlu0 %7874
      %7878 = vset.pattern.permute.xlu0 0
      %7879 = vperm.xlu0 %7878, %v7748
      %v7880 = vpop.permute.xlu0 %7879
      %7883 = vset.pattern.permute.xlu0 0
      %7884 = vperm.xlu0 %7883, %v7749
      %v7885 = vpop.permute.xlu0 %7884
      %7888 = vset.pattern.permute.xlu0 0
      %7889 = vperm.xlu0 %7888, %v7750
      %v7890 = vpop.permute.xlu0 %7889
      %7893 = vset.pattern.permute.xlu0 0
      %7894 = vperm.xlu0 %7893, %v7751
      %v7895 = vpop.permute.xlu0 %7894
      %7898 = vset.pattern.permute.xlu0 0
      %7899 = vperm.xlu0 %7898, %v7752
      %v7900 = vpop.permute.xlu0 %7899
      %7903 = vset.pattern.permute.xlu0 0
      %7904 = vperm.xlu0 %7903, %v7753
      %v7905 = vpop.permute.xlu0 %7904
      %7908 = vset.pattern.permute.xlu0 0
      %7909 = vperm.xlu0 %7908, %v7754
      %v7910 = vpop.permute.xlu0 %7909
      %7913 = vset.pattern.permute.xlu0 0
      %7914 = vperm.xlu0 %7913, %v7755
      %v7915 = vpop.permute.xlu0 %7914
      %7918 = vset.pattern.permute.xlu0 0
      %7919 = vperm.xlu0 %7918, %v7756
      %v7920 = vpop.permute.xlu0 %7919
      %v7922 = vadd.f32 %v7691, %v7760
      %v7923 = vadd.f32 %v7692, %v7765
      %v7924 = vadd.f32 %v7693, %v7770
      %v7925 = vadd.f32 %v7694, %v7775
      %v7926 = vadd.f32 %v7695, %v7780
      %v7927 = vadd.f32 %v7696, %v7785
      %v7928 = vadd.f32 %v7697, %v7790
      %v7929 = vadd.f32 %v7698, %v7795
      %v7930 = vadd.f32 %v7699, %v7800
      %v7931 = vadd.f32 %v7700, %v7805
      %v7932 = vadd.f32 %v7701, %v7810
      %v7933 = vadd.f32 %v7702, %v7815
      %v7934 = vadd.f32 %v7703, %v7820
      %v7935 = vadd.f32 %v7704, %v7825
      %v7936 = vadd.f32 %v7705, %v7830
      %v7937 = vadd.f32 %v7706, %v7835
      %v7938 = vadd.f32 %v7707, %v7840
      %v7939 = vadd.f32 %v7708, %v7845
      %v7940 = vadd.f32 %v7709, %v7850
      %v7941 = vadd.f32 %v7710, %v7855
      %v7942 = vadd.f32 %v7711, %v7860
      %v7943 = vadd.f32 %v7712, %v7865
      %v7944 = vadd.f32 %v7713, %v7870
      %v7945 = vadd.f32 %v7714, %v7875
      %v7946 = vadd.f32 %v7715, %v7880
      %v7947 = vadd.f32 %v7716, %v7885
      %v7948 = vadd.f32 %v7717, %v7890
      %v7949 = vadd.f32 %v7718, %v7895
      %v7950 = vadd.f32 %v7719, %v7900
      %v7951 = vadd.f32 %v7720, %v7905
      %v7952 = vadd.f32 %v7721, %v7910
      %v7953 = vadd.f32 %v7722, %v7915
      %v7954 = vadd.f32 %v7723, %v7920
      %v7955 = vsub.f32 0.0, %v7922
      %v7956 = vsub.f32 0.0, %v7923
      %v7957 = vsub.f32 0.0, %v7924
      %v7958 = vsub.f32 0.0, %v7925
      %v7959 = vsub.f32 0.0, %v7926
      %v7960 = vsub.f32 0.0, %v7927
      %v7961 = vsub.f32 0.0, %v7928
      %v7962 = vsub.f32 0.0, %v7929
      %v7963 = vsub.f32 0.0, %v7930
      %v7964 = vsub.f32 0.0, %v7931
      %v7965 = vsub.f32 0.0, %v7932
      %v7966 = vsub.f32 0.0, %v7933
      %v7967 = vsub.f32 0.0, %v7934
      %v7968 = vsub.f32 0.0, %v7935
      %v7969 = vsub.f32 0.0, %v7936
      %v7970 = vsub.f32 0.0, %v7937
      %v7971 = vsub.f32 0.0, %v7938
      %v7972 = vsub.f32 0.0, %v7939
      %v7973 = vsub.f32 0.0, %v7940
      %v7974 = vsub.f32 0.0, %v7941
      %v7975 = vsub.f32 0.0, %v7942
      %v7976 = vsub.f32 0.0, %v7943
      %v7977 = vsub.f32 0.0, %v7944
      %v7978 = vsub.f32 0.0, %v7945
      %v7979 = vsub.f32 0.0, %v7946
      %v7980 = vsub.f32 0.0, %v7947
      %v7981 = vsub.f32 0.0, %v7948
      %v7982 = vsub.f32 0.0, %v7949
      %v7983 = vsub.f32 0.0, %v7950
      %v7984 = vsub.f32 0.0, %v7951
      %v7985 = vsub.f32 0.0, %v7952
      %v7986 = vsub.f32 0.0, %v7953
      %v7987 = vsub.f32 0.0, %v7954
      %v7988 = vmul.f32 %v7955, 1.442695
      %v7989 = vpow.pop %v7988
      %v7990 = vmul.f32 %v7956, 1.442695
      %v7991 = vpow.pop %v7990
      %v7992 = vmul.f32 %v7957, 1.442695
      %v7993 = vpow.pop %v7992
      %v7994 = vmul.f32 %v7958, 1.442695
      %v7995 = vpow.pop %v7994
      %v7996 = vmul.f32 %v7959, 1.442695
      %v7997 = vpow.pop %v7996
      %v7998 = vmul.f32 %v7960, 1.442695
      %v7999 = vpow.pop %v7998
      %v8000 = vmul.f32 %v7961, 1.442695
      %v8001 = vpow.pop %v8000
      %v8002 = vmul.f32 %v7962, 1.442695
      %v8003 = vpow.pop %v8002
      %v8004 = vmul.f32 %v7963, 1.442695
      %v8005 = vpow.pop %v8004
      %v8006 = vmul.f32 %v7964, 1.442695
      %v8007 = vpow.pop %v8006
      %v8008 = vmul.f32 %v7965, 1.442695
      %v8009 = vpow.pop %v8008
      %v8010 = vmul.f32 %v7966, 1.442695
      %v8011 = vpow.pop %v8010
      %v8012 = vmul.f32 %v7967, 1.442695
      %v8013 = vpow.pop %v8012
      %v8014 = vmul.f32 %v7968, 1.442695
      %v8015 = vpow.pop %v8014
      %v8016 = vmul.f32 %v7969, 1.442695
      %v8017 = vpow.pop %v8016
      %v8018 = vmul.f32 %v7970, 1.442695
      %v8019 = vpow.pop %v8018
      %v8020 = vmul.f32 %v7971, 1.442695
      %v8021 = vpow.pop %v8020
      %v8022 = vmul.f32 %v7972, 1.442695
      %v8023 = vpow.pop %v8022
      %v8024 = vmul.f32 %v7973, 1.442695
      %v8025 = vpow.pop %v8024
      %v8026 = vmul.f32 %v7974, 1.442695
      %v8027 = vpow.pop %v8026
      %v8028 = vmul.f32 %v7975, 1.442695
      %v8029 = vpow.pop %v8028
      %v8030 = vmul.f32 %v7976, 1.442695
      %v8031 = vpow.pop %v8030
      %v8032 = vmul.f32 %v7977, 1.442695
      %v8033 = vpow.pop %v8032
      %v8034 = vmul.f32 %v7978, 1.442695
      %v8035 = vpow.pop %v8034
      %v8036 = vmul.f32 %v7979, 1.442695
      %v8037 = vpow.pop %v8036
      %v8038 = vmul.f32 %v7980, 1.442695
      %v8039 = vpow.pop %v8038
      %v8040 = vmul.f32 %v7981, 1.442695
      %v8041 = vpow.pop %v8040
      %v8042 = vmul.f32 %v7982, 1.442695
      %v8043 = vpow.pop %v8042
      %v8044 = vmul.f32 %v7983, 1.442695
      %v8045 = vpow.pop %v8044
      %v8046 = vmul.f32 %v7984, 1.442695
      %v8047 = vpow.pop %v8046
      %v8048 = vmul.f32 %v7985, 1.442695
      %v8049 = vpow.pop %v8048
      %v8050 = vmul.f32 %v7986, 1.442695
      %v8051 = vpow.pop %v8050
      %v8052 = vmul.f32 %v7987, 1.442695
      %v8053 = vpow.pop %v8052
      %v8054 = vadd.f32 %v7989, 1.0
      %v8055 = vadd.f32 %v7991, 1.0
      %v8056 = vadd.f32 %v7993, 1.0
      %v8057 = vadd.f32 %v7995, 1.0
      %v8058 = vadd.f32 %v7997, 1.0
      %v8059 = vadd.f32 %v7999, 1.0
      %v8060 = vadd.f32 %v8001, 1.0
      %v8061 = vadd.f32 %v8003, 1.0
      %v8062 = vadd.f32 %v8005, 1.0
      %v8063 = vadd.f32 %v8007, 1.0
      %v8064 = vadd.f32 %v8009, 1.0
      %v8065 = vadd.f32 %v8011, 1.0
      %v8066 = vadd.f32 %v8013, 1.0
      %v8067 = vadd.f32 %v8015, 1.0
      %v8068 = vadd.f32 %v8017, 1.0
      %v8069 = vadd.f32 %v8019, 1.0
      %v8070 = vadd.f32 %v8021, 1.0
      %v8071 = vadd.f32 %v8023, 1.0
      %v8072 = vadd.f32 %v8025, 1.0
      %v8073 = vadd.f32 %v8027, 1.0
      %v8074 = vadd.f32 %v8029, 1.0
      %v8075 = vadd.f32 %v8031, 1.0
      %v8076 = vadd.f32 %v8033, 1.0
      %v8077 = vadd.f32 %v8035, 1.0
      %v8078 = vadd.f32 %v8037, 1.0
      %v8079 = vadd.f32 %v8039, 1.0
      %v8080 = vadd.f32 %v8041, 1.0
      %v8081 = vadd.f32 %v8043, 1.0
      %v8082 = vadd.f32 %v8045, 1.0
      %v8083 = vadd.f32 %v8047, 1.0
      %v8084 = vadd.f32 %v8049, 1.0
      %v8085 = vadd.f32 %v8051, 1.0
      %v8086 = vadd.f32 %v8053, 1.0
      %v8087 = vrcp.pop %v8054
      %v8088 = vrcp.pop %v8055
      %v8089 = vrcp.pop %v8056
      %v8090 = vrcp.pop %v8057
      %v8091 = vrcp.pop %v8058
      %v8092 = vrcp.pop %v8059
      %v8093 = vrcp.pop %v8060
      %v8094 = vrcp.pop %v8061
      %v8095 = vrcp.pop %v8062
      %v8096 = vrcp.pop %v8063
      %v8097 = vrcp.pop %v8064
      %v8098 = vrcp.pop %v8065
      %v8099 = vrcp.pop %v8066
      %v8100 = vrcp.pop %v8067
      %v8101 = vrcp.pop %v8068
      %v8102 = vrcp.pop %v8069
      %v8103 = vrcp.pop %v8070
      %v8104 = vrcp.pop %v8071
      %v8105 = vrcp.pop %v8072
      %v8106 = vrcp.pop %v8073
      %v8107 = vrcp.pop %v8074
      %v8108 = vrcp.pop %v8075
      %v8109 = vrcp.pop %v8076
      %v8110 = vrcp.pop %v8077
      %v8111 = vrcp.pop %v8078
      %v8112 = vrcp.pop %v8079
      %v8113 = vrcp.pop %v8080
      %v8114 = vrcp.pop %v8081
      %v8115 = vrcp.pop %v8082
      %v8116 = vrcp.pop %v8083
      %v8117 = vrcp.pop %v8084
      %v8118 = vrcp.pop %v8085
      %v8119 = vrcp.pop %v8086
      %vm8120 = vcmask 130048
      %8121 = vst.msk [vmem:[%s197] sm:$0xff] %vm8120, %v8087
      %8122 = vst.msk [vmem:[%s197 + $0x8] sm:$0xff] %vm8120, %v8088
      %8123 = vst.msk [vmem:[%s197 + $0x10] sm:$0xff] %vm8120, %v8089
      %8124 = vst.msk [vmem:[%s197 + $0x18] sm:$0xff] %vm8120, %v8090
      %8125 = vst.msk [vmem:[%s197 + $0x20] sm:$0xff] %vm8120, %v8091
      %8126 = vst.msk [vmem:[%s197 + $0x28] sm:$0xff] %vm8120, %v8092
      %8127 = vst.msk [vmem:[%s197 + $0x30] sm:$0xff] %vm8120, %v8093
      %8128 = vst.msk [vmem:[%s197 + $0x38] sm:$0xff] %vm8120, %v8094
      %8129 = vst.msk [vmem:[%s197 + $0x40] sm:$0xff] %vm8120, %v8095
      %8130 = vst.msk [vmem:[%s197 + $0x48] sm:$0xff] %vm8120, %v8096
      %8131 = vst.msk [vmem:[%s197 + $0x50] sm:$0xff] %vm8120, %v8097
      %8132 = vst.msk [vmem:[%s197 + $0x58] sm:$0xff] %vm8120, %v8098
      %8133 = vst.msk [vmem:[%s197 + $0x60] sm:$0xff] %vm8120, %v8099
      %8134 = vst.msk [vmem:[%s197 + $0x68] sm:$0xff] %vm8120, %v8100
      %8135 = vst.msk [vmem:[%s197 + $0x70] sm:$0xff] %vm8120, %v8101
      %8136 = vst.msk [vmem:[%s197 + $0x78] sm:$0xff] %vm8120, %v8102
      %8137 = vst.msk [vmem:[%s197 + $0x80] sm:$0xff] %vm8120, %v8103
      %8138 = vst.msk [vmem:[%s197 + $0x88] sm:$0xff] %vm8120, %v8104
      %8139 = vst.msk [vmem:[%s197 + $0x90] sm:$0xff] %vm8120, %v8105
      %8140 = vst.msk [vmem:[%s197 + $0x98] sm:$0xff] %vm8120, %v8106
      %8141 = vst.msk [vmem:[%s197 + $0xa0] sm:$0xff] %vm8120, %v8107
      %8142 = vst.msk [vmem:[%s197 + $0xa8] sm:$0xff] %vm8120, %v8108
      %8143 = vst.msk [vmem:[%s197 + $0xb0] sm:$0xff] %vm8120, %v8109
      %8144 = vst.msk [vmem:[%s197 + $0xb8] sm:$0xff] %vm8120, %v8110
      %8145 = vst.msk [vmem:[%s197 + $0xc0] sm:$0xff] %vm8120, %v8111
      %8146 = vst.msk [vmem:[%s197 + $0xc8] sm:$0xff] %vm8120, %v8112
      %8147 = vst.msk [vmem:[%s197 + $0xd0] sm:$0xff] %vm8120, %v8113
      %8148 = vst.msk [vmem:[%s197 + $0xd8] sm:$0xff] %vm8120, %v8114
      %8149 = vst.msk [vmem:[%s197 + $0xe0] sm:$0xff] %vm8120, %v8115
      %8150 = vst.msk [vmem:[%s197 + $0xe8] sm:$0xff] %vm8120, %v8116
      %8151 = vst.msk [vmem:[%s197 + $0xf0] sm:$0xff] %vm8120, %v8117
      %8152 = vst.msk [vmem:[%s197 + $0xf8] sm:$0xff] %vm8120, %v8118
      %vm8153 = vcmask 122880
      %8154 = vst.msk [vmem:[%s197 + $0x100] sm:$0x1] %vm8153, %v8119
      %p8155 = scmp.lt.s32.totalorder %s15, 1
      %s8156 = scalar_select %p8155, %s15, 1
      %s8157 = smul.addr %s8156, 33
      %s8158 = smul.addr %s8157, 8
      %s8159 = scalar_lea.vmem %s4, %s8158
      // Predicated region
      $region37: #{base_model_forward.1} parent=35 // pred_check
        %p8160 = pneg %p122
      $region38: #{base_model_forward.1} parent=35 // pred_check_branch
        %8162 = sbr.rel (%p8160) target = $region40
      $region39: #{base_model_forward.1} parent=35 // pred_region
        _
      $region40: #{base_model_forward.1} parent=35 // pred_fallthru
        _
    $region36: #{base_model_forward.1} parent=5 // pred_fallthru
      _
    %p8163 = scmp.le.s32.totalorder 2, %s10
    // Predicated region
    $region41: #{base_model_forward.1} parent=5 // pred_check
      %p8164 = pneg %p8163
    $region42: #{base_model_forward.1} parent=5 // pred_check_branch
      %8166 = sbr.rel (%p8164) target = $region44
    $region43: #{base_model_forward.1} parent=5 // pred_region
      %s8167 = ssub.s32 %s10, 2
      // Predicated region
      $region45: #{base_model_forward.1} parent=43 // pred_check
        %p8168 = pneg %p128
      $region46: #{base_model_forward.1} parent=43 // pred_check_branch
        %8170 = sbr.rel (%p8168) target = $region48
      $region47: #{base_model_forward.1} parent=43 // pred_region
        %p8171 = scmp.lt.s32.totalorder %s16, 1
        %s8172 = scalar_select %p8171, %s16, 1
        %s8173 = smul.addr %s8172, 33
        %s8174 = smul.addr %s8173, 8
        %s8175 = scalar_lea.vmem %s4, %s8174
      $region48: #{base_model_forward.1} parent=43 // pred_fallthru
        _
    $region44: #{base_model_forward.1} parent=5 // pred_fallthru
      _
  $region6: #{base_model_forward.1} parent=0 // loop_footer
    %s14 = sadd.s32 1, %s10
  $region7: #{base_model_forward.1} parent=0 // loop_footer_branch
    %9 = sbr.rel target = $region3
  $region8: #{base_model_forward.1} parent=0 // loop_exit
    _

</llo_original>
